<compile_context>
chip_gen: v7x
topology: tpu7x:2x2x1
jax: 0.10.0
libtpu: 0.0.40
codegen_flags: <defaults>
</compile_context>

<pallas_src>
import jax
import jax.numpy as jnp
from jax import lax
from jax.experimental import pallas as pl
from jax.experimental.pallas import tpu as pltpu

IN_FEATURES = 196608   # 3 * 256 * 256
OUT_FEATURES = 10
LANE = 128


def _linear_kernel(x_ref, w_ref, b_ref, o_ref, acc_ref):
    """One grid step of y[B,N] = sum_K x[B,K] * w[N,K]  (+ bias at the end).

    x_ref  : [B, tc, 128] f32   activation tile (K chunked into 128-lane rows)
    w_ref  : [N, tc, 128] bf16  weight tile, PyTorch-native [N, K] layout
    b_ref  : [1, N]       f32   bias
    o_ref  : [B, N]       f32   output (one slot per K-split)
    acc_ref: [N, B, 128]  f32   per-output lane-parallel partial sums (scratch)
    """
    c = pl.program_id(0)                      # K-split index (TensorCore on v7x)
    k = pl.program_id(1)                      # K-step index within the split

    @pl.when(k == 0)
    def _init():
        acc_ref[...] = jnp.zeros_like(acc_ref)

    x = x_ref[...]                            # [B, tc, 128] f32
    n_out = w_ref.shape[0]
    # VPU contraction: for each output row n, multiply-accumulate x against
    # w[n] and reduce over the chunk (sublane) axis, keeping a 128-lane
    # running partial sum per (n, b).  No MXU, no transposes of big tiles.
    for n in range(n_out):                    # N = 10, unrolled
        w_n = w_ref[n].astype(jnp.float32)    # [tc, 128]
        acc_ref[n] += jnp.sum(x * w_n[None, :, :], axis=1)   # [B, 128]

    @pl.when(k == pl.num_programs(1) - 1)
    def _finalize():
        partial = jnp.sum(acc_ref[...], axis=-1)   # [N, B] cross-lane reduce (tiny)
        out = partial.T                            # [B, N]
        # Add the bias exactly once (split 0); other splits stay pure partials.
        bias = b_ref[...] * (c == 0).astype(jnp.float32)     # [1, N]
        o_ref[...] = (out + bias).astype(o_ref.dtype)


def _num_tensorcores_per_device():
    """TensorCores per JAX device (2 on v7x, else 1). Best-effort, safe default 1."""
    try:
        info = pltpu.get_tpu_info()
        for attr in ("tensorcores_per_chip", "num_tensorcores",
                     "tensor_cores_per_chip", "cores_per_chip"):
            v = getattr(info, attr, None)
            if isinstance(v, int) and v in (1, 2):
                return v
    except Exception:
        pass
    try:
        kind = jax.devices()[0].device_kind.lower()
        if "7" in kind:                        # fallback heuristic for v7x
            return 2
    except Exception:
        pass
    return 1


def _linear_pallas_impl(x, w, b, *, tk, num_splits):
    B, K = x.shape
    N, Kw = w.shape
    assert K == Kw and b.shape == (N,)
    assert K % LANE == 0, "K must be a multiple of 128"

    # Tile size along K (elements). Default: two grid steps total
    # (one step per core when the reduction is split across 2 TensorCores).
    if tk is None:
        half = K // 2
        tk = half if (K % 2 == 0 and half % LANE == 0) else K
    if tk % LANE != 0 or K % tk != 0:
        tk = K
    if K % (tk * num_splits) != 0:
        num_splits = 1
    steps = K // (tk * num_splits)
    tc = tk // LANE
    C = K // LANE

    # Free, contiguous reshapes: lane/sublane-dense tiles, no padding blowup.
    x3 = x.reshape(B, C, LANE)
    w3 = w.reshape(N, C, LANE)
    b2 = b.reshape(1, N).astype(jnp.float32)

    if num_splits == 1:
        out_shape = jax.ShapeDtypeStruct((B, N), jnp.float32)
        out_spec = pl.BlockSpec((B, N), lambda c, k: (0, 0))
        dims = (pltpu.ARBITRARY, pltpu.ARBITRARY)
    else:
        out_shape = jax.ShapeDtypeStruct((num_splits, B, N), jnp.float32)
        out_spec = pl.BlockSpec((None, B, N), lambda c, k: (c, 0, 0))
        # Guarantee the K-split actually lands on distinct TensorCores (v7x).
        dims = (pltpu.CORE_PARALLEL, pltpu.ARBITRARY)

    grid_spec = pltpu.PrefetchScalarGridSpec(
        num_scalar_prefetch=0,
        grid=(num_splits, steps),
        in_specs=[
            pl.BlockSpec((B, tc, LANE), lambda c, k: (0, c * steps + k, 0)),
            pl.BlockSpec((N, tc, LANE), lambda c, k: (0, c * steps + k, 0)),
            pl.BlockSpec((1, N), lambda c, k: (0, 0)),
        ],
        out_specs=out_spec,
        scratch_shapes=[pltpu.VMEM((N, B, LANE), jnp.float32)],
    )

    result = pl.pallas_call(
        _linear_kernel,
        out_shape=out_shape,
        grid_spec=grid_spec,
        compiler_params=pltpu.CompilerParams(
            dimension_semantics=dims,
            vmem_limit_bytes=32 * 1024 * 1024,
        ),
    )(x3, w3, b2)

    y = result if num_splits == 1 else jnp.sum(result, axis=0)
    return y.astype(x.dtype)


def linear_pallas(x, w, b, *, tk=None, num_splits=None):
    """y = x @ w.T + b   (x: [B, K] f32, w: [N, K] f32 or bf16, b: [N] f32)."""
    if num_splits is None:
        num_splits = _num_tensorcores_per_device()
    num_splits = max(1, int(num_splits))
    if num_splits > 1:
        try:
            return _linear_pallas_impl(x, w, b, tk=tk, num_splits=num_splits)
        except Exception:
            pass   # multi-TensorCore path unsupported here -> single stream
    return _linear_pallas_impl(x, w, b, tk=tk, num_splits=1)


def init_params(key):
    """nn.Linear default init: U(-1/sqrt(K), 1/sqrt(K)), native [N, K] layout."""
    kw, kb = jax.random.split(key)
    bound = 1.0 / jnp.sqrt(jnp.float32(IN_FEATURES))
    w = jax.random.uniform(
        kw, (OUT_FEATURES, IN_FEATURES), jnp.float32, -bound, bound
    )
    b = jax.random.uniform(kb, (OUT_FEATURES,), jnp.float32, -bound, bound)
    return w, b


if __name__ == "__main__":
    key = jax.random.PRNGKey(0)
    kx, kp = jax.random.split(key)

    batch = 2
    x = jax.random.normal(kx, (batch, IN_FEATURES), jnp.float32)
    w, b = init_params(kp)

    # One-time conversion: weights live in HBM as bf16 (halves the dominant
    # HBM traffic). This mirrors storing the layer's weights in bf16 at init.
    w_bf16 = w.astype(jnp.bfloat16)

    y = linear_pallas(x, w_bf16, b)
    jax.block_until_ready(y)

    assert y.shape == (batch, OUT_FEATURES)
    assert y.dtype == x.dtype

    # Reference 1: exact f32 math on the same bf16-quantized weights
    # (isolates kernel correctness from the intentional bf16 storage).
    w_deq = w_bf16.astype(jnp.float32)
    y_ref_bf = jnp.dot(x, w_deq.T, precision=lax.Precision.HIGHEST) + b
    assert jnp.allclose(y, y_ref_bf, atol=1e-3, rtol=1e-3), \
        "mismatch vs bf16-weight reference"

    # Reference 2: full-f32 PyTorch-equivalent math; loose tolerance absorbs
    # the deliberate bf16 weight-storage quantization (~1e-3 relative).
    y_ref_f32 = jnp.dot(x, w.T, precision=lax.Precision.HIGHEST) + b
    assert jnp.allclose(y, y_ref_f32, atol=1e-2, rtol=1e-2), \
        "mismatch vs f32 reference"

    print("KERNEL_OK")
</pallas_src>

<mosaic_0001>
module attributes {stable_mosaic.version = 11 : i64} {
  func.func @_linear_kernel(%arg0: i32, %arg1: i32, %arg2: memref<2x768x128xf32, #tpu.memory_space<vmem>>, %arg3: memref<10x768x128xbf16, #tpu.memory_space<vmem>>, %arg4: memref<1x10xf32, #tpu.memory_space<vmem>>, %arg5: memref<2x10xf32, #tpu.memory_space<vmem>>, %arg6: memref<10x2x128xf32, #tpu.memory_space<vmem>>) attributes {dimension_semantics = [#tpu.dimension_semantics<arbitrary>, #tpu.dimension_semantics<arbitrary>], iteration_bounds = array<i64: 1, 2>, scalar_prefetch = 0 : i64, scratch_operands = 1 : i64, tpu.core_type = #tpu.core_type<tc>, window_params = [{transform_indices = @transform_0, window_bounds = array<i64: 2, 768, 128>}, {transform_indices = @transform_1, window_bounds = array<i64: 10, 768, 128>}, {pipeline_mode = #tpu.pipeline_mode<synchronous>, transform_indices = @transform_2, window_bounds = array<i64: 1, 10>}, {pipeline_mode = #tpu.pipeline_mode<synchronous>, transform_indices = @transform_3, window_bounds = array<i64: 2, 10>}]} {
    %c0_i32 = arith.constant 0 : i32
    %0 = arith.cmpi eq, %arg1, %c0_i32 : i32
    %1 = arith.extui %0 : i1 to i32
    %c0_i32_0 = arith.constant 0 : i32
    %2 = arith.cmpi ne, %1, %c0_i32_0 : i32
    scf.if %2 {
      %cst_94 = arith.constant 0.000000e+00 : f32
      %137 = vector.broadcast %cst_94 : f32 to vector<10x2x128xf32>
      %c0_95 = arith.constant 0 : index
      %c0_96 = arith.constant 0 : index
      %c0_97 = arith.constant 0 : index
      %138 = vector.load %arg6[%c0_95, %c0_96, %c0_97] : memref<10x2x128xf32, #tpu.memory_space<vmem>>, vector<10x2x128xf32>
      tpu.vector_store %arg6[%c0_95, %c0_96, %c0_97], %137 {strides = array<i32>} : memref<10x2x128xf32, #tpu.memory_space<vmem>>, vector<10x2x128xf32>,
    } else {
    }
    %c0 = arith.constant 0 : index
    %c0_1 = arith.constant 0 : index
    %c0_2 = arith.constant 0 : index
    %3 = vector.load %arg2[%c0, %c0_1, %c0_2] : memref<2x768x128xf32, #tpu.memory_space<vmem>>, vector<2x768x128xf32>
    %c0_3 = arith.constant 0 : index
    %c0_4 = arith.constant 0 : index
    %c0_5 = arith.constant 0 : index
    %4 = vector.load %arg3[%c0_3, %c0_4, %c0_5] : memref<10x768x128xbf16, #tpu.memory_space<vmem>>, vector<1x768x128xbf16>
    %5 = vector.shape_cast %4 : vector<1x768x128xbf16> to vector<768x128xbf16>
    %6 = arith.extf %5 : vector<768x128xbf16> to vector<768x128xf32>
    %c0_6 = arith.constant 0 : index
    %c0_7 = arith.constant 0 : index
    %c0_8 = arith.constant 0 : index
    %7 = vector.load %arg6[%c0_6, %c0_7, %c0_8] : memref<10x2x128xf32, #tpu.memory_space<vmem>>, vector<1x2x128xf32>
    %8 = vector.shape_cast %7 : vector<1x2x128xf32> to vector<2x128xf32>
    %9 = vector.shape_cast %6 : vector<768x128xf32> to vector<1x768x128xf32>
    %10 = vector.broadcast %9 : vector<1x768x128xf32> to vector<2x768x128xf32>
    %11 = arith.mulf %3, %10 : vector<2x768x128xf32>
    %cst = arith.constant dense<0.000000e+00> : vector<2x128xf32>
    %12 = vector.multi_reduction <add>, %11, %cst [1] : vector<2x768x128xf32> to vector<2x128xf32>
    %13 = arith.addf %8, %12 : vector<2x128xf32>
    %c0_9 = arith.constant 0 : index
    %c0_10 = arith.constant 0 : index
    %c0_11 = arith.constant 0 : index
    %14 = vector.load %arg6[%c0_9, %c0_10, %c0_11] : memref<10x2x128xf32, #tpu.memory_space<vmem>>, vector<1x2x128xf32>
    %15 = vector.shape_cast %14 : vector<1x2x128xf32> to vector<2x128xf32>
    %16 = vector.shape_cast %13 : vector<2x128xf32> to vector<1x2x128xf32>
    tpu.vector_store %arg6[%c0_9, %c0_10, %c0_11], %16 {strides = array<i32>} : memref<10x2x128xf32, #tpu.memory_space<vmem>>, vector<1x2x128xf32>,
    %c1 = arith.constant 1 : index
    %c0_12 = arith.constant 0 : index
    %c0_13 = arith.constant 0 : index
    %17 = vector.load %arg3[%c1, %c0_12, %c0_13] : memref<10x768x128xbf16, #tpu.memory_space<vmem>>, vector<1x768x128xbf16>
    %18 = vector.shape_cast %17 : vector<1x768x128xbf16> to vector<768x128xbf16>
    %19 = arith.extf %18 : vector<768x128xbf16> to vector<768x128xf32>
    %c1_14 = arith.constant 1 : index
    %c0_15 = arith.constant 0 : index
    %c0_16 = arith.constant 0 : index
    %20 = vector.load %arg6[%c1_14, %c0_15, %c0_16] : memref<10x2x128xf32, #tpu.memory_space<vmem>>, vector<1x2x128xf32>
    %21 = vector.shape_cast %20 : vector<1x2x128xf32> to vector<2x128xf32>
    %22 = vector.shape_cast %19 : vector<768x128xf32> to vector<1x768x128xf32>
    %23 = vector.broadcast %22 : vector<1x768x128xf32> to vector<2x768x128xf32>
    %24 = arith.mulf %3, %23 : vector<2x768x128xf32>
    %cst_17 = arith.constant dense<0.000000e+00> : vector<2x128xf32>
    %25 = vector.multi_reduction <add>, %24, %cst_17 [1] : vector<2x768x128xf32> to vector<2x128xf32>
    %26 = arith.addf %21, %25 : vector<2x128xf32>
    %c1_18 = arith.constant 1 : index
    %c0_19 = arith.constant 0 : index
    %c0_20 = arith.constant 0 : index
    %27 = vector.load %arg6[%c1_18, %c0_19, %c0_20] : memref<10x2x128xf32, #tpu.memory_space<vmem>>, vector<1x2x128xf32>
    %28 = vector.shape_cast %27 : vector<1x2x128xf32> to vector<2x128xf32>
    %29 = vector.shape_cast %26 : vector<2x128xf32> to vector<1x2x128xf32>
    tpu.vector_store %arg6[%c1_18, %c0_19, %c0_20], %29 {strides = array<i32>} : memref<10x2x128xf32, #tpu.memory_space<vmem>>, vector<1x2x128xf32>,
    %c2 = arith.constant 2 : index
    %c0_21 = arith.constant 0 : index
    %c0_22 = arith.constant 0 : index
    %30 = vector.load %arg3[%c2, %c0_21, %c0_22] : memref<10x768x128xbf16, #tpu.memory_space<vmem>>, vector<1x768x128xbf16>
    %31 = vector.shape_cast %30 : vector<1x768x128xbf16> to vector<768x128xbf16>
    %32 = arith.extf %31 : vector<768x128xbf16> to vector<768x128xf32>
    %c2_23 = arith.constant 2 : index
    %c0_24 = arith.constant 0 : index
    %c0_25 = arith.constant 0 : index
    %33 = vector.load %arg6[%c2_23, %c0_24, %c0_25] : memref<10x2x128xf32, #tpu.memory_space<vmem>>, vector<1x2x128xf32>
    %34 = vector.shape_cast %33 : vector<1x2x128xf32> to vector<2x128xf32>
    %35 = vector.shape_cast %32 : vector<768x128xf32> to vector<1x768x128xf32>
    %36 = vector.broadcast %35 : vector<1x768x128xf32> to vector<2x768x128xf32>
    %37 = arith.mulf %3, %36 : vector<2x768x128xf32>
    %cst_26 = arith.constant dense<0.000000e+00> : vector<2x128xf32>
    %38 = vector.multi_reduction <add>, %37, %cst_26 [1] : vector<2x768x128xf32> to vector<2x128xf32>
    %39 = arith.addf %34, %38 : vector<2x128xf32>
    %c2_27 = arith.constant 2 : index
    %c0_28 = arith.constant 0 : index
    %c0_29 = arith.constant 0 : index
    %40 = vector.load %arg6[%c2_27, %c0_28, %c0_29] : memref<10x2x128xf32, #tpu.memory_space<vmem>>, vector<1x2x128xf32>
    %41 = vector.shape_cast %40 : vector<1x2x128xf32> to vector<2x128xf32>
    %42 = vector.shape_cast %39 : vector<2x128xf32> to vector<1x2x128xf32>
    tpu.vector_store %arg6[%c2_27, %c0_28, %c0_29], %42 {strides = array<i32>} : memref<10x2x128xf32, #tpu.memory_space<vmem>>, vector<1x2x128xf32>,
    %c3 = arith.constant 3 : index
    %c0_30 = arith.constant 0 : index
    %c0_31 = arith.constant 0 : index
    %43 = vector.load %arg3[%c3, %c0_30, %c0_31] : memref<10x768x128xbf16, #tpu.memory_space<vmem>>, vector<1x768x128xbf16>
    %44 = vector.shape_cast %43 : vector<1x768x128xbf16> to vector<768x128xbf16>
    %45 = arith.extf %44 : vector<768x128xbf16> to vector<768x128xf32>
    %c3_32 = arith.constant 3 : index
    %c0_33 = arith.constant 0 : index
    %c0_34 = arith.constant 0 : index
    %46 = vector.load %arg6[%c3_32, %c0_33, %c0_34] : memref<10x2x128xf32, #tpu.memory_space<vmem>>, vector<1x2x128xf32>
    %47 = vector.shape_cast %46 : vector<1x2x128xf32> to vector<2x128xf32>
    %48 = vector.shape_cast %45 : vector<768x128xf32> to vector<1x768x128xf32>
    %49 = vector.broadcast %48 : vector<1x768x128xf32> to vector<2x768x128xf32>
    %50 = arith.mulf %3, %49 : vector<2x768x128xf32>
    %cst_35 = arith.constant dense<0.000000e+00> : vector<2x128xf32>
    %51 = vector.multi_reduction <add>, %50, %cst_35 [1] : vector<2x768x128xf32> to vector<2x128xf32>
    %52 = arith.addf %47, %51 : vector<2x128xf32>
    %c3_36 = arith.constant 3 : index
    %c0_37 = arith.constant 0 : index
    %c0_38 = arith.constant 0 : index
    %53 = vector.load %arg6[%c3_36, %c0_37, %c0_38] : memref<10x2x128xf32, #tpu.memory_space<vmem>>, vector<1x2x128xf32>
    %54 = vector.shape_cast %53 : vector<1x2x128xf32> to vector<2x128xf32>
    %55 = vector.shape_cast %52 : vector<2x128xf32> to vector<1x2x128xf32>
    tpu.vector_store %arg6[%c3_36, %c0_37, %c0_38], %55 {strides = array<i32>} : memref<10x2x128xf32, #tpu.memory_space<vmem>>, vector<1x2x128xf32>,
    %c4 = arith.constant 4 : index
    %c0_39 = arith.constant 0 : index
    %c0_40 = arith.constant 0 : index
    %56 = vector.load %arg3[%c4, %c0_39, %c0_40] : memref<10x768x128xbf16, #tpu.memory_space<vmem>>, vector<1x768x128xbf16>
    %57 = vector.shape_cast %56 : vector<1x768x128xbf16> to vector<768x128xbf16>
    %58 = arith.extf %57 : vector<768x128xbf16> to vector<768x128xf32>
    %c4_41 = arith.constant 4 : index
    %c0_42 = arith.constant 0 : index
    %c0_43 = arith.constant 0 : index
    %59 = vector.load %arg6[%c4_41, %c0_42, %c0_43] : memref<10x2x128xf32, #tpu.memory_space<vmem>>, vector<1x2x128xf32>
    %60 = vector.shape_cast %59 : vector<1x2x128xf32> to vector<2x128xf32>
    %61 = vector.shape_cast %58 : vector<768x128xf32> to vector<1x768x128xf32>
    %62 = vector.broadcast %61 : vector<1x768x128xf32> to vector<2x768x128xf32>
    %63 = arith.mulf %3, %62 : vector<2x768x128xf32>
    %cst_44 = arith.constant dense<0.000000e+00> : vector<2x128xf32>
    %64 = vector.multi_reduction <add>, %63, %cst_44 [1] : vector<2x768x128xf32> to vector<2x128xf32>
    %65 = arith.addf %60, %64 : vector<2x128xf32>
    %c4_45 = arith.constant 4 : index
    %c0_46 = arith.constant 0 : index
    %c0_47 = arith.constant 0 : index
    %66 = vector.load %arg6[%c4_45, %c0_46, %c0_47] : memref<10x2x128xf32, #tpu.memory_space<vmem>>, vector<1x2x128xf32>
    %67 = vector.shape_cast %66 : vector<1x2x128xf32> to vector<2x128xf32>
    %68 = vector.shape_cast %65 : vector<2x128xf32> to vector<1x2x128xf32>
    tpu.vector_store %arg6[%c4_45, %c0_46, %c0_47], %68 {strides = array<i32>} : memref<10x2x128xf32, #tpu.memory_space<vmem>>, vector<1x2x128xf32>,
    %c5 = arith.constant 5 : index
    %c0_48 = arith.constant 0 : index
    %c0_49 = arith.constant 0 : index
    %69 = vector.load %arg3[%c5, %c0_48, %c0_49] : memref<10x768x128xbf16, #tpu.memory_space<vmem>>, vector<1x768x128xbf16>
    %70 = vector.shape_cast %69 : vector<1x768x128xbf16> to vector<768x128xbf16>
    %71 = arith.extf %70 : vector<768x128xbf16> to vector<768x128xf32>
    %c5_50 = arith.constant 5 : index
    %c0_51 = arith.constant 0 : index
    %c0_52 = arith.constant 0 : index
    %72 = vector.load %arg6[%c5_50, %c0_51, %c0_52] : memref<10x2x128xf32, #tpu.memory_space<vmem>>, vector<1x2x128xf32>
    %73 = vector.shape_cast %72 : vector<1x2x128xf32> to vector<2x128xf32>
    %74 = vector.shape_cast %71 : vector<768x128xf32> to vector<1x768x128xf32>
    %75 = vector.broadcast %74 : vector<1x768x128xf32> to vector<2x768x128xf32>
    %76 = arith.mulf %3, %75 : vector<2x768x128xf32>
    %cst_53 = arith.constant dense<0.000000e+00> : vector<2x128xf32>
    %77 = vector.multi_reduction <add>, %76, %cst_53 [1] : vector<2x768x128xf32> to vector<2x128xf32>
    %78 = arith.addf %73, %77 : vector<2x128xf32>
    %c5_54 = arith.constant 5 : index
    %c0_55 = arith.constant 0 : index
    %c0_56 = arith.constant 0 : index
    %79 = vector.load %arg6[%c5_54, %c0_55, %c0_56] : memref<10x2x128xf32, #tpu.memory_space<vmem>>, vector<1x2x128xf32>
    %80 = vector.shape_cast %79 : vector<1x2x128xf32> to vector<2x128xf32>
    %81 = vector.shape_cast %78 : vector<2x128xf32> to vector<1x2x128xf32>
    tpu.vector_store %arg6[%c5_54, %c0_55, %c0_56], %81 {strides = array<i32>} : memref<10x2x128xf32, #tpu.memory_space<vmem>>, vector<1x2x128xf32>,
    %c6 = arith.constant 6 : index
    %c0_57 = arith.constant 0 : index
    %c0_58 = arith.constant 0 : index
    %82 = vector.load %arg3[%c6, %c0_57, %c0_58] : memref<10x768x128xbf16, #tpu.memory_space<vmem>>, vector<1x768x128xbf16>
    %83 = vector.shape_cast %82 : vector<1x768x128xbf16> to vector<768x128xbf16>
    %84 = arith.extf %83 : vector<768x128xbf16> to vector<768x128xf32>
    %c6_59 = arith.constant 6 : index
    %c0_60 = arith.constant 0 : index
    %c0_61 = arith.constant 0 : index
    %85 = vector.load %arg6[%c6_59, %c0_60, %c0_61] : memref<10x2x128xf32, #tpu.memory_space<vmem>>, vector<1x2x128xf32>
    %86 = vector.shape_cast %85 : vector<1x2x128xf32> to vector<2x128xf32>
    %87 = vector.shape_cast %84 : vector<768x128xf32> to vector<1x768x128xf32>
    %88 = vector.broadcast %87 : vector<1x768x128xf32> to vector<2x768x128xf32>
    %89 = arith.mulf %3, %88 : vector<2x768x128xf32>
    %cst_62 = arith.constant dense<0.000000e+00> : vector<2x128xf32>
    %90 = vector.multi_reduction <add>, %89, %cst_62 [1] : vector<2x768x128xf32> to vector<2x128xf32>
    %91 = arith.addf %86, %90 : vector<2x128xf32>
    %c6_63 = arith.constant 6 : index
    %c0_64 = arith.constant 0 : index
    %c0_65 = arith.constant 0 : index
    %92 = vector.load %arg6[%c6_63, %c0_64, %c0_65] : memref<10x2x128xf32, #tpu.memory_space<vmem>>, vector<1x2x128xf32>
    %93 = vector.shape_cast %92 : vector<1x2x128xf32> to vector<2x128xf32>
    %94 = vector.shape_cast %91 : vector<2x128xf32> to vector<1x2x128xf32>
    tpu.vector_store %arg6[%c6_63, %c0_64, %c0_65], %94 {strides = array<i32>} : memref<10x2x128xf32, #tpu.memory_space<vmem>>, vector<1x2x128xf32>,
    %c7 = arith.constant 7 : index
    %c0_66 = arith.constant 0 : index
    %c0_67 = arith.constant 0 : index
    %95 = vector.load %arg3[%c7, %c0_66, %c0_67] : memref<10x768x128xbf16, #tpu.memory_space<vmem>>, vector<1x768x128xbf16>
    %96 = vector.shape_cast %95 : vector<1x768x128xbf16> to vector<768x128xbf16>
    %97 = arith.extf %96 : vector<768x128xbf16> to vector<768x128xf32>
    %c7_68 = arith.constant 7 : index
    %c0_69 = arith.constant 0 : index
    %c0_70 = arith.constant 0 : index
    %98 = vector.load %arg6[%c7_68, %c0_69, %c0_70] : memref<10x2x128xf32, #tpu.memory_space<vmem>>, vector<1x2x128xf32>
    %99 = vector.shape_cast %98 : vector<1x2x128xf32> to vector<2x128xf32>
    %100 = vector.shape_cast %97 : vector<768x128xf32> to vector<1x768x128xf32>
    %101 = vector.broadcast %100 : vector<1x768x128xf32> to vector<2x768x128xf32>
    %102 = arith.mulf %3, %101 : vector<2x768x128xf32>
    %cst_71 = arith.constant dense<0.000000e+00> : vector<2x128xf32>
    %103 = vector.multi_reduction <add>, %102, %cst_71 [1] : vector<2x768x128xf32> to vector<2x128xf32>
    %104 = arith.addf %99, %103 : vector<2x128xf32>
    %c7_72 = arith.constant 7 : index
    %c0_73 = arith.constant 0 : index
    %c0_74 = arith.constant 0 : index
    %105 = vector.load %arg6[%c7_72, %c0_73, %c0_74] : memref<10x2x128xf32, #tpu.memory_space<vmem>>, vector<1x2x128xf32>
    %106 = vector.shape_cast %105 : vector<1x2x128xf32> to vector<2x128xf32>
    %107 = vector.shape_cast %104 : vector<2x128xf32> to vector<1x2x128xf32>
    tpu.vector_store %arg6[%c7_72, %c0_73, %c0_74], %107 {strides = array<i32>} : memref<10x2x128xf32, #tpu.memory_space<vmem>>, vector<1x2x128xf32>,
    %c8 = arith.constant 8 : index
    %c0_75 = arith.constant 0 : index
    %c0_76 = arith.constant 0 : index
    %108 = vector.load %arg3[%c8, %c0_75, %c0_76] : memref<10x768x128xbf16, #tpu.memory_space<vmem>>, vector<1x768x128xbf16>
    %109 = vector.shape_cast %108 : vector<1x768x128xbf16> to vector<768x128xbf16>
    %110 = arith.extf %109 : vector<768x128xbf16> to vector<768x128xf32>
    %c8_77 = arith.constant 8 : index
    %c0_78 = arith.constant 0 : index
    %c0_79 = arith.constant 0 : index
    %111 = vector.load %arg6[%c8_77, %c0_78, %c0_79] : memref<10x2x128xf32, #tpu.memory_space<vmem>>, vector<1x2x128xf32>
    %112 = vector.shape_cast %111 : vector<1x2x128xf32> to vector<2x128xf32>
    %113 = vector.shape_cast %110 : vector<768x128xf32> to vector<1x768x128xf32>
    %114 = vector.broadcast %113 : vector<1x768x128xf32> to vector<2x768x128xf32>
    %115 = arith.mulf %3, %114 : vector<2x768x128xf32>
    %cst_80 = arith.constant dense<0.000000e+00> : vector<2x128xf32>
    %116 = vector.multi_reduction <add>, %115, %cst_80 [1] : vector<2x768x128xf32> to vector<2x128xf32>
    %117 = arith.addf %112, %116 : vector<2x128xf32>
    %c8_81 = arith.constant 8 : index
    %c0_82 = arith.constant 0 : index
    %c0_83 = arith.constant 0 : index
    %118 = vector.load %arg6[%c8_81, %c0_82, %c0_83] : memref<10x2x128xf32, #tpu.memory_space<vmem>>, vector<1x2x128xf32>
    %119 = vector.shape_cast %118 : vector<1x2x128xf32> to vector<2x128xf32>
    %120 = vector.shape_cast %117 : vector<2x128xf32> to vector<1x2x128xf32>
    tpu.vector_store %arg6[%c8_81, %c0_82, %c0_83], %120 {strides = array<i32>} : memref<10x2x128xf32, #tpu.memory_space<vmem>>, vector<1x2x128xf32>,
    %c9 = arith.constant 9 : index
    %c0_84 = arith.constant 0 : index
    %c0_85 = arith.constant 0 : index
    %121 = vector.load %arg3[%c9, %c0_84, %c0_85] : memref<10x768x128xbf16, #tpu.memory_space<vmem>>, vector<1x768x128xbf16>
    %122 = vector.shape_cast %121 : vector<1x768x128xbf16> to vector<768x128xbf16>
    %123 = arith.extf %122 : vector<768x128xbf16> to vector<768x128xf32>
    %c9_86 = arith.constant 9 : index
    %c0_87 = arith.constant 0 : index
    %c0_88 = arith.constant 0 : index
    %124 = vector.load %arg6[%c9_86, %c0_87, %c0_88] : memref<10x2x128xf32, #tpu.memory_space<vmem>>, vector<1x2x128xf32>
    %125 = vector.shape_cast %124 : vector<1x2x128xf32> to vector<2x128xf32>
    %126 = vector.shape_cast %123 : vector<768x128xf32> to vector<1x768x128xf32>
    %127 = vector.broadcast %126 : vector<1x768x128xf32> to vector<2x768x128xf32>
    %128 = arith.mulf %3, %127 : vector<2x768x128xf32>
    %cst_89 = arith.constant dense<0.000000e+00> : vector<2x128xf32>
    %129 = vector.multi_reduction <add>, %128, %cst_89 [1] : vector<2x768x128xf32> to vector<2x128xf32>
    %130 = arith.addf %125, %129 : vector<2x128xf32>
    %c9_90 = arith.constant 9 : index
    %c0_91 = arith.constant 0 : index
    %c0_92 = arith.constant 0 : index
    %131 = vector.load %arg6[%c9_90, %c0_91, %c0_92] : memref<10x2x128xf32, #tpu.memory_space<vmem>>, vector<1x2x128xf32>
    %132 = vector.shape_cast %131 : vector<1x2x128xf32> to vector<2x128xf32>
    %133 = vector.shape_cast %130 : vector<2x128xf32> to vector<1x2x128xf32>
    tpu.vector_store %arg6[%c9_90, %c0_91, %c0_92], %133 {strides = array<i32>} : memref<10x2x128xf32, #tpu.memory_space<vmem>>, vector<1x2x128xf32>,
    %c1_i32 = arith.constant 1 : i32
    %134 = arith.cmpi eq, %arg1, %c1_i32 : i32
    %135 = arith.extui %134 : i1 to i32
    %c0_i32_93 = arith.constant 0 : i32
    %136 = arith.cmpi ne, %135, %c0_i32_93 : i32
    scf.if %136 {
      %c0_94 = arith.constant 0 : index
      %c0_95 = arith.constant 0 : index
      %c0_96 = arith.constant 0 : index
      %137 = vector.load %arg6[%c0_94, %c0_95, %c0_96] : memref<10x2x128xf32, #tpu.memory_space<vmem>>, vector<10x2x128xf32>
      %cst_97 = arith.constant dense<0.000000e+00> : vector<10x2xf32>
      %138 = vector.multi_reduction <add>, %137, %cst_97 [2] : vector<10x2x128xf32> to vector<10x2xf32>
      %139 = tpu.transpose %138, [1, 0] : vector<10x2xf32> -> vector<2x10xf32>
      %c0_98 = arith.constant 0 : index
      %c0_99 = arith.constant 0 : index
      %140 = vector.load %arg4[%c0_98, %c0_99] : memref<1x10xf32, #tpu.memory_space<vmem>>, vector<1x10xf32>
      %c0_i32_100 = arith.constant 0 : i32
      %141 = arith.cmpi eq, %arg0, %c0_i32_100 : i32
      %142 = arith.extui %141 : i1 to i32
      %143 = arith.sitofp %142 : i32 to f32
      %144 = vector.broadcast %143 : f32 to vector<1x10xf32>
      %145 = arith.mulf %140, %144 : vector<1x10xf32>
      %146 = vector.broadcast %145 : vector<1x10xf32> to vector<2x10xf32>
      %147 = arith.addf %139, %146 : vector<2x10xf32>
      %c0_101 = arith.constant 0 : index
      %c0_102 = arith.constant 0 : index
      %148 = vector.load %arg5[%c0_101, %c0_102] : memref<2x10xf32, #tpu.memory_space<vmem>>, vector<2x10xf32>
      tpu.vector_store %arg5[%c0_101, %c0_102], %147 {strides = array<i32>} : memref<2x10xf32, #tpu.memory_space<vmem>>, vector<2x10xf32>,
    } else {
    }
    return
  }
  func.func @transform_0(%arg0: i32, %arg1: i32) -> (i32, i32, i32) {
    %c2_i32 = arith.constant 2 : i32
    %0 = arith.muli %arg0, %c2_i32 : i32
    %1 = arith.addi %0, %arg1 : i32
    %c0_i32 = arith.constant 0 : i32
    %c0_i32_0 = arith.constant 0 : i32
    %c0_i32_1 = arith.constant 0 : i32
    return %c0_i32, %1, %c0_i32_0 : i32, i32, i32
  }
  func.func @transform_1(%arg0: i32, %arg1: i32) -> (i32, i32, i32) {
    %c2_i32 = arith.constant 2 : i32
    %0 = arith.muli %arg0, %c2_i32 : i32
    %1 = arith.addi %0, %arg1 : i32
    %c0_i32 = arith.constant 0 : i32
    %c0_i32_0 = arith.constant 0 : i32
    %c0_i32_1 = arith.constant 0 : i32
    return %c0_i32, %1, %c0_i32_0 : i32, i32, i32
  }
  func.func @transform_2(%arg0: i32, %arg1: i32) -> (i32, i32) {
    %c0_i32 = arith.constant 0 : i32
    %c0_i32_0 = arith.constant 0 : i32
    %c0_i32_1 = arith.constant 0 : i32
    return %c0_i32, %c0_i32_0 : i32, i32
  }
  func.func @transform_3(%arg0: i32, %arg1: i32) -> (i32, i32) {
    %c0_i32 = arith.constant 0 : i32
    %c0_i32_0 = arith.constant 0 : i32
    %c0_i32_1 = arith.constant 0 : i32
    return %c0_i32, %c0_i32_0 : i32, i32
  }
}

</mosaic_0001>

<llo_original>
// kernel: tpu_custom_call.1
$region0: #{tpu_custom_call.1}
  #allocation0 [shape = 'u32[]', space=smem, size = 0x4, offset = 0x4, fixed_abs, tag = 'smem constant byte address 0x4 - core index']
  #allocation1 [shape = 'u32[144,128]{1,0:T(1,128)}', space=vmem, size = 0x12000, scoped, tag = 'internal scratch']
  #allocation2 [shape = 'f32[10,2,128]{2,1,0:T(2,128)}', space=vmem, size = 0x2800, scoped, tag = 'scratch operand']
  #allocation10 [shape = 's32[]', space=sflag, size = 0x4, offset = 0, fixed_abs, tag = 'sflag constant byte address 0x0 - dummy sync flag']
  #allocation12 [shape = 's32[]', space=sflag, size = 0x4, offset = 0, fixed_abs, tag = 'sflag constant byte address 0x0 - dummy sync flag']
  %s0 = inlined_call_operand.hbm [shape: f32[2,1536,128], index: 0, kind: input, shape index: {}]
  %s1 = inlined_call_operand.hbm [shape: bf16[10,1536,128], index: 1, kind: input, shape index: {}]
  %s2 = inlined_call_operand.hbm [shape: f32[1,10], index: 2, kind: input, shape index: {}]
  %s3 = inlined_call_operand.hbm [shape: f32[2,10], index: 3, kind: output, shape index: {}]
  %s4 = sld [smem:[#allocation0]]
  $region65: #{tpu_custom_call.1} parent=0
    _
  %s6 = ssub.s32 1, %s4
  %s7 = scalar_select 0, %s6, %s4
  $region1: #{tpu_custom_call.1} parent=0
    #allocation3 [shape = 'u8[1572864]{0}', space=vmem, size = 0x180000, scoped, tag = 'input window, operand 0']
    #allocation4 [shape = 's32[2]{0}', space=sflag, size = 0x8, scoped, tag = 'scoped memory for tpu_custom_call.1']
    #allocation5 [shape = 's32[2]{0}', space=sflag, size = 0x8, scoped, tag = 'scoped memory for tpu_custom_call.1']
    #allocation6 [shape = 'u8[3932160]{0}', space=vmem, size = 0x3c0000, scoped, tag = 'input window, operand 1']
    #allocation7 [shape = 's32[2]{0}', space=sflag, size = 0x8, scoped, tag = 'scoped memory for tpu_custom_call.1']
    #allocation8 [shape = 'u8[512]{0}', space=vmem, size = 0x400, scoped, tag = 'input window, operand 2, single buffered']
    #allocation9 [shape = 'u8[1024]{0}', space=vmem, size = 0x400, scoped, tag = 'output window, operand 0, single buffered']
    %8 = vsyncpa [#allocation4], 0
    %s9 = scalar_lea.sflag [#allocation4], 1
    %10 = vsyncpa %s9, 0
    %11 = vsyncpa [#allocation7], 0
    %s12 = scalar_lea.sflag [#allocation7], 1
    %13 = vsyncpa %s12, 0
    %14 = vsyncpa [#allocation5], 0
    loop: start=0, step=1, limit=4
    $region2: #{tpu_custom_call.1} parent=1 // loop_pre_header
      _
    $region3: #{tpu_custom_call.1} parent=1 // loop_header
      %s16 = sphi 0, %s20
      %p17 = scmp.ge.s32.totalorder %s16, 4
      %s23 = sphi 0, %s35
      %s24 = sphi 0, %s31
      %s25 = sphi 0, %s23
      %s26 = sphi 0, %s24
      %s27 = sphi 0, %s25
      %s28 = sphi 0, %s26
      %s42 = sphi 0, %s44
      %s45 = sphi 0, %s42
      %s46 = sphi 0, %s45
      %s62 = sphi 0, %s46
      %s72 = sphi 0, %s74
      %s75 = sphi 0, %s72
      %s76 = sphi 0, %s75
      %s92 = sphi 0, %s76
      %s96 = sphi 0, %s96
      %s98 = sphi 0, %s96
      %s99 = sphi 0, %s98
      %s113 = sphi 0, %s99
      %s117 = sphi 0, %s117
      %s119 = sphi 0, %s117
      %s120 = sphi 0, %s119
      %s134 = sphi 0, %s120
    $region4: #{tpu_custom_call.1} parent=1 // loop_header_branch
      %19 = sbr.rel (%p17) target = $region8
    $region5: #{tpu_custom_call.1} parent=1 // loop_body
      %s21 = ssub.s32 %s16, 1
      %s22 = ssub.s32 %s16, 2
      %s29 = sadd.s32 1, %s24
      %p30 = scmp.ge.s32.totalorder %s29, 2
      %s31 = scalar_select %p30, 0, %s29
      %s32 = sadd.s32 1, %s23
      %s33 = scalar_select %p30, %s32, %s23
      %p34 = scmp.ge.s32.totalorder %s33, 1
      %s35 = scalar_select %p34, 0, %s33
      %s36 = smul.u32 %s23, 2
      %s37 = sadd.s32 %s36, %s24
      %s38 = smul.u32 %s35, 2
      %s39 = sadd.s32 %s38, %s31
      %s40 = ssub.s32 %s37, %s39
      %p41 = scmp.eq.s32.totalorder %s40, 0
      %s43 = sadd.s32 %s42, 1
      %s44 = scalar_select %p41, %s42, %s43
      %p47 = pneg %p41
      %p48 = scmp.eq.s32.totalorder %s16, 1
      %p49 = por %p47, %p48
      %p50 = scmp.ne.s32.totalorder %s42, %s45
      %p51 = scmp.eq.s32.totalorder %s16, 0
      %p52 = por %p50, %p51
      %p53 = scmp.ne.s32.totalorder %s42, %s45
      %p54 = scmp.eq.s32.totalorder %s21, 1
      %p55 = por %p53, %p54
      %p56 = scmp.ne.s32.totalorder %s45, %s46
      %p57 = scmp.eq.s32.totalorder %s21, 0
      %p58 = por %p56, %p57
      %p59 = scmp.ne.s32.totalorder %s45, %s46
      %p60 = scmp.eq.s32.totalorder %s22, 1
      %p61 = por %p59, %p60
      %p63 = scmp.ne.s32.totalorder %s46, %s62
      %p64 = scmp.eq.s32.totalorder %s22, 0
      %p65 = por %p63, %p64
      %s66 = smul.u32 %s23, 2
      %s67 = sadd.s32 %s66, %s24
      %s68 = smul.u32 %s35, 2
      %s69 = sadd.s32 %s68, %s31
      %s70 = ssub.s32 %s67, %s69
      %p71 = scmp.eq.s32.totalorder %s70, 0
      %s73 = sadd.s32 %s72, 1
      %s74 = scalar_select %p71, %s72, %s73
      %p77 = pneg %p71
      %p78 = scmp.eq.s32.totalorder %s16, 1
      %p79 = por %p77, %p78
      %p80 = scmp.ne.s32.totalorder %s72, %s75
      %p81 = scmp.eq.s32.totalorder %s16, 0
      %p82 = por %p80, %p81
      %p83 = scmp.ne.s32.totalorder %s72, %s75
      %p84 = scmp.eq.s32.totalorder %s21, 1
      %p85 = por %p83, %p84
      %p86 = scmp.ne.s32.totalorder %s75, %s76
      %p87 = scmp.eq.s32.totalorder %s21, 0
      %p88 = por %p86, %p87
      %p89 = scmp.ne.s32.totalorder %s75, %s76
      %p90 = scmp.eq.s32.totalorder %s22, 1
      %p91 = por %p89, %p90
      %p93 = scmp.ne.s32.totalorder %s76, %s92
      %p94 = scmp.eq.s32.totalorder %s22, 0
      %p95 = por %p93, %p94
      %s97 = sadd.s32 %s96, 1
      %p100 = scmp.eq.s32.totalorder %s16, 1
      %p101 = scmp.ne.s32.totalorder %s96, %s98
      %p102 = scmp.eq.s32.totalorder %s16, 0
      %p103 = por %p101, %p102
      %p104 = scmp.ne.s32.totalorder %s96, %s98
      %p105 = scmp.eq.s32.totalorder %s21, 1
      %p106 = por %p104, %p105
      %p107 = scmp.ne.s32.totalorder %s98, %s99
      %p108 = scmp.eq.s32.totalorder %s21, 0
      %p109 = por %p107, %p108
      %p110 = scmp.ne.s32.totalorder %s98, %s99
      %p111 = scmp.eq.s32.totalorder %s22, 1
      %p112 = por %p110, %p111
      %p114 = scmp.ne.s32.totalorder %s99, %s113
      %p115 = scmp.eq.s32.totalorder %s22, 0
      %p116 = por %p114, %p115
      %s118 = sadd.s32 %s117, 1
      %p121 = scmp.eq.s32.totalorder %s16, 1
      %p122 = scmp.ne.s32.totalorder %s117, %s119
      %p123 = scmp.eq.s32.totalorder %s16, 0
      %p124 = por %p122, %p123
      %p125 = scmp.ne.s32.totalorder %s117, %s119
      %p126 = scmp.eq.s32.totalorder %s21, 1
      %p127 = por %p125, %p126
      %p128 = scmp.ne.s32.totalorder %s119, %s120
      %p129 = scmp.eq.s32.totalorder %s21, 0
      %p130 = por %p128, %p129
      %p131 = scmp.ne.s32.totalorder %s119, %s120
      %p132 = scmp.eq.s32.totalorder %s22, 1
      %p133 = por %p131, %p132
      %p135 = scmp.ne.s32.totalorder %s120, %s134
      %p136 = scmp.eq.s32.totalorder %s22, 0
      %p137 = por %p135, %p136
      %p138 = scmp.le.s32.totalorder 1, %s16
      %p139 = scmp.lt.s32.totalorder %s16, 3
      %p140 = pnand %p138, %p139
      %p141 = pneg %p140
      // Predicated region
      $region9: #{tpu_custom_call.1} parent=5 // pred_check
        _
      $region10: #{tpu_custom_call.1} parent=5 // pred_check_branch
        %143 = sbr.rel (%p140) target = $region12
      $region11: #{tpu_custom_call.1} parent=5 // pred_region
        %s144 = ssub.s32 %s16, 1
        // Predicated region
        $region13: #{tpu_custom_call.1} parent=11 // pred_check
          %p145 = pneg %p109
        $region14: #{tpu_custom_call.1} parent=11 // pred_check_branch
          %147 = sbr.rel (%p145) target = $region16
        $region15: #{tpu_custom_call.1} parent=11 // pred_region
          %s149 = ssub.s32 16, 16
          %150 = vsyncadd [#allocation7], %s149
          %s152 = sshll.u32 [#allocation8], 4
          %s153 = int_to_ptr.vmem [resolvable:$true] %s152
          %155 = dma.hbm_to_vmem [thread:$0]  %s2, 16, %s153, [#allocation7]
        $region16: #{tpu_custom_call.1} parent=11 // pred_fallthru
          _
      $region12: #{tpu_custom_call.1} parent=5 // pred_fallthru
        _
      %p156 = scmp.lt.s32.totalorder %s16, 2
      // Predicated region
      $region17: #{tpu_custom_call.1} parent=5 // pred_check
        %p157 = pneg %p156
      $region18: #{tpu_custom_call.1} parent=5 // pred_check_branch
        %159 = sbr.rel (%p157) target = $region20
      $region19: #{tpu_custom_call.1} parent=5 // pred_region
        // Predicated region
        $region21: #{tpu_custom_call.1} parent=19 // pred_check
          %p160 = pneg %p52
        $region22: #{tpu_custom_call.1} parent=19 // pred_check_branch
          %162 = sbr.rel (%p160) target = $region24
        $region23: #{tpu_custom_call.1} parent=19 // pred_region
          #allocation11 [shape = 'u32[6]{0}', space=smem, size = 0x18, scoped, tag = 'DMA stride descriptor']
          %s163 = sand.u32 %s42, 1
          %s164 = scalar_lea.sflag [#allocation4], %s163
          %s165 = sand.u32 %s42, 1
          %s166 = smul.addr %s165, 1536
          %s167 = scalar_lea.vmem [#allocation3], %s166
          %s168 = smul.u32 %s23, 2
          %s169 = sadd.s32 %s168, %s24
          %s170 = smul.u32 96, %s169
          %s172 = ssub.s32 24576, 24576
          %173 = vsyncadd %s164, %s172
          %s174 = smul.addr %s170, 128
          %s175 = scalar_lea.hbm %s0, %s174
          %s177 = sshll.u32 1, 14
          %s178 = sxor.u32 4294967295, %s177
          %s180 = sld [smem:[#allocation0]]
          %s181 = sadd.s32 2, %s180
          %s183 = sshll.u32 7, 26
          %s184 = sxor.u32 4294967295, %s183
          %s185 = sand.u32 0, %s184
          %s186 = sshll.u32 %s181, 26
          %s187 = sor.u32 %s185, %s186
          %s188 = sshll.u32 %s167, 4
          %s189 = int_to_ptr.vmem [resolvable:$true] %s188
          %195 = sst [smem:[#allocation11]] 24576
          %s196 = scalar_lea.smem [#allocation11], 1
          %197 = sst [smem:[%s196]] 12288
          %s198 = scalar_lea.smem [#allocation11], 2
          %199 = sst [smem:[%s198]] 96
          %s200 = scalar_lea.smem [#allocation11], 3
          %201 = sst [smem:[%s200]] 128
          %s202 = scalar_lea.smem [#allocation11], 4
          %203 = sst [smem:[%s202]] 128
          %s204 = scalar_lea.smem [#allocation11], 5
          %205 = sst [smem:[%s204]] 8
          %207 = dma.general %s175, 24576, %s189, %s164, [#allocation10], [#allocation11], %s187, 0
        $region24: #{tpu_custom_call.1} parent=19 // pred_fallthru
          _
        // Predicated region
        $region25: #{tpu_custom_call.1} parent=19 // pred_check
          %p208 = pneg %p82
        $region26: #{tpu_custom_call.1} parent=19 // pred_check_branch
          %210 = sbr.rel (%p208) target = $region28
        $region27: #{tpu_custom_call.1} parent=19 // pred_region
          #allocation13 [shape = 'u32[6]{0}', space=smem, size = 0x18, scoped, tag = 'DMA stride descriptor']
          %s211 = sand.u32 %s16, 1
          %s212 = scalar_lea.sflag [#allocation7], %s211
          %s213 = sand.u32 %s72, 1
          %s214 = smul.addr %s213, 3840
          %s215 = scalar_lea.vmem [#allocation6], %s214
          %s216 = smul.u32 %s23, 2
          %s217 = sadd.s32 %s216, %s24
          %s218 = smul.u32 96, %s217
          %s220 = ssub.s32 61440, 61440
          %221 = vsyncadd %s212, %s220
          %s222 = smul.addr %s218, 64
          %s223 = scalar_lea.hbm %s1, %s222
          %s225 = sshll.u32 1, 14
          %s226 = sxor.u32 4294967295, %s225
          %s228 = sld [smem:[#allocation0]]
          %s229 = sadd.s32 2, %s228
          %s231 = sshll.u32 7, 26
          %s232 = sxor.u32 4294967295, %s231
          %s233 = sand.u32 0, %s232
          %s234 = sshll.u32 %s229, 26
          %s235 = sor.u32 %s233, %s234
          %s236 = sshll.u32 %s215, 4
          %s237 = int_to_ptr.vmem [resolvable:$true] %s236
          %243 = sst [smem:[#allocation13]] 12288
          %s244 = scalar_lea.smem [#allocation13], 1
          %245 = sst [smem:[%s244]] 6144
          %s246 = scalar_lea.smem [#allocation13], 2
          %247 = sst [smem:[%s246]] 96
          %s248 = scalar_lea.smem [#allocation13], 3
          %249 = sst [smem:[%s248]] 64
          %s250 = scalar_lea.smem [#allocation13], 4
          %251 = sst [smem:[%s250]] 64
          %s252 = scalar_lea.smem [#allocation13], 5
          %253 = sst [smem:[%s252]] 4
          %255 = dma.general %s223, 61440, %s237, %s212, [#allocation12], [#allocation13], %s235, 0
        $region28: #{tpu_custom_call.1} parent=19 // pred_fallthru
          _
      $region20: #{tpu_custom_call.1} parent=5 // pred_fallthru
        _
      %p256 = scmp.le.s32.totalorder 1, %s16
      %p257 = scmp.lt.s32.totalorder %s16, 3
      %p258 = pnand %p256, %p257
      %p259 = pneg %p258
      // Predicated region
      $region29: #{tpu_custom_call.1} parent=5 // pred_check
        _
      $region30: #{tpu_custom_call.1} parent=5 // pred_check_branch
        %261 = sbr.rel (%p258) target = $region32
      $region31: #{tpu_custom_call.1} parent=5 // pred_region
        %s262 = ssub.s32 %s16, 1
        %s263 = sand.u32 %s45, 1
        %s264 = scalar_lea.sflag [#allocation4], %s263
        %s265 = sand.u32 %s45, 1
        %s266 = smul.addr %s265, 1536
        %s267 = scalar_lea.vmem [#allocation3], %s266
        // Predicated region
        $region33: #{tpu_custom_call.1} parent=31 // pred_check
          %p268 = pneg %p58
        $region34: #{tpu_custom_call.1} parent=31 // pred_check_branch
          %270 = sbr.rel (%p268) target = $region36
        $region35: #{tpu_custom_call.1} parent=31 // pred_region
          %271 = dma.done %s264, 24576
        $region36: #{tpu_custom_call.1} parent=31 // pred_fallthru
          _
        %s272 = sand.u32 %s21, 1
        %s273 = scalar_lea.sflag [#allocation7], %s272
        %s274 = sand.u32 %s75, 1
        %s275 = smul.addr %s274, 3840
        %s276 = scalar_lea.vmem [#allocation6], %s275
        // Predicated region
        $region37: #{tpu_custom_call.1} parent=31 // pred_check
          %p277 = pneg %p88
        $region38: #{tpu_custom_call.1} parent=31 // pred_check_branch
          %279 = sbr.rel (%p277) target = $region40
        $region39: #{tpu_custom_call.1} parent=31 // pred_region
          %280 = dma.done %s273, 61440
        $region40: #{tpu_custom_call.1} parent=31 // pred_fallthru
          _
        // Predicated region
        $region41: #{tpu_custom_call.1} parent=31 // pred_check
          %p281 = pneg %p109
        $region42: #{tpu_custom_call.1} parent=31 // pred_check_branch
          %283 = sbr.rel (%p281) target = $region44
        $region43: #{tpu_custom_call.1} parent=31 // pred_region
          %284 = dma.done [#allocation7], 16
        $region44: #{tpu_custom_call.1} parent=31 // pred_fallthru
          _
        %s285 = sand.u32 %s45, 1
        %s286 = scalar_lea.sflag [#allocation4], %s285
        %s287 = sand.u32 %s45, 1
        %s288 = smul.addr %s287, 1536
        %s289 = scalar_lea.vmem [#allocation3], %s288
        %p290 = pneg %p58
        %p291 = pneg %p55
        %s292 = sand.u32 %s21, 1
        %s293 = scalar_lea.sflag [#allocation7], %s292
        %s294 = sand.u32 %s75, 1
        %s295 = smul.addr %s294, 3840
        %s296 = scalar_lea.vmem [#allocation6], %s295
        %p297 = pneg %p88
        %p298 = pneg %p85
        %p299 = pneg %p109
        %p300 = pneg %p106
        %p301 = pneg %p130
        %p302 = pneg %p127
        %s303 = smul.u32 %s25, 2
        %s304 = sadd.s32 %s303, %s26
        %s305 = smul.u32 96, %s304
        %s306 = smul.u32 %s25, 2
        %s307 = sadd.s32 %s306, %s26
        %s308 = smul.u32 96, %s307
        %p309 = scmp.eq.s32.totalorder %s26, 0
        // Predicated region
        $region45: #{tpu_custom_call.1} parent=31 // pred_check
          %p310 = pneg %p309
        $region46: #{tpu_custom_call.1} parent=31 // pred_check_branch
          %312 = sbr.rel (%p310) target = $region48
        $region47: #{tpu_custom_call.1} parent=31 // pred_region
          %313 = vst [vmem:[#allocation2] sm:$0x3] 0.0
          %314 = vst [vmem:[#allocation2 + $0x2] sm:$0x3] 0.0
          %315 = vst [vmem:[#allocation2 + $0x4] sm:$0x3] 0.0
          %316 = vst [vmem:[#allocation2 + $0x6] sm:$0x3] 0.0
          %317 = vst [vmem:[#allocation2 + $0x8] sm:$0x3] 0.0
          %318 = vst [vmem:[#allocation2 + $0xa] sm:$0x3] 0.0
          %319 = vst [vmem:[#allocation2 + $0xc] sm:$0x3] 0.0
          %320 = vst [vmem:[#allocation2 + $0xe] sm:$0x3] 0.0
          %321 = vst [vmem:[#allocation2 + $0x10] sm:$0x3] 0.0
          %322 = vst [vmem:[#allocation2 + $0x12] sm:$0x3] 0.0
        $region48: #{tpu_custom_call.1} parent=31 // pred_fallthru
          _
        %v323 = vld [vmem:[%s267] sm:$0xff]
        %v324 = vld [vmem:[%s267 + $0x8] sm:$0xff]
        %v325 = vld [vmem:[%s267 + $0x10] sm:$0xff]
        %v326 = vld [vmem:[%s267 + $0x18] sm:$0xff]
        %v327 = vld [vmem:[%s267 + $0x20] sm:$0xff]
        %v328 = vld [vmem:[%s267 + $0x28] sm:$0xff]
        %v329 = vld [vmem:[%s267 + $0x30] sm:$0xff]
        %v330 = vld [vmem:[%s267 + $0x38] sm:$0xff]
        %v331 = vld [vmem:[%s267 + $0x40] sm:$0xff]
        %v332 = vld [vmem:[%s267 + $0x48] sm:$0xff]
        %v333 = vld [vmem:[%s267 + $0x50] sm:$0xff]
        %v334 = vld [vmem:[%s267 + $0x58] sm:$0xff]
        %v335 = vld [vmem:[%s267 + $0x60] sm:$0xff]
        %v336 = vld [vmem:[%s267 + $0x68] sm:$0xff]
        %v337 = vld [vmem:[%s267 + $0x70] sm:$0xff]
        %v338 = vld [vmem:[%s267 + $0x78] sm:$0xff]
        %v339 = vld [vmem:[%s267 + $0x80] sm:$0xff]
        %v340 = vld [vmem:[%s267 + $0x88] sm:$0xff]
        %v341 = vld [vmem:[%s267 + $0x90] sm:$0xff]
        %v342 = vld [vmem:[%s267 + $0x98] sm:$0xff]
        %v343 = vld [vmem:[%s267 + $0xa0] sm:$0xff]
        %v344 = vld [vmem:[%s267 + $0xa8] sm:$0xff]
        %v345 = vld [vmem:[%s267 + $0xb0] sm:$0xff]
        %v346 = vld [vmem:[%s267 + $0xb8] sm:$0xff]
        %v347 = vld [vmem:[%s267 + $0xc0] sm:$0xff]
        %v348 = vld [vmem:[%s267 + $0xc8] sm:$0xff]
        %v349 = vld [vmem:[%s267 + $0xd0] sm:$0xff]
        %v350 = vld [vmem:[%s267 + $0xd8] sm:$0xff]
        %v351 = vld [vmem:[%s267 + $0xe0] sm:$0xff]
        %v352 = vld [vmem:[%s267 + $0xe8] sm:$0xff]
        %v353 = vld [vmem:[%s267 + $0xf0] sm:$0xff]
        %v354 = vld [vmem:[%s267 + $0xf8] sm:$0xff]
        %v355 = vld [vmem:[%s267 + $0x100] sm:$0xff]
        %v356 = vld [vmem:[%s267 + $0x108] sm:$0xff]
        %v357 = vld [vmem:[%s267 + $0x110] sm:$0xff]
        %v358 = vld [vmem:[%s267 + $0x118] sm:$0xff]
        %v359 = vld [vmem:[%s267 + $0x120] sm:$0xff]
        %v360 = vld [vmem:[%s267 + $0x128] sm:$0xff]
        %v361 = vld [vmem:[%s267 + $0x130] sm:$0xff]
        %v362 = vld [vmem:[%s267 + $0x138] sm:$0xff]
        %v363 = vld [vmem:[%s267 + $0x140] sm:$0xff]
        %v364 = vld [vmem:[%s267 + $0x148] sm:$0xff]
        %v365 = vld [vmem:[%s267 + $0x150] sm:$0xff]
        %v366 = vld [vmem:[%s267 + $0x158] sm:$0xff]
        %v367 = vld [vmem:[%s267 + $0x160] sm:$0xff]
        %v368 = vld [vmem:[%s267 + $0x168] sm:$0xff]
        %v369 = vld [vmem:[%s267 + $0x170] sm:$0xff]
        %v370 = vld [vmem:[%s267 + $0x178] sm:$0xff]
        %v371 = vld [vmem:[%s267 + $0x180] sm:$0xff]
        %v372 = vld [vmem:[%s267 + $0x188] sm:$0xff]
        %v373 = vld [vmem:[%s267 + $0x190] sm:$0xff]
        %v374 = vld [vmem:[%s267 + $0x198] sm:$0xff]
        %v375 = vld [vmem:[%s267 + $0x1a0] sm:$0xff]
        %v376 = vld [vmem:[%s267 + $0x1a8] sm:$0xff]
        %v377 = vld [vmem:[%s267 + $0x1b0] sm:$0xff]
        %v378 = vld [vmem:[%s267 + $0x1b8] sm:$0xff]
        %v379 = vld [vmem:[%s267 + $0x1c0] sm:$0xff]
        %v380 = vld [vmem:[%s267 + $0x1c8] sm:$0xff]
        %v381 = vld [vmem:[%s267 + $0x1d0] sm:$0xff]
        %v382 = vld [vmem:[%s267 + $0x1d8] sm:$0xff]
        %v383 = vld [vmem:[%s267 + $0x1e0] sm:$0xff]
        %v384 = vld [vmem:[%s267 + $0x1e8] sm:$0xff]
        %v385 = vld [vmem:[%s267 + $0x1f0] sm:$0xff]
        %v386 = vld [vmem:[%s267 + $0x1f8] sm:$0xff]
        %v387 = vld [vmem:[%s267 + $0x200] sm:$0xff]
        %v388 = vld [vmem:[%s267 + $0x208] sm:$0xff]
        %v389 = vld [vmem:[%s267 + $0x210] sm:$0xff]
        %v390 = vld [vmem:[%s267 + $0x218] sm:$0xff]
        %v391 = vld [vmem:[%s267 + $0x220] sm:$0xff]
        %v392 = vld [vmem:[%s267 + $0x228] sm:$0xff]
        %v393 = vld [vmem:[%s267 + $0x230] sm:$0xff]
        %v394 = vld [vmem:[%s267 + $0x238] sm:$0xff]
        %v395 = vld [vmem:[%s267 + $0x240] sm:$0xff]
        %v396 = vld [vmem:[%s267 + $0x248] sm:$0xff]
        %v397 = vld [vmem:[%s267 + $0x250] sm:$0xff]
        %v398 = vld [vmem:[%s267 + $0x258] sm:$0xff]
        %v399 = vld [vmem:[%s267 + $0x260] sm:$0xff]
        %v400 = vld [vmem:[%s267 + $0x268] sm:$0xff]
        %v401 = vld [vmem:[%s267 + $0x270] sm:$0xff]
        %v402 = vld [vmem:[%s267 + $0x278] sm:$0xff]
        %v403 = vld [vmem:[%s267 + $0x280] sm:$0xff]
        %v404 = vld [vmem:[%s267 + $0x288] sm:$0xff]
        %v405 = vld [vmem:[%s267 + $0x290] sm:$0xff]
        %v406 = vld [vmem:[%s267 + $0x298] sm:$0xff]
        %v407 = vld [vmem:[%s267 + $0x2a0] sm:$0xff]
        %v408 = vld [vmem:[%s267 + $0x2a8] sm:$0xff]
        %v409 = vld [vmem:[%s267 + $0x2b0] sm:$0xff]
        %v410 = vld [vmem:[%s267 + $0x2b8] sm:$0xff]
        %v411 = vld [vmem:[%s267 + $0x2c0] sm:$0xff]
        %v412 = vld [vmem:[%s267 + $0x2c8] sm:$0xff]
        %v413 = vld [vmem:[%s267 + $0x2d0] sm:$0xff]
        %v414 = vld [vmem:[%s267 + $0x2d8] sm:$0xff]
        %v415 = vld [vmem:[%s267 + $0x2e0] sm:$0xff]
        %v416 = vld [vmem:[%s267 + $0x2e8] sm:$0xff]
        %v417 = vld [vmem:[%s267 + $0x2f0] sm:$0xff]
        %v418 = vld [vmem:[%s267 + $0x2f8] sm:$0xff]
        %v419 = vld [vmem:[%s267 + $0x300] sm:$0xff]
        %v420 = vld [vmem:[%s267 + $0x308] sm:$0xff]
        %v421 = vld [vmem:[%s267 + $0x310] sm:$0xff]
        %v422 = vld [vmem:[%s267 + $0x318] sm:$0xff]
        %v423 = vld [vmem:[%s267 + $0x320] sm:$0xff]
        %v424 = vld [vmem:[%s267 + $0x328] sm:$0xff]
        %v425 = vld [vmem:[%s267 + $0x330] sm:$0xff]
        %v426 = vld [vmem:[%s267 + $0x338] sm:$0xff]
        %v427 = vld [vmem:[%s267 + $0x340] sm:$0xff]
        %v428 = vld [vmem:[%s267 + $0x348] sm:$0xff]
        %v429 = vld [vmem:[%s267 + $0x350] sm:$0xff]
        %v430 = vld [vmem:[%s267 + $0x358] sm:$0xff]
        %v431 = vld [vmem:[%s267 + $0x360] sm:$0xff]
        %v432 = vld [vmem:[%s267 + $0x368] sm:$0xff]
        %v433 = vld [vmem:[%s267 + $0x370] sm:$0xff]
        %v434 = vld [vmem:[%s267 + $0x378] sm:$0xff]
        %v435 = vld [vmem:[%s267 + $0x380] sm:$0xff]
        %v436 = vld [vmem:[%s267 + $0x388] sm:$0xff]
        %v437 = vld [vmem:[%s267 + $0x390] sm:$0xff]
        %v438 = vld [vmem:[%s267 + $0x398] sm:$0xff]
        %v439 = vld [vmem:[%s267 + $0x3a0] sm:$0xff]
        %v440 = vld [vmem:[%s267 + $0x3a8] sm:$0xff]
        %v441 = vld [vmem:[%s267 + $0x3b0] sm:$0xff]
        %v442 = vld [vmem:[%s267 + $0x3b8] sm:$0xff]
        %v443 = vld [vmem:[%s267 + $0x3c0] sm:$0xff]
        %v444 = vld [vmem:[%s267 + $0x3c8] sm:$0xff]
        %v445 = vld [vmem:[%s267 + $0x3d0] sm:$0xff]
        %v446 = vld [vmem:[%s267 + $0x3d8] sm:$0xff]
        %v447 = vld [vmem:[%s267 + $0x3e0] sm:$0xff]
        %v448 = vld [vmem:[%s267 + $0x3e8] sm:$0xff]
        %v449 = vld [vmem:[%s267 + $0x3f0] sm:$0xff]
        %v450 = vld [vmem:[%s267 + $0x3f8] sm:$0xff]
        %v451 = vld [vmem:[%s267 + $0x400] sm:$0xff]
        %v452 = vld [vmem:[%s267 + $0x408] sm:$0xff]
        %v453 = vld [vmem:[%s267 + $0x410] sm:$0xff]
        %v454 = vld [vmem:[%s267 + $0x418] sm:$0xff]
        %v455 = vld [vmem:[%s267 + $0x420] sm:$0xff]
        %v456 = vld [vmem:[%s267 + $0x428] sm:$0xff]
        %v457 = vld [vmem:[%s267 + $0x430] sm:$0xff]
        %v458 = vld [vmem:[%s267 + $0x438] sm:$0xff]
        %v459 = vld [vmem:[%s267 + $0x440] sm:$0xff]
        %v460 = vld [vmem:[%s267 + $0x448] sm:$0xff]
        %v461 = vld [vmem:[%s267 + $0x450] sm:$0xff]
        %v462 = vld [vmem:[%s267 + $0x458] sm:$0xff]
        %v463 = vld [vmem:[%s267 + $0x460] sm:$0xff]
        %v464 = vld [vmem:[%s267 + $0x468] sm:$0xff]
        %v465 = vld [vmem:[%s267 + $0x470] sm:$0xff]
        %v466 = vld [vmem:[%s267 + $0x478] sm:$0xff]
        %v467 = vld [vmem:[%s267 + $0x480] sm:$0xff]
        %v468 = vld [vmem:[%s267 + $0x488] sm:$0xff]
        %v469 = vld [vmem:[%s267 + $0x490] sm:$0xff]
        %v470 = vld [vmem:[%s267 + $0x498] sm:$0xff]
        %v471 = vld [vmem:[%s267 + $0x4a0] sm:$0xff]
        %v472 = vld [vmem:[%s267 + $0x4a8] sm:$0xff]
        %v473 = vld [vmem:[%s267 + $0x4b0] sm:$0xff]
        %v474 = vld [vmem:[%s267 + $0x4b8] sm:$0xff]
        %v475 = vld [vmem:[%s267 + $0x4c0] sm:$0xff]
        %v476 = vld [vmem:[%s267 + $0x4c8] sm:$0xff]
        %v477 = vld [vmem:[%s267 + $0x4d0] sm:$0xff]
        %v478 = vld [vmem:[%s267 + $0x4d8] sm:$0xff]
        %v479 = vld [vmem:[%s267 + $0x4e0] sm:$0xff]
        %v480 = vld [vmem:[%s267 + $0x4e8] sm:$0xff]
        %v481 = vld [vmem:[%s267 + $0x4f0] sm:$0xff]
        %v482 = vld [vmem:[%s267 + $0x4f8] sm:$0xff]
        %v483 = vld [vmem:[%s267 + $0x500] sm:$0xff]
        %v484 = vld [vmem:[%s267 + $0x508] sm:$0xff]
        %v485 = vld [vmem:[%s267 + $0x510] sm:$0xff]
        %v486 = vld [vmem:[%s267 + $0x518] sm:$0xff]
        %v487 = vld [vmem:[%s267 + $0x520] sm:$0xff]
        %v488 = vld [vmem:[%s267 + $0x528] sm:$0xff]
        %v489 = vld [vmem:[%s267 + $0x530] sm:$0xff]
        %v490 = vld [vmem:[%s267 + $0x538] sm:$0xff]
        %v491 = vld [vmem:[%s267 + $0x540] sm:$0xff]
        %v492 = vld [vmem:[%s267 + $0x548] sm:$0xff]
        %v493 = vld [vmem:[%s267 + $0x550] sm:$0xff]
        %v494 = vld [vmem:[%s267 + $0x558] sm:$0xff]
        %v495 = vld [vmem:[%s267 + $0x560] sm:$0xff]
        %v496 = vld [vmem:[%s267 + $0x568] sm:$0xff]
        %v497 = vld [vmem:[%s267 + $0x570] sm:$0xff]
        %v498 = vld [vmem:[%s267 + $0x578] sm:$0xff]
        %v499 = vld [vmem:[%s267 + $0x580] sm:$0xff]
        %v500 = vld [vmem:[%s267 + $0x588] sm:$0xff]
        %v501 = vld [vmem:[%s267 + $0x590] sm:$0xff]
        %v502 = vld [vmem:[%s267 + $0x598] sm:$0xff]
        %v503 = vld [vmem:[%s267 + $0x5a0] sm:$0xff]
        %v504 = vld [vmem:[%s267 + $0x5a8] sm:$0xff]
        %v505 = vld [vmem:[%s267 + $0x5b0] sm:$0xff]
        %v506 = vld [vmem:[%s267 + $0x5b8] sm:$0xff]
        %v507 = vld [vmem:[%s267 + $0x5c0] sm:$0xff]
        %v508 = vld [vmem:[%s267 + $0x5c8] sm:$0xff]
        %v509 = vld [vmem:[%s267 + $0x5d0] sm:$0xff]
        %v510 = vld [vmem:[%s267 + $0x5d8] sm:$0xff]
        %v511 = vld [vmem:[%s267 + $0x5e0] sm:$0xff]
        %v512 = vld [vmem:[%s267 + $0x5e8] sm:$0xff]
        %v513 = vld [vmem:[%s267 + $0x5f0] sm:$0xff]
        %v514 = vld [vmem:[%s267 + $0x5f8] sm:$0xff]
        %v515 = vld [vmem:[%s276] sm:$0xf]
        %v516 = vld [vmem:[%s276 + $0x4] sm:$0xf]
        %v517 = vld [vmem:[%s276 + $0x8] sm:$0xf]
        %v518 = vld [vmem:[%s276 + $0xc] sm:$0xf]
        %v519 = vld [vmem:[%s276 + $0x10] sm:$0xf]
        %v520 = vld [vmem:[%s276 + $0x14] sm:$0xf]
        %v521 = vld [vmem:[%s276 + $0x18] sm:$0xf]
        %v522 = vld [vmem:[%s276 + $0x1c] sm:$0xf]
        %v523 = vld [vmem:[%s276 + $0x20] sm:$0xf]
        %v524 = vld [vmem:[%s276 + $0x24] sm:$0xf]
        %v525 = vld [vmem:[%s276 + $0x28] sm:$0xf]
        %v526 = vld [vmem:[%s276 + $0x2c] sm:$0xf]
        %v527 = vld [vmem:[%s276 + $0x30] sm:$0xf]
        %v528 = vld [vmem:[%s276 + $0x34] sm:$0xf]
        %v529 = vld [vmem:[%s276 + $0x38] sm:$0xf]
        %v530 = vld [vmem:[%s276 + $0x3c] sm:$0xf]
        %v531 = vld [vmem:[%s276 + $0x40] sm:$0xf]
        %v532 = vld [vmem:[%s276 + $0x44] sm:$0xf]
        %v533 = vld [vmem:[%s276 + $0x48] sm:$0xf]
        %v534 = vld [vmem:[%s276 + $0x4c] sm:$0xf]
        %v535 = vld [vmem:[%s276 + $0x50] sm:$0xf]
        %v536 = vld [vmem:[%s276 + $0x54] sm:$0xf]
        %v537 = vld [vmem:[%s276 + $0x58] sm:$0xf]
        %v538 = vld [vmem:[%s276 + $0x5c] sm:$0xf]
        %v539 = vld [vmem:[%s276 + $0x60] sm:$0xf]
        %v540 = vld [vmem:[%s276 + $0x64] sm:$0xf]
        %v541 = vld [vmem:[%s276 + $0x68] sm:$0xf]
        %v542 = vld [vmem:[%s276 + $0x6c] sm:$0xf]
        %v543 = vld [vmem:[%s276 + $0x70] sm:$0xf]
        %v544 = vld [vmem:[%s276 + $0x74] sm:$0xf]
        %v545 = vld [vmem:[%s276 + $0x78] sm:$0xf]
        %v546 = vld [vmem:[%s276 + $0x7c] sm:$0xf]
        %v547 = vld [vmem:[%s276 + $0x80] sm:$0xf]
        %v548 = vld [vmem:[%s276 + $0x84] sm:$0xf]
        %v549 = vld [vmem:[%s276 + $0x88] sm:$0xf]
        %v550 = vld [vmem:[%s276 + $0x8c] sm:$0xf]
        %v551 = vld [vmem:[%s276 + $0x90] sm:$0xf]
        %v552 = vld [vmem:[%s276 + $0x94] sm:$0xf]
        %v553 = vld [vmem:[%s276 + $0x98] sm:$0xf]
        %v554 = vld [vmem:[%s276 + $0x9c] sm:$0xf]
        %v555 = vld [vmem:[%s276 + $0xa0] sm:$0xf]
        %v556 = vld [vmem:[%s276 + $0xa4] sm:$0xf]
        %v557 = vld [vmem:[%s276 + $0xa8] sm:$0xf]
        %v558 = vld [vmem:[%s276 + $0xac] sm:$0xf]
        %v559 = vld [vmem:[%s276 + $0xb0] sm:$0xf]
        %v560 = vld [vmem:[%s276 + $0xb4] sm:$0xf]
        %v561 = vld [vmem:[%s276 + $0xb8] sm:$0xf]
        %v562 = vld [vmem:[%s276 + $0xbc] sm:$0xf]
        %v563 = vld [vmem:[%s276 + $0xc0] sm:$0xf]
        %v564 = vld [vmem:[%s276 + $0xc4] sm:$0xf]
        %v565 = vld [vmem:[%s276 + $0xc8] sm:$0xf]
        %v566 = vld [vmem:[%s276 + $0xcc] sm:$0xf]
        %v567 = vld [vmem:[%s276 + $0xd0] sm:$0xf]
        %v568 = vld [vmem:[%s276 + $0xd4] sm:$0xf]
        %v569 = vld [vmem:[%s276 + $0xd8] sm:$0xf]
        %v570 = vld [vmem:[%s276 + $0xdc] sm:$0xf]
        %v571 = vld [vmem:[%s276 + $0xe0] sm:$0xf]
        %v572 = vld [vmem:[%s276 + $0xe4] sm:$0xf]
        %v573 = vld [vmem:[%s276 + $0xe8] sm:$0xf]
        %v574 = vld [vmem:[%s276 + $0xec] sm:$0xf]
        %v575 = vld [vmem:[%s276 + $0xf0] sm:$0xf]
        %v576 = vld [vmem:[%s276 + $0xf4] sm:$0xf]
        %v577 = vld [vmem:[%s276 + $0xf8] sm:$0xf]
        %v578 = vld [vmem:[%s276 + $0xfc] sm:$0xf]
        %v579 = vld [vmem:[%s276 + $0x100] sm:$0xf]
        %v580 = vld [vmem:[%s276 + $0x104] sm:$0xf]
        %v581 = vld [vmem:[%s276 + $0x108] sm:$0xf]
        %v582 = vld [vmem:[%s276 + $0x10c] sm:$0xf]
        %v583 = vld [vmem:[%s276 + $0x110] sm:$0xf]
        %v584 = vld [vmem:[%s276 + $0x114] sm:$0xf]
        %v585 = vld [vmem:[%s276 + $0x118] sm:$0xf]
        %v586 = vld [vmem:[%s276 + $0x11c] sm:$0xf]
        %v587 = vld [vmem:[%s276 + $0x120] sm:$0xf]
        %v588 = vld [vmem:[%s276 + $0x124] sm:$0xf]
        %v589 = vld [vmem:[%s276 + $0x128] sm:$0xf]
        %v590 = vld [vmem:[%s276 + $0x12c] sm:$0xf]
        %v591 = vld [vmem:[%s276 + $0x130] sm:$0xf]
        %v592 = vld [vmem:[%s276 + $0x134] sm:$0xf]
        %v593 = vld [vmem:[%s276 + $0x138] sm:$0xf]
        %v594 = vld [vmem:[%s276 + $0x13c] sm:$0xf]
        %v595 = vld [vmem:[%s276 + $0x140] sm:$0xf]
        %v596 = vld [vmem:[%s276 + $0x144] sm:$0xf]
        %v597 = vld [vmem:[%s276 + $0x148] sm:$0xf]
        %v598 = vld [vmem:[%s276 + $0x14c] sm:$0xf]
        %v599 = vld [vmem:[%s276 + $0x150] sm:$0xf]
        %v600 = vld [vmem:[%s276 + $0x154] sm:$0xf]
        %v601 = vld [vmem:[%s276 + $0x158] sm:$0xf]
        %v602 = vld [vmem:[%s276 + $0x15c] sm:$0xf]
        %v603 = vld [vmem:[%s276 + $0x160] sm:$0xf]
        %v604 = vld [vmem:[%s276 + $0x164] sm:$0xf]
        %v605 = vld [vmem:[%s276 + $0x168] sm:$0xf]
        %v606 = vld [vmem:[%s276 + $0x16c] sm:$0xf]
        %v607 = vld [vmem:[%s276 + $0x170] sm:$0xf]
        %v608 = vld [vmem:[%s276 + $0x174] sm:$0xf]
        %v609 = vld [vmem:[%s276 + $0x178] sm:$0xf]
        %v610 = vld [vmem:[%s276 + $0x17c] sm:$0xf]
        %v611 = vunpack.c.l.bf16 %v515
        %v612 = vunpack.c.l.bf16 %v516
        %v613 = vunpack.c.l.bf16 %v517
        %v614 = vunpack.c.l.bf16 %v518
        %v615 = vunpack.c.l.bf16 %v519
        %v616 = vunpack.c.l.bf16 %v520
        %v617 = vunpack.c.l.bf16 %v521
        %v618 = vunpack.c.l.bf16 %v522
        %v619 = vunpack.c.l.bf16 %v523
        %v620 = vunpack.c.l.bf16 %v524
        %v621 = vunpack.c.l.bf16 %v525
        %v622 = vunpack.c.l.bf16 %v526
        %v623 = vunpack.c.l.bf16 %v527
        %v624 = vunpack.c.l.bf16 %v528
        %v625 = vunpack.c.l.bf16 %v529
        %v626 = vunpack.c.l.bf16 %v530
        %v627 = vunpack.c.l.bf16 %v531
        %v628 = vunpack.c.l.bf16 %v532
        %v629 = vunpack.c.l.bf16 %v533
        %v630 = vunpack.c.l.bf16 %v534
        %v631 = vunpack.c.l.bf16 %v535
        %v632 = vunpack.c.l.bf16 %v536
        %v633 = vunpack.c.l.bf16 %v537
        %v634 = vunpack.c.l.bf16 %v538
        %v635 = vunpack.c.l.bf16 %v539
        %v636 = vunpack.c.l.bf16 %v540
        %v637 = vunpack.c.l.bf16 %v541
        %v638 = vunpack.c.l.bf16 %v542
        %v639 = vunpack.c.l.bf16 %v543
        %v640 = vunpack.c.l.bf16 %v544
        %v641 = vunpack.c.l.bf16 %v545
        %v642 = vunpack.c.l.bf16 %v546
        %v643 = vunpack.c.l.bf16 %v547
        %v644 = vunpack.c.l.bf16 %v548
        %v645 = vunpack.c.l.bf16 %v549
        %v646 = vunpack.c.l.bf16 %v550
        %v647 = vunpack.c.l.bf16 %v551
        %v648 = vunpack.c.l.bf16 %v552
        %v649 = vunpack.c.l.bf16 %v553
        %v650 = vunpack.c.l.bf16 %v554
        %v651 = vunpack.c.l.bf16 %v555
        %v652 = vunpack.c.l.bf16 %v556
        %v653 = vunpack.c.l.bf16 %v557
        %v654 = vunpack.c.l.bf16 %v558
        %v655 = vunpack.c.l.bf16 %v559
        %v656 = vunpack.c.l.bf16 %v560
        %v657 = vunpack.c.l.bf16 %v561
        %v658 = vunpack.c.l.bf16 %v562
        %v659 = vunpack.c.l.bf16 %v563
        %v660 = vunpack.c.l.bf16 %v564
        %v661 = vunpack.c.l.bf16 %v565
        %v662 = vunpack.c.l.bf16 %v566
        %v663 = vunpack.c.l.bf16 %v567
        %v664 = vunpack.c.l.bf16 %v568
        %v665 = vunpack.c.l.bf16 %v569
        %v666 = vunpack.c.l.bf16 %v570
        %v667 = vunpack.c.l.bf16 %v571
        %v668 = vunpack.c.l.bf16 %v572
        %v669 = vunpack.c.l.bf16 %v573
        %v670 = vunpack.c.l.bf16 %v574
        %v671 = vunpack.c.l.bf16 %v575
        %v672 = vunpack.c.l.bf16 %v576
        %v673 = vunpack.c.l.bf16 %v577
        %v674 = vunpack.c.l.bf16 %v578
        %v675 = vunpack.c.l.bf16 %v579
        %v676 = vunpack.c.l.bf16 %v580
        %v677 = vunpack.c.l.bf16 %v581
        %v678 = vunpack.c.l.bf16 %v582
        %v679 = vunpack.c.l.bf16 %v583
        %v680 = vunpack.c.l.bf16 %v584
        %v681 = vunpack.c.l.bf16 %v585
        %v682 = vunpack.c.l.bf16 %v586
        %v683 = vunpack.c.l.bf16 %v587
        %v684 = vunpack.c.l.bf16 %v588
        %v685 = vunpack.c.l.bf16 %v589
        %v686 = vunpack.c.l.bf16 %v590
        %v687 = vunpack.c.l.bf16 %v591
        %v688 = vunpack.c.l.bf16 %v592
        %v689 = vunpack.c.l.bf16 %v593
        %v690 = vunpack.c.l.bf16 %v594
        %v691 = vunpack.c.l.bf16 %v595
        %v692 = vunpack.c.l.bf16 %v596
        %v693 = vunpack.c.l.bf16 %v597
        %v694 = vunpack.c.l.bf16 %v598
        %v695 = vunpack.c.l.bf16 %v599
        %v696 = vunpack.c.l.bf16 %v600
        %v697 = vunpack.c.l.bf16 %v601
        %v698 = vunpack.c.l.bf16 %v602
        %v699 = vunpack.c.l.bf16 %v603
        %v700 = vunpack.c.l.bf16 %v604
        %v701 = vunpack.c.l.bf16 %v605
        %v702 = vunpack.c.l.bf16 %v606
        %v703 = vunpack.c.l.bf16 %v607
        %v704 = vunpack.c.l.bf16 %v608
        %v705 = vunpack.c.l.bf16 %v609
        %v706 = vunpack.c.l.bf16 %v610
        %v707 = vld [vmem:[#allocation2] sm:$0x3]
        %v708 = vmul.f32 %v323, %v611
        %v709 = vmul.f32 %v324, %v612
        %v710 = vmul.f32 %v325, %v613
        %v711 = vmul.f32 %v326, %v614
        %v712 = vmul.f32 %v327, %v615
        %v713 = vmul.f32 %v328, %v616
        %v714 = vmul.f32 %v329, %v617
        %v715 = vmul.f32 %v330, %v618
        %v716 = vmul.f32 %v331, %v619
        %v717 = vmul.f32 %v332, %v620
        %v718 = vmul.f32 %v333, %v621
        %v719 = vmul.f32 %v334, %v622
        %v720 = vmul.f32 %v335, %v623
        %v721 = vmul.f32 %v336, %v624
        %v722 = vmul.f32 %v337, %v625
        %v723 = vmul.f32 %v338, %v626
        %v724 = vmul.f32 %v339, %v627
        %v725 = vmul.f32 %v340, %v628
        %v726 = vmul.f32 %v341, %v629
        %v727 = vmul.f32 %v342, %v630
        %v728 = vmul.f32 %v343, %v631
        %v729 = vmul.f32 %v344, %v632
        %v730 = vmul.f32 %v345, %v633
        %v731 = vmul.f32 %v346, %v634
        %v732 = vmul.f32 %v347, %v635
        %v733 = vmul.f32 %v348, %v636
        %v734 = vmul.f32 %v349, %v637
        %v735 = vmul.f32 %v350, %v638
        %v736 = vmul.f32 %v351, %v639
        %v737 = vmul.f32 %v352, %v640
        %v738 = vmul.f32 %v353, %v641
        %v739 = vmul.f32 %v354, %v642
        %v740 = vmul.f32 %v355, %v643
        %v741 = vmul.f32 %v356, %v644
        %v742 = vmul.f32 %v357, %v645
        %v743 = vmul.f32 %v358, %v646
        %v744 = vmul.f32 %v359, %v647
        %v745 = vmul.f32 %v360, %v648
        %v746 = vmul.f32 %v361, %v649
        %v747 = vmul.f32 %v362, %v650
        %v748 = vmul.f32 %v363, %v651
        %v749 = vmul.f32 %v364, %v652
        %v750 = vmul.f32 %v365, %v653
        %v751 = vmul.f32 %v366, %v654
        %v752 = vmul.f32 %v367, %v655
        %v753 = vmul.f32 %v368, %v656
        %v754 = vmul.f32 %v369, %v657
        %v755 = vmul.f32 %v370, %v658
        %v756 = vmul.f32 %v371, %v659
        %v757 = vmul.f32 %v372, %v660
        %v758 = vmul.f32 %v373, %v661
        %v759 = vmul.f32 %v374, %v662
        %v760 = vmul.f32 %v375, %v663
        %v761 = vmul.f32 %v376, %v664
        %v762 = vmul.f32 %v377, %v665
        %v763 = vmul.f32 %v378, %v666
        %v764 = vmul.f32 %v379, %v667
        %v765 = vmul.f32 %v380, %v668
        %v766 = vmul.f32 %v381, %v669
        %v767 = vmul.f32 %v382, %v670
        %v768 = vmul.f32 %v383, %v671
        %v769 = vmul.f32 %v384, %v672
        %v770 = vmul.f32 %v385, %v673
        %v771 = vmul.f32 %v386, %v674
        %v772 = vmul.f32 %v387, %v675
        %v773 = vmul.f32 %v388, %v676
        %v774 = vmul.f32 %v389, %v677
        %v775 = vmul.f32 %v390, %v678
        %v776 = vmul.f32 %v391, %v679
        %v777 = vmul.f32 %v392, %v680
        %v778 = vmul.f32 %v393, %v681
        %v779 = vmul.f32 %v394, %v682
        %v780 = vmul.f32 %v395, %v683
        %v781 = vmul.f32 %v396, %v684
        %v782 = vmul.f32 %v397, %v685
        %v783 = vmul.f32 %v398, %v686
        %v784 = vmul.f32 %v399, %v687
        %v785 = vmul.f32 %v400, %v688
        %v786 = vmul.f32 %v401, %v689
        %v787 = vmul.f32 %v402, %v690
        %v788 = vmul.f32 %v403, %v691
        %v789 = vmul.f32 %v404, %v692
        %v790 = vmul.f32 %v405, %v693
        %v791 = vmul.f32 %v406, %v694
        %v792 = vmul.f32 %v407, %v695
        %v793 = vmul.f32 %v408, %v696
        %v794 = vmul.f32 %v409, %v697
        %v795 = vmul.f32 %v410, %v698
        %v796 = vmul.f32 %v411, %v699
        %v797 = vmul.f32 %v412, %v700
        %v798 = vmul.f32 %v413, %v701
        %v799 = vmul.f32 %v414, %v702
        %v800 = vmul.f32 %v415, %v703
        %v801 = vmul.f32 %v416, %v704
        %v802 = vmul.f32 %v417, %v705
        %v803 = vmul.f32 %v418, %v706
        %v804 = vmul.f32 %v419, %v611
        %v805 = vmul.f32 %v420, %v612
        %v806 = vmul.f32 %v421, %v613
        %v807 = vmul.f32 %v422, %v614
        %v808 = vmul.f32 %v423, %v615
        %v809 = vmul.f32 %v424, %v616
        %v810 = vmul.f32 %v425, %v617
        %v811 = vmul.f32 %v426, %v618
        %v812 = vmul.f32 %v427, %v619
        %v813 = vmul.f32 %v428, %v620
        %v814 = vmul.f32 %v429, %v621
        %v815 = vmul.f32 %v430, %v622
        %v816 = vmul.f32 %v431, %v623
        %v817 = vmul.f32 %v432, %v624
        %v818 = vmul.f32 %v433, %v625
        %v819 = vmul.f32 %v434, %v626
        %v820 = vmul.f32 %v435, %v627
        %v821 = vmul.f32 %v436, %v628
        %v822 = vmul.f32 %v437, %v629
        %v823 = vmul.f32 %v438, %v630
        %v824 = vmul.f32 %v439, %v631
        %v825 = vmul.f32 %v440, %v632
        %v826 = vmul.f32 %v441, %v633
        %v827 = vmul.f32 %v442, %v634
        %v828 = vmul.f32 %v443, %v635
        %v829 = vmul.f32 %v444, %v636
        %v830 = vmul.f32 %v445, %v637
        %v831 = vmul.f32 %v446, %v638
        %v832 = vmul.f32 %v447, %v639
        %v833 = vmul.f32 %v448, %v640
        %v834 = vmul.f32 %v449, %v641
        %v835 = vmul.f32 %v450, %v642
        %v836 = vmul.f32 %v451, %v643
        %v837 = vmul.f32 %v452, %v644
        %v838 = vmul.f32 %v453, %v645
        %v839 = vmul.f32 %v454, %v646
        %v840 = vmul.f32 %v455, %v647
        %v841 = vmul.f32 %v456, %v648
        %v842 = vmul.f32 %v457, %v649
        %v843 = vmul.f32 %v458, %v650
        %v844 = vmul.f32 %v459, %v651
        %v845 = vmul.f32 %v460, %v652
        %v846 = vmul.f32 %v461, %v653
        %v847 = vmul.f32 %v462, %v654
        %v848 = vmul.f32 %v463, %v655
        %v849 = vmul.f32 %v464, %v656
        %v850 = vmul.f32 %v465, %v657
        %v851 = vmul.f32 %v466, %v658
        %v852 = vmul.f32 %v467, %v659
        %v853 = vmul.f32 %v468, %v660
        %v854 = vmul.f32 %v469, %v661
        %v855 = vmul.f32 %v470, %v662
        %v856 = vmul.f32 %v471, %v663
        %v857 = vmul.f32 %v472, %v664
        %v858 = vmul.f32 %v473, %v665
        %v859 = vmul.f32 %v474, %v666
        %v860 = vmul.f32 %v475, %v667
        %v861 = vmul.f32 %v476, %v668
        %v862 = vmul.f32 %v477, %v669
        %v863 = vmul.f32 %v478, %v670
        %v864 = vmul.f32 %v479, %v671
        %v865 = vmul.f32 %v480, %v672
        %v866 = vmul.f32 %v481, %v673
        %v867 = vmul.f32 %v482, %v674
        %v868 = vmul.f32 %v483, %v675
        %v869 = vmul.f32 %v484, %v676
        %v870 = vmul.f32 %v485, %v677
        %v871 = vmul.f32 %v486, %v678
        %v872 = vmul.f32 %v487, %v679
        %v873 = vmul.f32 %v488, %v680
        %v874 = vmul.f32 %v489, %v681
        %v875 = vmul.f32 %v490, %v682
        %v876 = vmul.f32 %v491, %v683
        %v877 = vmul.f32 %v492, %v684
        %v878 = vmul.f32 %v493, %v685
        %v879 = vmul.f32 %v494, %v686
        %v880 = vmul.f32 %v495, %v687
        %v881 = vmul.f32 %v496, %v688
        %v882 = vmul.f32 %v497, %v689
        %v883 = vmul.f32 %v498, %v690
        %v884 = vmul.f32 %v499, %v691
        %v885 = vmul.f32 %v500, %v692
        %v886 = vmul.f32 %v501, %v693
        %v887 = vmul.f32 %v502, %v694
        %v888 = vmul.f32 %v503, %v695
        %v889 = vmul.f32 %v504, %v696
        %v890 = vmul.f32 %v505, %v697
        %v891 = vmul.f32 %v506, %v698
        %v892 = vmul.f32 %v507, %v699
        %v893 = vmul.f32 %v508, %v700
        %v894 = vmul.f32 %v509, %v701
        %v895 = vmul.f32 %v510, %v702
        %v896 = vmul.f32 %v511, %v703
        %v897 = vmul.f32 %v512, %v704
        %v898 = vmul.f32 %v513, %v705
        %v899 = vmul.f32 %v514, %v706
        %v900 = vadd.f32 %v708, %v709
        %v901 = vadd.f32 %v900, %v710
        %v902 = vadd.f32 %v901, %v711
        %v903 = vadd.f32 %v902, %v712
        %v904 = vadd.f32 %v903, %v713
        %v905 = vadd.f32 %v904, %v714
        %v906 = vadd.f32 %v905, %v715
        %v907 = vadd.f32 %v906, %v716
        %v908 = vadd.f32 %v907, %v717
        %v909 = vadd.f32 %v908, %v718
        %v910 = vadd.f32 %v909, %v719
        %v911 = vadd.f32 %v910, %v720
        %v912 = vadd.f32 %v911, %v721
        %v913 = vadd.f32 %v912, %v722
        %v914 = vadd.f32 %v913, %v723
        %v915 = vadd.f32 %v914, %v724
        %v916 = vadd.f32 %v915, %v725
        %v917 = vadd.f32 %v916, %v726
        %v918 = vadd.f32 %v917, %v727
        %v919 = vadd.f32 %v918, %v728
        %v920 = vadd.f32 %v919, %v729
        %v921 = vadd.f32 %v920, %v730
        %v922 = vadd.f32 %v921, %v731
        %v923 = vadd.f32 %v922, %v732
        %v924 = vadd.f32 %v923, %v733
        %v925 = vadd.f32 %v924, %v734
        %v926 = vadd.f32 %v925, %v735
        %v927 = vadd.f32 %v926, %v736
        %v928 = vadd.f32 %v927, %v737
        %v929 = vadd.f32 %v928, %v738
        %v930 = vadd.f32 %v929, %v739
        %v931 = vadd.f32 %v930, %v740
        %v932 = vadd.f32 %v931, %v741
        %v933 = vadd.f32 %v932, %v742
        %v934 = vadd.f32 %v933, %v743
        %v935 = vadd.f32 %v934, %v744
        %v936 = vadd.f32 %v935, %v745
        %v937 = vadd.f32 %v936, %v746
        %v938 = vadd.f32 %v937, %v747
        %v939 = vadd.f32 %v938, %v748
        %v940 = vadd.f32 %v939, %v749
        %v941 = vadd.f32 %v940, %v750
        %v942 = vadd.f32 %v941, %v751
        %v943 = vadd.f32 %v942, %v752
        %v944 = vadd.f32 %v943, %v753
        %v945 = vadd.f32 %v944, %v754
        %v946 = vadd.f32 %v945, %v755
        %v947 = vadd.f32 %v946, %v756
        %v948 = vadd.f32 %v947, %v757
        %v949 = vadd.f32 %v948, %v758
        %v950 = vadd.f32 %v949, %v759
        %v951 = vadd.f32 %v950, %v760
        %v952 = vadd.f32 %v951, %v761
        %v953 = vadd.f32 %v952, %v762
        %v954 = vadd.f32 %v953, %v763
        %v955 = vadd.f32 %v954, %v764
        %v956 = vadd.f32 %v955, %v765
        %v957 = vadd.f32 %v956, %v766
        %v958 = vadd.f32 %v957, %v767
        %v959 = vadd.f32 %v958, %v768
        %v960 = vadd.f32 %v959, %v769
        %v961 = vadd.f32 %v960, %v770
        %v962 = vadd.f32 %v961, %v771
        %v963 = vadd.f32 %v962, %v772
        %v964 = vadd.f32 %v963, %v773
        %v965 = vadd.f32 %v964, %v774
        %v966 = vadd.f32 %v965, %v775
        %v967 = vadd.f32 %v966, %v776
        %v968 = vadd.f32 %v967, %v777
        %v969 = vadd.f32 %v968, %v778
        %v970 = vadd.f32 %v969, %v779
        %v971 = vadd.f32 %v970, %v780
        %v972 = vadd.f32 %v971, %v781
        %v973 = vadd.f32 %v972, %v782
        %v974 = vadd.f32 %v973, %v783
        %v975 = vadd.f32 %v974, %v784
        %v976 = vadd.f32 %v975, %v785
        %v977 = vadd.f32 %v976, %v786
        %v978 = vadd.f32 %v977, %v787
        %v979 = vadd.f32 %v978, %v788
        %v980 = vadd.f32 %v979, %v789
        %v981 = vadd.f32 %v980, %v790
        %v982 = vadd.f32 %v981, %v791
        %v983 = vadd.f32 %v982, %v792
        %v984 = vadd.f32 %v983, %v793
        %v985 = vadd.f32 %v984, %v794
        %v986 = vadd.f32 %v985, %v795
        %v987 = vadd.f32 %v986, %v796
        %v988 = vadd.f32 %v987, %v797
        %v989 = vadd.f32 %v988, %v798
        %v990 = vadd.f32 %v989, %v799
        %v991 = vadd.f32 %v990, %v800
        %v992 = vadd.f32 %v991, %v801
        %v993 = vadd.f32 %v992, %v802
        %v994 = vadd.f32 %v993, %v803
        %v995 = vrot.slane %v994, 4
        %v996 = vadd.f32 %v994, %v995
        %v997 = vrot.slane %v996, 2
        %v998 = vadd.f32 %v996, %v997
        %v999 = vrot.slane %v998, 1
        %v1000 = vadd.f32 %v998, %v999
        %v1001 = vadd.f32 %v804, %v805
        %v1002 = vadd.f32 %v1001, %v806
        %v1003 = vadd.f32 %v1002, %v807
        %v1004 = vadd.f32 %v1003, %v808
        %v1005 = vadd.f32 %v1004, %v809
        %v1006 = vadd.f32 %v1005, %v810
        %v1007 = vadd.f32 %v1006, %v811
        %v1008 = vadd.f32 %v1007, %v812
        %v1009 = vadd.f32 %v1008, %v813
        %v1010 = vadd.f32 %v1009, %v814
        %v1011 = vadd.f32 %v1010, %v815
        %v1012 = vadd.f32 %v1011, %v816
        %v1013 = vadd.f32 %v1012, %v817
        %v1014 = vadd.f32 %v1013, %v818
        %v1015 = vadd.f32 %v1014, %v819
        %v1016 = vadd.f32 %v1015, %v820
        %v1017 = vadd.f32 %v1016, %v821
        %v1018 = vadd.f32 %v1017, %v822
        %v1019 = vadd.f32 %v1018, %v823
        %v1020 = vadd.f32 %v1019, %v824
        %v1021 = vadd.f32 %v1020, %v825
        %v1022 = vadd.f32 %v1021, %v826
        %v1023 = vadd.f32 %v1022, %v827
        %v1024 = vadd.f32 %v1023, %v828
        %v1025 = vadd.f32 %v1024, %v829
        %v1026 = vadd.f32 %v1025, %v830
        %v1027 = vadd.f32 %v1026, %v831
        %v1028 = vadd.f32 %v1027, %v832
        %v1029 = vadd.f32 %v1028, %v833
        %v1030 = vadd.f32 %v1029, %v834
        %v1031 = vadd.f32 %v1030, %v835
        %v1032 = vadd.f32 %v1031, %v836
        %v1033 = vadd.f32 %v1032, %v837
        %v1034 = vadd.f32 %v1033, %v838
        %v1035 = vadd.f32 %v1034, %v839
        %v1036 = vadd.f32 %v1035, %v840
        %v1037 = vadd.f32 %v1036, %v841
        %v1038 = vadd.f32 %v1037, %v842
        %v1039 = vadd.f32 %v1038, %v843
        %v1040 = vadd.f32 %v1039, %v844
        %v1041 = vadd.f32 %v1040, %v845
        %v1042 = vadd.f32 %v1041, %v846
        %v1043 = vadd.f32 %v1042, %v847
        %v1044 = vadd.f32 %v1043, %v848
        %v1045 = vadd.f32 %v1044, %v849
        %v1046 = vadd.f32 %v1045, %v850
        %v1047 = vadd.f32 %v1046, %v851
        %v1048 = vadd.f32 %v1047, %v852
        %v1049 = vadd.f32 %v1048, %v853
        %v1050 = vadd.f32 %v1049, %v854
        %v1051 = vadd.f32 %v1050, %v855
        %v1052 = vadd.f32 %v1051, %v856
        %v1053 = vadd.f32 %v1052, %v857
        %v1054 = vadd.f32 %v1053, %v858
        %v1055 = vadd.f32 %v1054, %v859
        %v1056 = vadd.f32 %v1055, %v860
        %v1057 = vadd.f32 %v1056, %v861
        %v1058 = vadd.f32 %v1057, %v862
        %v1059 = vadd.f32 %v1058, %v863
        %v1060 = vadd.f32 %v1059, %v864
        %v1061 = vadd.f32 %v1060, %v865
        %v1062 = vadd.f32 %v1061, %v866
        %v1063 = vadd.f32 %v1062, %v867
        %v1064 = vadd.f32 %v1063, %v868
        %v1065 = vadd.f32 %v1064, %v869
        %v1066 = vadd.f32 %v1065, %v870
        %v1067 = vadd.f32 %v1066, %v871
        %v1068 = vadd.f32 %v1067, %v872
        %v1069 = vadd.f32 %v1068, %v873
        %v1070 = vadd.f32 %v1069, %v874
        %v1071 = vadd.f32 %v1070, %v875
        %v1072 = vadd.f32 %v1071, %v876
        %v1073 = vadd.f32 %v1072, %v877
        %v1074 = vadd.f32 %v1073, %v878
        %v1075 = vadd.f32 %v1074, %v879
        %v1076 = vadd.f32 %v1075, %v880
        %v1077 = vadd.f32 %v1076, %v881
        %v1078 = vadd.f32 %v1077, %v882
        %v1079 = vadd.f32 %v1078, %v883
        %v1080 = vadd.f32 %v1079, %v884
        %v1081 = vadd.f32 %v1080, %v885
        %v1082 = vadd.f32 %v1081, %v886
        %v1083 = vadd.f32 %v1082, %v887
        %v1084 = vadd.f32 %v1083, %v888
        %v1085 = vadd.f32 %v1084, %v889
        %v1086 = vadd.f32 %v1085, %v890
        %v1087 = vadd.f32 %v1086, %v891
        %v1088 = vadd.f32 %v1087, %v892
        %v1089 = vadd.f32 %v1088, %v893
        %v1090 = vadd.f32 %v1089, %v894
        %v1091 = vadd.f32 %v1090, %v895
        %v1092 = vadd.f32 %v1091, %v896
        %v1093 = vadd.f32 %v1092, %v897
        %v1094 = vadd.f32 %v1093, %v898
        %v1095 = vadd.f32 %v1094, %v899
        %v1096 = vrot.slane %v1095, 4
        %v1097 = vadd.f32 %v1095, %v1096
        %v1098 = vrot.slane %v1097, 2
        %v1099 = vadd.f32 %v1097, %v1098
        %v1100 = vrot.slane %v1099, 1
        %v1101 = vadd.f32 %v1099, %v1100
        %vm1104 = vcmask 1041409
        %v1105 = vsel %vm1104, %v1101, %v1000
        %v1107 = vadd.f32 %v707, %v1105
        %1108 = vst [vmem:[#allocation2] sm:$0x3] %v1107
        %s1109 = scalar_lea.vmem %s276, 384 [#allocation6]
        %v1110 = vld [vmem:[%s1109] sm:$0xf]
        %v1111 = vld [vmem:[%s1109 + $0x4] sm:$0xf]
        %v1112 = vld [vmem:[%s1109 + $0x8] sm:$0xf]
        %v1113 = vld [vmem:[%s1109 + $0xc] sm:$0xf]
        %v1114 = vld [vmem:[%s1109 + $0x10] sm:$0xf]
        %v1115 = vld [vmem:[%s1109 + $0x14] sm:$0xf]
        %v1116 = vld [vmem:[%s1109 + $0x18] sm:$0xf]
        %v1117 = vld [vmem:[%s1109 + $0x1c] sm:$0xf]
        %v1118 = vld [vmem:[%s1109 + $0x20] sm:$0xf]
        %v1119 = vld [vmem:[%s1109 + $0x24] sm:$0xf]
        %v1120 = vld [vmem:[%s1109 + $0x28] sm:$0xf]
        %v1121 = vld [vmem:[%s1109 + $0x2c] sm:$0xf]
        %v1122 = vld [vmem:[%s1109 + $0x30] sm:$0xf]
        %v1123 = vld [vmem:[%s1109 + $0x34] sm:$0xf]
        %v1124 = vld [vmem:[%s1109 + $0x38] sm:$0xf]
        %v1125 = vld [vmem:[%s1109 + $0x3c] sm:$0xf]
        %v1126 = vld [vmem:[%s1109 + $0x40] sm:$0xf]
        %v1127 = vld [vmem:[%s1109 + $0x44] sm:$0xf]
        %v1128 = vld [vmem:[%s1109 + $0x48] sm:$0xf]
        %v1129 = vld [vmem:[%s1109 + $0x4c] sm:$0xf]
        %v1130 = vld [vmem:[%s1109 + $0x50] sm:$0xf]
        %v1131 = vld [vmem:[%s1109 + $0x54] sm:$0xf]
        %v1132 = vld [vmem:[%s1109 + $0x58] sm:$0xf]
        %v1133 = vld [vmem:[%s1109 + $0x5c] sm:$0xf]
        %v1134 = vld [vmem:[%s1109 + $0x60] sm:$0xf]
        %v1135 = vld [vmem:[%s1109 + $0x64] sm:$0xf]
        %v1136 = vld [vmem:[%s1109 + $0x68] sm:$0xf]
        %v1137 = vld [vmem:[%s1109 + $0x6c] sm:$0xf]
        %v1138 = vld [vmem:[%s1109 + $0x70] sm:$0xf]
        %v1139 = vld [vmem:[%s1109 + $0x74] sm:$0xf]
        %v1140 = vld [vmem:[%s1109 + $0x78] sm:$0xf]
        %v1141 = vld [vmem:[%s1109 + $0x7c] sm:$0xf]
        %v1142 = vld [vmem:[%s1109 + $0x80] sm:$0xf]
        %v1143 = vld [vmem:[%s1109 + $0x84] sm:$0xf]
        %v1144 = vld [vmem:[%s1109 + $0x88] sm:$0xf]
        %v1145 = vld [vmem:[%s1109 + $0x8c] sm:$0xf]
        %v1146 = vld [vmem:[%s1109 + $0x90] sm:$0xf]
        %v1147 = vld [vmem:[%s1109 + $0x94] sm:$0xf]
        %v1148 = vld [vmem:[%s1109 + $0x98] sm:$0xf]
        %v1149 = vld [vmem:[%s1109 + $0x9c] sm:$0xf]
        %v1150 = vld [vmem:[%s1109 + $0xa0] sm:$0xf]
        %v1151 = vld [vmem:[%s1109 + $0xa4] sm:$0xf]
        %v1152 = vld [vmem:[%s1109 + $0xa8] sm:$0xf]
        %v1153 = vld [vmem:[%s1109 + $0xac] sm:$0xf]
        %v1154 = vld [vmem:[%s1109 + $0xb0] sm:$0xf]
        %v1155 = vld [vmem:[%s1109 + $0xb4] sm:$0xf]
        %v1156 = vld [vmem:[%s1109 + $0xb8] sm:$0xf]
        %v1157 = vld [vmem:[%s1109 + $0xbc] sm:$0xf]
        %v1158 = vld [vmem:[%s1109 + $0xc0] sm:$0xf]
        %v1159 = vld [vmem:[%s1109 + $0xc4] sm:$0xf]
        %v1160 = vld [vmem:[%s1109 + $0xc8] sm:$0xf]
        %v1161 = vld [vmem:[%s1109 + $0xcc] sm:$0xf]
        %v1162 = vld [vmem:[%s1109 + $0xd0] sm:$0xf]
        %v1163 = vld [vmem:[%s1109 + $0xd4] sm:$0xf]
        %v1164 = vld [vmem:[%s1109 + $0xd8] sm:$0xf]
        %v1165 = vld [vmem:[%s1109 + $0xdc] sm:$0xf]
        %v1166 = vld [vmem:[%s1109 + $0xe0] sm:$0xf]
        %v1167 = vld [vmem:[%s1109 + $0xe4] sm:$0xf]
        %v1168 = vld [vmem:[%s1109 + $0xe8] sm:$0xf]
        %v1169 = vld [vmem:[%s1109 + $0xec] sm:$0xf]
        %v1170 = vld [vmem:[%s1109 + $0xf0] sm:$0xf]
        %v1171 = vld [vmem:[%s1109 + $0xf4] sm:$0xf]
        %v1172 = vld [vmem:[%s1109 + $0xf8] sm:$0xf]
        %v1173 = vld [vmem:[%s1109 + $0xfc] sm:$0xf]
        %v1174 = vld [vmem:[%s1109 + $0x100] sm:$0xf]
        %v1175 = vld [vmem:[%s1109 + $0x104] sm:$0xf]
        %v1176 = vld [vmem:[%s1109 + $0x108] sm:$0xf]
        %v1177 = vld [vmem:[%s1109 + $0x10c] sm:$0xf]
        %v1178 = vld [vmem:[%s1109 + $0x110] sm:$0xf]
        %v1179 = vld [vmem:[%s1109 + $0x114] sm:$0xf]
        %v1180 = vld [vmem:[%s1109 + $0x118] sm:$0xf]
        %v1181 = vld [vmem:[%s1109 + $0x11c] sm:$0xf]
        %v1182 = vld [vmem:[%s1109 + $0x120] sm:$0xf]
        %v1183 = vld [vmem:[%s1109 + $0x124] sm:$0xf]
        %v1184 = vld [vmem:[%s1109 + $0x128] sm:$0xf]
        %v1185 = vld [vmem:[%s1109 + $0x12c] sm:$0xf]
        %v1186 = vld [vmem:[%s1109 + $0x130] sm:$0xf]
        %v1187 = vld [vmem:[%s1109 + $0x134] sm:$0xf]
        %v1188 = vld [vmem:[%s1109 + $0x138] sm:$0xf]
        %v1189 = vld [vmem:[%s1109 + $0x13c] sm:$0xf]
        %v1190 = vld [vmem:[%s1109 + $0x140] sm:$0xf]
        %v1191 = vld [vmem:[%s1109 + $0x144] sm:$0xf]
        %v1192 = vld [vmem:[%s1109 + $0x148] sm:$0xf]
        %v1193 = vld [vmem:[%s1109 + $0x14c] sm:$0xf]
        %v1194 = vld [vmem:[%s1109 + $0x150] sm:$0xf]
        %v1195 = vld [vmem:[%s1109 + $0x154] sm:$0xf]
        %v1196 = vld [vmem:[%s1109 + $0x158] sm:$0xf]
        %v1197 = vld [vmem:[%s1109 + $0x15c] sm:$0xf]
        %v1198 = vld [vmem:[%s1109 + $0x160] sm:$0xf]
        %v1199 = vld [vmem:[%s1109 + $0x164] sm:$0xf]
        %v1200 = vld [vmem:[%s1109 + $0x168] sm:$0xf]
        %v1201 = vld [vmem:[%s1109 + $0x16c] sm:$0xf]
        %v1202 = vld [vmem:[%s1109 + $0x170] sm:$0xf]
        %v1203 = vld [vmem:[%s1109 + $0x174] sm:$0xf]
        %v1204 = vld [vmem:[%s1109 + $0x178] sm:$0xf]
        %v1205 = vld [vmem:[%s1109 + $0x17c] sm:$0xf]
        %v1206 = vunpack.c.l.bf16 %v1110
        %v1207 = vunpack.c.l.bf16 %v1111
        %v1208 = vunpack.c.l.bf16 %v1112
        %v1209 = vunpack.c.l.bf16 %v1113
        %v1210 = vunpack.c.l.bf16 %v1114
        %v1211 = vunpack.c.l.bf16 %v1115
        %v1212 = vunpack.c.l.bf16 %v1116
        %v1213 = vunpack.c.l.bf16 %v1117
        %v1214 = vunpack.c.l.bf16 %v1118
        %v1215 = vunpack.c.l.bf16 %v1119
        %v1216 = vunpack.c.l.bf16 %v1120
        %v1217 = vunpack.c.l.bf16 %v1121
        %v1218 = vunpack.c.l.bf16 %v1122
        %v1219 = vunpack.c.l.bf16 %v1123
        %v1220 = vunpack.c.l.bf16 %v1124
        %v1221 = vunpack.c.l.bf16 %v1125
        %v1222 = vunpack.c.l.bf16 %v1126
        %v1223 = vunpack.c.l.bf16 %v1127
        %v1224 = vunpack.c.l.bf16 %v1128
        %v1225 = vunpack.c.l.bf16 %v1129
        %v1226 = vunpack.c.l.bf16 %v1130
        %v1227 = vunpack.c.l.bf16 %v1131
        %v1228 = vunpack.c.l.bf16 %v1132
        %v1229 = vunpack.c.l.bf16 %v1133
        %v1230 = vunpack.c.l.bf16 %v1134
        %v1231 = vunpack.c.l.bf16 %v1135
        %v1232 = vunpack.c.l.bf16 %v1136
        %v1233 = vunpack.c.l.bf16 %v1137
        %v1234 = vunpack.c.l.bf16 %v1138
        %v1235 = vunpack.c.l.bf16 %v1139
        %v1236 = vunpack.c.l.bf16 %v1140
        %v1237 = vunpack.c.l.bf16 %v1141
        %v1238 = vunpack.c.l.bf16 %v1142
        %v1239 = vunpack.c.l.bf16 %v1143
        %v1240 = vunpack.c.l.bf16 %v1144
        %v1241 = vunpack.c.l.bf16 %v1145
        %v1242 = vunpack.c.l.bf16 %v1146
        %v1243 = vunpack.c.l.bf16 %v1147
        %v1244 = vunpack.c.l.bf16 %v1148
        %v1245 = vunpack.c.l.bf16 %v1149
        %v1246 = vunpack.c.l.bf16 %v1150
        %v1247 = vunpack.c.l.bf16 %v1151
        %v1248 = vunpack.c.l.bf16 %v1152
        %v1249 = vunpack.c.l.bf16 %v1153
        %v1250 = vunpack.c.l.bf16 %v1154
        %v1251 = vunpack.c.l.bf16 %v1155
        %v1252 = vunpack.c.l.bf16 %v1156
        %v1253 = vunpack.c.l.bf16 %v1157
        %v1254 = vunpack.c.l.bf16 %v1158
        %v1255 = vunpack.c.l.bf16 %v1159
        %v1256 = vunpack.c.l.bf16 %v1160
        %v1257 = vunpack.c.l.bf16 %v1161
        %v1258 = vunpack.c.l.bf16 %v1162
        %v1259 = vunpack.c.l.bf16 %v1163
        %v1260 = vunpack.c.l.bf16 %v1164
        %v1261 = vunpack.c.l.bf16 %v1165
        %v1262 = vunpack.c.l.bf16 %v1166
        %v1263 = vunpack.c.l.bf16 %v1167
        %v1264 = vunpack.c.l.bf16 %v1168
        %v1265 = vunpack.c.l.bf16 %v1169
        %v1266 = vunpack.c.l.bf16 %v1170
        %v1267 = vunpack.c.l.bf16 %v1171
        %v1268 = vunpack.c.l.bf16 %v1172
        %v1269 = vunpack.c.l.bf16 %v1173
        %v1270 = vunpack.c.l.bf16 %v1174
        %v1271 = vunpack.c.l.bf16 %v1175
        %v1272 = vunpack.c.l.bf16 %v1176
        %v1273 = vunpack.c.l.bf16 %v1177
        %v1274 = vunpack.c.l.bf16 %v1178
        %v1275 = vunpack.c.l.bf16 %v1179
        %v1276 = vunpack.c.l.bf16 %v1180
        %v1277 = vunpack.c.l.bf16 %v1181
        %v1278 = vunpack.c.l.bf16 %v1182
        %v1279 = vunpack.c.l.bf16 %v1183
        %v1280 = vunpack.c.l.bf16 %v1184
        %v1281 = vunpack.c.l.bf16 %v1185
        %v1282 = vunpack.c.l.bf16 %v1186
        %v1283 = vunpack.c.l.bf16 %v1187
        %v1284 = vunpack.c.l.bf16 %v1188
        %v1285 = vunpack.c.l.bf16 %v1189
        %v1286 = vunpack.c.l.bf16 %v1190
        %v1287 = vunpack.c.l.bf16 %v1191
        %v1288 = vunpack.c.l.bf16 %v1192
        %v1289 = vunpack.c.l.bf16 %v1193
        %v1290 = vunpack.c.l.bf16 %v1194
        %v1291 = vunpack.c.l.bf16 %v1195
        %v1292 = vunpack.c.l.bf16 %v1196
        %v1293 = vunpack.c.l.bf16 %v1197
        %v1294 = vunpack.c.l.bf16 %v1198
        %v1295 = vunpack.c.l.bf16 %v1199
        %v1296 = vunpack.c.l.bf16 %v1200
        %v1297 = vunpack.c.l.bf16 %v1201
        %v1298 = vunpack.c.l.bf16 %v1202
        %v1299 = vunpack.c.l.bf16 %v1203
        %v1300 = vunpack.c.l.bf16 %v1204
        %v1301 = vunpack.c.l.bf16 %v1205
        %s1302 = scalar_lea.vmem [#allocation2], 2
        %v1303 = vld [vmem:[%s1302] sm:$0x3]
        %v1304 = vmul.f32 %v323, %v1206
        %v1305 = vmul.f32 %v324, %v1207
        %v1306 = vmul.f32 %v325, %v1208
        %v1307 = vmul.f32 %v326, %v1209
        %v1308 = vmul.f32 %v327, %v1210
        %v1309 = vmul.f32 %v328, %v1211
        %v1310 = vmul.f32 %v329, %v1212
        %v1311 = vmul.f32 %v330, %v1213
        %v1312 = vmul.f32 %v331, %v1214
        %v1313 = vmul.f32 %v332, %v1215
        %v1314 = vmul.f32 %v333, %v1216
        %v1315 = vmul.f32 %v334, %v1217
        %v1316 = vmul.f32 %v335, %v1218
        %v1317 = vmul.f32 %v336, %v1219
        %v1318 = vmul.f32 %v337, %v1220
        %v1319 = vmul.f32 %v338, %v1221
        %v1320 = vmul.f32 %v339, %v1222
        %v1321 = vmul.f32 %v340, %v1223
        %v1322 = vmul.f32 %v341, %v1224
        %v1323 = vmul.f32 %v342, %v1225
        %v1324 = vmul.f32 %v343, %v1226
        %v1325 = vmul.f32 %v344, %v1227
        %v1326 = vmul.f32 %v345, %v1228
        %v1327 = vmul.f32 %v346, %v1229
        %v1328 = vmul.f32 %v347, %v1230
        %v1329 = vmul.f32 %v348, %v1231
        %v1330 = vmul.f32 %v349, %v1232
        %v1331 = vmul.f32 %v350, %v1233
        %v1332 = vmul.f32 %v351, %v1234
        %v1333 = vmul.f32 %v352, %v1235
        %v1334 = vmul.f32 %v353, %v1236
        %v1335 = vmul.f32 %v354, %v1237
        %v1336 = vmul.f32 %v355, %v1238
        %v1337 = vmul.f32 %v356, %v1239
        %v1338 = vmul.f32 %v357, %v1240
        %v1339 = vmul.f32 %v358, %v1241
        %v1340 = vmul.f32 %v359, %v1242
        %v1341 = vmul.f32 %v360, %v1243
        %v1342 = vmul.f32 %v361, %v1244
        %v1343 = vmul.f32 %v362, %v1245
        %v1344 = vmul.f32 %v363, %v1246
        %v1345 = vmul.f32 %v364, %v1247
        %v1346 = vmul.f32 %v365, %v1248
        %v1347 = vmul.f32 %v366, %v1249
        %v1348 = vmul.f32 %v367, %v1250
        %v1349 = vmul.f32 %v368, %v1251
        %v1350 = vmul.f32 %v369, %v1252
        %v1351 = vmul.f32 %v370, %v1253
        %v1352 = vmul.f32 %v371, %v1254
        %v1353 = vmul.f32 %v372, %v1255
        %v1354 = vmul.f32 %v373, %v1256
        %v1355 = vmul.f32 %v374, %v1257
        %v1356 = vmul.f32 %v375, %v1258
        %v1357 = vmul.f32 %v376, %v1259
        %v1358 = vmul.f32 %v377, %v1260
        %v1359 = vmul.f32 %v378, %v1261
        %v1360 = vmul.f32 %v379, %v1262
        %v1361 = vmul.f32 %v380, %v1263
        %v1362 = vmul.f32 %v381, %v1264
        %v1363 = vmul.f32 %v382, %v1265
        %v1364 = vmul.f32 %v383, %v1266
        %v1365 = vmul.f32 %v384, %v1267
        %v1366 = vmul.f32 %v385, %v1268
        %v1367 = vmul.f32 %v386, %v1269
        %v1368 = vmul.f32 %v387, %v1270
        %v1369 = vmul.f32 %v388, %v1271
        %v1370 = vmul.f32 %v389, %v1272
        %v1371 = vmul.f32 %v390, %v1273
        %v1372 = vmul.f32 %v391, %v1274
        %v1373 = vmul.f32 %v392, %v1275
        %v1374 = vmul.f32 %v393, %v1276
        %v1375 = vmul.f32 %v394, %v1277
        %v1376 = vmul.f32 %v395, %v1278
        %v1377 = vmul.f32 %v396, %v1279
        %v1378 = vmul.f32 %v397, %v1280
        %v1379 = vmul.f32 %v398, %v1281
        %v1380 = vmul.f32 %v399, %v1282
        %v1381 = vmul.f32 %v400, %v1283
        %v1382 = vmul.f32 %v401, %v1284
        %v1383 = vmul.f32 %v402, %v1285
        %v1384 = vmul.f32 %v403, %v1286
        %v1385 = vmul.f32 %v404, %v1287
        %v1386 = vmul.f32 %v405, %v1288
        %v1387 = vmul.f32 %v406, %v1289
        %v1388 = vmul.f32 %v407, %v1290
        %v1389 = vmul.f32 %v408, %v1291
        %v1390 = vmul.f32 %v409, %v1292
        %v1391 = vmul.f32 %v410, %v1293
        %v1392 = vmul.f32 %v411, %v1294
        %v1393 = vmul.f32 %v412, %v1295
        %v1394 = vmul.f32 %v413, %v1296
        %v1395 = vmul.f32 %v414, %v1297
        %v1396 = vmul.f32 %v415, %v1298
        %v1397 = vmul.f32 %v416, %v1299
        %v1398 = vmul.f32 %v417, %v1300
        %v1399 = vmul.f32 %v418, %v1301
        %v1400 = vmul.f32 %v419, %v1206
        %v1401 = vmul.f32 %v420, %v1207
        %v1402 = vmul.f32 %v421, %v1208
        %v1403 = vmul.f32 %v422, %v1209
        %v1404 = vmul.f32 %v423, %v1210
        %v1405 = vmul.f32 %v424, %v1211
        %v1406 = vmul.f32 %v425, %v1212
        %v1407 = vmul.f32 %v426, %v1213
        %v1408 = vmul.f32 %v427, %v1214
        %v1409 = vmul.f32 %v428, %v1215
        %v1410 = vmul.f32 %v429, %v1216
        %v1411 = vmul.f32 %v430, %v1217
        %v1412 = vmul.f32 %v431, %v1218
        %v1413 = vmul.f32 %v432, %v1219
        %v1414 = vmul.f32 %v433, %v1220
        %v1415 = vmul.f32 %v434, %v1221
        %v1416 = vmul.f32 %v435, %v1222
        %v1417 = vmul.f32 %v436, %v1223
        %v1418 = vmul.f32 %v437, %v1224
        %v1419 = vmul.f32 %v438, %v1225
        %v1420 = vmul.f32 %v439, %v1226
        %v1421 = vmul.f32 %v440, %v1227
        %v1422 = vmul.f32 %v441, %v1228
        %v1423 = vmul.f32 %v442, %v1229
        %v1424 = vmul.f32 %v443, %v1230
        %v1425 = vmul.f32 %v444, %v1231
        %v1426 = vmul.f32 %v445, %v1232
        %v1427 = vmul.f32 %v446, %v1233
        %v1428 = vmul.f32 %v447, %v1234
        %v1429 = vmul.f32 %v448, %v1235
        %v1430 = vmul.f32 %v449, %v1236
        %v1431 = vmul.f32 %v450, %v1237
        %v1432 = vmul.f32 %v451, %v1238
        %v1433 = vmul.f32 %v452, %v1239
        %v1434 = vmul.f32 %v453, %v1240
        %v1435 = vmul.f32 %v454, %v1241
        %v1436 = vmul.f32 %v455, %v1242
        %v1437 = vmul.f32 %v456, %v1243
        %v1438 = vmul.f32 %v457, %v1244
        %v1439 = vmul.f32 %v458, %v1245
        %v1440 = vmul.f32 %v459, %v1246
        %v1441 = vmul.f32 %v460, %v1247
        %v1442 = vmul.f32 %v461, %v1248
        %v1443 = vmul.f32 %v462, %v1249
        %v1444 = vmul.f32 %v463, %v1250
        %v1445 = vmul.f32 %v464, %v1251
        %v1446 = vmul.f32 %v465, %v1252
        %v1447 = vmul.f32 %v466, %v1253
        %v1448 = vmul.f32 %v467, %v1254
        %v1449 = vmul.f32 %v468, %v1255
        %v1450 = vmul.f32 %v469, %v1256
        %v1451 = vmul.f32 %v470, %v1257
        %v1452 = vmul.f32 %v471, %v1258
        %v1453 = vmul.f32 %v472, %v1259
        %v1454 = vmul.f32 %v473, %v1260
        %v1455 = vmul.f32 %v474, %v1261
        %v1456 = vmul.f32 %v475, %v1262
        %v1457 = vmul.f32 %v476, %v1263
        %v1458 = vmul.f32 %v477, %v1264
        %v1459 = vmul.f32 %v478, %v1265
        %v1460 = vmul.f32 %v479, %v1266
        %v1461 = vmul.f32 %v480, %v1267
        %v1462 = vmul.f32 %v481, %v1268
        %v1463 = vmul.f32 %v482, %v1269
        %v1464 = vmul.f32 %v483, %v1270
        %v1465 = vmul.f32 %v484, %v1271
        %v1466 = vmul.f32 %v485, %v1272
        %v1467 = vmul.f32 %v486, %v1273
        %v1468 = vmul.f32 %v487, %v1274
        %v1469 = vmul.f32 %v488, %v1275
        %v1470 = vmul.f32 %v489, %v1276
        %v1471 = vmul.f32 %v490, %v1277
        %v1472 = vmul.f32 %v491, %v1278
        %v1473 = vmul.f32 %v492, %v1279
        %v1474 = vmul.f32 %v493, %v1280
        %v1475 = vmul.f32 %v494, %v1281
        %v1476 = vmul.f32 %v495, %v1282
        %v1477 = vmul.f32 %v496, %v1283
        %v1478 = vmul.f32 %v497, %v1284
        %v1479 = vmul.f32 %v498, %v1285
        %v1480 = vmul.f32 %v499, %v1286
        %v1481 = vmul.f32 %v500, %v1287
        %v1482 = vmul.f32 %v501, %v1288
        %v1483 = vmul.f32 %v502, %v1289
        %v1484 = vmul.f32 %v503, %v1290
        %v1485 = vmul.f32 %v504, %v1291
        %v1486 = vmul.f32 %v505, %v1292
        %v1487 = vmul.f32 %v506, %v1293
        %v1488 = vmul.f32 %v507, %v1294
        %v1489 = vmul.f32 %v508, %v1295
        %v1490 = vmul.f32 %v509, %v1296
        %v1491 = vmul.f32 %v510, %v1297
        %v1492 = vmul.f32 %v511, %v1298
        %v1493 = vmul.f32 %v512, %v1299
        %v1494 = vmul.f32 %v513, %v1300
        %v1495 = vmul.f32 %v514, %v1301
        %v1496 = vadd.f32 %v1304, %v1305
        %v1497 = vadd.f32 %v1496, %v1306
        %v1498 = vadd.f32 %v1497, %v1307
        %v1499 = vadd.f32 %v1498, %v1308
        %v1500 = vadd.f32 %v1499, %v1309
        %v1501 = vadd.f32 %v1500, %v1310
        %v1502 = vadd.f32 %v1501, %v1311
        %v1503 = vadd.f32 %v1502, %v1312
        %v1504 = vadd.f32 %v1503, %v1313
        %v1505 = vadd.f32 %v1504, %v1314
        %v1506 = vadd.f32 %v1505, %v1315
        %v1507 = vadd.f32 %v1506, %v1316
        %v1508 = vadd.f32 %v1507, %v1317
        %v1509 = vadd.f32 %v1508, %v1318
        %v1510 = vadd.f32 %v1509, %v1319
        %v1511 = vadd.f32 %v1510, %v1320
        %v1512 = vadd.f32 %v1511, %v1321
        %v1513 = vadd.f32 %v1512, %v1322
        %v1514 = vadd.f32 %v1513, %v1323
        %v1515 = vadd.f32 %v1514, %v1324
        %v1516 = vadd.f32 %v1515, %v1325
        %v1517 = vadd.f32 %v1516, %v1326
        %v1518 = vadd.f32 %v1517, %v1327
        %v1519 = vadd.f32 %v1518, %v1328
        %v1520 = vadd.f32 %v1519, %v1329
        %v1521 = vadd.f32 %v1520, %v1330
        %v1522 = vadd.f32 %v1521, %v1331
        %v1523 = vadd.f32 %v1522, %v1332
        %v1524 = vadd.f32 %v1523, %v1333
        %v1525 = vadd.f32 %v1524, %v1334
        %v1526 = vadd.f32 %v1525, %v1335
        %v1527 = vadd.f32 %v1526, %v1336
        %v1528 = vadd.f32 %v1527, %v1337
        %v1529 = vadd.f32 %v1528, %v1338
        %v1530 = vadd.f32 %v1529, %v1339
        %v1531 = vadd.f32 %v1530, %v1340
        %v1532 = vadd.f32 %v1531, %v1341
        %v1533 = vadd.f32 %v1532, %v1342
        %v1534 = vadd.f32 %v1533, %v1343
        %v1535 = vadd.f32 %v1534, %v1344
        %v1536 = vadd.f32 %v1535, %v1345
        %v1537 = vadd.f32 %v1536, %v1346
        %v1538 = vadd.f32 %v1537, %v1347
        %v1539 = vadd.f32 %v1538, %v1348
        %v1540 = vadd.f32 %v1539, %v1349
        %v1541 = vadd.f32 %v1540, %v1350
        %v1542 = vadd.f32 %v1541, %v1351
        %v1543 = vadd.f32 %v1542, %v1352
        %v1544 = vadd.f32 %v1543, %v1353
        %v1545 = vadd.f32 %v1544, %v1354
        %v1546 = vadd.f32 %v1545, %v1355
        %v1547 = vadd.f32 %v1546, %v1356
        %v1548 = vadd.f32 %v1547, %v1357
        %v1549 = vadd.f32 %v1548, %v1358
        %v1550 = vadd.f32 %v1549, %v1359
        %v1551 = vadd.f32 %v1550, %v1360
        %v1552 = vadd.f32 %v1551, %v1361
        %v1553 = vadd.f32 %v1552, %v1362
        %v1554 = vadd.f32 %v1553, %v1363
        %v1555 = vadd.f32 %v1554, %v1364
        %v1556 = vadd.f32 %v1555, %v1365
        %v1557 = vadd.f32 %v1556, %v1366
        %v1558 = vadd.f32 %v1557, %v1367
        %v1559 = vadd.f32 %v1558, %v1368
        %v1560 = vadd.f32 %v1559, %v1369
        %v1561 = vadd.f32 %v1560, %v1370
        %v1562 = vadd.f32 %v1561, %v1371
        %v1563 = vadd.f32 %v1562, %v1372
        %v1564 = vadd.f32 %v1563, %v1373
        %v1565 = vadd.f32 %v1564, %v1374
        %v1566 = vadd.f32 %v1565, %v1375
        %v1567 = vadd.f32 %v1566, %v1376
        %v1568 = vadd.f32 %v1567, %v1377
        %v1569 = vadd.f32 %v1568, %v1378
        %v1570 = vadd.f32 %v1569, %v1379
        %v1571 = vadd.f32 %v1570, %v1380
        %v1572 = vadd.f32 %v1571, %v1381
        %v1573 = vadd.f32 %v1572, %v1382
        %v1574 = vadd.f32 %v1573, %v1383
        %v1575 = vadd.f32 %v1574, %v1384
        %v1576 = vadd.f32 %v1575, %v1385
        %v1577 = vadd.f32 %v1576, %v1386
        %v1578 = vadd.f32 %v1577, %v1387
        %v1579 = vadd.f32 %v1578, %v1388
        %v1580 = vadd.f32 %v1579, %v1389
        %v1581 = vadd.f32 %v1580, %v1390
        %v1582 = vadd.f32 %v1581, %v1391
        %v1583 = vadd.f32 %v1582, %v1392
        %v1584 = vadd.f32 %v1583, %v1393
        %v1585 = vadd.f32 %v1584, %v1394
        %v1586 = vadd.f32 %v1585, %v1395
        %v1587 = vadd.f32 %v1586, %v1396
        %v1588 = vadd.f32 %v1587, %v1397
        %v1589 = vadd.f32 %v1588, %v1398
        %v1590 = vadd.f32 %v1589, %v1399
        %v1591 = vrot.slane %v1590, 4
        %v1592 = vadd.f32 %v1590, %v1591
        %v1593 = vrot.slane %v1592, 2
        %v1594 = vadd.f32 %v1592, %v1593
        %v1595 = vrot.slane %v1594, 1
        %v1596 = vadd.f32 %v1594, %v1595
        %v1597 = vadd.f32 %v1400, %v1401
        %v1598 = vadd.f32 %v1597, %v1402
        %v1599 = vadd.f32 %v1598, %v1403
        %v1600 = vadd.f32 %v1599, %v1404
        %v1601 = vadd.f32 %v1600, %v1405
        %v1602 = vadd.f32 %v1601, %v1406
        %v1603 = vadd.f32 %v1602, %v1407
        %v1604 = vadd.f32 %v1603, %v1408
        %v1605 = vadd.f32 %v1604, %v1409
        %v1606 = vadd.f32 %v1605, %v1410
        %v1607 = vadd.f32 %v1606, %v1411
        %v1608 = vadd.f32 %v1607, %v1412
        %v1609 = vadd.f32 %v1608, %v1413
        %v1610 = vadd.f32 %v1609, %v1414
        %v1611 = vadd.f32 %v1610, %v1415
        %v1612 = vadd.f32 %v1611, %v1416
        %v1613 = vadd.f32 %v1612, %v1417
        %v1614 = vadd.f32 %v1613, %v1418
        %v1615 = vadd.f32 %v1614, %v1419
        %v1616 = vadd.f32 %v1615, %v1420
        %v1617 = vadd.f32 %v1616, %v1421
        %v1618 = vadd.f32 %v1617, %v1422
        %v1619 = vadd.f32 %v1618, %v1423
        %v1620 = vadd.f32 %v1619, %v1424
        %v1621 = vadd.f32 %v1620, %v1425
        %v1622 = vadd.f32 %v1621, %v1426
        %v1623 = vadd.f32 %v1622, %v1427
        %v1624 = vadd.f32 %v1623, %v1428
        %v1625 = vadd.f32 %v1624, %v1429
        %v1626 = vadd.f32 %v1625, %v1430
        %v1627 = vadd.f32 %v1626, %v1431
        %v1628 = vadd.f32 %v1627, %v1432
        %v1629 = vadd.f32 %v1628, %v1433
        %v1630 = vadd.f32 %v1629, %v1434
        %v1631 = vadd.f32 %v1630, %v1435
        %v1632 = vadd.f32 %v1631, %v1436
        %v1633 = vadd.f32 %v1632, %v1437
        %v1634 = vadd.f32 %v1633, %v1438
        %v1635 = vadd.f32 %v1634, %v1439
        %v1636 = vadd.f32 %v1635, %v1440
        %v1637 = vadd.f32 %v1636, %v1441
        %v1638 = vadd.f32 %v1637, %v1442
        %v1639 = vadd.f32 %v1638, %v1443
        %v1640 = vadd.f32 %v1639, %v1444
        %v1641 = vadd.f32 %v1640, %v1445
        %v1642 = vadd.f32 %v1641, %v1446
        %v1643 = vadd.f32 %v1642, %v1447
        %v1644 = vadd.f32 %v1643, %v1448
        %v1645 = vadd.f32 %v1644, %v1449
        %v1646 = vadd.f32 %v1645, %v1450
        %v1647 = vadd.f32 %v1646, %v1451
        %v1648 = vadd.f32 %v1647, %v1452
        %v1649 = vadd.f32 %v1648, %v1453
        %v1650 = vadd.f32 %v1649, %v1454
        %v1651 = vadd.f32 %v1650, %v1455
        %v1652 = vadd.f32 %v1651, %v1456
        %v1653 = vadd.f32 %v1652, %v1457
        %v1654 = vadd.f32 %v1653, %v1458
        %v1655 = vadd.f32 %v1654, %v1459
        %v1656 = vadd.f32 %v1655, %v1460
        %v1657 = vadd.f32 %v1656, %v1461
        %v1658 = vadd.f32 %v1657, %v1462
        %v1659 = vadd.f32 %v1658, %v1463
        %v1660 = vadd.f32 %v1659, %v1464
        %v1661 = vadd.f32 %v1660, %v1465
        %v1662 = vadd.f32 %v1661, %v1466
        %v1663 = vadd.f32 %v1662, %v1467
        %v1664 = vadd.f32 %v1663, %v1468
        %v1665 = vadd.f32 %v1664, %v1469
        %v1666 = vadd.f32 %v1665, %v1470
        %v1667 = vadd.f32 %v1666, %v1471
        %v1668 = vadd.f32 %v1667, %v1472
        %v1669 = vadd.f32 %v1668, %v1473
        %v1670 = vadd.f32 %v1669, %v1474
        %v1671 = vadd.f32 %v1670, %v1475
        %v1672 = vadd.f32 %v1671, %v1476
        %v1673 = vadd.f32 %v1672, %v1477
        %v1674 = vadd.f32 %v1673, %v1478
        %v1675 = vadd.f32 %v1674, %v1479
        %v1676 = vadd.f32 %v1675, %v1480
        %v1677 = vadd.f32 %v1676, %v1481
        %v1678 = vadd.f32 %v1677, %v1482
        %v1679 = vadd.f32 %v1678, %v1483
        %v1680 = vadd.f32 %v1679, %v1484
        %v1681 = vadd.f32 %v1680, %v1485
        %v1682 = vadd.f32 %v1681, %v1486
        %v1683 = vadd.f32 %v1682, %v1487
        %v1684 = vadd.f32 %v1683, %v1488
        %v1685 = vadd.f32 %v1684, %v1489
        %v1686 = vadd.f32 %v1685, %v1490
        %v1687 = vadd.f32 %v1686, %v1491
        %v1688 = vadd.f32 %v1687, %v1492
        %v1689 = vadd.f32 %v1688, %v1493
        %v1690 = vadd.f32 %v1689, %v1494
        %v1691 = vadd.f32 %v1690, %v1495
        %v1692 = vrot.slane %v1691, 4
        %v1693 = vadd.f32 %v1691, %v1692
        %v1694 = vrot.slane %v1693, 2
        %v1695 = vadd.f32 %v1693, %v1694
        %v1696 = vrot.slane %v1695, 1
        %v1697 = vadd.f32 %v1695, %v1696
        %v1700 = vsel %vm1104, %v1697, %v1596
        %v1702 = vadd.f32 %v1303, %v1700
        %1703 = vst [vmem:[%s1302] sm:$0x3] %v1702
        %s1704 = scalar_lea.vmem %s276, 768 [#allocation6]
        %v1705 = vld [vmem:[%s1704] sm:$0xf]
        %v1706 = vld [vmem:[%s1704 + $0x4] sm:$0xf]
        %v1707 = vld [vmem:[%s1704 + $0x8] sm:$0xf]
        %v1708 = vld [vmem:[%s1704 + $0xc] sm:$0xf]
        %v1709 = vld [vmem:[%s1704 + $0x10] sm:$0xf]
        %v1710 = vld [vmem:[%s1704 + $0x14] sm:$0xf]
        %v1711 = vld [vmem:[%s1704 + $0x18] sm:$0xf]
        %v1712 = vld [vmem:[%s1704 + $0x1c] sm:$0xf]
        %v1713 = vld [vmem:[%s1704 + $0x20] sm:$0xf]
        %v1714 = vld [vmem:[%s1704 + $0x24] sm:$0xf]
        %v1715 = vld [vmem:[%s1704 + $0x28] sm:$0xf]
        %v1716 = vld [vmem:[%s1704 + $0x2c] sm:$0xf]
        %v1717 = vld [vmem:[%s1704 + $0x30] sm:$0xf]
        %v1718 = vld [vmem:[%s1704 + $0x34] sm:$0xf]
        %v1719 = vld [vmem:[%s1704 + $0x38] sm:$0xf]
        %v1720 = vld [vmem:[%s1704 + $0x3c] sm:$0xf]
        %v1721 = vld [vmem:[%s1704 + $0x40] sm:$0xf]
        %v1722 = vld [vmem:[%s1704 + $0x44] sm:$0xf]
        %v1723 = vld [vmem:[%s1704 + $0x48] sm:$0xf]
        %v1724 = vld [vmem:[%s1704 + $0x4c] sm:$0xf]
        %v1725 = vld [vmem:[%s1704 + $0x50] sm:$0xf]
        %v1726 = vld [vmem:[%s1704 + $0x54] sm:$0xf]
        %v1727 = vld [vmem:[%s1704 + $0x58] sm:$0xf]
        %v1728 = vld [vmem:[%s1704 + $0x5c] sm:$0xf]
        %v1729 = vld [vmem:[%s1704 + $0x60] sm:$0xf]
        %v1730 = vld [vmem:[%s1704 + $0x64] sm:$0xf]
        %v1731 = vld [vmem:[%s1704 + $0x68] sm:$0xf]
        %v1732 = vld [vmem:[%s1704 + $0x6c] sm:$0xf]
        %v1733 = vld [vmem:[%s1704 + $0x70] sm:$0xf]
        %v1734 = vld [vmem:[%s1704 + $0x74] sm:$0xf]
        %v1735 = vld [vmem:[%s1704 + $0x78] sm:$0xf]
        %v1736 = vld [vmem:[%s1704 + $0x7c] sm:$0xf]
        %v1737 = vld [vmem:[%s1704 + $0x80] sm:$0xf]
        %v1738 = vld [vmem:[%s1704 + $0x84] sm:$0xf]
        %v1739 = vld [vmem:[%s1704 + $0x88] sm:$0xf]
        %v1740 = vld [vmem:[%s1704 + $0x8c] sm:$0xf]
        %v1741 = vld [vmem:[%s1704 + $0x90] sm:$0xf]
        %v1742 = vld [vmem:[%s1704 + $0x94] sm:$0xf]
        %v1743 = vld [vmem:[%s1704 + $0x98] sm:$0xf]
        %v1744 = vld [vmem:[%s1704 + $0x9c] sm:$0xf]
        %v1745 = vld [vmem:[%s1704 + $0xa0] sm:$0xf]
        %v1746 = vld [vmem:[%s1704 + $0xa4] sm:$0xf]
        %v1747 = vld [vmem:[%s1704 + $0xa8] sm:$0xf]
        %v1748 = vld [vmem:[%s1704 + $0xac] sm:$0xf]
        %v1749 = vld [vmem:[%s1704 + $0xb0] sm:$0xf]
        %v1750 = vld [vmem:[%s1704 + $0xb4] sm:$0xf]
        %v1751 = vld [vmem:[%s1704 + $0xb8] sm:$0xf]
        %v1752 = vld [vmem:[%s1704 + $0xbc] sm:$0xf]
        %v1753 = vld [vmem:[%s1704 + $0xc0] sm:$0xf]
        %v1754 = vld [vmem:[%s1704 + $0xc4] sm:$0xf]
        %v1755 = vld [vmem:[%s1704 + $0xc8] sm:$0xf]
        %v1756 = vld [vmem:[%s1704 + $0xcc] sm:$0xf]
        %v1757 = vld [vmem:[%s1704 + $0xd0] sm:$0xf]
        %v1758 = vld [vmem:[%s1704 + $0xd4] sm:$0xf]
        %v1759 = vld [vmem:[%s1704 + $0xd8] sm:$0xf]
        %v1760 = vld [vmem:[%s1704 + $0xdc] sm:$0xf]
        %v1761 = vld [vmem:[%s1704 + $0xe0] sm:$0xf]
        %v1762 = vld [vmem:[%s1704 + $0xe4] sm:$0xf]
        %v1763 = vld [vmem:[%s1704 + $0xe8] sm:$0xf]
        %v1764 = vld [vmem:[%s1704 + $0xec] sm:$0xf]
        %v1765 = vld [vmem:[%s1704 + $0xf0] sm:$0xf]
        %v1766 = vld [vmem:[%s1704 + $0xf4] sm:$0xf]
        %v1767 = vld [vmem:[%s1704 + $0xf8] sm:$0xf]
        %v1768 = vld [vmem:[%s1704 + $0xfc] sm:$0xf]
        %v1769 = vld [vmem:[%s1704 + $0x100] sm:$0xf]
        %v1770 = vld [vmem:[%s1704 + $0x104] sm:$0xf]
        %v1771 = vld [vmem:[%s1704 + $0x108] sm:$0xf]
        %v1772 = vld [vmem:[%s1704 + $0x10c] sm:$0xf]
        %v1773 = vld [vmem:[%s1704 + $0x110] sm:$0xf]
        %v1774 = vld [vmem:[%s1704 + $0x114] sm:$0xf]
        %v1775 = vld [vmem:[%s1704 + $0x118] sm:$0xf]
        %v1776 = vld [vmem:[%s1704 + $0x11c] sm:$0xf]
        %v1777 = vld [vmem:[%s1704 + $0x120] sm:$0xf]
        %v1778 = vld [vmem:[%s1704 + $0x124] sm:$0xf]
        %v1779 = vld [vmem:[%s1704 + $0x128] sm:$0xf]
        %v1780 = vld [vmem:[%s1704 + $0x12c] sm:$0xf]
        %v1781 = vld [vmem:[%s1704 + $0x130] sm:$0xf]
        %v1782 = vld [vmem:[%s1704 + $0x134] sm:$0xf]
        %v1783 = vld [vmem:[%s1704 + $0x138] sm:$0xf]
        %v1784 = vld [vmem:[%s1704 + $0x13c] sm:$0xf]
        %v1785 = vld [vmem:[%s1704 + $0x140] sm:$0xf]
        %v1786 = vld [vmem:[%s1704 + $0x144] sm:$0xf]
        %v1787 = vld [vmem:[%s1704 + $0x148] sm:$0xf]
        %v1788 = vld [vmem:[%s1704 + $0x14c] sm:$0xf]
        %v1789 = vld [vmem:[%s1704 + $0x150] sm:$0xf]
        %v1790 = vld [vmem:[%s1704 + $0x154] sm:$0xf]
        %v1791 = vld [vmem:[%s1704 + $0x158] sm:$0xf]
        %v1792 = vld [vmem:[%s1704 + $0x15c] sm:$0xf]
        %v1793 = vld [vmem:[%s1704 + $0x160] sm:$0xf]
        %v1794 = vld [vmem:[%s1704 + $0x164] sm:$0xf]
        %v1795 = vld [vmem:[%s1704 + $0x168] sm:$0xf]
        %v1796 = vld [vmem:[%s1704 + $0x16c] sm:$0xf]
        %v1797 = vld [vmem:[%s1704 + $0x170] sm:$0xf]
        %v1798 = vld [vmem:[%s1704 + $0x174] sm:$0xf]
        %v1799 = vld [vmem:[%s1704 + $0x178] sm:$0xf]
        %v1800 = vld [vmem:[%s1704 + $0x17c] sm:$0xf]
        %v1801 = vunpack.c.l.bf16 %v1705
        %v1802 = vunpack.c.l.bf16 %v1706
        %v1803 = vunpack.c.l.bf16 %v1707
        %v1804 = vunpack.c.l.bf16 %v1708
        %v1805 = vunpack.c.l.bf16 %v1709
        %v1806 = vunpack.c.l.bf16 %v1710
        %v1807 = vunpack.c.l.bf16 %v1711
        %v1808 = vunpack.c.l.bf16 %v1712
        %v1809 = vunpack.c.l.bf16 %v1713
        %v1810 = vunpack.c.l.bf16 %v1714
        %v1811 = vunpack.c.l.bf16 %v1715
        %v1812 = vunpack.c.l.bf16 %v1716
        %v1813 = vunpack.c.l.bf16 %v1717
        %v1814 = vunpack.c.l.bf16 %v1718
        %v1815 = vunpack.c.l.bf16 %v1719
        %v1816 = vunpack.c.l.bf16 %v1720
        %v1817 = vunpack.c.l.bf16 %v1721
        %v1818 = vunpack.c.l.bf16 %v1722
        %v1819 = vunpack.c.l.bf16 %v1723
        %v1820 = vunpack.c.l.bf16 %v1724
        %v1821 = vunpack.c.l.bf16 %v1725
        %v1822 = vunpack.c.l.bf16 %v1726
        %v1823 = vunpack.c.l.bf16 %v1727
        %v1824 = vunpack.c.l.bf16 %v1728
        %v1825 = vunpack.c.l.bf16 %v1729
        %v1826 = vunpack.c.l.bf16 %v1730
        %v1827 = vunpack.c.l.bf16 %v1731
        %v1828 = vunpack.c.l.bf16 %v1732
        %v1829 = vunpack.c.l.bf16 %v1733
        %v1830 = vunpack.c.l.bf16 %v1734
        %v1831 = vunpack.c.l.bf16 %v1735
        %v1832 = vunpack.c.l.bf16 %v1736
        %v1833 = vunpack.c.l.bf16 %v1737
        %v1834 = vunpack.c.l.bf16 %v1738
        %v1835 = vunpack.c.l.bf16 %v1739
        %v1836 = vunpack.c.l.bf16 %v1740
        %v1837 = vunpack.c.l.bf16 %v1741
        %v1838 = vunpack.c.l.bf16 %v1742
        %v1839 = vunpack.c.l.bf16 %v1743
        %v1840 = vunpack.c.l.bf16 %v1744
        %v1841 = vunpack.c.l.bf16 %v1745
        %v1842 = vunpack.c.l.bf16 %v1746
        %v1843 = vunpack.c.l.bf16 %v1747
        %v1844 = vunpack.c.l.bf16 %v1748
        %v1845 = vunpack.c.l.bf16 %v1749
        %v1846 = vunpack.c.l.bf16 %v1750
        %v1847 = vunpack.c.l.bf16 %v1751
        %v1848 = vunpack.c.l.bf16 %v1752
        %v1849 = vunpack.c.l.bf16 %v1753
        %v1850 = vunpack.c.l.bf16 %v1754
        %v1851 = vunpack.c.l.bf16 %v1755
        %v1852 = vunpack.c.l.bf16 %v1756
        %v1853 = vunpack.c.l.bf16 %v1757
        %v1854 = vunpack.c.l.bf16 %v1758
        %v1855 = vunpack.c.l.bf16 %v1759
        %v1856 = vunpack.c.l.bf16 %v1760
        %v1857 = vunpack.c.l.bf16 %v1761
        %v1858 = vunpack.c.l.bf16 %v1762
        %v1859 = vunpack.c.l.bf16 %v1763
        %v1860 = vunpack.c.l.bf16 %v1764
        %v1861 = vunpack.c.l.bf16 %v1765
        %v1862 = vunpack.c.l.bf16 %v1766
        %v1863 = vunpack.c.l.bf16 %v1767
        %v1864 = vunpack.c.l.bf16 %v1768
        %v1865 = vunpack.c.l.bf16 %v1769
        %v1866 = vunpack.c.l.bf16 %v1770
        %v1867 = vunpack.c.l.bf16 %v1771
        %v1868 = vunpack.c.l.bf16 %v1772
        %v1869 = vunpack.c.l.bf16 %v1773
        %v1870 = vunpack.c.l.bf16 %v1774
        %v1871 = vunpack.c.l.bf16 %v1775
        %v1872 = vunpack.c.l.bf16 %v1776
        %v1873 = vunpack.c.l.bf16 %v1777
        %v1874 = vunpack.c.l.bf16 %v1778
        %v1875 = vunpack.c.l.bf16 %v1779
        %v1876 = vunpack.c.l.bf16 %v1780
        %v1877 = vunpack.c.l.bf16 %v1781
        %v1878 = vunpack.c.l.bf16 %v1782
        %v1879 = vunpack.c.l.bf16 %v1783
        %v1880 = vunpack.c.l.bf16 %v1784
        %v1881 = vunpack.c.l.bf16 %v1785
        %v1882 = vunpack.c.l.bf16 %v1786
        %v1883 = vunpack.c.l.bf16 %v1787
        %v1884 = vunpack.c.l.bf16 %v1788
        %v1885 = vunpack.c.l.bf16 %v1789
        %v1886 = vunpack.c.l.bf16 %v1790
        %v1887 = vunpack.c.l.bf16 %v1791
        %v1888 = vunpack.c.l.bf16 %v1792
        %v1889 = vunpack.c.l.bf16 %v1793
        %v1890 = vunpack.c.l.bf16 %v1794
        %v1891 = vunpack.c.l.bf16 %v1795
        %v1892 = vunpack.c.l.bf16 %v1796
        %v1893 = vunpack.c.l.bf16 %v1797
        %v1894 = vunpack.c.l.bf16 %v1798
        %v1895 = vunpack.c.l.bf16 %v1799
        %v1896 = vunpack.c.l.bf16 %v1800
        %s1897 = scalar_lea.vmem [#allocation2], 4
        %v1898 = vld [vmem:[%s1897] sm:$0x3]
        %v1899 = vmul.f32 %v323, %v1801
        %v1900 = vmul.f32 %v324, %v1802
        %v1901 = vmul.f32 %v325, %v1803
        %v1902 = vmul.f32 %v326, %v1804
        %v1903 = vmul.f32 %v327, %v1805
        %v1904 = vmul.f32 %v328, %v1806
        %v1905 = vmul.f32 %v329, %v1807
        %v1906 = vmul.f32 %v330, %v1808
        %v1907 = vmul.f32 %v331, %v1809
        %v1908 = vmul.f32 %v332, %v1810
        %v1909 = vmul.f32 %v333, %v1811
        %v1910 = vmul.f32 %v334, %v1812
        %v1911 = vmul.f32 %v335, %v1813
        %v1912 = vmul.f32 %v336, %v1814
        %v1913 = vmul.f32 %v337, %v1815
        %v1914 = vmul.f32 %v338, %v1816
        %v1915 = vmul.f32 %v339, %v1817
        %v1916 = vmul.f32 %v340, %v1818
        %v1917 = vmul.f32 %v341, %v1819
        %v1918 = vmul.f32 %v342, %v1820
        %v1919 = vmul.f32 %v343, %v1821
        %v1920 = vmul.f32 %v344, %v1822
        %v1921 = vmul.f32 %v345, %v1823
        %v1922 = vmul.f32 %v346, %v1824
        %v1923 = vmul.f32 %v347, %v1825
        %v1924 = vmul.f32 %v348, %v1826
        %v1925 = vmul.f32 %v349, %v1827
        %v1926 = vmul.f32 %v350, %v1828
        %v1927 = vmul.f32 %v351, %v1829
        %v1928 = vmul.f32 %v352, %v1830
        %v1929 = vmul.f32 %v353, %v1831
        %v1930 = vmul.f32 %v354, %v1832
        %v1931 = vmul.f32 %v355, %v1833
        %v1932 = vmul.f32 %v356, %v1834
        %v1933 = vmul.f32 %v357, %v1835
        %v1934 = vmul.f32 %v358, %v1836
        %v1935 = vmul.f32 %v359, %v1837
        %v1936 = vmul.f32 %v360, %v1838
        %v1937 = vmul.f32 %v361, %v1839
        %v1938 = vmul.f32 %v362, %v1840
        %v1939 = vmul.f32 %v363, %v1841
        %v1940 = vmul.f32 %v364, %v1842
        %v1941 = vmul.f32 %v365, %v1843
        %v1942 = vmul.f32 %v366, %v1844
        %v1943 = vmul.f32 %v367, %v1845
        %v1944 = vmul.f32 %v368, %v1846
        %v1945 = vmul.f32 %v369, %v1847
        %v1946 = vmul.f32 %v370, %v1848
        %v1947 = vmul.f32 %v371, %v1849
        %v1948 = vmul.f32 %v372, %v1850
        %v1949 = vmul.f32 %v373, %v1851
        %v1950 = vmul.f32 %v374, %v1852
        %v1951 = vmul.f32 %v375, %v1853
        %v1952 = vmul.f32 %v376, %v1854
        %v1953 = vmul.f32 %v377, %v1855
        %v1954 = vmul.f32 %v378, %v1856
        %v1955 = vmul.f32 %v379, %v1857
        %v1956 = vmul.f32 %v380, %v1858
        %v1957 = vmul.f32 %v381, %v1859
        %v1958 = vmul.f32 %v382, %v1860
        %v1959 = vmul.f32 %v383, %v1861
        %v1960 = vmul.f32 %v384, %v1862
        %v1961 = vmul.f32 %v385, %v1863
        %v1962 = vmul.f32 %v386, %v1864
        %v1963 = vmul.f32 %v387, %v1865
        %v1964 = vmul.f32 %v388, %v1866
        %v1965 = vmul.f32 %v389, %v1867
        %v1966 = vmul.f32 %v390, %v1868
        %v1967 = vmul.f32 %v391, %v1869
        %v1968 = vmul.f32 %v392, %v1870
        %v1969 = vmul.f32 %v393, %v1871
        %v1970 = vmul.f32 %v394, %v1872
        %v1971 = vmul.f32 %v395, %v1873
        %v1972 = vmul.f32 %v396, %v1874
        %v1973 = vmul.f32 %v397, %v1875
        %v1974 = vmul.f32 %v398, %v1876
        %v1975 = vmul.f32 %v399, %v1877
        %v1976 = vmul.f32 %v400, %v1878
        %v1977 = vmul.f32 %v401, %v1879
        %v1978 = vmul.f32 %v402, %v1880
        %v1979 = vmul.f32 %v403, %v1881
        %v1980 = vmul.f32 %v404, %v1882
        %v1981 = vmul.f32 %v405, %v1883
        %v1982 = vmul.f32 %v406, %v1884
        %v1983 = vmul.f32 %v407, %v1885
        %v1984 = vmul.f32 %v408, %v1886
        %v1985 = vmul.f32 %v409, %v1887
        %v1986 = vmul.f32 %v410, %v1888
        %v1987 = vmul.f32 %v411, %v1889
        %v1988 = vmul.f32 %v412, %v1890
        %v1989 = vmul.f32 %v413, %v1891
        %v1990 = vmul.f32 %v414, %v1892
        %v1991 = vmul.f32 %v415, %v1893
        %v1992 = vmul.f32 %v416, %v1894
        %v1993 = vmul.f32 %v417, %v1895
        %v1994 = vmul.f32 %v418, %v1896
        %v1995 = vmul.f32 %v419, %v1801
        %v1996 = vmul.f32 %v420, %v1802
        %v1997 = vmul.f32 %v421, %v1803
        %v1998 = vmul.f32 %v422, %v1804
        %v1999 = vmul.f32 %v423, %v1805
        %v2000 = vmul.f32 %v424, %v1806
        %v2001 = vmul.f32 %v425, %v1807
        %v2002 = vmul.f32 %v426, %v1808
        %v2003 = vmul.f32 %v427, %v1809
        %v2004 = vmul.f32 %v428, %v1810
        %v2005 = vmul.f32 %v429, %v1811
        %v2006 = vmul.f32 %v430, %v1812
        %v2007 = vmul.f32 %v431, %v1813
        %v2008 = vmul.f32 %v432, %v1814
        %v2009 = vmul.f32 %v433, %v1815
        %v2010 = vmul.f32 %v434, %v1816
        %v2011 = vmul.f32 %v435, %v1817
        %v2012 = vmul.f32 %v436, %v1818
        %v2013 = vmul.f32 %v437, %v1819
        %v2014 = vmul.f32 %v438, %v1820
        %v2015 = vmul.f32 %v439, %v1821
        %v2016 = vmul.f32 %v440, %v1822
        %v2017 = vmul.f32 %v441, %v1823
        %v2018 = vmul.f32 %v442, %v1824
        %v2019 = vmul.f32 %v443, %v1825
        %v2020 = vmul.f32 %v444, %v1826
        %v2021 = vmul.f32 %v445, %v1827
        %v2022 = vmul.f32 %v446, %v1828
        %v2023 = vmul.f32 %v447, %v1829
        %v2024 = vmul.f32 %v448, %v1830
        %v2025 = vmul.f32 %v449, %v1831
        %v2026 = vmul.f32 %v450, %v1832
        %v2027 = vmul.f32 %v451, %v1833
        %v2028 = vmul.f32 %v452, %v1834
        %v2029 = vmul.f32 %v453, %v1835
        %v2030 = vmul.f32 %v454, %v1836
        %v2031 = vmul.f32 %v455, %v1837
        %v2032 = vmul.f32 %v456, %v1838
        %v2033 = vmul.f32 %v457, %v1839
        %v2034 = vmul.f32 %v458, %v1840
        %v2035 = vmul.f32 %v459, %v1841
        %v2036 = vmul.f32 %v460, %v1842
        %v2037 = vmul.f32 %v461, %v1843
        %v2038 = vmul.f32 %v462, %v1844
        %v2039 = vmul.f32 %v463, %v1845
        %v2040 = vmul.f32 %v464, %v1846
        %v2041 = vmul.f32 %v465, %v1847
        %v2042 = vmul.f32 %v466, %v1848
        %v2043 = vmul.f32 %v467, %v1849
        %v2044 = vmul.f32 %v468, %v1850
        %v2045 = vmul.f32 %v469, %v1851
        %v2046 = vmul.f32 %v470, %v1852
        %v2047 = vmul.f32 %v471, %v1853
        %v2048 = vmul.f32 %v472, %v1854
        %v2049 = vmul.f32 %v473, %v1855
        %v2050 = vmul.f32 %v474, %v1856
        %v2051 = vmul.f32 %v475, %v1857
        %v2052 = vmul.f32 %v476, %v1858
        %v2053 = vmul.f32 %v477, %v1859
        %v2054 = vmul.f32 %v478, %v1860
        %v2055 = vmul.f32 %v479, %v1861
        %v2056 = vmul.f32 %v480, %v1862
        %v2057 = vmul.f32 %v481, %v1863
        %v2058 = vmul.f32 %v482, %v1864
        %v2059 = vmul.f32 %v483, %v1865
        %v2060 = vmul.f32 %v484, %v1866
        %v2061 = vmul.f32 %v485, %v1867
        %v2062 = vmul.f32 %v486, %v1868
        %v2063 = vmul.f32 %v487, %v1869
        %v2064 = vmul.f32 %v488, %v1870
        %v2065 = vmul.f32 %v489, %v1871
        %v2066 = vmul.f32 %v490, %v1872
        %v2067 = vmul.f32 %v491, %v1873
        %v2068 = vmul.f32 %v492, %v1874
        %v2069 = vmul.f32 %v493, %v1875
        %v2070 = vmul.f32 %v494, %v1876
        %v2071 = vmul.f32 %v495, %v1877
        %v2072 = vmul.f32 %v496, %v1878
        %v2073 = vmul.f32 %v497, %v1879
        %v2074 = vmul.f32 %v498, %v1880
        %v2075 = vmul.f32 %v499, %v1881
        %v2076 = vmul.f32 %v500, %v1882
        %v2077 = vmul.f32 %v501, %v1883
        %v2078 = vmul.f32 %v502, %v1884
        %v2079 = vmul.f32 %v503, %v1885
        %v2080 = vmul.f32 %v504, %v1886
        %v2081 = vmul.f32 %v505, %v1887
        %v2082 = vmul.f32 %v506, %v1888
        %v2083 = vmul.f32 %v507, %v1889
        %v2084 = vmul.f32 %v508, %v1890
        %v2085 = vmul.f32 %v509, %v1891
        %v2086 = vmul.f32 %v510, %v1892
        %v2087 = vmul.f32 %v511, %v1893
        %v2088 = vmul.f32 %v512, %v1894
        %v2089 = vmul.f32 %v513, %v1895
        %v2090 = vmul.f32 %v514, %v1896
        %v2091 = vadd.f32 %v1899, %v1900
        %v2092 = vadd.f32 %v2091, %v1901
        %v2093 = vadd.f32 %v2092, %v1902
        %v2094 = vadd.f32 %v2093, %v1903
        %v2095 = vadd.f32 %v2094, %v1904
        %v2096 = vadd.f32 %v2095, %v1905
        %v2097 = vadd.f32 %v2096, %v1906
        %v2098 = vadd.f32 %v2097, %v1907
        %v2099 = vadd.f32 %v2098, %v1908
        %v2100 = vadd.f32 %v2099, %v1909
        %v2101 = vadd.f32 %v2100, %v1910
        %v2102 = vadd.f32 %v2101, %v1911
        %v2103 = vadd.f32 %v2102, %v1912
        %v2104 = vadd.f32 %v2103, %v1913
        %v2105 = vadd.f32 %v2104, %v1914
        %v2106 = vadd.f32 %v2105, %v1915
        %v2107 = vadd.f32 %v2106, %v1916
        %v2108 = vadd.f32 %v2107, %v1917
        %v2109 = vadd.f32 %v2108, %v1918
        %v2110 = vadd.f32 %v2109, %v1919
        %v2111 = vadd.f32 %v2110, %v1920
        %v2112 = vadd.f32 %v2111, %v1921
        %v2113 = vadd.f32 %v2112, %v1922
        %v2114 = vadd.f32 %v2113, %v1923
        %v2115 = vadd.f32 %v2114, %v1924
        %v2116 = vadd.f32 %v2115, %v1925
        %v2117 = vadd.f32 %v2116, %v1926
        %v2118 = vadd.f32 %v2117, %v1927
        %v2119 = vadd.f32 %v2118, %v1928
        %v2120 = vadd.f32 %v2119, %v1929
        %v2121 = vadd.f32 %v2120, %v1930
        %v2122 = vadd.f32 %v2121, %v1931
        %v2123 = vadd.f32 %v2122, %v1932
        %v2124 = vadd.f32 %v2123, %v1933
        %v2125 = vadd.f32 %v2124, %v1934
        %v2126 = vadd.f32 %v2125, %v1935
        %v2127 = vadd.f32 %v2126, %v1936
        %v2128 = vadd.f32 %v2127, %v1937
        %v2129 = vadd.f32 %v2128, %v1938
        %v2130 = vadd.f32 %v2129, %v1939
        %v2131 = vadd.f32 %v2130, %v1940
        %v2132 = vadd.f32 %v2131, %v1941
        %v2133 = vadd.f32 %v2132, %v1942
        %v2134 = vadd.f32 %v2133, %v1943
        %v2135 = vadd.f32 %v2134, %v1944
        %v2136 = vadd.f32 %v2135, %v1945
        %v2137 = vadd.f32 %v2136, %v1946
        %v2138 = vadd.f32 %v2137, %v1947
        %v2139 = vadd.f32 %v2138, %v1948
        %v2140 = vadd.f32 %v2139, %v1949
        %v2141 = vadd.f32 %v2140, %v1950
        %v2142 = vadd.f32 %v2141, %v1951
        %v2143 = vadd.f32 %v2142, %v1952
        %v2144 = vadd.f32 %v2143, %v1953
        %v2145 = vadd.f32 %v2144, %v1954
        %v2146 = vadd.f32 %v2145, %v1955
        %v2147 = vadd.f32 %v2146, %v1956
        %v2148 = vadd.f32 %v2147, %v1957
        %v2149 = vadd.f32 %v2148, %v1958
        %v2150 = vadd.f32 %v2149, %v1959
        %v2151 = vadd.f32 %v2150, %v1960
        %v2152 = vadd.f32 %v2151, %v1961
        %v2153 = vadd.f32 %v2152, %v1962
        %v2154 = vadd.f32 %v2153, %v1963
        %v2155 = vadd.f32 %v2154, %v1964
        %v2156 = vadd.f32 %v2155, %v1965
        %v2157 = vadd.f32 %v2156, %v1966
        %v2158 = vadd.f32 %v2157, %v1967
        %v2159 = vadd.f32 %v2158, %v1968
        %v2160 = vadd.f32 %v2159, %v1969
        %v2161 = vadd.f32 %v2160, %v1970
        %v2162 = vadd.f32 %v2161, %v1971
        %v2163 = vadd.f32 %v2162, %v1972
        %v2164 = vadd.f32 %v2163, %v1973
        %v2165 = vadd.f32 %v2164, %v1974
        %v2166 = vadd.f32 %v2165, %v1975
        %v2167 = vadd.f32 %v2166, %v1976
        %v2168 = vadd.f32 %v2167, %v1977
        %v2169 = vadd.f32 %v2168, %v1978
        %v2170 = vadd.f32 %v2169, %v1979
        %v2171 = vadd.f32 %v2170, %v1980
        %v2172 = vadd.f32 %v2171, %v1981
        %v2173 = vadd.f32 %v2172, %v1982
        %v2174 = vadd.f32 %v2173, %v1983
        %v2175 = vadd.f32 %v2174, %v1984
        %v2176 = vadd.f32 %v2175, %v1985
        %v2177 = vadd.f32 %v2176, %v1986
        %v2178 = vadd.f32 %v2177, %v1987
        %v2179 = vadd.f32 %v2178, %v1988
        %v2180 = vadd.f32 %v2179, %v1989
        %v2181 = vadd.f32 %v2180, %v1990
        %v2182 = vadd.f32 %v2181, %v1991
        %v2183 = vadd.f32 %v2182, %v1992
        %v2184 = vadd.f32 %v2183, %v1993
        %v2185 = vadd.f32 %v2184, %v1994
        %v2186 = vrot.slane %v2185, 4
        %v2187 = vadd.f32 %v2185, %v2186
        %v2188 = vrot.slane %v2187, 2
        %v2189 = vadd.f32 %v2187, %v2188
        %v2190 = vrot.slane %v2189, 1
        %v2191 = vadd.f32 %v2189, %v2190
        %v2192 = vadd.f32 %v1995, %v1996
        %v2193 = vadd.f32 %v2192, %v1997
        %v2194 = vadd.f32 %v2193, %v1998
        %v2195 = vadd.f32 %v2194, %v1999
        %v2196 = vadd.f32 %v2195, %v2000
        %v2197 = vadd.f32 %v2196, %v2001
        %v2198 = vadd.f32 %v2197, %v2002
        %v2199 = vadd.f32 %v2198, %v2003
        %v2200 = vadd.f32 %v2199, %v2004
        %v2201 = vadd.f32 %v2200, %v2005
        %v2202 = vadd.f32 %v2201, %v2006
        %v2203 = vadd.f32 %v2202, %v2007
        %v2204 = vadd.f32 %v2203, %v2008
        %v2205 = vadd.f32 %v2204, %v2009
        %v2206 = vadd.f32 %v2205, %v2010
        %v2207 = vadd.f32 %v2206, %v2011
        %v2208 = vadd.f32 %v2207, %v2012
        %v2209 = vadd.f32 %v2208, %v2013
        %v2210 = vadd.f32 %v2209, %v2014
        %v2211 = vadd.f32 %v2210, %v2015
        %v2212 = vadd.f32 %v2211, %v2016
        %v2213 = vadd.f32 %v2212, %v2017
        %v2214 = vadd.f32 %v2213, %v2018
        %v2215 = vadd.f32 %v2214, %v2019
        %v2216 = vadd.f32 %v2215, %v2020
        %v2217 = vadd.f32 %v2216, %v2021
        %v2218 = vadd.f32 %v2217, %v2022
        %v2219 = vadd.f32 %v2218, %v2023
        %v2220 = vadd.f32 %v2219, %v2024
        %v2221 = vadd.f32 %v2220, %v2025
        %v2222 = vadd.f32 %v2221, %v2026
        %v2223 = vadd.f32 %v2222, %v2027
        %v2224 = vadd.f32 %v2223, %v2028
        %v2225 = vadd.f32 %v2224, %v2029
        %v2226 = vadd.f32 %v2225, %v2030
        %v2227 = vadd.f32 %v2226, %v2031
        %v2228 = vadd.f32 %v2227, %v2032
        %v2229 = vadd.f32 %v2228, %v2033
        %v2230 = vadd.f32 %v2229, %v2034
        %v2231 = vadd.f32 %v2230, %v2035
        %v2232 = vadd.f32 %v2231, %v2036
        %v2233 = vadd.f32 %v2232, %v2037
        %v2234 = vadd.f32 %v2233, %v2038
        %v2235 = vadd.f32 %v2234, %v2039
        %v2236 = vadd.f32 %v2235, %v2040
        %v2237 = vadd.f32 %v2236, %v2041
        %v2238 = vadd.f32 %v2237, %v2042
        %v2239 = vadd.f32 %v2238, %v2043
        %v2240 = vadd.f32 %v2239, %v2044
        %v2241 = vadd.f32 %v2240, %v2045
        %v2242 = vadd.f32 %v2241, %v2046
        %v2243 = vadd.f32 %v2242, %v2047
        %v2244 = vadd.f32 %v2243, %v2048
        %v2245 = vadd.f32 %v2244, %v2049
        %v2246 = vadd.f32 %v2245, %v2050
        %v2247 = vadd.f32 %v2246, %v2051
        %v2248 = vadd.f32 %v2247, %v2052
        %v2249 = vadd.f32 %v2248, %v2053
        %v2250 = vadd.f32 %v2249, %v2054
        %v2251 = vadd.f32 %v2250, %v2055
        %v2252 = vadd.f32 %v2251, %v2056
        %v2253 = vadd.f32 %v2252, %v2057
        %v2254 = vadd.f32 %v2253, %v2058
        %v2255 = vadd.f32 %v2254, %v2059
        %v2256 = vadd.f32 %v2255, %v2060
        %v2257 = vadd.f32 %v2256, %v2061
        %v2258 = vadd.f32 %v2257, %v2062
        %v2259 = vadd.f32 %v2258, %v2063
        %v2260 = vadd.f32 %v2259, %v2064
        %v2261 = vadd.f32 %v2260, %v2065
        %v2262 = vadd.f32 %v2261, %v2066
        %v2263 = vadd.f32 %v2262, %v2067
        %v2264 = vadd.f32 %v2263, %v2068
        %v2265 = vadd.f32 %v2264, %v2069
        %v2266 = vadd.f32 %v2265, %v2070
        %v2267 = vadd.f32 %v2266, %v2071
        %v2268 = vadd.f32 %v2267, %v2072
        %v2269 = vadd.f32 %v2268, %v2073
        %v2270 = vadd.f32 %v2269, %v2074
        %v2271 = vadd.f32 %v2270, %v2075
        %v2272 = vadd.f32 %v2271, %v2076
        %v2273 = vadd.f32 %v2272, %v2077
        %v2274 = vadd.f32 %v2273, %v2078
        %v2275 = vadd.f32 %v2274, %v2079
        %v2276 = vadd.f32 %v2275, %v2080
        %v2277 = vadd.f32 %v2276, %v2081
        %v2278 = vadd.f32 %v2277, %v2082
        %v2279 = vadd.f32 %v2278, %v2083
        %v2280 = vadd.f32 %v2279, %v2084
        %v2281 = vadd.f32 %v2280, %v2085
        %v2282 = vadd.f32 %v2281, %v2086
        %v2283 = vadd.f32 %v2282, %v2087
        %v2284 = vadd.f32 %v2283, %v2088
        %v2285 = vadd.f32 %v2284, %v2089
        %v2286 = vadd.f32 %v2285, %v2090
        %v2287 = vrot.slane %v2286, 4
        %v2288 = vadd.f32 %v2286, %v2287
        %v2289 = vrot.slane %v2288, 2
        %v2290 = vadd.f32 %v2288, %v2289
        %v2291 = vrot.slane %v2290, 1
        %v2292 = vadd.f32 %v2290, %v2291
        %v2295 = vsel %vm1104, %v2292, %v2191
        %v2297 = vadd.f32 %v1898, %v2295
        %2298 = vst [vmem:[%s1897] sm:$0x3] %v2297
        %s2299 = scalar_lea.vmem %s276, 1152 [#allocation6]
        %v2300 = vld [vmem:[%s2299] sm:$0xf]
        %v2301 = vld [vmem:[%s2299 + $0x4] sm:$0xf]
        %v2302 = vld [vmem:[%s2299 + $0x8] sm:$0xf]
        %v2303 = vld [vmem:[%s2299 + $0xc] sm:$0xf]
        %v2304 = vld [vmem:[%s2299 + $0x10] sm:$0xf]
        %v2305 = vld [vmem:[%s2299 + $0x14] sm:$0xf]
        %v2306 = vld [vmem:[%s2299 + $0x18] sm:$0xf]
        %v2307 = vld [vmem:[%s2299 + $0x1c] sm:$0xf]
        %v2308 = vld [vmem:[%s2299 + $0x20] sm:$0xf]
        %v2309 = vld [vmem:[%s2299 + $0x24] sm:$0xf]
        %v2310 = vld [vmem:[%s2299 + $0x28] sm:$0xf]
        %v2311 = vld [vmem:[%s2299 + $0x2c] sm:$0xf]
        %v2312 = vld [vmem:[%s2299 + $0x30] sm:$0xf]
        %v2313 = vld [vmem:[%s2299 + $0x34] sm:$0xf]
        %v2314 = vld [vmem:[%s2299 + $0x38] sm:$0xf]
        %v2315 = vld [vmem:[%s2299 + $0x3c] sm:$0xf]
        %v2316 = vld [vmem:[%s2299 + $0x40] sm:$0xf]
        %v2317 = vld [vmem:[%s2299 + $0x44] sm:$0xf]
        %v2318 = vld [vmem:[%s2299 + $0x48] sm:$0xf]
        %v2319 = vld [vmem:[%s2299 + $0x4c] sm:$0xf]
        %v2320 = vld [vmem:[%s2299 + $0x50] sm:$0xf]
        %v2321 = vld [vmem:[%s2299 + $0x54] sm:$0xf]
        %v2322 = vld [vmem:[%s2299 + $0x58] sm:$0xf]
        %v2323 = vld [vmem:[%s2299 + $0x5c] sm:$0xf]
        %v2324 = vld [vmem:[%s2299 + $0x60] sm:$0xf]
        %v2325 = vld [vmem:[%s2299 + $0x64] sm:$0xf]
        %v2326 = vld [vmem:[%s2299 + $0x68] sm:$0xf]
        %v2327 = vld [vmem:[%s2299 + $0x6c] sm:$0xf]
        %v2328 = vld [vmem:[%s2299 + $0x70] sm:$0xf]
        %v2329 = vld [vmem:[%s2299 + $0x74] sm:$0xf]
        %v2330 = vld [vmem:[%s2299 + $0x78] sm:$0xf]
        %v2331 = vld [vmem:[%s2299 + $0x7c] sm:$0xf]
        %v2332 = vld [vmem:[%s2299 + $0x80] sm:$0xf]
        %v2333 = vld [vmem:[%s2299 + $0x84] sm:$0xf]
        %v2334 = vld [vmem:[%s2299 + $0x88] sm:$0xf]
        %v2335 = vld [vmem:[%s2299 + $0x8c] sm:$0xf]
        %v2336 = vld [vmem:[%s2299 + $0x90] sm:$0xf]
        %v2337 = vld [vmem:[%s2299 + $0x94] sm:$0xf]
        %v2338 = vld [vmem:[%s2299 + $0x98] sm:$0xf]
        %v2339 = vld [vmem:[%s2299 + $0x9c] sm:$0xf]
        %v2340 = vld [vmem:[%s2299 + $0xa0] sm:$0xf]
        %v2341 = vld [vmem:[%s2299 + $0xa4] sm:$0xf]
        %v2342 = vld [vmem:[%s2299 + $0xa8] sm:$0xf]
        %v2343 = vld [vmem:[%s2299 + $0xac] sm:$0xf]
        %v2344 = vld [vmem:[%s2299 + $0xb0] sm:$0xf]
        %v2345 = vld [vmem:[%s2299 + $0xb4] sm:$0xf]
        %v2346 = vld [vmem:[%s2299 + $0xb8] sm:$0xf]
        %v2347 = vld [vmem:[%s2299 + $0xbc] sm:$0xf]
        %v2348 = vld [vmem:[%s2299 + $0xc0] sm:$0xf]
        %v2349 = vld [vmem:[%s2299 + $0xc4] sm:$0xf]
        %v2350 = vld [vmem:[%s2299 + $0xc8] sm:$0xf]
        %v2351 = vld [vmem:[%s2299 + $0xcc] sm:$0xf]
        %v2352 = vld [vmem:[%s2299 + $0xd0] sm:$0xf]
        %v2353 = vld [vmem:[%s2299 + $0xd4] sm:$0xf]
        %v2354 = vld [vmem:[%s2299 + $0xd8] sm:$0xf]
        %v2355 = vld [vmem:[%s2299 + $0xdc] sm:$0xf]
        %v2356 = vld [vmem:[%s2299 + $0xe0] sm:$0xf]
        %v2357 = vld [vmem:[%s2299 + $0xe4] sm:$0xf]
        %v2358 = vld [vmem:[%s2299 + $0xe8] sm:$0xf]
        %v2359 = vld [vmem:[%s2299 + $0xec] sm:$0xf]
        %v2360 = vld [vmem:[%s2299 + $0xf0] sm:$0xf]
        %v2361 = vld [vmem:[%s2299 + $0xf4] sm:$0xf]
        %v2362 = vld [vmem:[%s2299 + $0xf8] sm:$0xf]
        %v2363 = vld [vmem:[%s2299 + $0xfc] sm:$0xf]
        %v2364 = vld [vmem:[%s2299 + $0x100] sm:$0xf]
        %v2365 = vld [vmem:[%s2299 + $0x104] sm:$0xf]
        %v2366 = vld [vmem:[%s2299 + $0x108] sm:$0xf]
        %v2367 = vld [vmem:[%s2299 + $0x10c] sm:$0xf]
        %v2368 = vld [vmem:[%s2299 + $0x110] sm:$0xf]
        %v2369 = vld [vmem:[%s2299 + $0x114] sm:$0xf]
        %v2370 = vld [vmem:[%s2299 + $0x118] sm:$0xf]
        %v2371 = vld [vmem:[%s2299 + $0x11c] sm:$0xf]
        %v2372 = vld [vmem:[%s2299 + $0x120] sm:$0xf]
        %v2373 = vld [vmem:[%s2299 + $0x124] sm:$0xf]
        %v2374 = vld [vmem:[%s2299 + $0x128] sm:$0xf]
        %v2375 = vld [vmem:[%s2299 + $0x12c] sm:$0xf]
        %v2376 = vld [vmem:[%s2299 + $0x130] sm:$0xf]
        %v2377 = vld [vmem:[%s2299 + $0x134] sm:$0xf]
        %v2378 = vld [vmem:[%s2299 + $0x138] sm:$0xf]
        %v2379 = vld [vmem:[%s2299 + $0x13c] sm:$0xf]
        %v2380 = vld [vmem:[%s2299 + $0x140] sm:$0xf]
        %v2381 = vld [vmem:[%s2299 + $0x144] sm:$0xf]
        %v2382 = vld [vmem:[%s2299 + $0x148] sm:$0xf]
        %v2383 = vld [vmem:[%s2299 + $0x14c] sm:$0xf]
        %v2384 = vld [vmem:[%s2299 + $0x150] sm:$0xf]
        %v2385 = vld [vmem:[%s2299 + $0x154] sm:$0xf]
        %v2386 = vld [vmem:[%s2299 + $0x158] sm:$0xf]
        %v2387 = vld [vmem:[%s2299 + $0x15c] sm:$0xf]
        %v2388 = vld [vmem:[%s2299 + $0x160] sm:$0xf]
        %v2389 = vld [vmem:[%s2299 + $0x164] sm:$0xf]
        %v2390 = vld [vmem:[%s2299 + $0x168] sm:$0xf]
        %v2391 = vld [vmem:[%s2299 + $0x16c] sm:$0xf]
        %v2392 = vld [vmem:[%s2299 + $0x170] sm:$0xf]
        %v2393 = vld [vmem:[%s2299 + $0x174] sm:$0xf]
        %v2394 = vld [vmem:[%s2299 + $0x178] sm:$0xf]
        %v2395 = vld [vmem:[%s2299 + $0x17c] sm:$0xf]
        %v2396 = vunpack.c.l.bf16 %v2300
        %v2397 = vunpack.c.l.bf16 %v2301
        %v2398 = vunpack.c.l.bf16 %v2302
        %v2399 = vunpack.c.l.bf16 %v2303
        %v2400 = vunpack.c.l.bf16 %v2304
        %v2401 = vunpack.c.l.bf16 %v2305
        %v2402 = vunpack.c.l.bf16 %v2306
        %v2403 = vunpack.c.l.bf16 %v2307
        %v2404 = vunpack.c.l.bf16 %v2308
        %v2405 = vunpack.c.l.bf16 %v2309
        %v2406 = vunpack.c.l.bf16 %v2310
        %v2407 = vunpack.c.l.bf16 %v2311
        %v2408 = vunpack.c.l.bf16 %v2312
        %v2409 = vunpack.c.l.bf16 %v2313
        %v2410 = vunpack.c.l.bf16 %v2314
        %v2411 = vunpack.c.l.bf16 %v2315
        %v2412 = vunpack.c.l.bf16 %v2316
        %v2413 = vunpack.c.l.bf16 %v2317
        %v2414 = vunpack.c.l.bf16 %v2318
        %v2415 = vunpack.c.l.bf16 %v2319
        %v2416 = vunpack.c.l.bf16 %v2320
        %v2417 = vunpack.c.l.bf16 %v2321
        %v2418 = vunpack.c.l.bf16 %v2322
        %v2419 = vunpack.c.l.bf16 %v2323
        %v2420 = vunpack.c.l.bf16 %v2324
        %v2421 = vunpack.c.l.bf16 %v2325
        %v2422 = vunpack.c.l.bf16 %v2326
        %v2423 = vunpack.c.l.bf16 %v2327
        %v2424 = vunpack.c.l.bf16 %v2328
        %v2425 = vunpack.c.l.bf16 %v2329
        %v2426 = vunpack.c.l.bf16 %v2330
        %v2427 = vunpack.c.l.bf16 %v2331
        %v2428 = vunpack.c.l.bf16 %v2332
        %v2429 = vunpack.c.l.bf16 %v2333
        %v2430 = vunpack.c.l.bf16 %v2334
        %v2431 = vunpack.c.l.bf16 %v2335
        %v2432 = vunpack.c.l.bf16 %v2336
        %v2433 = vunpack.c.l.bf16 %v2337
        %v2434 = vunpack.c.l.bf16 %v2338
        %v2435 = vunpack.c.l.bf16 %v2339
        %v2436 = vunpack.c.l.bf16 %v2340
        %v2437 = vunpack.c.l.bf16 %v2341
        %v2438 = vunpack.c.l.bf16 %v2342
        %v2439 = vunpack.c.l.bf16 %v2343
        %v2440 = vunpack.c.l.bf16 %v2344
        %v2441 = vunpack.c.l.bf16 %v2345
        %v2442 = vunpack.c.l.bf16 %v2346
        %v2443 = vunpack.c.l.bf16 %v2347
        %v2444 = vunpack.c.l.bf16 %v2348
        %v2445 = vunpack.c.l.bf16 %v2349
        %v2446 = vunpack.c.l.bf16 %v2350
        %v2447 = vunpack.c.l.bf16 %v2351
        %v2448 = vunpack.c.l.bf16 %v2352
        %v2449 = vunpack.c.l.bf16 %v2353
        %v2450 = vunpack.c.l.bf16 %v2354
        %v2451 = vunpack.c.l.bf16 %v2355
        %v2452 = vunpack.c.l.bf16 %v2356
        %v2453 = vunpack.c.l.bf16 %v2357
        %v2454 = vunpack.c.l.bf16 %v2358
        %v2455 = vunpack.c.l.bf16 %v2359
        %v2456 = vunpack.c.l.bf16 %v2360
        %v2457 = vunpack.c.l.bf16 %v2361
        %v2458 = vunpack.c.l.bf16 %v2362
        %v2459 = vunpack.c.l.bf16 %v2363
        %v2460 = vunpack.c.l.bf16 %v2364
        %v2461 = vunpack.c.l.bf16 %v2365
        %v2462 = vunpack.c.l.bf16 %v2366
        %v2463 = vunpack.c.l.bf16 %v2367
        %v2464 = vunpack.c.l.bf16 %v2368
        %v2465 = vunpack.c.l.bf16 %v2369
        %v2466 = vunpack.c.l.bf16 %v2370
        %v2467 = vunpack.c.l.bf16 %v2371
        %v2468 = vunpack.c.l.bf16 %v2372
        %v2469 = vunpack.c.l.bf16 %v2373
        %v2470 = vunpack.c.l.bf16 %v2374
        %v2471 = vunpack.c.l.bf16 %v2375
        %v2472 = vunpack.c.l.bf16 %v2376
        %v2473 = vunpack.c.l.bf16 %v2377
        %v2474 = vunpack.c.l.bf16 %v2378
        %v2475 = vunpack.c.l.bf16 %v2379
        %v2476 = vunpack.c.l.bf16 %v2380
        %v2477 = vunpack.c.l.bf16 %v2381
        %v2478 = vunpack.c.l.bf16 %v2382
        %v2479 = vunpack.c.l.bf16 %v2383
        %v2480 = vunpack.c.l.bf16 %v2384
        %v2481 = vunpack.c.l.bf16 %v2385
        %v2482 = vunpack.c.l.bf16 %v2386
        %v2483 = vunpack.c.l.bf16 %v2387
        %v2484 = vunpack.c.l.bf16 %v2388
        %v2485 = vunpack.c.l.bf16 %v2389
        %v2486 = vunpack.c.l.bf16 %v2390
        %v2487 = vunpack.c.l.bf16 %v2391
        %v2488 = vunpack.c.l.bf16 %v2392
        %v2489 = vunpack.c.l.bf16 %v2393
        %v2490 = vunpack.c.l.bf16 %v2394
        %v2491 = vunpack.c.l.bf16 %v2395
        %s2492 = scalar_lea.vmem [#allocation2], 6
        %v2493 = vld [vmem:[%s2492] sm:$0x3]
        %v2494 = vmul.f32 %v323, %v2396
        %v2495 = vmul.f32 %v324, %v2397
        %v2496 = vmul.f32 %v325, %v2398
        %v2497 = vmul.f32 %v326, %v2399
        %v2498 = vmul.f32 %v327, %v2400
        %v2499 = vmul.f32 %v328, %v2401
        %v2500 = vmul.f32 %v329, %v2402
        %v2501 = vmul.f32 %v330, %v2403
        %v2502 = vmul.f32 %v331, %v2404
        %v2503 = vmul.f32 %v332, %v2405
        %v2504 = vmul.f32 %v333, %v2406
        %v2505 = vmul.f32 %v334, %v2407
        %v2506 = vmul.f32 %v335, %v2408
        %v2507 = vmul.f32 %v336, %v2409
        %v2508 = vmul.f32 %v337, %v2410
        %v2509 = vmul.f32 %v338, %v2411
        %v2510 = vmul.f32 %v339, %v2412
        %v2511 = vmul.f32 %v340, %v2413
        %v2512 = vmul.f32 %v341, %v2414
        %v2513 = vmul.f32 %v342, %v2415
        %v2514 = vmul.f32 %v343, %v2416
        %v2515 = vmul.f32 %v344, %v2417
        %v2516 = vmul.f32 %v345, %v2418
        %v2517 = vmul.f32 %v346, %v2419
        %v2518 = vmul.f32 %v347, %v2420
        %v2519 = vmul.f32 %v348, %v2421
        %v2520 = vmul.f32 %v349, %v2422
        %v2521 = vmul.f32 %v350, %v2423
        %v2522 = vmul.f32 %v351, %v2424
        %v2523 = vmul.f32 %v352, %v2425
        %v2524 = vmul.f32 %v353, %v2426
        %v2525 = vmul.f32 %v354, %v2427
        %v2526 = vmul.f32 %v355, %v2428
        %v2527 = vmul.f32 %v356, %v2429
        %v2528 = vmul.f32 %v357, %v2430
        %v2529 = vmul.f32 %v358, %v2431
        %v2530 = vmul.f32 %v359, %v2432
        %v2531 = vmul.f32 %v360, %v2433
        %v2532 = vmul.f32 %v361, %v2434
        %v2533 = vmul.f32 %v362, %v2435
        %v2534 = vmul.f32 %v363, %v2436
        %v2535 = vmul.f32 %v364, %v2437
        %v2536 = vmul.f32 %v365, %v2438
        %v2537 = vmul.f32 %v366, %v2439
        %v2538 = vmul.f32 %v367, %v2440
        %v2539 = vmul.f32 %v368, %v2441
        %v2540 = vmul.f32 %v369, %v2442
        %v2541 = vmul.f32 %v370, %v2443
        %v2542 = vmul.f32 %v371, %v2444
        %v2543 = vmul.f32 %v372, %v2445
        %v2544 = vmul.f32 %v373, %v2446
        %v2545 = vmul.f32 %v374, %v2447
        %v2546 = vmul.f32 %v375, %v2448
        %v2547 = vmul.f32 %v376, %v2449
        %v2548 = vmul.f32 %v377, %v2450
        %v2549 = vmul.f32 %v378, %v2451
        %v2550 = vmul.f32 %v379, %v2452
        %v2551 = vmul.f32 %v380, %v2453
        %v2552 = vmul.f32 %v381, %v2454
        %v2553 = vmul.f32 %v382, %v2455
        %v2554 = vmul.f32 %v383, %v2456
        %v2555 = vmul.f32 %v384, %v2457
        %v2556 = vmul.f32 %v385, %v2458
        %v2557 = vmul.f32 %v386, %v2459
        %v2558 = vmul.f32 %v387, %v2460
        %v2559 = vmul.f32 %v388, %v2461
        %v2560 = vmul.f32 %v389, %v2462
        %v2561 = vmul.f32 %v390, %v2463
        %v2562 = vmul.f32 %v391, %v2464
        %v2563 = vmul.f32 %v392, %v2465
        %v2564 = vmul.f32 %v393, %v2466
        %v2565 = vmul.f32 %v394, %v2467
        %v2566 = vmul.f32 %v395, %v2468
        %v2567 = vmul.f32 %v396, %v2469
        %v2568 = vmul.f32 %v397, %v2470
        %v2569 = vmul.f32 %v398, %v2471
        %v2570 = vmul.f32 %v399, %v2472
        %v2571 = vmul.f32 %v400, %v2473
        %v2572 = vmul.f32 %v401, %v2474
        %v2573 = vmul.f32 %v402, %v2475
        %v2574 = vmul.f32 %v403, %v2476
        %v2575 = vmul.f32 %v404, %v2477
        %v2576 = vmul.f32 %v405, %v2478
        %v2577 = vmul.f32 %v406, %v2479
        %v2578 = vmul.f32 %v407, %v2480
        %v2579 = vmul.f32 %v408, %v2481
        %v2580 = vmul.f32 %v409, %v2482
        %v2581 = vmul.f32 %v410, %v2483
        %v2582 = vmul.f32 %v411, %v2484
        %v2583 = vmul.f32 %v412, %v2485
        %v2584 = vmul.f32 %v413, %v2486
        %v2585 = vmul.f32 %v414, %v2487
        %v2586 = vmul.f32 %v415, %v2488
        %v2587 = vmul.f32 %v416, %v2489
        %v2588 = vmul.f32 %v417, %v2490
        %v2589 = vmul.f32 %v418, %v2491
        %v2590 = vmul.f32 %v419, %v2396
        %v2591 = vmul.f32 %v420, %v2397
        %v2592 = vmul.f32 %v421, %v2398
        %v2593 = vmul.f32 %v422, %v2399
        %v2594 = vmul.f32 %v423, %v2400
        %v2595 = vmul.f32 %v424, %v2401
        %v2596 = vmul.f32 %v425, %v2402
        %v2597 = vmul.f32 %v426, %v2403
        %v2598 = vmul.f32 %v427, %v2404
        %v2599 = vmul.f32 %v428, %v2405
        %v2600 = vmul.f32 %v429, %v2406
        %v2601 = vmul.f32 %v430, %v2407
        %v2602 = vmul.f32 %v431, %v2408
        %v2603 = vmul.f32 %v432, %v2409
        %v2604 = vmul.f32 %v433, %v2410
        %v2605 = vmul.f32 %v434, %v2411
        %v2606 = vmul.f32 %v435, %v2412
        %v2607 = vmul.f32 %v436, %v2413
        %v2608 = vmul.f32 %v437, %v2414
        %v2609 = vmul.f32 %v438, %v2415
        %v2610 = vmul.f32 %v439, %v2416
        %v2611 = vmul.f32 %v440, %v2417
        %v2612 = vmul.f32 %v441, %v2418
        %v2613 = vmul.f32 %v442, %v2419
        %v2614 = vmul.f32 %v443, %v2420
        %v2615 = vmul.f32 %v444, %v2421
        %v2616 = vmul.f32 %v445, %v2422
        %v2617 = vmul.f32 %v446, %v2423
        %v2618 = vmul.f32 %v447, %v2424
        %v2619 = vmul.f32 %v448, %v2425
        %v2620 = vmul.f32 %v449, %v2426
        %v2621 = vmul.f32 %v450, %v2427
        %v2622 = vmul.f32 %v451, %v2428
        %v2623 = vmul.f32 %v452, %v2429
        %v2624 = vmul.f32 %v453, %v2430
        %v2625 = vmul.f32 %v454, %v2431
        %v2626 = vmul.f32 %v455, %v2432
        %v2627 = vmul.f32 %v456, %v2433
        %v2628 = vmul.f32 %v457, %v2434
        %v2629 = vmul.f32 %v458, %v2435
        %v2630 = vmul.f32 %v459, %v2436
        %v2631 = vmul.f32 %v460, %v2437
        %v2632 = vmul.f32 %v461, %v2438
        %v2633 = vmul.f32 %v462, %v2439
        %v2634 = vmul.f32 %v463, %v2440
        %v2635 = vmul.f32 %v464, %v2441
        %v2636 = vmul.f32 %v465, %v2442
        %v2637 = vmul.f32 %v466, %v2443
        %v2638 = vmul.f32 %v467, %v2444
        %v2639 = vmul.f32 %v468, %v2445
        %v2640 = vmul.f32 %v469, %v2446
        %v2641 = vmul.f32 %v470, %v2447
        %v2642 = vmul.f32 %v471, %v2448
        %v2643 = vmul.f32 %v472, %v2449
        %v2644 = vmul.f32 %v473, %v2450
        %v2645 = vmul.f32 %v474, %v2451
        %v2646 = vmul.f32 %v475, %v2452
        %v2647 = vmul.f32 %v476, %v2453
        %v2648 = vmul.f32 %v477, %v2454
        %v2649 = vmul.f32 %v478, %v2455
        %v2650 = vmul.f32 %v479, %v2456
        %v2651 = vmul.f32 %v480, %v2457
        %v2652 = vmul.f32 %v481, %v2458
        %v2653 = vmul.f32 %v482, %v2459
        %v2654 = vmul.f32 %v483, %v2460
        %v2655 = vmul.f32 %v484, %v2461
        %v2656 = vmul.f32 %v485, %v2462
        %v2657 = vmul.f32 %v486, %v2463
        %v2658 = vmul.f32 %v487, %v2464
        %v2659 = vmul.f32 %v488, %v2465
        %v2660 = vmul.f32 %v489, %v2466
        %v2661 = vmul.f32 %v490, %v2467
        %v2662 = vmul.f32 %v491, %v2468
        %v2663 = vmul.f32 %v492, %v2469
        %v2664 = vmul.f32 %v493, %v2470
        %v2665 = vmul.f32 %v494, %v2471
        %v2666 = vmul.f32 %v495, %v2472
        %v2667 = vmul.f32 %v496, %v2473
        %v2668 = vmul.f32 %v497, %v2474
        %v2669 = vmul.f32 %v498, %v2475
        %v2670 = vmul.f32 %v499, %v2476
        %v2671 = vmul.f32 %v500, %v2477
        %v2672 = vmul.f32 %v501, %v2478
        %v2673 = vmul.f32 %v502, %v2479
        %v2674 = vmul.f32 %v503, %v2480
        %v2675 = vmul.f32 %v504, %v2481
        %v2676 = vmul.f32 %v505, %v2482
        %v2677 = vmul.f32 %v506, %v2483
        %v2678 = vmul.f32 %v507, %v2484
        %v2679 = vmul.f32 %v508, %v2485
        %v2680 = vmul.f32 %v509, %v2486
        %v2681 = vmul.f32 %v510, %v2487
        %v2682 = vmul.f32 %v511, %v2488
        %v2683 = vmul.f32 %v512, %v2489
        %v2684 = vmul.f32 %v513, %v2490
        %v2685 = vmul.f32 %v514, %v2491
        %v2686 = vadd.f32 %v2494, %v2495
        %v2687 = vadd.f32 %v2686, %v2496
        %v2688 = vadd.f32 %v2687, %v2497
        %v2689 = vadd.f32 %v2688, %v2498
        %v2690 = vadd.f32 %v2689, %v2499
        %v2691 = vadd.f32 %v2690, %v2500
        %v2692 = vadd.f32 %v2691, %v2501
        %v2693 = vadd.f32 %v2692, %v2502
        %v2694 = vadd.f32 %v2693, %v2503
        %v2695 = vadd.f32 %v2694, %v2504
        %v2696 = vadd.f32 %v2695, %v2505
        %v2697 = vadd.f32 %v2696, %v2506
        %v2698 = vadd.f32 %v2697, %v2507
        %v2699 = vadd.f32 %v2698, %v2508
        %v2700 = vadd.f32 %v2699, %v2509
        %v2701 = vadd.f32 %v2700, %v2510
        %v2702 = vadd.f32 %v2701, %v2511
        %v2703 = vadd.f32 %v2702, %v2512
        %v2704 = vadd.f32 %v2703, %v2513
        %v2705 = vadd.f32 %v2704, %v2514
        %v2706 = vadd.f32 %v2705, %v2515
        %v2707 = vadd.f32 %v2706, %v2516
        %v2708 = vadd.f32 %v2707, %v2517
        %v2709 = vadd.f32 %v2708, %v2518
        %v2710 = vadd.f32 %v2709, %v2519
        %v2711 = vadd.f32 %v2710, %v2520
        %v2712 = vadd.f32 %v2711, %v2521
        %v2713 = vadd.f32 %v2712, %v2522
        %v2714 = vadd.f32 %v2713, %v2523
        %v2715 = vadd.f32 %v2714, %v2524
        %v2716 = vadd.f32 %v2715, %v2525
        %v2717 = vadd.f32 %v2716, %v2526
        %v2718 = vadd.f32 %v2717, %v2527
        %v2719 = vadd.f32 %v2718, %v2528
        %v2720 = vadd.f32 %v2719, %v2529
        %v2721 = vadd.f32 %v2720, %v2530
        %v2722 = vadd.f32 %v2721, %v2531
        %v2723 = vadd.f32 %v2722, %v2532
        %v2724 = vadd.f32 %v2723, %v2533
        %v2725 = vadd.f32 %v2724, %v2534
        %v2726 = vadd.f32 %v2725, %v2535
        %v2727 = vadd.f32 %v2726, %v2536
        %v2728 = vadd.f32 %v2727, %v2537
        %v2729 = vadd.f32 %v2728, %v2538
        %v2730 = vadd.f32 %v2729, %v2539
        %v2731 = vadd.f32 %v2730, %v2540
        %v2732 = vadd.f32 %v2731, %v2541
        %v2733 = vadd.f32 %v2732, %v2542
        %v2734 = vadd.f32 %v2733, %v2543
        %v2735 = vadd.f32 %v2734, %v2544
        %v2736 = vadd.f32 %v2735, %v2545
        %v2737 = vadd.f32 %v2736, %v2546
        %v2738 = vadd.f32 %v2737, %v2547
        %v2739 = vadd.f32 %v2738, %v2548
        %v2740 = vadd.f32 %v2739, %v2549
        %v2741 = vadd.f32 %v2740, %v2550
        %v2742 = vadd.f32 %v2741, %v2551
        %v2743 = vadd.f32 %v2742, %v2552
        %v2744 = vadd.f32 %v2743, %v2553
        %v2745 = vadd.f32 %v2744, %v2554
        %v2746 = vadd.f32 %v2745, %v2555
        %v2747 = vadd.f32 %v2746, %v2556
        %v2748 = vadd.f32 %v2747, %v2557
        %v2749 = vadd.f32 %v2748, %v2558
        %v2750 = vadd.f32 %v2749, %v2559
        %v2751 = vadd.f32 %v2750, %v2560
        %v2752 = vadd.f32 %v2751, %v2561
        %v2753 = vadd.f32 %v2752, %v2562
        %v2754 = vadd.f32 %v2753, %v2563
        %v2755 = vadd.f32 %v2754, %v2564
        %v2756 = vadd.f32 %v2755, %v2565
        %v2757 = vadd.f32 %v2756, %v2566
        %v2758 = vadd.f32 %v2757, %v2567
        %v2759 = vadd.f32 %v2758, %v2568
        %v2760 = vadd.f32 %v2759, %v2569
        %v2761 = vadd.f32 %v2760, %v2570
        %v2762 = vadd.f32 %v2761, %v2571
        %v2763 = vadd.f32 %v2762, %v2572
        %v2764 = vadd.f32 %v2763, %v2573
        %v2765 = vadd.f32 %v2764, %v2574
        %v2766 = vadd.f32 %v2765, %v2575
        %v2767 = vadd.f32 %v2766, %v2576
        %v2768 = vadd.f32 %v2767, %v2577
        %v2769 = vadd.f32 %v2768, %v2578
        %v2770 = vadd.f32 %v2769, %v2579
        %v2771 = vadd.f32 %v2770, %v2580
        %v2772 = vadd.f32 %v2771, %v2581
        %v2773 = vadd.f32 %v2772, %v2582
        %v2774 = vadd.f32 %v2773, %v2583
        %v2775 = vadd.f32 %v2774, %v2584
        %v2776 = vadd.f32 %v2775, %v2585
        %v2777 = vadd.f32 %v2776, %v2586
        %v2778 = vadd.f32 %v2777, %v2587
        %v2779 = vadd.f32 %v2778, %v2588
        %v2780 = vadd.f32 %v2779, %v2589
        %v2781 = vrot.slane %v2780, 4
        %v2782 = vadd.f32 %v2780, %v2781
        %v2783 = vrot.slane %v2782, 2
        %v2784 = vadd.f32 %v2782, %v2783
        %v2785 = vrot.slane %v2784, 1
        %v2786 = vadd.f32 %v2784, %v2785
        %v2787 = vadd.f32 %v2590, %v2591
        %v2788 = vadd.f32 %v2787, %v2592
        %v2789 = vadd.f32 %v2788, %v2593
        %v2790 = vadd.f32 %v2789, %v2594
        %v2791 = vadd.f32 %v2790, %v2595
        %v2792 = vadd.f32 %v2791, %v2596
        %v2793 = vadd.f32 %v2792, %v2597
        %v2794 = vadd.f32 %v2793, %v2598
        %v2795 = vadd.f32 %v2794, %v2599
        %v2796 = vadd.f32 %v2795, %v2600
        %v2797 = vadd.f32 %v2796, %v2601
        %v2798 = vadd.f32 %v2797, %v2602
        %v2799 = vadd.f32 %v2798, %v2603
        %v2800 = vadd.f32 %v2799, %v2604
        %v2801 = vadd.f32 %v2800, %v2605
        %v2802 = vadd.f32 %v2801, %v2606
        %v2803 = vadd.f32 %v2802, %v2607
        %v2804 = vadd.f32 %v2803, %v2608
        %v2805 = vadd.f32 %v2804, %v2609
        %v2806 = vadd.f32 %v2805, %v2610
        %v2807 = vadd.f32 %v2806, %v2611
        %v2808 = vadd.f32 %v2807, %v2612
        %v2809 = vadd.f32 %v2808, %v2613
        %v2810 = vadd.f32 %v2809, %v2614
        %v2811 = vadd.f32 %v2810, %v2615
        %v2812 = vadd.f32 %v2811, %v2616
        %v2813 = vadd.f32 %v2812, %v2617
        %v2814 = vadd.f32 %v2813, %v2618
        %v2815 = vadd.f32 %v2814, %v2619
        %v2816 = vadd.f32 %v2815, %v2620
        %v2817 = vadd.f32 %v2816, %v2621
        %v2818 = vadd.f32 %v2817, %v2622
        %v2819 = vadd.f32 %v2818, %v2623
        %v2820 = vadd.f32 %v2819, %v2624
        %v2821 = vadd.f32 %v2820, %v2625
        %v2822 = vadd.f32 %v2821, %v2626
        %v2823 = vadd.f32 %v2822, %v2627
        %v2824 = vadd.f32 %v2823, %v2628
        %v2825 = vadd.f32 %v2824, %v2629
        %v2826 = vadd.f32 %v2825, %v2630
        %v2827 = vadd.f32 %v2826, %v2631
        %v2828 = vadd.f32 %v2827, %v2632
        %v2829 = vadd.f32 %v2828, %v2633
        %v2830 = vadd.f32 %v2829, %v2634
        %v2831 = vadd.f32 %v2830, %v2635
        %v2832 = vadd.f32 %v2831, %v2636
        %v2833 = vadd.f32 %v2832, %v2637
        %v2834 = vadd.f32 %v2833, %v2638
        %v2835 = vadd.f32 %v2834, %v2639
        %v2836 = vadd.f32 %v2835, %v2640
        %v2837 = vadd.f32 %v2836, %v2641
        %v2838 = vadd.f32 %v2837, %v2642
        %v2839 = vadd.f32 %v2838, %v2643
        %v2840 = vadd.f32 %v2839, %v2644
        %v2841 = vadd.f32 %v2840, %v2645
        %v2842 = vadd.f32 %v2841, %v2646
        %v2843 = vadd.f32 %v2842, %v2647
        %v2844 = vadd.f32 %v2843, %v2648
        %v2845 = vadd.f32 %v2844, %v2649
        %v2846 = vadd.f32 %v2845, %v2650
        %v2847 = vadd.f32 %v2846, %v2651
        %v2848 = vadd.f32 %v2847, %v2652
        %v2849 = vadd.f32 %v2848, %v2653
        %v2850 = vadd.f32 %v2849, %v2654
        %v2851 = vadd.f32 %v2850, %v2655
        %v2852 = vadd.f32 %v2851, %v2656
        %v2853 = vadd.f32 %v2852, %v2657
        %v2854 = vadd.f32 %v2853, %v2658
        %v2855 = vadd.f32 %v2854, %v2659
        %v2856 = vadd.f32 %v2855, %v2660
        %v2857 = vadd.f32 %v2856, %v2661
        %v2858 = vadd.f32 %v2857, %v2662
        %v2859 = vadd.f32 %v2858, %v2663
        %v2860 = vadd.f32 %v2859, %v2664
        %v2861 = vadd.f32 %v2860, %v2665
        %v2862 = vadd.f32 %v2861, %v2666
        %v2863 = vadd.f32 %v2862, %v2667
        %v2864 = vadd.f32 %v2863, %v2668
        %v2865 = vadd.f32 %v2864, %v2669
        %v2866 = vadd.f32 %v2865, %v2670
        %v2867 = vadd.f32 %v2866, %v2671
        %v2868 = vadd.f32 %v2867, %v2672
        %v2869 = vadd.f32 %v2868, %v2673
        %v2870 = vadd.f32 %v2869, %v2674
        %v2871 = vadd.f32 %v2870, %v2675
        %v2872 = vadd.f32 %v2871, %v2676
        %v2873 = vadd.f32 %v2872, %v2677
        %v2874 = vadd.f32 %v2873, %v2678
        %v2875 = vadd.f32 %v2874, %v2679
        %v2876 = vadd.f32 %v2875, %v2680
        %v2877 = vadd.f32 %v2876, %v2681
        %v2878 = vadd.f32 %v2877, %v2682
        %v2879 = vadd.f32 %v2878, %v2683
        %v2880 = vadd.f32 %v2879, %v2684
        %v2881 = vadd.f32 %v2880, %v2685
        %v2882 = vrot.slane %v2881, 4
        %v2883 = vadd.f32 %v2881, %v2882
        %v2884 = vrot.slane %v2883, 2
        %v2885 = vadd.f32 %v2883, %v2884
        %v2886 = vrot.slane %v2885, 1
        %v2887 = vadd.f32 %v2885, %v2886
        %v2890 = vsel %vm1104, %v2887, %v2786
        %v2892 = vadd.f32 %v2493, %v2890
        %2893 = vst [vmem:[%s2492] sm:$0x3] %v2892
        %s2894 = scalar_lea.vmem %s276, 1536 [#allocation6]
        %v2895 = vld [vmem:[%s2894] sm:$0xf]
        %v2896 = vld [vmem:[%s2894 + $0x4] sm:$0xf]
        %v2897 = vld [vmem:[%s2894 + $0x8] sm:$0xf]
        %v2898 = vld [vmem:[%s2894 + $0xc] sm:$0xf]
        %v2899 = vld [vmem:[%s2894 + $0x10] sm:$0xf]
        %v2900 = vld [vmem:[%s2894 + $0x14] sm:$0xf]
        %v2901 = vld [vmem:[%s2894 + $0x18] sm:$0xf]
        %v2902 = vld [vmem:[%s2894 + $0x1c] sm:$0xf]
        %v2903 = vld [vmem:[%s2894 + $0x20] sm:$0xf]
        %v2904 = vld [vmem:[%s2894 + $0x24] sm:$0xf]
        %v2905 = vld [vmem:[%s2894 + $0x28] sm:$0xf]
        %v2906 = vld [vmem:[%s2894 + $0x2c] sm:$0xf]
        %v2907 = vld [vmem:[%s2894 + $0x30] sm:$0xf]
        %v2908 = vld [vmem:[%s2894 + $0x34] sm:$0xf]
        %v2909 = vld [vmem:[%s2894 + $0x38] sm:$0xf]
        %v2910 = vld [vmem:[%s2894 + $0x3c] sm:$0xf]
        %v2911 = vld [vmem:[%s2894 + $0x40] sm:$0xf]
        %v2912 = vld [vmem:[%s2894 + $0x44] sm:$0xf]
        %v2913 = vld [vmem:[%s2894 + $0x48] sm:$0xf]
        %v2914 = vld [vmem:[%s2894 + $0x4c] sm:$0xf]
        %v2915 = vld [vmem:[%s2894 + $0x50] sm:$0xf]
        %v2916 = vld [vmem:[%s2894 + $0x54] sm:$0xf]
        %v2917 = vld [vmem:[%s2894 + $0x58] sm:$0xf]
        %v2918 = vld [vmem:[%s2894 + $0x5c] sm:$0xf]
        %v2919 = vld [vmem:[%s2894 + $0x60] sm:$0xf]
        %v2920 = vld [vmem:[%s2894 + $0x64] sm:$0xf]
        %v2921 = vld [vmem:[%s2894 + $0x68] sm:$0xf]
        %v2922 = vld [vmem:[%s2894 + $0x6c] sm:$0xf]
        %v2923 = vld [vmem:[%s2894 + $0x70] sm:$0xf]
        %v2924 = vld [vmem:[%s2894 + $0x74] sm:$0xf]
        %v2925 = vld [vmem:[%s2894 + $0x78] sm:$0xf]
        %v2926 = vld [vmem:[%s2894 + $0x7c] sm:$0xf]
        %v2927 = vld [vmem:[%s2894 + $0x80] sm:$0xf]
        %v2928 = vld [vmem:[%s2894 + $0x84] sm:$0xf]
        %v2929 = vld [vmem:[%s2894 + $0x88] sm:$0xf]
        %v2930 = vld [vmem:[%s2894 + $0x8c] sm:$0xf]
        %v2931 = vld [vmem:[%s2894 + $0x90] sm:$0xf]
        %v2932 = vld [vmem:[%s2894 + $0x94] sm:$0xf]
        %v2933 = vld [vmem:[%s2894 + $0x98] sm:$0xf]
        %v2934 = vld [vmem:[%s2894 + $0x9c] sm:$0xf]
        %v2935 = vld [vmem:[%s2894 + $0xa0] sm:$0xf]
        %v2936 = vld [vmem:[%s2894 + $0xa4] sm:$0xf]
        %v2937 = vld [vmem:[%s2894 + $0xa8] sm:$0xf]
        %v2938 = vld [vmem:[%s2894 + $0xac] sm:$0xf]
        %v2939 = vld [vmem:[%s2894 + $0xb0] sm:$0xf]
        %v2940 = vld [vmem:[%s2894 + $0xb4] sm:$0xf]
        %v2941 = vld [vmem:[%s2894 + $0xb8] sm:$0xf]
        %v2942 = vld [vmem:[%s2894 + $0xbc] sm:$0xf]
        %v2943 = vld [vmem:[%s2894 + $0xc0] sm:$0xf]
        %v2944 = vld [vmem:[%s2894 + $0xc4] sm:$0xf]
        %v2945 = vld [vmem:[%s2894 + $0xc8] sm:$0xf]
        %v2946 = vld [vmem:[%s2894 + $0xcc] sm:$0xf]
        %v2947 = vld [vmem:[%s2894 + $0xd0] sm:$0xf]
        %v2948 = vld [vmem:[%s2894 + $0xd4] sm:$0xf]
        %v2949 = vld [vmem:[%s2894 + $0xd8] sm:$0xf]
        %v2950 = vld [vmem:[%s2894 + $0xdc] sm:$0xf]
        %v2951 = vld [vmem:[%s2894 + $0xe0] sm:$0xf]
        %v2952 = vld [vmem:[%s2894 + $0xe4] sm:$0xf]
        %v2953 = vld [vmem:[%s2894 + $0xe8] sm:$0xf]
        %v2954 = vld [vmem:[%s2894 + $0xec] sm:$0xf]
        %v2955 = vld [vmem:[%s2894 + $0xf0] sm:$0xf]
        %v2956 = vld [vmem:[%s2894 + $0xf4] sm:$0xf]
        %v2957 = vld [vmem:[%s2894 + $0xf8] sm:$0xf]
        %v2958 = vld [vmem:[%s2894 + $0xfc] sm:$0xf]
        %v2959 = vld [vmem:[%s2894 + $0x100] sm:$0xf]
        %v2960 = vld [vmem:[%s2894 + $0x104] sm:$0xf]
        %v2961 = vld [vmem:[%s2894 + $0x108] sm:$0xf]
        %v2962 = vld [vmem:[%s2894 + $0x10c] sm:$0xf]
        %v2963 = vld [vmem:[%s2894 + $0x110] sm:$0xf]
        %v2964 = vld [vmem:[%s2894 + $0x114] sm:$0xf]
        %v2965 = vld [vmem:[%s2894 + $0x118] sm:$0xf]
        %v2966 = vld [vmem:[%s2894 + $0x11c] sm:$0xf]
        %v2967 = vld [vmem:[%s2894 + $0x120] sm:$0xf]
        %v2968 = vld [vmem:[%s2894 + $0x124] sm:$0xf]
        %v2969 = vld [vmem:[%s2894 + $0x128] sm:$0xf]
        %v2970 = vld [vmem:[%s2894 + $0x12c] sm:$0xf]
        %v2971 = vld [vmem:[%s2894 + $0x130] sm:$0xf]
        %v2972 = vld [vmem:[%s2894 + $0x134] sm:$0xf]
        %v2973 = vld [vmem:[%s2894 + $0x138] sm:$0xf]
        %v2974 = vld [vmem:[%s2894 + $0x13c] sm:$0xf]
        %v2975 = vld [vmem:[%s2894 + $0x140] sm:$0xf]
        %v2976 = vld [vmem:[%s2894 + $0x144] sm:$0xf]
        %v2977 = vld [vmem:[%s2894 + $0x148] sm:$0xf]
        %v2978 = vld [vmem:[%s2894 + $0x14c] sm:$0xf]
        %v2979 = vld [vmem:[%s2894 + $0x150] sm:$0xf]
        %v2980 = vld [vmem:[%s2894 + $0x154] sm:$0xf]
        %v2981 = vld [vmem:[%s2894 + $0x158] sm:$0xf]
        %v2982 = vld [vmem:[%s2894 + $0x15c] sm:$0xf]
        %v2983 = vld [vmem:[%s2894 + $0x160] sm:$0xf]
        %v2984 = vld [vmem:[%s2894 + $0x164] sm:$0xf]
        %v2985 = vld [vmem:[%s2894 + $0x168] sm:$0xf]
        %v2986 = vld [vmem:[%s2894 + $0x16c] sm:$0xf]
        %v2987 = vld [vmem:[%s2894 + $0x170] sm:$0xf]
        %v2988 = vld [vmem:[%s2894 + $0x174] sm:$0xf]
        %v2989 = vld [vmem:[%s2894 + $0x178] sm:$0xf]
        %v2990 = vld [vmem:[%s2894 + $0x17c] sm:$0xf]
        %v2991 = vunpack.c.l.bf16 %v2895
        %v2992 = vunpack.c.l.bf16 %v2896
        %v2993 = vunpack.c.l.bf16 %v2897
        %v2994 = vunpack.c.l.bf16 %v2898
        %v2995 = vunpack.c.l.bf16 %v2899
        %v2996 = vunpack.c.l.bf16 %v2900
        %v2997 = vunpack.c.l.bf16 %v2901
        %v2998 = vunpack.c.l.bf16 %v2902
        %v2999 = vunpack.c.l.bf16 %v2903
        %v3000 = vunpack.c.l.bf16 %v2904
        %v3001 = vunpack.c.l.bf16 %v2905
        %v3002 = vunpack.c.l.bf16 %v2906
        %v3003 = vunpack.c.l.bf16 %v2907
        %v3004 = vunpack.c.l.bf16 %v2908
        %v3005 = vunpack.c.l.bf16 %v2909
        %v3006 = vunpack.c.l.bf16 %v2910
        %v3007 = vunpack.c.l.bf16 %v2911
        %v3008 = vunpack.c.l.bf16 %v2912
        %v3009 = vunpack.c.l.bf16 %v2913
        %v3010 = vunpack.c.l.bf16 %v2914
        %v3011 = vunpack.c.l.bf16 %v2915
        %v3012 = vunpack.c.l.bf16 %v2916
        %v3013 = vunpack.c.l.bf16 %v2917
        %v3014 = vunpack.c.l.bf16 %v2918
        %v3015 = vunpack.c.l.bf16 %v2919
        %v3016 = vunpack.c.l.bf16 %v2920
        %v3017 = vunpack.c.l.bf16 %v2921
        %v3018 = vunpack.c.l.bf16 %v2922
        %v3019 = vunpack.c.l.bf16 %v2923
        %v3020 = vunpack.c.l.bf16 %v2924
        %v3021 = vunpack.c.l.bf16 %v2925
        %v3022 = vunpack.c.l.bf16 %v2926
        %v3023 = vunpack.c.l.bf16 %v2927
        %v3024 = vunpack.c.l.bf16 %v2928
        %v3025 = vunpack.c.l.bf16 %v2929
        %v3026 = vunpack.c.l.bf16 %v2930
        %v3027 = vunpack.c.l.bf16 %v2931
        %v3028 = vunpack.c.l.bf16 %v2932
        %v3029 = vunpack.c.l.bf16 %v2933
        %v3030 = vunpack.c.l.bf16 %v2934
        %v3031 = vunpack.c.l.bf16 %v2935
        %v3032 = vunpack.c.l.bf16 %v2936
        %v3033 = vunpack.c.l.bf16 %v2937
        %v3034 = vunpack.c.l.bf16 %v2938
        %v3035 = vunpack.c.l.bf16 %v2939
        %v3036 = vunpack.c.l.bf16 %v2940
        %v3037 = vunpack.c.l.bf16 %v2941
        %v3038 = vunpack.c.l.bf16 %v2942
        %v3039 = vunpack.c.l.bf16 %v2943
        %v3040 = vunpack.c.l.bf16 %v2944
        %v3041 = vunpack.c.l.bf16 %v2945
        %v3042 = vunpack.c.l.bf16 %v2946
        %v3043 = vunpack.c.l.bf16 %v2947
        %v3044 = vunpack.c.l.bf16 %v2948
        %v3045 = vunpack.c.l.bf16 %v2949
        %v3046 = vunpack.c.l.bf16 %v2950
        %v3047 = vunpack.c.l.bf16 %v2951
        %v3048 = vunpack.c.l.bf16 %v2952
        %v3049 = vunpack.c.l.bf16 %v2953
        %v3050 = vunpack.c.l.bf16 %v2954
        %v3051 = vunpack.c.l.bf16 %v2955
        %v3052 = vunpack.c.l.bf16 %v2956
        %v3053 = vunpack.c.l.bf16 %v2957
        %v3054 = vunpack.c.l.bf16 %v2958
        %v3055 = vunpack.c.l.bf16 %v2959
        %v3056 = vunpack.c.l.bf16 %v2960
        %v3057 = vunpack.c.l.bf16 %v2961
        %v3058 = vunpack.c.l.bf16 %v2962
        %v3059 = vunpack.c.l.bf16 %v2963
        %v3060 = vunpack.c.l.bf16 %v2964
        %v3061 = vunpack.c.l.bf16 %v2965
        %v3062 = vunpack.c.l.bf16 %v2966
        %v3063 = vunpack.c.l.bf16 %v2967
        %v3064 = vunpack.c.l.bf16 %v2968
        %v3065 = vunpack.c.l.bf16 %v2969
        %v3066 = vunpack.c.l.bf16 %v2970
        %v3067 = vunpack.c.l.bf16 %v2971
        %v3068 = vunpack.c.l.bf16 %v2972
        %v3069 = vunpack.c.l.bf16 %v2973
        %v3070 = vunpack.c.l.bf16 %v2974
        %v3071 = vunpack.c.l.bf16 %v2975
        %v3072 = vunpack.c.l.bf16 %v2976
        %v3073 = vunpack.c.l.bf16 %v2977
        %v3074 = vunpack.c.l.bf16 %v2978
        %v3075 = vunpack.c.l.bf16 %v2979
        %v3076 = vunpack.c.l.bf16 %v2980
        %v3077 = vunpack.c.l.bf16 %v2981
        %v3078 = vunpack.c.l.bf16 %v2982
        %v3079 = vunpack.c.l.bf16 %v2983
        %v3080 = vunpack.c.l.bf16 %v2984
        %v3081 = vunpack.c.l.bf16 %v2985
        %v3082 = vunpack.c.l.bf16 %v2986
        %v3083 = vunpack.c.l.bf16 %v2987
        %v3084 = vunpack.c.l.bf16 %v2988
        %v3085 = vunpack.c.l.bf16 %v2989
        %v3086 = vunpack.c.l.bf16 %v2990
        %s3087 = scalar_lea.vmem [#allocation2], 8
        %v3088 = vld [vmem:[%s3087] sm:$0x3]
        %v3089 = vmul.f32 %v323, %v2991
        %v3090 = vmul.f32 %v324, %v2992
        %v3091 = vmul.f32 %v325, %v2993
        %v3092 = vmul.f32 %v326, %v2994
        %v3093 = vmul.f32 %v327, %v2995
        %v3094 = vmul.f32 %v328, %v2996
        %v3095 = vmul.f32 %v329, %v2997
        %v3096 = vmul.f32 %v330, %v2998
        %v3097 = vmul.f32 %v331, %v2999
        %v3098 = vmul.f32 %v332, %v3000
        %v3099 = vmul.f32 %v333, %v3001
        %v3100 = vmul.f32 %v334, %v3002
        %v3101 = vmul.f32 %v335, %v3003
        %v3102 = vmul.f32 %v336, %v3004
        %v3103 = vmul.f32 %v337, %v3005
        %v3104 = vmul.f32 %v338, %v3006
        %v3105 = vmul.f32 %v339, %v3007
        %v3106 = vmul.f32 %v340, %v3008
        %v3107 = vmul.f32 %v341, %v3009
        %v3108 = vmul.f32 %v342, %v3010
        %v3109 = vmul.f32 %v343, %v3011
        %v3110 = vmul.f32 %v344, %v3012
        %v3111 = vmul.f32 %v345, %v3013
        %v3112 = vmul.f32 %v346, %v3014
        %v3113 = vmul.f32 %v347, %v3015
        %v3114 = vmul.f32 %v348, %v3016
        %v3115 = vmul.f32 %v349, %v3017
        %v3116 = vmul.f32 %v350, %v3018
        %v3117 = vmul.f32 %v351, %v3019
        %v3118 = vmul.f32 %v352, %v3020
        %v3119 = vmul.f32 %v353, %v3021
        %v3120 = vmul.f32 %v354, %v3022
        %v3121 = vmul.f32 %v355, %v3023
        %v3122 = vmul.f32 %v356, %v3024
        %v3123 = vmul.f32 %v357, %v3025
        %v3124 = vmul.f32 %v358, %v3026
        %v3125 = vmul.f32 %v359, %v3027
        %v3126 = vmul.f32 %v360, %v3028
        %v3127 = vmul.f32 %v361, %v3029
        %v3128 = vmul.f32 %v362, %v3030
        %v3129 = vmul.f32 %v363, %v3031
        %v3130 = vmul.f32 %v364, %v3032
        %v3131 = vmul.f32 %v365, %v3033
        %v3132 = vmul.f32 %v366, %v3034
        %v3133 = vmul.f32 %v367, %v3035
        %v3134 = vmul.f32 %v368, %v3036
        %v3135 = vmul.f32 %v369, %v3037
        %v3136 = vmul.f32 %v370, %v3038
        %v3137 = vmul.f32 %v371, %v3039
        %v3138 = vmul.f32 %v372, %v3040
        %v3139 = vmul.f32 %v373, %v3041
        %v3140 = vmul.f32 %v374, %v3042
        %v3141 = vmul.f32 %v375, %v3043
        %v3142 = vmul.f32 %v376, %v3044
        %v3143 = vmul.f32 %v377, %v3045
        %v3144 = vmul.f32 %v378, %v3046
        %v3145 = vmul.f32 %v379, %v3047
        %v3146 = vmul.f32 %v380, %v3048
        %v3147 = vmul.f32 %v381, %v3049
        %v3148 = vmul.f32 %v382, %v3050
        %v3149 = vmul.f32 %v383, %v3051
        %v3150 = vmul.f32 %v384, %v3052
        %v3151 = vmul.f32 %v385, %v3053
        %v3152 = vmul.f32 %v386, %v3054
        %v3153 = vmul.f32 %v387, %v3055
        %v3154 = vmul.f32 %v388, %v3056
        %v3155 = vmul.f32 %v389, %v3057
        %v3156 = vmul.f32 %v390, %v3058
        %v3157 = vmul.f32 %v391, %v3059
        %v3158 = vmul.f32 %v392, %v3060
        %v3159 = vmul.f32 %v393, %v3061
        %v3160 = vmul.f32 %v394, %v3062
        %v3161 = vmul.f32 %v395, %v3063
        %v3162 = vmul.f32 %v396, %v3064
        %v3163 = vmul.f32 %v397, %v3065
        %v3164 = vmul.f32 %v398, %v3066
        %v3165 = vmul.f32 %v399, %v3067
        %v3166 = vmul.f32 %v400, %v3068
        %v3167 = vmul.f32 %v401, %v3069
        %v3168 = vmul.f32 %v402, %v3070
        %v3169 = vmul.f32 %v403, %v3071
        %v3170 = vmul.f32 %v404, %v3072
        %v3171 = vmul.f32 %v405, %v3073
        %v3172 = vmul.f32 %v406, %v3074
        %v3173 = vmul.f32 %v407, %v3075
        %v3174 = vmul.f32 %v408, %v3076
        %v3175 = vmul.f32 %v409, %v3077
        %v3176 = vmul.f32 %v410, %v3078
        %v3177 = vmul.f32 %v411, %v3079
        %v3178 = vmul.f32 %v412, %v3080
        %v3179 = vmul.f32 %v413, %v3081
        %v3180 = vmul.f32 %v414, %v3082
        %v3181 = vmul.f32 %v415, %v3083
        %v3182 = vmul.f32 %v416, %v3084
        %v3183 = vmul.f32 %v417, %v3085
        %v3184 = vmul.f32 %v418, %v3086
        %v3185 = vmul.f32 %v419, %v2991
        %v3186 = vmul.f32 %v420, %v2992
        %v3187 = vmul.f32 %v421, %v2993
        %v3188 = vmul.f32 %v422, %v2994
        %v3189 = vmul.f32 %v423, %v2995
        %v3190 = vmul.f32 %v424, %v2996
        %v3191 = vmul.f32 %v425, %v2997
        %v3192 = vmul.f32 %v426, %v2998
        %v3193 = vmul.f32 %v427, %v2999
        %v3194 = vmul.f32 %v428, %v3000
        %v3195 = vmul.f32 %v429, %v3001
        %v3196 = vmul.f32 %v430, %v3002
        %v3197 = vmul.f32 %v431, %v3003
        %v3198 = vmul.f32 %v432, %v3004
        %v3199 = vmul.f32 %v433, %v3005
        %v3200 = vmul.f32 %v434, %v3006
        %v3201 = vmul.f32 %v435, %v3007
        %v3202 = vmul.f32 %v436, %v3008
        %v3203 = vmul.f32 %v437, %v3009
        %v3204 = vmul.f32 %v438, %v3010
        %v3205 = vmul.f32 %v439, %v3011
        %v3206 = vmul.f32 %v440, %v3012
        %v3207 = vmul.f32 %v441, %v3013
        %v3208 = vmul.f32 %v442, %v3014
        %v3209 = vmul.f32 %v443, %v3015
        %v3210 = vmul.f32 %v444, %v3016
        %v3211 = vmul.f32 %v445, %v3017
        %v3212 = vmul.f32 %v446, %v3018
        %v3213 = vmul.f32 %v447, %v3019
        %v3214 = vmul.f32 %v448, %v3020
        %v3215 = vmul.f32 %v449, %v3021
        %v3216 = vmul.f32 %v450, %v3022
        %v3217 = vmul.f32 %v451, %v3023
        %v3218 = vmul.f32 %v452, %v3024
        %v3219 = vmul.f32 %v453, %v3025
        %v3220 = vmul.f32 %v454, %v3026
        %v3221 = vmul.f32 %v455, %v3027
        %v3222 = vmul.f32 %v456, %v3028
        %v3223 = vmul.f32 %v457, %v3029
        %v3224 = vmul.f32 %v458, %v3030
        %v3225 = vmul.f32 %v459, %v3031
        %v3226 = vmul.f32 %v460, %v3032
        %v3227 = vmul.f32 %v461, %v3033
        %v3228 = vmul.f32 %v462, %v3034
        %v3229 = vmul.f32 %v463, %v3035
        %v3230 = vmul.f32 %v464, %v3036
        %v3231 = vmul.f32 %v465, %v3037
        %v3232 = vmul.f32 %v466, %v3038
        %v3233 = vmul.f32 %v467, %v3039
        %v3234 = vmul.f32 %v468, %v3040
        %v3235 = vmul.f32 %v469, %v3041
        %v3236 = vmul.f32 %v470, %v3042
        %v3237 = vmul.f32 %v471, %v3043
        %v3238 = vmul.f32 %v472, %v3044
        %v3239 = vmul.f32 %v473, %v3045
        %v3240 = vmul.f32 %v474, %v3046
        %v3241 = vmul.f32 %v475, %v3047
        %v3242 = vmul.f32 %v476, %v3048
        %v3243 = vmul.f32 %v477, %v3049
        %v3244 = vmul.f32 %v478, %v3050
        %v3245 = vmul.f32 %v479, %v3051
        %v3246 = vmul.f32 %v480, %v3052
        %v3247 = vmul.f32 %v481, %v3053
        %v3248 = vmul.f32 %v482, %v3054
        %v3249 = vmul.f32 %v483, %v3055
        %v3250 = vmul.f32 %v484, %v3056
        %v3251 = vmul.f32 %v485, %v3057
        %v3252 = vmul.f32 %v486, %v3058
        %v3253 = vmul.f32 %v487, %v3059
        %v3254 = vmul.f32 %v488, %v3060
        %v3255 = vmul.f32 %v489, %v3061
        %v3256 = vmul.f32 %v490, %v3062
        %v3257 = vmul.f32 %v491, %v3063
        %v3258 = vmul.f32 %v492, %v3064
        %v3259 = vmul.f32 %v493, %v3065
        %v3260 = vmul.f32 %v494, %v3066
        %v3261 = vmul.f32 %v495, %v3067
        %v3262 = vmul.f32 %v496, %v3068
        %v3263 = vmul.f32 %v497, %v3069
        %v3264 = vmul.f32 %v498, %v3070
        %v3265 = vmul.f32 %v499, %v3071
        %v3266 = vmul.f32 %v500, %v3072
        %v3267 = vmul.f32 %v501, %v3073
        %v3268 = vmul.f32 %v502, %v3074
        %v3269 = vmul.f32 %v503, %v3075
        %v3270 = vmul.f32 %v504, %v3076
        %v3271 = vmul.f32 %v505, %v3077
        %v3272 = vmul.f32 %v506, %v3078
        %v3273 = vmul.f32 %v507, %v3079
        %v3274 = vmul.f32 %v508, %v3080
        %v3275 = vmul.f32 %v509, %v3081
        %v3276 = vmul.f32 %v510, %v3082
        %v3277 = vmul.f32 %v511, %v3083
        %v3278 = vmul.f32 %v512, %v3084
        %v3279 = vmul.f32 %v513, %v3085
        %v3280 = vmul.f32 %v514, %v3086
        %v3281 = vadd.f32 %v3089, %v3090
        %v3282 = vadd.f32 %v3281, %v3091
        %v3283 = vadd.f32 %v3282, %v3092
        %v3284 = vadd.f32 %v3283, %v3093
        %v3285 = vadd.f32 %v3284, %v3094
        %v3286 = vadd.f32 %v3285, %v3095
        %v3287 = vadd.f32 %v3286, %v3096
        %v3288 = vadd.f32 %v3287, %v3097
        %v3289 = vadd.f32 %v3288, %v3098
        %v3290 = vadd.f32 %v3289, %v3099
        %v3291 = vadd.f32 %v3290, %v3100
        %v3292 = vadd.f32 %v3291, %v3101
        %v3293 = vadd.f32 %v3292, %v3102
        %v3294 = vadd.f32 %v3293, %v3103
        %v3295 = vadd.f32 %v3294, %v3104
        %v3296 = vadd.f32 %v3295, %v3105
        %v3297 = vadd.f32 %v3296, %v3106
        %v3298 = vadd.f32 %v3297, %v3107
        %v3299 = vadd.f32 %v3298, %v3108
        %v3300 = vadd.f32 %v3299, %v3109
        %v3301 = vadd.f32 %v3300, %v3110
        %v3302 = vadd.f32 %v3301, %v3111
        %v3303 = vadd.f32 %v3302, %v3112
        %v3304 = vadd.f32 %v3303, %v3113
        %v3305 = vadd.f32 %v3304, %v3114
        %v3306 = vadd.f32 %v3305, %v3115
        %v3307 = vadd.f32 %v3306, %v3116
        %v3308 = vadd.f32 %v3307, %v3117
        %v3309 = vadd.f32 %v3308, %v3118
        %v3310 = vadd.f32 %v3309, %v3119
        %v3311 = vadd.f32 %v3310, %v3120
        %v3312 = vadd.f32 %v3311, %v3121
        %v3313 = vadd.f32 %v3312, %v3122
        %v3314 = vadd.f32 %v3313, %v3123
        %v3315 = vadd.f32 %v3314, %v3124
        %v3316 = vadd.f32 %v3315, %v3125
        %v3317 = vadd.f32 %v3316, %v3126
        %v3318 = vadd.f32 %v3317, %v3127
        %v3319 = vadd.f32 %v3318, %v3128
        %v3320 = vadd.f32 %v3319, %v3129
        %v3321 = vadd.f32 %v3320, %v3130
        %v3322 = vadd.f32 %v3321, %v3131
        %v3323 = vadd.f32 %v3322, %v3132
        %v3324 = vadd.f32 %v3323, %v3133
        %v3325 = vadd.f32 %v3324, %v3134
        %v3326 = vadd.f32 %v3325, %v3135
        %v3327 = vadd.f32 %v3326, %v3136
        %v3328 = vadd.f32 %v3327, %v3137
        %v3329 = vadd.f32 %v3328, %v3138
        %v3330 = vadd.f32 %v3329, %v3139
        %v3331 = vadd.f32 %v3330, %v3140
        %v3332 = vadd.f32 %v3331, %v3141
        %v3333 = vadd.f32 %v3332, %v3142
        %v3334 = vadd.f32 %v3333, %v3143
        %v3335 = vadd.f32 %v3334, %v3144
        %v3336 = vadd.f32 %v3335, %v3145
        %v3337 = vadd.f32 %v3336, %v3146
        %v3338 = vadd.f32 %v3337, %v3147
        %v3339 = vadd.f32 %v3338, %v3148
        %v3340 = vadd.f32 %v3339, %v3149
        %v3341 = vadd.f32 %v3340, %v3150
        %v3342 = vadd.f32 %v3341, %v3151
        %v3343 = vadd.f32 %v3342, %v3152
        %v3344 = vadd.f32 %v3343, %v3153
        %v3345 = vadd.f32 %v3344, %v3154
        %v3346 = vadd.f32 %v3345, %v3155
        %v3347 = vadd.f32 %v3346, %v3156
        %v3348 = vadd.f32 %v3347, %v3157
        %v3349 = vadd.f32 %v3348, %v3158
        %v3350 = vadd.f32 %v3349, %v3159
        %v3351 = vadd.f32 %v3350, %v3160
        %v3352 = vadd.f32 %v3351, %v3161
        %v3353 = vadd.f32 %v3352, %v3162
        %v3354 = vadd.f32 %v3353, %v3163
        %v3355 = vadd.f32 %v3354, %v3164
        %v3356 = vadd.f32 %v3355, %v3165
        %v3357 = vadd.f32 %v3356, %v3166
        %v3358 = vadd.f32 %v3357, %v3167
        %v3359 = vadd.f32 %v3358, %v3168
        %v3360 = vadd.f32 %v3359, %v3169
        %v3361 = vadd.f32 %v3360, %v3170
        %v3362 = vadd.f32 %v3361, %v3171
        %v3363 = vadd.f32 %v3362, %v3172
        %v3364 = vadd.f32 %v3363, %v3173
        %v3365 = vadd.f32 %v3364, %v3174
        %v3366 = vadd.f32 %v3365, %v3175
        %v3367 = vadd.f32 %v3366, %v3176
        %v3368 = vadd.f32 %v3367, %v3177
        %v3369 = vadd.f32 %v3368, %v3178
        %v3370 = vadd.f32 %v3369, %v3179
        %v3371 = vadd.f32 %v3370, %v3180
        %v3372 = vadd.f32 %v3371, %v3181
        %v3373 = vadd.f32 %v3372, %v3182
        %v3374 = vadd.f32 %v3373, %v3183
        %v3375 = vadd.f32 %v3374, %v3184
        %v3376 = vrot.slane %v3375, 4
        %v3377 = vadd.f32 %v3375, %v3376
        %v3378 = vrot.slane %v3377, 2
        %v3379 = vadd.f32 %v3377, %v3378
        %v3380 = vrot.slane %v3379, 1
        %v3381 = vadd.f32 %v3379, %v3380
        %v3382 = vadd.f32 %v3185, %v3186
        %v3383 = vadd.f32 %v3382, %v3187
        %v3384 = vadd.f32 %v3383, %v3188
        %v3385 = vadd.f32 %v3384, %v3189
        %v3386 = vadd.f32 %v3385, %v3190
        %v3387 = vadd.f32 %v3386, %v3191
        %v3388 = vadd.f32 %v3387, %v3192
        %v3389 = vadd.f32 %v3388, %v3193
        %v3390 = vadd.f32 %v3389, %v3194
        %v3391 = vadd.f32 %v3390, %v3195
        %v3392 = vadd.f32 %v3391, %v3196
        %v3393 = vadd.f32 %v3392, %v3197
        %v3394 = vadd.f32 %v3393, %v3198
        %v3395 = vadd.f32 %v3394, %v3199
        %v3396 = vadd.f32 %v3395, %v3200
        %v3397 = vadd.f32 %v3396, %v3201
        %v3398 = vadd.f32 %v3397, %v3202
        %v3399 = vadd.f32 %v3398, %v3203
        %v3400 = vadd.f32 %v3399, %v3204
        %v3401 = vadd.f32 %v3400, %v3205
        %v3402 = vadd.f32 %v3401, %v3206
        %v3403 = vadd.f32 %v3402, %v3207
        %v3404 = vadd.f32 %v3403, %v3208
        %v3405 = vadd.f32 %v3404, %v3209
        %v3406 = vadd.f32 %v3405, %v3210
        %v3407 = vadd.f32 %v3406, %v3211
        %v3408 = vadd.f32 %v3407, %v3212
        %v3409 = vadd.f32 %v3408, %v3213
        %v3410 = vadd.f32 %v3409, %v3214
        %v3411 = vadd.f32 %v3410, %v3215
        %v3412 = vadd.f32 %v3411, %v3216
        %v3413 = vadd.f32 %v3412, %v3217
        %v3414 = vadd.f32 %v3413, %v3218
        %v3415 = vadd.f32 %v3414, %v3219
        %v3416 = vadd.f32 %v3415, %v3220
        %v3417 = vadd.f32 %v3416, %v3221
        %v3418 = vadd.f32 %v3417, %v3222
        %v3419 = vadd.f32 %v3418, %v3223
        %v3420 = vadd.f32 %v3419, %v3224
        %v3421 = vadd.f32 %v3420, %v3225
        %v3422 = vadd.f32 %v3421, %v3226
        %v3423 = vadd.f32 %v3422, %v3227
        %v3424 = vadd.f32 %v3423, %v3228
        %v3425 = vadd.f32 %v3424, %v3229
        %v3426 = vadd.f32 %v3425, %v3230
        %v3427 = vadd.f32 %v3426, %v3231
        %v3428 = vadd.f32 %v3427, %v3232
        %v3429 = vadd.f32 %v3428, %v3233
        %v3430 = vadd.f32 %v3429, %v3234
        %v3431 = vadd.f32 %v3430, %v3235
        %v3432 = vadd.f32 %v3431, %v3236
        %v3433 = vadd.f32 %v3432, %v3237
        %v3434 = vadd.f32 %v3433, %v3238
        %v3435 = vadd.f32 %v3434, %v3239
        %v3436 = vadd.f32 %v3435, %v3240
        %v3437 = vadd.f32 %v3436, %v3241
        %v3438 = vadd.f32 %v3437, %v3242
        %v3439 = vadd.f32 %v3438, %v3243
        %v3440 = vadd.f32 %v3439, %v3244
        %v3441 = vadd.f32 %v3440, %v3245
        %v3442 = vadd.f32 %v3441, %v3246
        %v3443 = vadd.f32 %v3442, %v3247
        %v3444 = vadd.f32 %v3443, %v3248
        %v3445 = vadd.f32 %v3444, %v3249
        %v3446 = vadd.f32 %v3445, %v3250
        %v3447 = vadd.f32 %v3446, %v3251
        %v3448 = vadd.f32 %v3447, %v3252
        %v3449 = vadd.f32 %v3448, %v3253
        %v3450 = vadd.f32 %v3449, %v3254
        %v3451 = vadd.f32 %v3450, %v3255
        %v3452 = vadd.f32 %v3451, %v3256
        %v3453 = vadd.f32 %v3452, %v3257
        %v3454 = vadd.f32 %v3453, %v3258
        %v3455 = vadd.f32 %v3454, %v3259
        %v3456 = vadd.f32 %v3455, %v3260
        %v3457 = vadd.f32 %v3456, %v3261
        %v3458 = vadd.f32 %v3457, %v3262
        %v3459 = vadd.f32 %v3458, %v3263
        %v3460 = vadd.f32 %v3459, %v3264
        %v3461 = vadd.f32 %v3460, %v3265
        %v3462 = vadd.f32 %v3461, %v3266
        %v3463 = vadd.f32 %v3462, %v3267
        %v3464 = vadd.f32 %v3463, %v3268
        %v3465 = vadd.f32 %v3464, %v3269
        %v3466 = vadd.f32 %v3465, %v3270
        %v3467 = vadd.f32 %v3466, %v3271
        %v3468 = vadd.f32 %v3467, %v3272
        %v3469 = vadd.f32 %v3468, %v3273
        %v3470 = vadd.f32 %v3469, %v3274
        %v3471 = vadd.f32 %v3470, %v3275
        %v3472 = vadd.f32 %v3471, %v3276
        %v3473 = vadd.f32 %v3472, %v3277
        %v3474 = vadd.f32 %v3473, %v3278
        %v3475 = vadd.f32 %v3474, %v3279
        %v3476 = vadd.f32 %v3475, %v3280
        %v3477 = vrot.slane %v3476, 4
        %v3478 = vadd.f32 %v3476, %v3477
        %v3479 = vrot.slane %v3478, 2
        %v3480 = vadd.f32 %v3478, %v3479
        %v3481 = vrot.slane %v3480, 1
        %v3482 = vadd.f32 %v3480, %v3481
        %v3485 = vsel %vm1104, %v3482, %v3381
        %v3487 = vadd.f32 %v3088, %v3485
        %3488 = vst [vmem:[%s3087] sm:$0x3] %v3487
        %s3489 = scalar_lea.vmem %s276, 1920 [#allocation6]
        %v3490 = vld [vmem:[%s3489] sm:$0xf]
        %v3491 = vld [vmem:[%s3489 + $0x4] sm:$0xf]
        %v3492 = vld [vmem:[%s3489 + $0x8] sm:$0xf]
        %v3493 = vld [vmem:[%s3489 + $0xc] sm:$0xf]
        %v3494 = vld [vmem:[%s3489 + $0x10] sm:$0xf]
        %v3495 = vld [vmem:[%s3489 + $0x14] sm:$0xf]
        %v3496 = vld [vmem:[%s3489 + $0x18] sm:$0xf]
        %v3497 = vld [vmem:[%s3489 + $0x1c] sm:$0xf]
        %v3498 = vld [vmem:[%s3489 + $0x20] sm:$0xf]
        %v3499 = vld [vmem:[%s3489 + $0x24] sm:$0xf]
        %v3500 = vld [vmem:[%s3489 + $0x28] sm:$0xf]
        %v3501 = vld [vmem:[%s3489 + $0x2c] sm:$0xf]
        %v3502 = vld [vmem:[%s3489 + $0x30] sm:$0xf]
        %v3503 = vld [vmem:[%s3489 + $0x34] sm:$0xf]
        %v3504 = vld [vmem:[%s3489 + $0x38] sm:$0xf]
        %v3505 = vld [vmem:[%s3489 + $0x3c] sm:$0xf]
        %v3506 = vld [vmem:[%s3489 + $0x40] sm:$0xf]
        %v3507 = vld [vmem:[%s3489 + $0x44] sm:$0xf]
        %v3508 = vld [vmem:[%s3489 + $0x48] sm:$0xf]
        %v3509 = vld [vmem:[%s3489 + $0x4c] sm:$0xf]
        %v3510 = vld [vmem:[%s3489 + $0x50] sm:$0xf]
        %v3511 = vld [vmem:[%s3489 + $0x54] sm:$0xf]
        %v3512 = vld [vmem:[%s3489 + $0x58] sm:$0xf]
        %v3513 = vld [vmem:[%s3489 + $0x5c] sm:$0xf]
        %v3514 = vld [vmem:[%s3489 + $0x60] sm:$0xf]
        %v3515 = vld [vmem:[%s3489 + $0x64] sm:$0xf]
        %v3516 = vld [vmem:[%s3489 + $0x68] sm:$0xf]
        %v3517 = vld [vmem:[%s3489 + $0x6c] sm:$0xf]
        %v3518 = vld [vmem:[%s3489 + $0x70] sm:$0xf]
        %v3519 = vld [vmem:[%s3489 + $0x74] sm:$0xf]
        %v3520 = vld [vmem:[%s3489 + $0x78] sm:$0xf]
        %v3521 = vld [vmem:[%s3489 + $0x7c] sm:$0xf]
        %v3522 = vld [vmem:[%s3489 + $0x80] sm:$0xf]
        %v3523 = vld [vmem:[%s3489 + $0x84] sm:$0xf]
        %v3524 = vld [vmem:[%s3489 + $0x88] sm:$0xf]
        %v3525 = vld [vmem:[%s3489 + $0x8c] sm:$0xf]
        %v3526 = vld [vmem:[%s3489 + $0x90] sm:$0xf]
        %v3527 = vld [vmem:[%s3489 + $0x94] sm:$0xf]
        %v3528 = vld [vmem:[%s3489 + $0x98] sm:$0xf]
        %v3529 = vld [vmem:[%s3489 + $0x9c] sm:$0xf]
        %v3530 = vld [vmem:[%s3489 + $0xa0] sm:$0xf]
        %v3531 = vld [vmem:[%s3489 + $0xa4] sm:$0xf]
        %v3532 = vld [vmem:[%s3489 + $0xa8] sm:$0xf]
        %v3533 = vld [vmem:[%s3489 + $0xac] sm:$0xf]
        %v3534 = vld [vmem:[%s3489 + $0xb0] sm:$0xf]
        %v3535 = vld [vmem:[%s3489 + $0xb4] sm:$0xf]
        %v3536 = vld [vmem:[%s3489 + $0xb8] sm:$0xf]
        %v3537 = vld [vmem:[%s3489 + $0xbc] sm:$0xf]
        %v3538 = vld [vmem:[%s3489 + $0xc0] sm:$0xf]
        %v3539 = vld [vmem:[%s3489 + $0xc4] sm:$0xf]
        %v3540 = vld [vmem:[%s3489 + $0xc8] sm:$0xf]
        %v3541 = vld [vmem:[%s3489 + $0xcc] sm:$0xf]
        %v3542 = vld [vmem:[%s3489 + $0xd0] sm:$0xf]
        %v3543 = vld [vmem:[%s3489 + $0xd4] sm:$0xf]
        %v3544 = vld [vmem:[%s3489 + $0xd8] sm:$0xf]
        %v3545 = vld [vmem:[%s3489 + $0xdc] sm:$0xf]
        %v3546 = vld [vmem:[%s3489 + $0xe0] sm:$0xf]
        %v3547 = vld [vmem:[%s3489 + $0xe4] sm:$0xf]
        %v3548 = vld [vmem:[%s3489 + $0xe8] sm:$0xf]
        %v3549 = vld [vmem:[%s3489 + $0xec] sm:$0xf]
        %v3550 = vld [vmem:[%s3489 + $0xf0] sm:$0xf]
        %v3551 = vld [vmem:[%s3489 + $0xf4] sm:$0xf]
        %v3552 = vld [vmem:[%s3489 + $0xf8] sm:$0xf]
        %v3553 = vld [vmem:[%s3489 + $0xfc] sm:$0xf]
        %v3554 = vld [vmem:[%s3489 + $0x100] sm:$0xf]
        %v3555 = vld [vmem:[%s3489 + $0x104] sm:$0xf]
        %v3556 = vld [vmem:[%s3489 + $0x108] sm:$0xf]
        %v3557 = vld [vmem:[%s3489 + $0x10c] sm:$0xf]
        %v3558 = vld [vmem:[%s3489 + $0x110] sm:$0xf]
        %v3559 = vld [vmem:[%s3489 + $0x114] sm:$0xf]
        %v3560 = vld [vmem:[%s3489 + $0x118] sm:$0xf]
        %v3561 = vld [vmem:[%s3489 + $0x11c] sm:$0xf]
        %v3562 = vld [vmem:[%s3489 + $0x120] sm:$0xf]
        %v3563 = vld [vmem:[%s3489 + $0x124] sm:$0xf]
        %v3564 = vld [vmem:[%s3489 + $0x128] sm:$0xf]
        %v3565 = vld [vmem:[%s3489 + $0x12c] sm:$0xf]
        %v3566 = vld [vmem:[%s3489 + $0x130] sm:$0xf]
        %v3567 = vld [vmem:[%s3489 + $0x134] sm:$0xf]
        %v3568 = vld [vmem:[%s3489 + $0x138] sm:$0xf]
        %v3569 = vld [vmem:[%s3489 + $0x13c] sm:$0xf]
        %v3570 = vld [vmem:[%s3489 + $0x140] sm:$0xf]
        %v3571 = vld [vmem:[%s3489 + $0x144] sm:$0xf]
        %v3572 = vld [vmem:[%s3489 + $0x148] sm:$0xf]
        %v3573 = vld [vmem:[%s3489 + $0x14c] sm:$0xf]
        %v3574 = vld [vmem:[%s3489 + $0x150] sm:$0xf]
        %v3575 = vld [vmem:[%s3489 + $0x154] sm:$0xf]
        %v3576 = vld [vmem:[%s3489 + $0x158] sm:$0xf]
        %v3577 = vld [vmem:[%s3489 + $0x15c] sm:$0xf]
        %v3578 = vld [vmem:[%s3489 + $0x160] sm:$0xf]
        %v3579 = vld [vmem:[%s3489 + $0x164] sm:$0xf]
        %v3580 = vld [vmem:[%s3489 + $0x168] sm:$0xf]
        %v3581 = vld [vmem:[%s3489 + $0x16c] sm:$0xf]
        %v3582 = vld [vmem:[%s3489 + $0x170] sm:$0xf]
        %v3583 = vld [vmem:[%s3489 + $0x174] sm:$0xf]
        %v3584 = vld [vmem:[%s3489 + $0x178] sm:$0xf]
        %v3585 = vld [vmem:[%s3489 + $0x17c] sm:$0xf]
        %v3586 = vunpack.c.l.bf16 %v3490
        %v3587 = vunpack.c.l.bf16 %v3491
        %v3588 = vunpack.c.l.bf16 %v3492
        %v3589 = vunpack.c.l.bf16 %v3493
        %v3590 = vunpack.c.l.bf16 %v3494
        %v3591 = vunpack.c.l.bf16 %v3495
        %v3592 = vunpack.c.l.bf16 %v3496
        %v3593 = vunpack.c.l.bf16 %v3497
        %v3594 = vunpack.c.l.bf16 %v3498
        %v3595 = vunpack.c.l.bf16 %v3499
        %v3596 = vunpack.c.l.bf16 %v3500
        %v3597 = vunpack.c.l.bf16 %v3501
        %v3598 = vunpack.c.l.bf16 %v3502
        %v3599 = vunpack.c.l.bf16 %v3503
        %v3600 = vunpack.c.l.bf16 %v3504
        %v3601 = vunpack.c.l.bf16 %v3505
        %v3602 = vunpack.c.l.bf16 %v3506
        %v3603 = vunpack.c.l.bf16 %v3507
        %v3604 = vunpack.c.l.bf16 %v3508
        %v3605 = vunpack.c.l.bf16 %v3509
        %v3606 = vunpack.c.l.bf16 %v3510
        %v3607 = vunpack.c.l.bf16 %v3511
        %v3608 = vunpack.c.l.bf16 %v3512
        %v3609 = vunpack.c.l.bf16 %v3513
        %v3610 = vunpack.c.l.bf16 %v3514
        %v3611 = vunpack.c.l.bf16 %v3515
        %v3612 = vunpack.c.l.bf16 %v3516
        %v3613 = vunpack.c.l.bf16 %v3517
        %v3614 = vunpack.c.l.bf16 %v3518
        %v3615 = vunpack.c.l.bf16 %v3519
        %v3616 = vunpack.c.l.bf16 %v3520
        %v3617 = vunpack.c.l.bf16 %v3521
        %v3618 = vunpack.c.l.bf16 %v3522
        %v3619 = vunpack.c.l.bf16 %v3523
        %v3620 = vunpack.c.l.bf16 %v3524
        %v3621 = vunpack.c.l.bf16 %v3525
        %v3622 = vunpack.c.l.bf16 %v3526
        %v3623 = vunpack.c.l.bf16 %v3527
        %v3624 = vunpack.c.l.bf16 %v3528
        %v3625 = vunpack.c.l.bf16 %v3529
        %v3626 = vunpack.c.l.bf16 %v3530
        %v3627 = vunpack.c.l.bf16 %v3531
        %v3628 = vunpack.c.l.bf16 %v3532
        %v3629 = vunpack.c.l.bf16 %v3533
        %v3630 = vunpack.c.l.bf16 %v3534
        %v3631 = vunpack.c.l.bf16 %v3535
        %v3632 = vunpack.c.l.bf16 %v3536
        %v3633 = vunpack.c.l.bf16 %v3537
        %v3634 = vunpack.c.l.bf16 %v3538
        %v3635 = vunpack.c.l.bf16 %v3539
        %v3636 = vunpack.c.l.bf16 %v3540
        %v3637 = vunpack.c.l.bf16 %v3541
        %v3638 = vunpack.c.l.bf16 %v3542
        %v3639 = vunpack.c.l.bf16 %v3543
        %v3640 = vunpack.c.l.bf16 %v3544
        %v3641 = vunpack.c.l.bf16 %v3545
        %v3642 = vunpack.c.l.bf16 %v3546
        %v3643 = vunpack.c.l.bf16 %v3547
        %v3644 = vunpack.c.l.bf16 %v3548
        %v3645 = vunpack.c.l.bf16 %v3549
        %v3646 = vunpack.c.l.bf16 %v3550
        %v3647 = vunpack.c.l.bf16 %v3551
        %v3648 = vunpack.c.l.bf16 %v3552
        %v3649 = vunpack.c.l.bf16 %v3553
        %v3650 = vunpack.c.l.bf16 %v3554
        %v3651 = vunpack.c.l.bf16 %v3555
        %v3652 = vunpack.c.l.bf16 %v3556
        %v3653 = vunpack.c.l.bf16 %v3557
        %v3654 = vunpack.c.l.bf16 %v3558
        %v3655 = vunpack.c.l.bf16 %v3559
        %v3656 = vunpack.c.l.bf16 %v3560
        %v3657 = vunpack.c.l.bf16 %v3561
        %v3658 = vunpack.c.l.bf16 %v3562
        %v3659 = vunpack.c.l.bf16 %v3563
        %v3660 = vunpack.c.l.bf16 %v3564
        %v3661 = vunpack.c.l.bf16 %v3565
        %v3662 = vunpack.c.l.bf16 %v3566
        %v3663 = vunpack.c.l.bf16 %v3567
        %v3664 = vunpack.c.l.bf16 %v3568
        %v3665 = vunpack.c.l.bf16 %v3569
        %v3666 = vunpack.c.l.bf16 %v3570
        %v3667 = vunpack.c.l.bf16 %v3571
        %v3668 = vunpack.c.l.bf16 %v3572
        %v3669 = vunpack.c.l.bf16 %v3573
        %v3670 = vunpack.c.l.bf16 %v3574
        %v3671 = vunpack.c.l.bf16 %v3575
        %v3672 = vunpack.c.l.bf16 %v3576
        %v3673 = vunpack.c.l.bf16 %v3577
        %v3674 = vunpack.c.l.bf16 %v3578
        %v3675 = vunpack.c.l.bf16 %v3579
        %v3676 = vunpack.c.l.bf16 %v3580
        %v3677 = vunpack.c.l.bf16 %v3581
        %v3678 = vunpack.c.l.bf16 %v3582
        %v3679 = vunpack.c.l.bf16 %v3583
        %v3680 = vunpack.c.l.bf16 %v3584
        %v3681 = vunpack.c.l.bf16 %v3585
        %s3682 = scalar_lea.vmem [#allocation2], 10
        %v3683 = vld [vmem:[%s3682] sm:$0x3]
        %v3684 = vmul.f32 %v323, %v3586
        %v3685 = vmul.f32 %v324, %v3587
        %v3686 = vmul.f32 %v325, %v3588
        %v3687 = vmul.f32 %v326, %v3589
        %v3688 = vmul.f32 %v327, %v3590
        %v3689 = vmul.f32 %v328, %v3591
        %v3690 = vmul.f32 %v329, %v3592
        %v3691 = vmul.f32 %v330, %v3593
        %v3692 = vmul.f32 %v331, %v3594
        %v3693 = vmul.f32 %v332, %v3595
        %v3694 = vmul.f32 %v333, %v3596
        %v3695 = vmul.f32 %v334, %v3597
        %v3696 = vmul.f32 %v335, %v3598
        %v3697 = vmul.f32 %v336, %v3599
        %v3698 = vmul.f32 %v337, %v3600
        %v3699 = vmul.f32 %v338, %v3601
        %v3700 = vmul.f32 %v339, %v3602
        %v3701 = vmul.f32 %v340, %v3603
        %v3702 = vmul.f32 %v341, %v3604
        %v3703 = vmul.f32 %v342, %v3605
        %v3704 = vmul.f32 %v343, %v3606
        %v3705 = vmul.f32 %v344, %v3607
        %v3706 = vmul.f32 %v345, %v3608
        %v3707 = vmul.f32 %v346, %v3609
        %v3708 = vmul.f32 %v347, %v3610
        %v3709 = vmul.f32 %v348, %v3611
        %v3710 = vmul.f32 %v349, %v3612
        %v3711 = vmul.f32 %v350, %v3613
        %v3712 = vmul.f32 %v351, %v3614
        %v3713 = vmul.f32 %v352, %v3615
        %v3714 = vmul.f32 %v353, %v3616
        %v3715 = vmul.f32 %v354, %v3617
        %v3716 = vmul.f32 %v355, %v3618
        %v3717 = vmul.f32 %v356, %v3619
        %v3718 = vmul.f32 %v357, %v3620
        %v3719 = vmul.f32 %v358, %v3621
        %v3720 = vmul.f32 %v359, %v3622
        %v3721 = vmul.f32 %v360, %v3623
        %v3722 = vmul.f32 %v361, %v3624
        %v3723 = vmul.f32 %v362, %v3625
        %v3724 = vmul.f32 %v363, %v3626
        %v3725 = vmul.f32 %v364, %v3627
        %v3726 = vmul.f32 %v365, %v3628
        %v3727 = vmul.f32 %v366, %v3629
        %v3728 = vmul.f32 %v367, %v3630
        %v3729 = vmul.f32 %v368, %v3631
        %v3730 = vmul.f32 %v369, %v3632
        %v3731 = vmul.f32 %v370, %v3633
        %v3732 = vmul.f32 %v371, %v3634
        %v3733 = vmul.f32 %v372, %v3635
        %v3734 = vmul.f32 %v373, %v3636
        %v3735 = vmul.f32 %v374, %v3637
        %v3736 = vmul.f32 %v375, %v3638
        %v3737 = vmul.f32 %v376, %v3639
        %v3738 = vmul.f32 %v377, %v3640
        %v3739 = vmul.f32 %v378, %v3641
        %v3740 = vmul.f32 %v379, %v3642
        %v3741 = vmul.f32 %v380, %v3643
        %v3742 = vmul.f32 %v381, %v3644
        %v3743 = vmul.f32 %v382, %v3645
        %v3744 = vmul.f32 %v383, %v3646
        %v3745 = vmul.f32 %v384, %v3647
        %v3746 = vmul.f32 %v385, %v3648
        %v3747 = vmul.f32 %v386, %v3649
        %v3748 = vmul.f32 %v387, %v3650
        %v3749 = vmul.f32 %v388, %v3651
        %v3750 = vmul.f32 %v389, %v3652
        %v3751 = vmul.f32 %v390, %v3653
        %v3752 = vmul.f32 %v391, %v3654
        %v3753 = vmul.f32 %v392, %v3655
        %v3754 = vmul.f32 %v393, %v3656
        %v3755 = vmul.f32 %v394, %v3657
        %v3756 = vmul.f32 %v395, %v3658
        %v3757 = vmul.f32 %v396, %v3659
        %v3758 = vmul.f32 %v397, %v3660
        %v3759 = vmul.f32 %v398, %v3661
        %v3760 = vmul.f32 %v399, %v3662
        %v3761 = vmul.f32 %v400, %v3663
        %v3762 = vmul.f32 %v401, %v3664
        %v3763 = vmul.f32 %v402, %v3665
        %v3764 = vmul.f32 %v403, %v3666
        %v3765 = vmul.f32 %v404, %v3667
        %v3766 = vmul.f32 %v405, %v3668
        %v3767 = vmul.f32 %v406, %v3669
        %v3768 = vmul.f32 %v407, %v3670
        %v3769 = vmul.f32 %v408, %v3671
        %v3770 = vmul.f32 %v409, %v3672
        %v3771 = vmul.f32 %v410, %v3673
        %v3772 = vmul.f32 %v411, %v3674
        %v3773 = vmul.f32 %v412, %v3675
        %v3774 = vmul.f32 %v413, %v3676
        %v3775 = vmul.f32 %v414, %v3677
        %v3776 = vmul.f32 %v415, %v3678
        %v3777 = vmul.f32 %v416, %v3679
        %v3778 = vmul.f32 %v417, %v3680
        %v3779 = vmul.f32 %v418, %v3681
        %v3780 = vmul.f32 %v419, %v3586
        %v3781 = vmul.f32 %v420, %v3587
        %v3782 = vmul.f32 %v421, %v3588
        %v3783 = vmul.f32 %v422, %v3589
        %v3784 = vmul.f32 %v423, %v3590
        %v3785 = vmul.f32 %v424, %v3591
        %v3786 = vmul.f32 %v425, %v3592
        %v3787 = vmul.f32 %v426, %v3593
        %v3788 = vmul.f32 %v427, %v3594
        %v3789 = vmul.f32 %v428, %v3595
        %v3790 = vmul.f32 %v429, %v3596
        %v3791 = vmul.f32 %v430, %v3597
        %v3792 = vmul.f32 %v431, %v3598
        %v3793 = vmul.f32 %v432, %v3599
        %v3794 = vmul.f32 %v433, %v3600
        %v3795 = vmul.f32 %v434, %v3601
        %v3796 = vmul.f32 %v435, %v3602
        %v3797 = vmul.f32 %v436, %v3603
        %v3798 = vmul.f32 %v437, %v3604
        %v3799 = vmul.f32 %v438, %v3605
        %v3800 = vmul.f32 %v439, %v3606
        %v3801 = vmul.f32 %v440, %v3607
        %v3802 = vmul.f32 %v441, %v3608
        %v3803 = vmul.f32 %v442, %v3609
        %v3804 = vmul.f32 %v443, %v3610
        %v3805 = vmul.f32 %v444, %v3611
        %v3806 = vmul.f32 %v445, %v3612
        %v3807 = vmul.f32 %v446, %v3613
        %v3808 = vmul.f32 %v447, %v3614
        %v3809 = vmul.f32 %v448, %v3615
        %v3810 = vmul.f32 %v449, %v3616
        %v3811 = vmul.f32 %v450, %v3617
        %v3812 = vmul.f32 %v451, %v3618
        %v3813 = vmul.f32 %v452, %v3619
        %v3814 = vmul.f32 %v453, %v3620
        %v3815 = vmul.f32 %v454, %v3621
        %v3816 = vmul.f32 %v455, %v3622
        %v3817 = vmul.f32 %v456, %v3623
        %v3818 = vmul.f32 %v457, %v3624
        %v3819 = vmul.f32 %v458, %v3625
        %v3820 = vmul.f32 %v459, %v3626
        %v3821 = vmul.f32 %v460, %v3627
        %v3822 = vmul.f32 %v461, %v3628
        %v3823 = vmul.f32 %v462, %v3629
        %v3824 = vmul.f32 %v463, %v3630
        %v3825 = vmul.f32 %v464, %v3631
        %v3826 = vmul.f32 %v465, %v3632
        %v3827 = vmul.f32 %v466, %v3633
        %v3828 = vmul.f32 %v467, %v3634
        %v3829 = vmul.f32 %v468, %v3635
        %v3830 = vmul.f32 %v469, %v3636
        %v3831 = vmul.f32 %v470, %v3637
        %v3832 = vmul.f32 %v471, %v3638
        %v3833 = vmul.f32 %v472, %v3639
        %v3834 = vmul.f32 %v473, %v3640
        %v3835 = vmul.f32 %v474, %v3641
        %v3836 = vmul.f32 %v475, %v3642
        %v3837 = vmul.f32 %v476, %v3643
        %v3838 = vmul.f32 %v477, %v3644
        %v3839 = vmul.f32 %v478, %v3645
        %v3840 = vmul.f32 %v479, %v3646
        %v3841 = vmul.f32 %v480, %v3647
        %v3842 = vmul.f32 %v481, %v3648
        %v3843 = vmul.f32 %v482, %v3649
        %v3844 = vmul.f32 %v483, %v3650
        %v3845 = vmul.f32 %v484, %v3651
        %v3846 = vmul.f32 %v485, %v3652
        %v3847 = vmul.f32 %v486, %v3653
        %v3848 = vmul.f32 %v487, %v3654
        %v3849 = vmul.f32 %v488, %v3655
        %v3850 = vmul.f32 %v489, %v3656
        %v3851 = vmul.f32 %v490, %v3657
        %v3852 = vmul.f32 %v491, %v3658
        %v3853 = vmul.f32 %v492, %v3659
        %v3854 = vmul.f32 %v493, %v3660
        %v3855 = vmul.f32 %v494, %v3661
        %v3856 = vmul.f32 %v495, %v3662
        %v3857 = vmul.f32 %v496, %v3663
        %v3858 = vmul.f32 %v497, %v3664
        %v3859 = vmul.f32 %v498, %v3665
        %v3860 = vmul.f32 %v499, %v3666
        %v3861 = vmul.f32 %v500, %v3667
        %v3862 = vmul.f32 %v501, %v3668
        %v3863 = vmul.f32 %v502, %v3669
        %v3864 = vmul.f32 %v503, %v3670
        %v3865 = vmul.f32 %v504, %v3671
        %v3866 = vmul.f32 %v505, %v3672
        %v3867 = vmul.f32 %v506, %v3673
        %v3868 = vmul.f32 %v507, %v3674
        %v3869 = vmul.f32 %v508, %v3675
        %v3870 = vmul.f32 %v509, %v3676
        %v3871 = vmul.f32 %v510, %v3677
        %v3872 = vmul.f32 %v511, %v3678
        %v3873 = vmul.f32 %v512, %v3679
        %v3874 = vmul.f32 %v513, %v3680
        %v3875 = vmul.f32 %v514, %v3681
        %v3876 = vadd.f32 %v3684, %v3685
        %v3877 = vadd.f32 %v3876, %v3686
        %v3878 = vadd.f32 %v3877, %v3687
        %v3879 = vadd.f32 %v3878, %v3688
        %v3880 = vadd.f32 %v3879, %v3689
        %v3881 = vadd.f32 %v3880, %v3690
        %v3882 = vadd.f32 %v3881, %v3691
        %v3883 = vadd.f32 %v3882, %v3692
        %v3884 = vadd.f32 %v3883, %v3693
        %v3885 = vadd.f32 %v3884, %v3694
        %v3886 = vadd.f32 %v3885, %v3695
        %v3887 = vadd.f32 %v3886, %v3696
        %v3888 = vadd.f32 %v3887, %v3697
        %v3889 = vadd.f32 %v3888, %v3698
        %v3890 = vadd.f32 %v3889, %v3699
        %v3891 = vadd.f32 %v3890, %v3700
        %v3892 = vadd.f32 %v3891, %v3701
        %v3893 = vadd.f32 %v3892, %v3702
        %v3894 = vadd.f32 %v3893, %v3703
        %v3895 = vadd.f32 %v3894, %v3704
        %v3896 = vadd.f32 %v3895, %v3705
        %v3897 = vadd.f32 %v3896, %v3706
        %v3898 = vadd.f32 %v3897, %v3707
        %v3899 = vadd.f32 %v3898, %v3708
        %v3900 = vadd.f32 %v3899, %v3709
        %v3901 = vadd.f32 %v3900, %v3710
        %v3902 = vadd.f32 %v3901, %v3711
        %v3903 = vadd.f32 %v3902, %v3712
        %v3904 = vadd.f32 %v3903, %v3713
        %v3905 = vadd.f32 %v3904, %v3714
        %v3906 = vadd.f32 %v3905, %v3715
        %v3907 = vadd.f32 %v3906, %v3716
        %v3908 = vadd.f32 %v3907, %v3717
        %v3909 = vadd.f32 %v3908, %v3718
        %v3910 = vadd.f32 %v3909, %v3719
        %v3911 = vadd.f32 %v3910, %v3720
        %v3912 = vadd.f32 %v3911, %v3721
        %v3913 = vadd.f32 %v3912, %v3722
        %v3914 = vadd.f32 %v3913, %v3723
        %v3915 = vadd.f32 %v3914, %v3724
        %v3916 = vadd.f32 %v3915, %v3725
        %v3917 = vadd.f32 %v3916, %v3726
        %v3918 = vadd.f32 %v3917, %v3727
        %v3919 = vadd.f32 %v3918, %v3728
        %v3920 = vadd.f32 %v3919, %v3729
        %v3921 = vadd.f32 %v3920, %v3730
        %v3922 = vadd.f32 %v3921, %v3731
        %v3923 = vadd.f32 %v3922, %v3732
        %v3924 = vadd.f32 %v3923, %v3733
        %v3925 = vadd.f32 %v3924, %v3734
        %v3926 = vadd.f32 %v3925, %v3735
        %v3927 = vadd.f32 %v3926, %v3736
        %v3928 = vadd.f32 %v3927, %v3737
        %v3929 = vadd.f32 %v3928, %v3738
        %v3930 = vadd.f32 %v3929, %v3739
        %v3931 = vadd.f32 %v3930, %v3740
        %v3932 = vadd.f32 %v3931, %v3741
        %v3933 = vadd.f32 %v3932, %v3742
        %v3934 = vadd.f32 %v3933, %v3743
        %v3935 = vadd.f32 %v3934, %v3744
        %v3936 = vadd.f32 %v3935, %v3745
        %v3937 = vadd.f32 %v3936, %v3746
        %v3938 = vadd.f32 %v3937, %v3747
        %v3939 = vadd.f32 %v3938, %v3748
        %v3940 = vadd.f32 %v3939, %v3749
        %v3941 = vadd.f32 %v3940, %v3750
        %v3942 = vadd.f32 %v3941, %v3751
        %v3943 = vadd.f32 %v3942, %v3752
        %v3944 = vadd.f32 %v3943, %v3753
        %v3945 = vadd.f32 %v3944, %v3754
        %v3946 = vadd.f32 %v3945, %v3755
        %v3947 = vadd.f32 %v3946, %v3756
        %v3948 = vadd.f32 %v3947, %v3757
        %v3949 = vadd.f32 %v3948, %v3758
        %v3950 = vadd.f32 %v3949, %v3759
        %v3951 = vadd.f32 %v3950, %v3760
        %v3952 = vadd.f32 %v3951, %v3761
        %v3953 = vadd.f32 %v3952, %v3762
        %v3954 = vadd.f32 %v3953, %v3763
        %v3955 = vadd.f32 %v3954, %v3764
        %v3956 = vadd.f32 %v3955, %v3765
        %v3957 = vadd.f32 %v3956, %v3766
        %v3958 = vadd.f32 %v3957, %v3767
        %v3959 = vadd.f32 %v3958, %v3768
        %v3960 = vadd.f32 %v3959, %v3769
        %v3961 = vadd.f32 %v3960, %v3770
        %v3962 = vadd.f32 %v3961, %v3771
        %v3963 = vadd.f32 %v3962, %v3772
        %v3964 = vadd.f32 %v3963, %v3773
        %v3965 = vadd.f32 %v3964, %v3774
        %v3966 = vadd.f32 %v3965, %v3775
        %v3967 = vadd.f32 %v3966, %v3776
        %v3968 = vadd.f32 %v3967, %v3777
        %v3969 = vadd.f32 %v3968, %v3778
        %v3970 = vadd.f32 %v3969, %v3779
        %v3971 = vrot.slane %v3970, 4
        %v3972 = vadd.f32 %v3970, %v3971
        %v3973 = vrot.slane %v3972, 2
        %v3974 = vadd.f32 %v3972, %v3973
        %v3975 = vrot.slane %v3974, 1
        %v3976 = vadd.f32 %v3974, %v3975
        %v3977 = vadd.f32 %v3780, %v3781
        %v3978 = vadd.f32 %v3977, %v3782
        %v3979 = vadd.f32 %v3978, %v3783
        %v3980 = vadd.f32 %v3979, %v3784
        %v3981 = vadd.f32 %v3980, %v3785
        %v3982 = vadd.f32 %v3981, %v3786
        %v3983 = vadd.f32 %v3982, %v3787
        %v3984 = vadd.f32 %v3983, %v3788
        %v3985 = vadd.f32 %v3984, %v3789
        %v3986 = vadd.f32 %v3985, %v3790
        %v3987 = vadd.f32 %v3986, %v3791
        %v3988 = vadd.f32 %v3987, %v3792
        %v3989 = vadd.f32 %v3988, %v3793
        %v3990 = vadd.f32 %v3989, %v3794
        %v3991 = vadd.f32 %v3990, %v3795
        %v3992 = vadd.f32 %v3991, %v3796
        %v3993 = vadd.f32 %v3992, %v3797
        %v3994 = vadd.f32 %v3993, %v3798
        %v3995 = vadd.f32 %v3994, %v3799
        %v3996 = vadd.f32 %v3995, %v3800
        %v3997 = vadd.f32 %v3996, %v3801
        %v3998 = vadd.f32 %v3997, %v3802
        %v3999 = vadd.f32 %v3998, %v3803
        %v4000 = vadd.f32 %v3999, %v3804
        %v4001 = vadd.f32 %v4000, %v3805
        %v4002 = vadd.f32 %v4001, %v3806
        %v4003 = vadd.f32 %v4002, %v3807
        %v4004 = vadd.f32 %v4003, %v3808
        %v4005 = vadd.f32 %v4004, %v3809
        %v4006 = vadd.f32 %v4005, %v3810
        %v4007 = vadd.f32 %v4006, %v3811
        %v4008 = vadd.f32 %v4007, %v3812
        %v4009 = vadd.f32 %v4008, %v3813
        %v4010 = vadd.f32 %v4009, %v3814
        %v4011 = vadd.f32 %v4010, %v3815
        %v4012 = vadd.f32 %v4011, %v3816
        %v4013 = vadd.f32 %v4012, %v3817
        %v4014 = vadd.f32 %v4013, %v3818
        %v4015 = vadd.f32 %v4014, %v3819
        %v4016 = vadd.f32 %v4015, %v3820
        %v4017 = vadd.f32 %v4016, %v3821
        %v4018 = vadd.f32 %v4017, %v3822
        %v4019 = vadd.f32 %v4018, %v3823
        %v4020 = vadd.f32 %v4019, %v3824
        %v4021 = vadd.f32 %v4020, %v3825
        %v4022 = vadd.f32 %v4021, %v3826
        %v4023 = vadd.f32 %v4022, %v3827
        %v4024 = vadd.f32 %v4023, %v3828
        %v4025 = vadd.f32 %v4024, %v3829
        %v4026 = vadd.f32 %v4025, %v3830
        %v4027 = vadd.f32 %v4026, %v3831
        %v4028 = vadd.f32 %v4027, %v3832
        %v4029 = vadd.f32 %v4028, %v3833
        %v4030 = vadd.f32 %v4029, %v3834
        %v4031 = vadd.f32 %v4030, %v3835
        %v4032 = vadd.f32 %v4031, %v3836
        %v4033 = vadd.f32 %v4032, %v3837
        %v4034 = vadd.f32 %v4033, %v3838
        %v4035 = vadd.f32 %v4034, %v3839
        %v4036 = vadd.f32 %v4035, %v3840
        %v4037 = vadd.f32 %v4036, %v3841
        %v4038 = vadd.f32 %v4037, %v3842
        %v4039 = vadd.f32 %v4038, %v3843
        %v4040 = vadd.f32 %v4039, %v3844
        %v4041 = vadd.f32 %v4040, %v3845
        %v4042 = vadd.f32 %v4041, %v3846
        %v4043 = vadd.f32 %v4042, %v3847
        %v4044 = vadd.f32 %v4043, %v3848
        %v4045 = vadd.f32 %v4044, %v3849
        %v4046 = vadd.f32 %v4045, %v3850
        %v4047 = vadd.f32 %v4046, %v3851
        %v4048 = vadd.f32 %v4047, %v3852
        %v4049 = vadd.f32 %v4048, %v3853
        %v4050 = vadd.f32 %v4049, %v3854
        %v4051 = vadd.f32 %v4050, %v3855
        %v4052 = vadd.f32 %v4051, %v3856
        %v4053 = vadd.f32 %v4052, %v3857
        %v4054 = vadd.f32 %v4053, %v3858
        %v4055 = vadd.f32 %v4054, %v3859
        %v4056 = vadd.f32 %v4055, %v3860
        %v4057 = vadd.f32 %v4056, %v3861
        %v4058 = vadd.f32 %v4057, %v3862
        %v4059 = vadd.f32 %v4058, %v3863
        %v4060 = vadd.f32 %v4059, %v3864
        %v4061 = vadd.f32 %v4060, %v3865
        %v4062 = vadd.f32 %v4061, %v3866
        %v4063 = vadd.f32 %v4062, %v3867
        %v4064 = vadd.f32 %v4063, %v3868
        %v4065 = vadd.f32 %v4064, %v3869
        %v4066 = vadd.f32 %v4065, %v3870
        %v4067 = vadd.f32 %v4066, %v3871
        %v4068 = vadd.f32 %v4067, %v3872
        %v4069 = vadd.f32 %v4068, %v3873
        %v4070 = vadd.f32 %v4069, %v3874
        %v4071 = vadd.f32 %v4070, %v3875
        %v4072 = vrot.slane %v4071, 4
        %v4073 = vadd.f32 %v4071, %v4072
        %v4074 = vrot.slane %v4073, 2
        %v4075 = vadd.f32 %v4073, %v4074
        %v4076 = vrot.slane %v4075, 1
        %v4077 = vadd.f32 %v4075, %v4076
        %v4080 = vsel %vm1104, %v4077, %v3976
        %v4082 = vadd.f32 %v3683, %v4080
        %4083 = vst [vmem:[%s3682] sm:$0x3] %v4082
        %s4084 = scalar_lea.vmem %s276, 2304 [#allocation6]
        %v4085 = vld [vmem:[%s4084] sm:$0xf]
        %v4086 = vld [vmem:[%s4084 + $0x4] sm:$0xf]
        %v4087 = vld [vmem:[%s4084 + $0x8] sm:$0xf]
        %v4088 = vld [vmem:[%s4084 + $0xc] sm:$0xf]
        %v4089 = vld [vmem:[%s4084 + $0x10] sm:$0xf]
        %v4090 = vld [vmem:[%s4084 + $0x14] sm:$0xf]
        %v4091 = vld [vmem:[%s4084 + $0x18] sm:$0xf]
        %v4092 = vld [vmem:[%s4084 + $0x1c] sm:$0xf]
        %v4093 = vld [vmem:[%s4084 + $0x20] sm:$0xf]
        %v4094 = vld [vmem:[%s4084 + $0x24] sm:$0xf]
        %v4095 = vld [vmem:[%s4084 + $0x28] sm:$0xf]
        %v4096 = vld [vmem:[%s4084 + $0x2c] sm:$0xf]
        %v4097 = vld [vmem:[%s4084 + $0x30] sm:$0xf]
        %v4098 = vld [vmem:[%s4084 + $0x34] sm:$0xf]
        %v4099 = vld [vmem:[%s4084 + $0x38] sm:$0xf]
        %v4100 = vld [vmem:[%s4084 + $0x3c] sm:$0xf]
        %v4101 = vld [vmem:[%s4084 + $0x40] sm:$0xf]
        %v4102 = vld [vmem:[%s4084 + $0x44] sm:$0xf]
        %v4103 = vld [vmem:[%s4084 + $0x48] sm:$0xf]
        %v4104 = vld [vmem:[%s4084 + $0x4c] sm:$0xf]
        %v4105 = vld [vmem:[%s4084 + $0x50] sm:$0xf]
        %v4106 = vld [vmem:[%s4084 + $0x54] sm:$0xf]
        %v4107 = vld [vmem:[%s4084 + $0x58] sm:$0xf]
        %v4108 = vld [vmem:[%s4084 + $0x5c] sm:$0xf]
        %v4109 = vld [vmem:[%s4084 + $0x60] sm:$0xf]
        %v4110 = vld [vmem:[%s4084 + $0x64] sm:$0xf]
        %v4111 = vld [vmem:[%s4084 + $0x68] sm:$0xf]
        %v4112 = vld [vmem:[%s4084 + $0x6c] sm:$0xf]
        %v4113 = vld [vmem:[%s4084 + $0x70] sm:$0xf]
        %v4114 = vld [vmem:[%s4084 + $0x74] sm:$0xf]
        %v4115 = vld [vmem:[%s4084 + $0x78] sm:$0xf]
        %v4116 = vld [vmem:[%s4084 + $0x7c] sm:$0xf]
        %v4117 = vld [vmem:[%s4084 + $0x80] sm:$0xf]
        %v4118 = vld [vmem:[%s4084 + $0x84] sm:$0xf]
        %v4119 = vld [vmem:[%s4084 + $0x88] sm:$0xf]
        %v4120 = vld [vmem:[%s4084 + $0x8c] sm:$0xf]
        %v4121 = vld [vmem:[%s4084 + $0x90] sm:$0xf]
        %v4122 = vld [vmem:[%s4084 + $0x94] sm:$0xf]
        %v4123 = vld [vmem:[%s4084 + $0x98] sm:$0xf]
        %v4124 = vld [vmem:[%s4084 + $0x9c] sm:$0xf]
        %v4125 = vld [vmem:[%s4084 + $0xa0] sm:$0xf]
        %v4126 = vld [vmem:[%s4084 + $0xa4] sm:$0xf]
        %v4127 = vld [vmem:[%s4084 + $0xa8] sm:$0xf]
        %v4128 = vld [vmem:[%s4084 + $0xac] sm:$0xf]
        %v4129 = vld [vmem:[%s4084 + $0xb0] sm:$0xf]
        %v4130 = vld [vmem:[%s4084 + $0xb4] sm:$0xf]
        %v4131 = vld [vmem:[%s4084 + $0xb8] sm:$0xf]
        %v4132 = vld [vmem:[%s4084 + $0xbc] sm:$0xf]
        %v4133 = vld [vmem:[%s4084 + $0xc0] sm:$0xf]
        %v4134 = vld [vmem:[%s4084 + $0xc4] sm:$0xf]
        %v4135 = vld [vmem:[%s4084 + $0xc8] sm:$0xf]
        %v4136 = vld [vmem:[%s4084 + $0xcc] sm:$0xf]
        %v4137 = vld [vmem:[%s4084 + $0xd0] sm:$0xf]
        %v4138 = vld [vmem:[%s4084 + $0xd4] sm:$0xf]
        %v4139 = vld [vmem:[%s4084 + $0xd8] sm:$0xf]
        %v4140 = vld [vmem:[%s4084 + $0xdc] sm:$0xf]
        %v4141 = vld [vmem:[%s4084 + $0xe0] sm:$0xf]
        %v4142 = vld [vmem:[%s4084 + $0xe4] sm:$0xf]
        %v4143 = vld [vmem:[%s4084 + $0xe8] sm:$0xf]
        %v4144 = vld [vmem:[%s4084 + $0xec] sm:$0xf]
        %v4145 = vld [vmem:[%s4084 + $0xf0] sm:$0xf]
        %v4146 = vld [vmem:[%s4084 + $0xf4] sm:$0xf]
        %v4147 = vld [vmem:[%s4084 + $0xf8] sm:$0xf]
        %v4148 = vld [vmem:[%s4084 + $0xfc] sm:$0xf]
        %v4149 = vld [vmem:[%s4084 + $0x100] sm:$0xf]
        %v4150 = vld [vmem:[%s4084 + $0x104] sm:$0xf]
        %v4151 = vld [vmem:[%s4084 + $0x108] sm:$0xf]
        %v4152 = vld [vmem:[%s4084 + $0x10c] sm:$0xf]
        %v4153 = vld [vmem:[%s4084 + $0x110] sm:$0xf]
        %v4154 = vld [vmem:[%s4084 + $0x114] sm:$0xf]
        %v4155 = vld [vmem:[%s4084 + $0x118] sm:$0xf]
        %v4156 = vld [vmem:[%s4084 + $0x11c] sm:$0xf]
        %v4157 = vld [vmem:[%s4084 + $0x120] sm:$0xf]
        %v4158 = vld [vmem:[%s4084 + $0x124] sm:$0xf]
        %v4159 = vld [vmem:[%s4084 + $0x128] sm:$0xf]
        %v4160 = vld [vmem:[%s4084 + $0x12c] sm:$0xf]
        %v4161 = vld [vmem:[%s4084 + $0x130] sm:$0xf]
        %v4162 = vld [vmem:[%s4084 + $0x134] sm:$0xf]
        %v4163 = vld [vmem:[%s4084 + $0x138] sm:$0xf]
        %v4164 = vld [vmem:[%s4084 + $0x13c] sm:$0xf]
        %v4165 = vld [vmem:[%s4084 + $0x140] sm:$0xf]
        %v4166 = vld [vmem:[%s4084 + $0x144] sm:$0xf]
        %v4167 = vld [vmem:[%s4084 + $0x148] sm:$0xf]
        %v4168 = vld [vmem:[%s4084 + $0x14c] sm:$0xf]
        %v4169 = vld [vmem:[%s4084 + $0x150] sm:$0xf]
        %v4170 = vld [vmem:[%s4084 + $0x154] sm:$0xf]
        %v4171 = vld [vmem:[%s4084 + $0x158] sm:$0xf]
        %v4172 = vld [vmem:[%s4084 + $0x15c] sm:$0xf]
        %v4173 = vld [vmem:[%s4084 + $0x160] sm:$0xf]
        %v4174 = vld [vmem:[%s4084 + $0x164] sm:$0xf]
        %v4175 = vld [vmem:[%s4084 + $0x168] sm:$0xf]
        %v4176 = vld [vmem:[%s4084 + $0x16c] sm:$0xf]
        %v4177 = vld [vmem:[%s4084 + $0x170] sm:$0xf]
        %v4178 = vld [vmem:[%s4084 + $0x174] sm:$0xf]
        %v4179 = vld [vmem:[%s4084 + $0x178] sm:$0xf]
        %v4180 = vld [vmem:[%s4084 + $0x17c] sm:$0xf]
        %v4181 = vunpack.c.l.bf16 %v4085
        %v4182 = vunpack.c.l.bf16 %v4086
        %v4183 = vunpack.c.l.bf16 %v4087
        %v4184 = vunpack.c.l.bf16 %v4088
        %v4185 = vunpack.c.l.bf16 %v4089
        %v4186 = vunpack.c.l.bf16 %v4090
        %v4187 = vunpack.c.l.bf16 %v4091
        %v4188 = vunpack.c.l.bf16 %v4092
        %v4189 = vunpack.c.l.bf16 %v4093
        %v4190 = vunpack.c.l.bf16 %v4094
        %v4191 = vunpack.c.l.bf16 %v4095
        %v4192 = vunpack.c.l.bf16 %v4096
        %v4193 = vunpack.c.l.bf16 %v4097
        %v4194 = vunpack.c.l.bf16 %v4098
        %v4195 = vunpack.c.l.bf16 %v4099
        %v4196 = vunpack.c.l.bf16 %v4100
        %v4197 = vunpack.c.l.bf16 %v4101
        %v4198 = vunpack.c.l.bf16 %v4102
        %v4199 = vunpack.c.l.bf16 %v4103
        %v4200 = vunpack.c.l.bf16 %v4104
        %v4201 = vunpack.c.l.bf16 %v4105
        %v4202 = vunpack.c.l.bf16 %v4106
        %v4203 = vunpack.c.l.bf16 %v4107
        %v4204 = vunpack.c.l.bf16 %v4108
        %v4205 = vunpack.c.l.bf16 %v4109
        %v4206 = vunpack.c.l.bf16 %v4110
        %v4207 = vunpack.c.l.bf16 %v4111
        %v4208 = vunpack.c.l.bf16 %v4112
        %v4209 = vunpack.c.l.bf16 %v4113
        %v4210 = vunpack.c.l.bf16 %v4114
        %v4211 = vunpack.c.l.bf16 %v4115
        %v4212 = vunpack.c.l.bf16 %v4116
        %v4213 = vunpack.c.l.bf16 %v4117
        %v4214 = vunpack.c.l.bf16 %v4118
        %v4215 = vunpack.c.l.bf16 %v4119
        %v4216 = vunpack.c.l.bf16 %v4120
        %v4217 = vunpack.c.l.bf16 %v4121
        %v4218 = vunpack.c.l.bf16 %v4122
        %v4219 = vunpack.c.l.bf16 %v4123
        %v4220 = vunpack.c.l.bf16 %v4124
        %v4221 = vunpack.c.l.bf16 %v4125
        %v4222 = vunpack.c.l.bf16 %v4126
        %v4223 = vunpack.c.l.bf16 %v4127
        %v4224 = vunpack.c.l.bf16 %v4128
        %v4225 = vunpack.c.l.bf16 %v4129
        %v4226 = vunpack.c.l.bf16 %v4130
        %v4227 = vunpack.c.l.bf16 %v4131
        %v4228 = vunpack.c.l.bf16 %v4132
        %v4229 = vunpack.c.l.bf16 %v4133
        %v4230 = vunpack.c.l.bf16 %v4134
        %v4231 = vunpack.c.l.bf16 %v4135
        %v4232 = vunpack.c.l.bf16 %v4136
        %v4233 = vunpack.c.l.bf16 %v4137
        %v4234 = vunpack.c.l.bf16 %v4138
        %v4235 = vunpack.c.l.bf16 %v4139
        %v4236 = vunpack.c.l.bf16 %v4140
        %v4237 = vunpack.c.l.bf16 %v4141
        %v4238 = vunpack.c.l.bf16 %v4142
        %v4239 = vunpack.c.l.bf16 %v4143
        %v4240 = vunpack.c.l.bf16 %v4144
        %v4241 = vunpack.c.l.bf16 %v4145
        %v4242 = vunpack.c.l.bf16 %v4146
        %v4243 = vunpack.c.l.bf16 %v4147
        %v4244 = vunpack.c.l.bf16 %v4148
        %v4245 = vunpack.c.l.bf16 %v4149
        %v4246 = vunpack.c.l.bf16 %v4150
        %v4247 = vunpack.c.l.bf16 %v4151
        %v4248 = vunpack.c.l.bf16 %v4152
        %v4249 = vunpack.c.l.bf16 %v4153
        %v4250 = vunpack.c.l.bf16 %v4154
        %v4251 = vunpack.c.l.bf16 %v4155
        %v4252 = vunpack.c.l.bf16 %v4156
        %v4253 = vunpack.c.l.bf16 %v4157
        %v4254 = vunpack.c.l.bf16 %v4158
        %v4255 = vunpack.c.l.bf16 %v4159
        %v4256 = vunpack.c.l.bf16 %v4160
        %v4257 = vunpack.c.l.bf16 %v4161
        %v4258 = vunpack.c.l.bf16 %v4162
        %v4259 = vunpack.c.l.bf16 %v4163
        %v4260 = vunpack.c.l.bf16 %v4164
        %v4261 = vunpack.c.l.bf16 %v4165
        %v4262 = vunpack.c.l.bf16 %v4166
        %v4263 = vunpack.c.l.bf16 %v4167
        %v4264 = vunpack.c.l.bf16 %v4168
        %v4265 = vunpack.c.l.bf16 %v4169
        %v4266 = vunpack.c.l.bf16 %v4170
        %v4267 = vunpack.c.l.bf16 %v4171
        %v4268 = vunpack.c.l.bf16 %v4172
        %v4269 = vunpack.c.l.bf16 %v4173
        %v4270 = vunpack.c.l.bf16 %v4174
        %v4271 = vunpack.c.l.bf16 %v4175
        %v4272 = vunpack.c.l.bf16 %v4176
        %v4273 = vunpack.c.l.bf16 %v4177
        %v4274 = vunpack.c.l.bf16 %v4178
        %v4275 = vunpack.c.l.bf16 %v4179
        %v4276 = vunpack.c.l.bf16 %v4180
        %s4277 = scalar_lea.vmem [#allocation2], 12
        %v4278 = vld [vmem:[%s4277] sm:$0x3]
        %v4279 = vmul.f32 %v323, %v4181
        %v4280 = vmul.f32 %v324, %v4182
        %v4281 = vmul.f32 %v325, %v4183
        %v4282 = vmul.f32 %v326, %v4184
        %v4283 = vmul.f32 %v327, %v4185
        %v4284 = vmul.f32 %v328, %v4186
        %v4285 = vmul.f32 %v329, %v4187
        %v4286 = vmul.f32 %v330, %v4188
        %v4287 = vmul.f32 %v331, %v4189
        %v4288 = vmul.f32 %v332, %v4190
        %v4289 = vmul.f32 %v333, %v4191
        %v4290 = vmul.f32 %v334, %v4192
        %v4291 = vmul.f32 %v335, %v4193
        %v4292 = vmul.f32 %v336, %v4194
        %v4293 = vmul.f32 %v337, %v4195
        %v4294 = vmul.f32 %v338, %v4196
        %v4295 = vmul.f32 %v339, %v4197
        %v4296 = vmul.f32 %v340, %v4198
        %v4297 = vmul.f32 %v341, %v4199
        %v4298 = vmul.f32 %v342, %v4200
        %v4299 = vmul.f32 %v343, %v4201
        %v4300 = vmul.f32 %v344, %v4202
        %v4301 = vmul.f32 %v345, %v4203
        %v4302 = vmul.f32 %v346, %v4204
        %v4303 = vmul.f32 %v347, %v4205
        %v4304 = vmul.f32 %v348, %v4206
        %v4305 = vmul.f32 %v349, %v4207
        %v4306 = vmul.f32 %v350, %v4208
        %v4307 = vmul.f32 %v351, %v4209
        %v4308 = vmul.f32 %v352, %v4210
        %v4309 = vmul.f32 %v353, %v4211
        %v4310 = vmul.f32 %v354, %v4212
        %v4311 = vmul.f32 %v355, %v4213
        %v4312 = vmul.f32 %v356, %v4214
        %v4313 = vmul.f32 %v357, %v4215
        %v4314 = vmul.f32 %v358, %v4216
        %v4315 = vmul.f32 %v359, %v4217
        %v4316 = vmul.f32 %v360, %v4218
        %v4317 = vmul.f32 %v361, %v4219
        %v4318 = vmul.f32 %v362, %v4220
        %v4319 = vmul.f32 %v363, %v4221
        %v4320 = vmul.f32 %v364, %v4222
        %v4321 = vmul.f32 %v365, %v4223
        %v4322 = vmul.f32 %v366, %v4224
        %v4323 = vmul.f32 %v367, %v4225
        %v4324 = vmul.f32 %v368, %v4226
        %v4325 = vmul.f32 %v369, %v4227
        %v4326 = vmul.f32 %v370, %v4228
        %v4327 = vmul.f32 %v371, %v4229
        %v4328 = vmul.f32 %v372, %v4230
        %v4329 = vmul.f32 %v373, %v4231
        %v4330 = vmul.f32 %v374, %v4232
        %v4331 = vmul.f32 %v375, %v4233
        %v4332 = vmul.f32 %v376, %v4234
        %v4333 = vmul.f32 %v377, %v4235
        %v4334 = vmul.f32 %v378, %v4236
        %v4335 = vmul.f32 %v379, %v4237
        %v4336 = vmul.f32 %v380, %v4238
        %v4337 = vmul.f32 %v381, %v4239
        %v4338 = vmul.f32 %v382, %v4240
        %v4339 = vmul.f32 %v383, %v4241
        %v4340 = vmul.f32 %v384, %v4242
        %v4341 = vmul.f32 %v385, %v4243
        %v4342 = vmul.f32 %v386, %v4244
        %v4343 = vmul.f32 %v387, %v4245
        %v4344 = vmul.f32 %v388, %v4246
        %v4345 = vmul.f32 %v389, %v4247
        %v4346 = vmul.f32 %v390, %v4248
        %v4347 = vmul.f32 %v391, %v4249
        %v4348 = vmul.f32 %v392, %v4250
        %v4349 = vmul.f32 %v393, %v4251
        %v4350 = vmul.f32 %v394, %v4252
        %v4351 = vmul.f32 %v395, %v4253
        %v4352 = vmul.f32 %v396, %v4254
        %v4353 = vmul.f32 %v397, %v4255
        %v4354 = vmul.f32 %v398, %v4256
        %v4355 = vmul.f32 %v399, %v4257
        %v4356 = vmul.f32 %v400, %v4258
        %v4357 = vmul.f32 %v401, %v4259
        %v4358 = vmul.f32 %v402, %v4260
        %v4359 = vmul.f32 %v403, %v4261
        %v4360 = vmul.f32 %v404, %v4262
        %v4361 = vmul.f32 %v405, %v4263
        %v4362 = vmul.f32 %v406, %v4264
        %v4363 = vmul.f32 %v407, %v4265
        %v4364 = vmul.f32 %v408, %v4266
        %v4365 = vmul.f32 %v409, %v4267
        %v4366 = vmul.f32 %v410, %v4268
        %v4367 = vmul.f32 %v411, %v4269
        %v4368 = vmul.f32 %v412, %v4270
        %v4369 = vmul.f32 %v413, %v4271
        %v4370 = vmul.f32 %v414, %v4272
        %v4371 = vmul.f32 %v415, %v4273
        %v4372 = vmul.f32 %v416, %v4274
        %v4373 = vmul.f32 %v417, %v4275
        %v4374 = vmul.f32 %v418, %v4276
        %v4375 = vmul.f32 %v419, %v4181
        %v4376 = vmul.f32 %v420, %v4182
        %v4377 = vmul.f32 %v421, %v4183
        %v4378 = vmul.f32 %v422, %v4184
        %v4379 = vmul.f32 %v423, %v4185
        %v4380 = vmul.f32 %v424, %v4186
        %v4381 = vmul.f32 %v425, %v4187
        %v4382 = vmul.f32 %v426, %v4188
        %v4383 = vmul.f32 %v427, %v4189
        %v4384 = vmul.f32 %v428, %v4190
        %v4385 = vmul.f32 %v429, %v4191
        %v4386 = vmul.f32 %v430, %v4192
        %v4387 = vmul.f32 %v431, %v4193
        %v4388 = vmul.f32 %v432, %v4194
        %v4389 = vmul.f32 %v433, %v4195
        %v4390 = vmul.f32 %v434, %v4196
        %v4391 = vmul.f32 %v435, %v4197
        %v4392 = vmul.f32 %v436, %v4198
        %v4393 = vmul.f32 %v437, %v4199
        %v4394 = vmul.f32 %v438, %v4200
        %v4395 = vmul.f32 %v439, %v4201
        %v4396 = vmul.f32 %v440, %v4202
        %v4397 = vmul.f32 %v441, %v4203
        %v4398 = vmul.f32 %v442, %v4204
        %v4399 = vmul.f32 %v443, %v4205
        %v4400 = vmul.f32 %v444, %v4206
        %v4401 = vmul.f32 %v445, %v4207
        %v4402 = vmul.f32 %v446, %v4208
        %v4403 = vmul.f32 %v447, %v4209
        %v4404 = vmul.f32 %v448, %v4210
        %v4405 = vmul.f32 %v449, %v4211
        %v4406 = vmul.f32 %v450, %v4212
        %v4407 = vmul.f32 %v451, %v4213
        %v4408 = vmul.f32 %v452, %v4214
        %v4409 = vmul.f32 %v453, %v4215
        %v4410 = vmul.f32 %v454, %v4216
        %v4411 = vmul.f32 %v455, %v4217
        %v4412 = vmul.f32 %v456, %v4218
        %v4413 = vmul.f32 %v457, %v4219
        %v4414 = vmul.f32 %v458, %v4220
        %v4415 = vmul.f32 %v459, %v4221
        %v4416 = vmul.f32 %v460, %v4222
        %v4417 = vmul.f32 %v461, %v4223
        %v4418 = vmul.f32 %v462, %v4224
        %v4419 = vmul.f32 %v463, %v4225
        %v4420 = vmul.f32 %v464, %v4226
        %v4421 = vmul.f32 %v465, %v4227
        %v4422 = vmul.f32 %v466, %v4228
        %v4423 = vmul.f32 %v467, %v4229
        %v4424 = vmul.f32 %v468, %v4230
        %v4425 = vmul.f32 %v469, %v4231
        %v4426 = vmul.f32 %v470, %v4232
        %v4427 = vmul.f32 %v471, %v4233
        %v4428 = vmul.f32 %v472, %v4234
        %v4429 = vmul.f32 %v473, %v4235
        %v4430 = vmul.f32 %v474, %v4236
        %v4431 = vmul.f32 %v475, %v4237
        %v4432 = vmul.f32 %v476, %v4238
        %v4433 = vmul.f32 %v477, %v4239
        %v4434 = vmul.f32 %v478, %v4240
        %v4435 = vmul.f32 %v479, %v4241
        %v4436 = vmul.f32 %v480, %v4242
        %v4437 = vmul.f32 %v481, %v4243
        %v4438 = vmul.f32 %v482, %v4244
        %v4439 = vmul.f32 %v483, %v4245
        %v4440 = vmul.f32 %v484, %v4246
        %v4441 = vmul.f32 %v485, %v4247
        %v4442 = vmul.f32 %v486, %v4248
        %v4443 = vmul.f32 %v487, %v4249
        %v4444 = vmul.f32 %v488, %v4250
        %v4445 = vmul.f32 %v489, %v4251
        %v4446 = vmul.f32 %v490, %v4252
        %v4447 = vmul.f32 %v491, %v4253
        %v4448 = vmul.f32 %v492, %v4254
        %v4449 = vmul.f32 %v493, %v4255
        %v4450 = vmul.f32 %v494, %v4256
        %v4451 = vmul.f32 %v495, %v4257
        %v4452 = vmul.f32 %v496, %v4258
        %v4453 = vmul.f32 %v497, %v4259
        %v4454 = vmul.f32 %v498, %v4260
        %v4455 = vmul.f32 %v499, %v4261
        %v4456 = vmul.f32 %v500, %v4262
        %v4457 = vmul.f32 %v501, %v4263
        %v4458 = vmul.f32 %v502, %v4264
        %v4459 = vmul.f32 %v503, %v4265
        %v4460 = vmul.f32 %v504, %v4266
        %v4461 = vmul.f32 %v505, %v4267
        %v4462 = vmul.f32 %v506, %v4268
        %v4463 = vmul.f32 %v507, %v4269
        %v4464 = vmul.f32 %v508, %v4270
        %v4465 = vmul.f32 %v509, %v4271
        %v4466 = vmul.f32 %v510, %v4272
        %v4467 = vmul.f32 %v511, %v4273
        %v4468 = vmul.f32 %v512, %v4274
        %v4469 = vmul.f32 %v513, %v4275
        %v4470 = vmul.f32 %v514, %v4276
        %v4471 = vadd.f32 %v4279, %v4280
        %v4472 = vadd.f32 %v4471, %v4281
        %v4473 = vadd.f32 %v4472, %v4282
        %v4474 = vadd.f32 %v4473, %v4283
        %v4475 = vadd.f32 %v4474, %v4284
        %v4476 = vadd.f32 %v4475, %v4285
        %v4477 = vadd.f32 %v4476, %v4286
        %v4478 = vadd.f32 %v4477, %v4287
        %v4479 = vadd.f32 %v4478, %v4288
        %v4480 = vadd.f32 %v4479, %v4289
        %v4481 = vadd.f32 %v4480, %v4290
        %v4482 = vadd.f32 %v4481, %v4291
        %v4483 = vadd.f32 %v4482, %v4292
        %v4484 = vadd.f32 %v4483, %v4293
        %v4485 = vadd.f32 %v4484, %v4294
        %v4486 = vadd.f32 %v4485, %v4295
        %v4487 = vadd.f32 %v4486, %v4296
        %v4488 = vadd.f32 %v4487, %v4297
        %v4489 = vadd.f32 %v4488, %v4298
        %v4490 = vadd.f32 %v4489, %v4299
        %v4491 = vadd.f32 %v4490, %v4300
        %v4492 = vadd.f32 %v4491, %v4301
        %v4493 = vadd.f32 %v4492, %v4302
        %v4494 = vadd.f32 %v4493, %v4303
        %v4495 = vadd.f32 %v4494, %v4304
        %v4496 = vadd.f32 %v4495, %v4305
        %v4497 = vadd.f32 %v4496, %v4306
        %v4498 = vadd.f32 %v4497, %v4307
        %v4499 = vadd.f32 %v4498, %v4308
        %v4500 = vadd.f32 %v4499, %v4309
        %v4501 = vadd.f32 %v4500, %v4310
        %v4502 = vadd.f32 %v4501, %v4311
        %v4503 = vadd.f32 %v4502, %v4312
        %v4504 = vadd.f32 %v4503, %v4313
        %v4505 = vadd.f32 %v4504, %v4314
        %v4506 = vadd.f32 %v4505, %v4315
        %v4507 = vadd.f32 %v4506, %v4316
        %v4508 = vadd.f32 %v4507, %v4317
        %v4509 = vadd.f32 %v4508, %v4318
        %v4510 = vadd.f32 %v4509, %v4319
        %v4511 = vadd.f32 %v4510, %v4320
        %v4512 = vadd.f32 %v4511, %v4321
        %v4513 = vadd.f32 %v4512, %v4322
        %v4514 = vadd.f32 %v4513, %v4323
        %v4515 = vadd.f32 %v4514, %v4324
        %v4516 = vadd.f32 %v4515, %v4325
        %v4517 = vadd.f32 %v4516, %v4326
        %v4518 = vadd.f32 %v4517, %v4327
        %v4519 = vadd.f32 %v4518, %v4328
        %v4520 = vadd.f32 %v4519, %v4329
        %v4521 = vadd.f32 %v4520, %v4330
        %v4522 = vadd.f32 %v4521, %v4331
        %v4523 = vadd.f32 %v4522, %v4332
        %v4524 = vadd.f32 %v4523, %v4333
        %v4525 = vadd.f32 %v4524, %v4334
        %v4526 = vadd.f32 %v4525, %v4335
        %v4527 = vadd.f32 %v4526, %v4336
        %v4528 = vadd.f32 %v4527, %v4337
        %v4529 = vadd.f32 %v4528, %v4338
        %v4530 = vadd.f32 %v4529, %v4339
        %v4531 = vadd.f32 %v4530, %v4340
        %v4532 = vadd.f32 %v4531, %v4341
        %v4533 = vadd.f32 %v4532, %v4342
        %v4534 = vadd.f32 %v4533, %v4343
        %v4535 = vadd.f32 %v4534, %v4344
        %v4536 = vadd.f32 %v4535, %v4345
        %v4537 = vadd.f32 %v4536, %v4346
        %v4538 = vadd.f32 %v4537, %v4347
        %v4539 = vadd.f32 %v4538, %v4348
        %v4540 = vadd.f32 %v4539, %v4349
        %v4541 = vadd.f32 %v4540, %v4350
        %v4542 = vadd.f32 %v4541, %v4351
        %v4543 = vadd.f32 %v4542, %v4352
        %v4544 = vadd.f32 %v4543, %v4353
        %v4545 = vadd.f32 %v4544, %v4354
        %v4546 = vadd.f32 %v4545, %v4355
        %v4547 = vadd.f32 %v4546, %v4356
        %v4548 = vadd.f32 %v4547, %v4357
        %v4549 = vadd.f32 %v4548, %v4358
        %v4550 = vadd.f32 %v4549, %v4359
        %v4551 = vadd.f32 %v4550, %v4360
        %v4552 = vadd.f32 %v4551, %v4361
        %v4553 = vadd.f32 %v4552, %v4362
        %v4554 = vadd.f32 %v4553, %v4363
        %v4555 = vadd.f32 %v4554, %v4364
        %v4556 = vadd.f32 %v4555, %v4365
        %v4557 = vadd.f32 %v4556, %v4366
        %v4558 = vadd.f32 %v4557, %v4367
        %v4559 = vadd.f32 %v4558, %v4368
        %v4560 = vadd.f32 %v4559, %v4369
        %v4561 = vadd.f32 %v4560, %v4370
        %v4562 = vadd.f32 %v4561, %v4371
        %v4563 = vadd.f32 %v4562, %v4372
        %v4564 = vadd.f32 %v4563, %v4373
        %v4565 = vadd.f32 %v4564, %v4374
        %v4566 = vrot.slane %v4565, 4
        %v4567 = vadd.f32 %v4565, %v4566
        %v4568 = vrot.slane %v4567, 2
        %v4569 = vadd.f32 %v4567, %v4568
        %v4570 = vrot.slane %v4569, 1
        %v4571 = vadd.f32 %v4569, %v4570
        %v4572 = vadd.f32 %v4375, %v4376
        %v4573 = vadd.f32 %v4572, %v4377
        %v4574 = vadd.f32 %v4573, %v4378
        %v4575 = vadd.f32 %v4574, %v4379
        %v4576 = vadd.f32 %v4575, %v4380
        %v4577 = vadd.f32 %v4576, %v4381
        %v4578 = vadd.f32 %v4577, %v4382
        %v4579 = vadd.f32 %v4578, %v4383
        %v4580 = vadd.f32 %v4579, %v4384
        %v4581 = vadd.f32 %v4580, %v4385
        %v4582 = vadd.f32 %v4581, %v4386
        %v4583 = vadd.f32 %v4582, %v4387
        %v4584 = vadd.f32 %v4583, %v4388
        %v4585 = vadd.f32 %v4584, %v4389
        %v4586 = vadd.f32 %v4585, %v4390
        %v4587 = vadd.f32 %v4586, %v4391
        %v4588 = vadd.f32 %v4587, %v4392
        %v4589 = vadd.f32 %v4588, %v4393
        %v4590 = vadd.f32 %v4589, %v4394
        %v4591 = vadd.f32 %v4590, %v4395
        %v4592 = vadd.f32 %v4591, %v4396
        %v4593 = vadd.f32 %v4592, %v4397
        %v4594 = vadd.f32 %v4593, %v4398
        %v4595 = vadd.f32 %v4594, %v4399
        %v4596 = vadd.f32 %v4595, %v4400
        %v4597 = vadd.f32 %v4596, %v4401
        %v4598 = vadd.f32 %v4597, %v4402
        %v4599 = vadd.f32 %v4598, %v4403
        %v4600 = vadd.f32 %v4599, %v4404
        %v4601 = vadd.f32 %v4600, %v4405
        %v4602 = vadd.f32 %v4601, %v4406
        %v4603 = vadd.f32 %v4602, %v4407
        %v4604 = vadd.f32 %v4603, %v4408
        %v4605 = vadd.f32 %v4604, %v4409
        %v4606 = vadd.f32 %v4605, %v4410
        %v4607 = vadd.f32 %v4606, %v4411
        %v4608 = vadd.f32 %v4607, %v4412
        %v4609 = vadd.f32 %v4608, %v4413
        %v4610 = vadd.f32 %v4609, %v4414
        %v4611 = vadd.f32 %v4610, %v4415
        %v4612 = vadd.f32 %v4611, %v4416
        %v4613 = vadd.f32 %v4612, %v4417
        %v4614 = vadd.f32 %v4613, %v4418
        %v4615 = vadd.f32 %v4614, %v4419
        %v4616 = vadd.f32 %v4615, %v4420
        %v4617 = vadd.f32 %v4616, %v4421
        %v4618 = vadd.f32 %v4617, %v4422
        %v4619 = vadd.f32 %v4618, %v4423
        %v4620 = vadd.f32 %v4619, %v4424
        %v4621 = vadd.f32 %v4620, %v4425
        %v4622 = vadd.f32 %v4621, %v4426
        %v4623 = vadd.f32 %v4622, %v4427
        %v4624 = vadd.f32 %v4623, %v4428
        %v4625 = vadd.f32 %v4624, %v4429
        %v4626 = vadd.f32 %v4625, %v4430
        %v4627 = vadd.f32 %v4626, %v4431
        %v4628 = vadd.f32 %v4627, %v4432
        %v4629 = vadd.f32 %v4628, %v4433
        %v4630 = vadd.f32 %v4629, %v4434
        %v4631 = vadd.f32 %v4630, %v4435
        %v4632 = vadd.f32 %v4631, %v4436
        %v4633 = vadd.f32 %v4632, %v4437
        %v4634 = vadd.f32 %v4633, %v4438
        %v4635 = vadd.f32 %v4634, %v4439
        %v4636 = vadd.f32 %v4635, %v4440
        %v4637 = vadd.f32 %v4636, %v4441
        %v4638 = vadd.f32 %v4637, %v4442
        %v4639 = vadd.f32 %v4638, %v4443
        %v4640 = vadd.f32 %v4639, %v4444
        %v4641 = vadd.f32 %v4640, %v4445
        %v4642 = vadd.f32 %v4641, %v4446
        %v4643 = vadd.f32 %v4642, %v4447
        %v4644 = vadd.f32 %v4643, %v4448
        %v4645 = vadd.f32 %v4644, %v4449
        %v4646 = vadd.f32 %v4645, %v4450
        %v4647 = vadd.f32 %v4646, %v4451
        %v4648 = vadd.f32 %v4647, %v4452
        %v4649 = vadd.f32 %v4648, %v4453
        %v4650 = vadd.f32 %v4649, %v4454
        %v4651 = vadd.f32 %v4650, %v4455
        %v4652 = vadd.f32 %v4651, %v4456
        %v4653 = vadd.f32 %v4652, %v4457
        %v4654 = vadd.f32 %v4653, %v4458
        %v4655 = vadd.f32 %v4654, %v4459
        %v4656 = vadd.f32 %v4655, %v4460
        %v4657 = vadd.f32 %v4656, %v4461
        %v4658 = vadd.f32 %v4657, %v4462
        %v4659 = vadd.f32 %v4658, %v4463
        %v4660 = vadd.f32 %v4659, %v4464
        %v4661 = vadd.f32 %v4660, %v4465
        %v4662 = vadd.f32 %v4661, %v4466
        %v4663 = vadd.f32 %v4662, %v4467
        %v4664 = vadd.f32 %v4663, %v4468
        %v4665 = vadd.f32 %v4664, %v4469
        %v4666 = vadd.f32 %v4665, %v4470
        %v4667 = vrot.slane %v4666, 4
        %v4668 = vadd.f32 %v4666, %v4667
        %v4669 = vrot.slane %v4668, 2
        %v4670 = vadd.f32 %v4668, %v4669
        %v4671 = vrot.slane %v4670, 1
        %v4672 = vadd.f32 %v4670, %v4671
        %v4675 = vsel %vm1104, %v4672, %v4571
        %v4677 = vadd.f32 %v4278, %v4675
        %4678 = vst [vmem:[%s4277] sm:$0x3] %v4677
        %s4679 = scalar_lea.vmem %s276, 2688 [#allocation6]
        %v4680 = vld [vmem:[%s4679] sm:$0xf]
        %v4681 = vld [vmem:[%s4679 + $0x4] sm:$0xf]
        %v4682 = vld [vmem:[%s4679 + $0x8] sm:$0xf]
        %v4683 = vld [vmem:[%s4679 + $0xc] sm:$0xf]
        %v4684 = vld [vmem:[%s4679 + $0x10] sm:$0xf]
        %v4685 = vld [vmem:[%s4679 + $0x14] sm:$0xf]
        %v4686 = vld [vmem:[%s4679 + $0x18] sm:$0xf]
        %v4687 = vld [vmem:[%s4679 + $0x1c] sm:$0xf]
        %v4688 = vld [vmem:[%s4679 + $0x20] sm:$0xf]
        %v4689 = vld [vmem:[%s4679 + $0x24] sm:$0xf]
        %v4690 = vld [vmem:[%s4679 + $0x28] sm:$0xf]
        %v4691 = vld [vmem:[%s4679 + $0x2c] sm:$0xf]
        %v4692 = vld [vmem:[%s4679 + $0x30] sm:$0xf]
        %v4693 = vld [vmem:[%s4679 + $0x34] sm:$0xf]
        %v4694 = vld [vmem:[%s4679 + $0x38] sm:$0xf]
        %v4695 = vld [vmem:[%s4679 + $0x3c] sm:$0xf]
        %v4696 = vld [vmem:[%s4679 + $0x40] sm:$0xf]
        %v4697 = vld [vmem:[%s4679 + $0x44] sm:$0xf]
        %v4698 = vld [vmem:[%s4679 + $0x48] sm:$0xf]
        %v4699 = vld [vmem:[%s4679 + $0x4c] sm:$0xf]
        %v4700 = vld [vmem:[%s4679 + $0x50] sm:$0xf]
        %v4701 = vld [vmem:[%s4679 + $0x54] sm:$0xf]
        %v4702 = vld [vmem:[%s4679 + $0x58] sm:$0xf]
        %v4703 = vld [vmem:[%s4679 + $0x5c] sm:$0xf]
        %v4704 = vld [vmem:[%s4679 + $0x60] sm:$0xf]
        %v4705 = vld [vmem:[%s4679 + $0x64] sm:$0xf]
        %v4706 = vld [vmem:[%s4679 + $0x68] sm:$0xf]
        %v4707 = vld [vmem:[%s4679 + $0x6c] sm:$0xf]
        %v4708 = vld [vmem:[%s4679 + $0x70] sm:$0xf]
        %v4709 = vld [vmem:[%s4679 + $0x74] sm:$0xf]
        %v4710 = vld [vmem:[%s4679 + $0x78] sm:$0xf]
        %v4711 = vld [vmem:[%s4679 + $0x7c] sm:$0xf]
        %v4712 = vld [vmem:[%s4679 + $0x80] sm:$0xf]
        %v4713 = vld [vmem:[%s4679 + $0x84] sm:$0xf]
        %v4714 = vld [vmem:[%s4679 + $0x88] sm:$0xf]
        %v4715 = vld [vmem:[%s4679 + $0x8c] sm:$0xf]
        %v4716 = vld [vmem:[%s4679 + $0x90] sm:$0xf]
        %v4717 = vld [vmem:[%s4679 + $0x94] sm:$0xf]
        %v4718 = vld [vmem:[%s4679 + $0x98] sm:$0xf]
        %v4719 = vld [vmem:[%s4679 + $0x9c] sm:$0xf]
        %v4720 = vld [vmem:[%s4679 + $0xa0] sm:$0xf]
        %v4721 = vld [vmem:[%s4679 + $0xa4] sm:$0xf]
        %v4722 = vld [vmem:[%s4679 + $0xa8] sm:$0xf]
        %v4723 = vld [vmem:[%s4679 + $0xac] sm:$0xf]
        %v4724 = vld [vmem:[%s4679 + $0xb0] sm:$0xf]
        %v4725 = vld [vmem:[%s4679 + $0xb4] sm:$0xf]
        %v4726 = vld [vmem:[%s4679 + $0xb8] sm:$0xf]
        %v4727 = vld [vmem:[%s4679 + $0xbc] sm:$0xf]
        %v4728 = vld [vmem:[%s4679 + $0xc0] sm:$0xf]
        %v4729 = vld [vmem:[%s4679 + $0xc4] sm:$0xf]
        %v4730 = vld [vmem:[%s4679 + $0xc8] sm:$0xf]
        %v4731 = vld [vmem:[%s4679 + $0xcc] sm:$0xf]
        %v4732 = vld [vmem:[%s4679 + $0xd0] sm:$0xf]
        %v4733 = vld [vmem:[%s4679 + $0xd4] sm:$0xf]
        %v4734 = vld [vmem:[%s4679 + $0xd8] sm:$0xf]
        %v4735 = vld [vmem:[%s4679 + $0xdc] sm:$0xf]
        %v4736 = vld [vmem:[%s4679 + $0xe0] sm:$0xf]
        %v4737 = vld [vmem:[%s4679 + $0xe4] sm:$0xf]
        %v4738 = vld [vmem:[%s4679 + $0xe8] sm:$0xf]
        %v4739 = vld [vmem:[%s4679 + $0xec] sm:$0xf]
        %v4740 = vld [vmem:[%s4679 + $0xf0] sm:$0xf]
        %v4741 = vld [vmem:[%s4679 + $0xf4] sm:$0xf]
        %v4742 = vld [vmem:[%s4679 + $0xf8] sm:$0xf]
        %v4743 = vld [vmem:[%s4679 + $0xfc] sm:$0xf]
        %v4744 = vld [vmem:[%s4679 + $0x100] sm:$0xf]
        %v4745 = vld [vmem:[%s4679 + $0x104] sm:$0xf]
        %v4746 = vld [vmem:[%s4679 + $0x108] sm:$0xf]
        %v4747 = vld [vmem:[%s4679 + $0x10c] sm:$0xf]
        %v4748 = vld [vmem:[%s4679 + $0x110] sm:$0xf]
        %v4749 = vld [vmem:[%s4679 + $0x114] sm:$0xf]
        %v4750 = vld [vmem:[%s4679 + $0x118] sm:$0xf]
        %v4751 = vld [vmem:[%s4679 + $0x11c] sm:$0xf]
        %v4752 = vld [vmem:[%s4679 + $0x120] sm:$0xf]
        %v4753 = vld [vmem:[%s4679 + $0x124] sm:$0xf]
        %v4754 = vld [vmem:[%s4679 + $0x128] sm:$0xf]
        %v4755 = vld [vmem:[%s4679 + $0x12c] sm:$0xf]
        %v4756 = vld [vmem:[%s4679 + $0x130] sm:$0xf]
        %v4757 = vld [vmem:[%s4679 + $0x134] sm:$0xf]
        %v4758 = vld [vmem:[%s4679 + $0x138] sm:$0xf]
        %v4759 = vld [vmem:[%s4679 + $0x13c] sm:$0xf]
        %v4760 = vld [vmem:[%s4679 + $0x140] sm:$0xf]
        %v4761 = vld [vmem:[%s4679 + $0x144] sm:$0xf]
        %v4762 = vld [vmem:[%s4679 + $0x148] sm:$0xf]
        %v4763 = vld [vmem:[%s4679 + $0x14c] sm:$0xf]
        %v4764 = vld [vmem:[%s4679 + $0x150] sm:$0xf]
        %v4765 = vld [vmem:[%s4679 + $0x154] sm:$0xf]
        %v4766 = vld [vmem:[%s4679 + $0x158] sm:$0xf]
        %v4767 = vld [vmem:[%s4679 + $0x15c] sm:$0xf]
        %v4768 = vld [vmem:[%s4679 + $0x160] sm:$0xf]
        %v4769 = vld [vmem:[%s4679 + $0x164] sm:$0xf]
        %v4770 = vld [vmem:[%s4679 + $0x168] sm:$0xf]
        %v4771 = vld [vmem:[%s4679 + $0x16c] sm:$0xf]
        %v4772 = vld [vmem:[%s4679 + $0x170] sm:$0xf]
        %v4773 = vld [vmem:[%s4679 + $0x174] sm:$0xf]
        %v4774 = vld [vmem:[%s4679 + $0x178] sm:$0xf]
        %v4775 = vld [vmem:[%s4679 + $0x17c] sm:$0xf]
        %v4776 = vunpack.c.l.bf16 %v4680
        %v4777 = vunpack.c.l.bf16 %v4681
        %v4778 = vunpack.c.l.bf16 %v4682
        %v4779 = vunpack.c.l.bf16 %v4683
        %v4780 = vunpack.c.l.bf16 %v4684
        %v4781 = vunpack.c.l.bf16 %v4685
        %v4782 = vunpack.c.l.bf16 %v4686
        %v4783 = vunpack.c.l.bf16 %v4687
        %v4784 = vunpack.c.l.bf16 %v4688
        %v4785 = vunpack.c.l.bf16 %v4689
        %v4786 = vunpack.c.l.bf16 %v4690
        %v4787 = vunpack.c.l.bf16 %v4691
        %v4788 = vunpack.c.l.bf16 %v4692
        %v4789 = vunpack.c.l.bf16 %v4693
        %v4790 = vunpack.c.l.bf16 %v4694
        %v4791 = vunpack.c.l.bf16 %v4695
        %v4792 = vunpack.c.l.bf16 %v4696
        %v4793 = vunpack.c.l.bf16 %v4697
        %v4794 = vunpack.c.l.bf16 %v4698
        %v4795 = vunpack.c.l.bf16 %v4699
        %v4796 = vunpack.c.l.bf16 %v4700
        %v4797 = vunpack.c.l.bf16 %v4701
        %v4798 = vunpack.c.l.bf16 %v4702
        %v4799 = vunpack.c.l.bf16 %v4703
        %v4800 = vunpack.c.l.bf16 %v4704
        %v4801 = vunpack.c.l.bf16 %v4705
        %v4802 = vunpack.c.l.bf16 %v4706
        %v4803 = vunpack.c.l.bf16 %v4707
        %v4804 = vunpack.c.l.bf16 %v4708
        %v4805 = vunpack.c.l.bf16 %v4709
        %v4806 = vunpack.c.l.bf16 %v4710
        %v4807 = vunpack.c.l.bf16 %v4711
        %v4808 = vunpack.c.l.bf16 %v4712
        %v4809 = vunpack.c.l.bf16 %v4713
        %v4810 = vunpack.c.l.bf16 %v4714
        %v4811 = vunpack.c.l.bf16 %v4715
        %v4812 = vunpack.c.l.bf16 %v4716
        %v4813 = vunpack.c.l.bf16 %v4717
        %v4814 = vunpack.c.l.bf16 %v4718
        %v4815 = vunpack.c.l.bf16 %v4719
        %v4816 = vunpack.c.l.bf16 %v4720
        %v4817 = vunpack.c.l.bf16 %v4721
        %v4818 = vunpack.c.l.bf16 %v4722
        %v4819 = vunpack.c.l.bf16 %v4723
        %v4820 = vunpack.c.l.bf16 %v4724
        %v4821 = vunpack.c.l.bf16 %v4725
        %v4822 = vunpack.c.l.bf16 %v4726
        %v4823 = vunpack.c.l.bf16 %v4727
        %v4824 = vunpack.c.l.bf16 %v4728
        %v4825 = vunpack.c.l.bf16 %v4729
        %v4826 = vunpack.c.l.bf16 %v4730
        %v4827 = vunpack.c.l.bf16 %v4731
        %v4828 = vunpack.c.l.bf16 %v4732
        %v4829 = vunpack.c.l.bf16 %v4733
        %v4830 = vunpack.c.l.bf16 %v4734
        %v4831 = vunpack.c.l.bf16 %v4735
        %v4832 = vunpack.c.l.bf16 %v4736
        %v4833 = vunpack.c.l.bf16 %v4737
        %v4834 = vunpack.c.l.bf16 %v4738
        %v4835 = vunpack.c.l.bf16 %v4739
        %v4836 = vunpack.c.l.bf16 %v4740
        %v4837 = vunpack.c.l.bf16 %v4741
        %v4838 = vunpack.c.l.bf16 %v4742
        %v4839 = vunpack.c.l.bf16 %v4743
        %v4840 = vunpack.c.l.bf16 %v4744
        %v4841 = vunpack.c.l.bf16 %v4745
        %v4842 = vunpack.c.l.bf16 %v4746
        %v4843 = vunpack.c.l.bf16 %v4747
        %v4844 = vunpack.c.l.bf16 %v4748
        %v4845 = vunpack.c.l.bf16 %v4749
        %v4846 = vunpack.c.l.bf16 %v4750
        %v4847 = vunpack.c.l.bf16 %v4751
        %v4848 = vunpack.c.l.bf16 %v4752
        %v4849 = vunpack.c.l.bf16 %v4753
        %v4850 = vunpack.c.l.bf16 %v4754
        %v4851 = vunpack.c.l.bf16 %v4755
        %v4852 = vunpack.c.l.bf16 %v4756
        %v4853 = vunpack.c.l.bf16 %v4757
        %v4854 = vunpack.c.l.bf16 %v4758
        %v4855 = vunpack.c.l.bf16 %v4759
        %v4856 = vunpack.c.l.bf16 %v4760
        %v4857 = vunpack.c.l.bf16 %v4761
        %v4858 = vunpack.c.l.bf16 %v4762
        %v4859 = vunpack.c.l.bf16 %v4763
        %v4860 = vunpack.c.l.bf16 %v4764
        %v4861 = vunpack.c.l.bf16 %v4765
        %v4862 = vunpack.c.l.bf16 %v4766
        %v4863 = vunpack.c.l.bf16 %v4767
        %v4864 = vunpack.c.l.bf16 %v4768
        %v4865 = vunpack.c.l.bf16 %v4769
        %v4866 = vunpack.c.l.bf16 %v4770
        %v4867 = vunpack.c.l.bf16 %v4771
        %v4868 = vunpack.c.l.bf16 %v4772
        %v4869 = vunpack.c.l.bf16 %v4773
        %v4870 = vunpack.c.l.bf16 %v4774
        %v4871 = vunpack.c.l.bf16 %v4775
        %s4872 = scalar_lea.vmem [#allocation2], 14
        %v4873 = vld [vmem:[%s4872] sm:$0x3]
        %v4874 = vmul.f32 %v323, %v4776
        %v4875 = vmul.f32 %v324, %v4777
        %v4876 = vmul.f32 %v325, %v4778
        %v4877 = vmul.f32 %v326, %v4779
        %v4878 = vmul.f32 %v327, %v4780
        %v4879 = vmul.f32 %v328, %v4781
        %v4880 = vmul.f32 %v329, %v4782
        %v4881 = vmul.f32 %v330, %v4783
        %v4882 = vmul.f32 %v331, %v4784
        %v4883 = vmul.f32 %v332, %v4785
        %v4884 = vmul.f32 %v333, %v4786
        %v4885 = vmul.f32 %v334, %v4787
        %v4886 = vmul.f32 %v335, %v4788
        %v4887 = vmul.f32 %v336, %v4789
        %v4888 = vmul.f32 %v337, %v4790
        %v4889 = vmul.f32 %v338, %v4791
        %v4890 = vmul.f32 %v339, %v4792
        %v4891 = vmul.f32 %v340, %v4793
        %v4892 = vmul.f32 %v341, %v4794
        %v4893 = vmul.f32 %v342, %v4795
        %v4894 = vmul.f32 %v343, %v4796
        %v4895 = vmul.f32 %v344, %v4797
        %v4896 = vmul.f32 %v345, %v4798
        %v4897 = vmul.f32 %v346, %v4799
        %v4898 = vmul.f32 %v347, %v4800
        %v4899 = vmul.f32 %v348, %v4801
        %v4900 = vmul.f32 %v349, %v4802
        %v4901 = vmul.f32 %v350, %v4803
        %v4902 = vmul.f32 %v351, %v4804
        %v4903 = vmul.f32 %v352, %v4805
        %v4904 = vmul.f32 %v353, %v4806
        %v4905 = vmul.f32 %v354, %v4807
        %v4906 = vmul.f32 %v355, %v4808
        %v4907 = vmul.f32 %v356, %v4809
        %v4908 = vmul.f32 %v357, %v4810
        %v4909 = vmul.f32 %v358, %v4811
        %v4910 = vmul.f32 %v359, %v4812
        %v4911 = vmul.f32 %v360, %v4813
        %v4912 = vmul.f32 %v361, %v4814
        %v4913 = vmul.f32 %v362, %v4815
        %v4914 = vmul.f32 %v363, %v4816
        %v4915 = vmul.f32 %v364, %v4817
        %v4916 = vmul.f32 %v365, %v4818
        %v4917 = vmul.f32 %v366, %v4819
        %v4918 = vmul.f32 %v367, %v4820
        %v4919 = vmul.f32 %v368, %v4821
        %v4920 = vmul.f32 %v369, %v4822
        %v4921 = vmul.f32 %v370, %v4823
        %v4922 = vmul.f32 %v371, %v4824
        %v4923 = vmul.f32 %v372, %v4825
        %v4924 = vmul.f32 %v373, %v4826
        %v4925 = vmul.f32 %v374, %v4827
        %v4926 = vmul.f32 %v375, %v4828
        %v4927 = vmul.f32 %v376, %v4829
        %v4928 = vmul.f32 %v377, %v4830
        %v4929 = vmul.f32 %v378, %v4831
        %v4930 = vmul.f32 %v379, %v4832
        %v4931 = vmul.f32 %v380, %v4833
        %v4932 = vmul.f32 %v381, %v4834
        %v4933 = vmul.f32 %v382, %v4835
        %v4934 = vmul.f32 %v383, %v4836
        %v4935 = vmul.f32 %v384, %v4837
        %v4936 = vmul.f32 %v385, %v4838
        %v4937 = vmul.f32 %v386, %v4839
        %v4938 = vmul.f32 %v387, %v4840
        %v4939 = vmul.f32 %v388, %v4841
        %v4940 = vmul.f32 %v389, %v4842
        %v4941 = vmul.f32 %v390, %v4843
        %v4942 = vmul.f32 %v391, %v4844
        %v4943 = vmul.f32 %v392, %v4845
        %v4944 = vmul.f32 %v393, %v4846
        %v4945 = vmul.f32 %v394, %v4847
        %v4946 = vmul.f32 %v395, %v4848
        %v4947 = vmul.f32 %v396, %v4849
        %v4948 = vmul.f32 %v397, %v4850
        %v4949 = vmul.f32 %v398, %v4851
        %v4950 = vmul.f32 %v399, %v4852
        %v4951 = vmul.f32 %v400, %v4853
        %v4952 = vmul.f32 %v401, %v4854
        %v4953 = vmul.f32 %v402, %v4855
        %v4954 = vmul.f32 %v403, %v4856
        %v4955 = vmul.f32 %v404, %v4857
        %v4956 = vmul.f32 %v405, %v4858
        %v4957 = vmul.f32 %v406, %v4859
        %v4958 = vmul.f32 %v407, %v4860
        %v4959 = vmul.f32 %v408, %v4861
        %v4960 = vmul.f32 %v409, %v4862
        %v4961 = vmul.f32 %v410, %v4863
        %v4962 = vmul.f32 %v411, %v4864
        %v4963 = vmul.f32 %v412, %v4865
        %v4964 = vmul.f32 %v413, %v4866
        %v4965 = vmul.f32 %v414, %v4867
        %v4966 = vmul.f32 %v415, %v4868
        %v4967 = vmul.f32 %v416, %v4869
        %v4968 = vmul.f32 %v417, %v4870
        %v4969 = vmul.f32 %v418, %v4871
        %v4970 = vmul.f32 %v419, %v4776
        %v4971 = vmul.f32 %v420, %v4777
        %v4972 = vmul.f32 %v421, %v4778
        %v4973 = vmul.f32 %v422, %v4779
        %v4974 = vmul.f32 %v423, %v4780
        %v4975 = vmul.f32 %v424, %v4781
        %v4976 = vmul.f32 %v425, %v4782
        %v4977 = vmul.f32 %v426, %v4783
        %v4978 = vmul.f32 %v427, %v4784
        %v4979 = vmul.f32 %v428, %v4785
        %v4980 = vmul.f32 %v429, %v4786
        %v4981 = vmul.f32 %v430, %v4787
        %v4982 = vmul.f32 %v431, %v4788
        %v4983 = vmul.f32 %v432, %v4789
        %v4984 = vmul.f32 %v433, %v4790
        %v4985 = vmul.f32 %v434, %v4791
        %v4986 = vmul.f32 %v435, %v4792
        %v4987 = vmul.f32 %v436, %v4793
        %v4988 = vmul.f32 %v437, %v4794
        %v4989 = vmul.f32 %v438, %v4795
        %v4990 = vmul.f32 %v439, %v4796
        %v4991 = vmul.f32 %v440, %v4797
        %v4992 = vmul.f32 %v441, %v4798
        %v4993 = vmul.f32 %v442, %v4799
        %v4994 = vmul.f32 %v443, %v4800
        %v4995 = vmul.f32 %v444, %v4801
        %v4996 = vmul.f32 %v445, %v4802
        %v4997 = vmul.f32 %v446, %v4803
        %v4998 = vmul.f32 %v447, %v4804
        %v4999 = vmul.f32 %v448, %v4805
        %v5000 = vmul.f32 %v449, %v4806
        %v5001 = vmul.f32 %v450, %v4807
        %v5002 = vmul.f32 %v451, %v4808
        %v5003 = vmul.f32 %v452, %v4809
        %v5004 = vmul.f32 %v453, %v4810
        %v5005 = vmul.f32 %v454, %v4811
        %v5006 = vmul.f32 %v455, %v4812
        %v5007 = vmul.f32 %v456, %v4813
        %v5008 = vmul.f32 %v457, %v4814
        %v5009 = vmul.f32 %v458, %v4815
        %v5010 = vmul.f32 %v459, %v4816
        %v5011 = vmul.f32 %v460, %v4817
        %v5012 = vmul.f32 %v461, %v4818
        %v5013 = vmul.f32 %v462, %v4819
        %v5014 = vmul.f32 %v463, %v4820
        %v5015 = vmul.f32 %v464, %v4821
        %v5016 = vmul.f32 %v465, %v4822
        %v5017 = vmul.f32 %v466, %v4823
        %v5018 = vmul.f32 %v467, %v4824
        %v5019 = vmul.f32 %v468, %v4825
        %v5020 = vmul.f32 %v469, %v4826
        %v5021 = vmul.f32 %v470, %v4827
        %v5022 = vmul.f32 %v471, %v4828
        %v5023 = vmul.f32 %v472, %v4829
        %v5024 = vmul.f32 %v473, %v4830
        %v5025 = vmul.f32 %v474, %v4831
        %v5026 = vmul.f32 %v475, %v4832
        %v5027 = vmul.f32 %v476, %v4833
        %v5028 = vmul.f32 %v477, %v4834
        %v5029 = vmul.f32 %v478, %v4835
        %v5030 = vmul.f32 %v479, %v4836
        %v5031 = vmul.f32 %v480, %v4837
        %v5032 = vmul.f32 %v481, %v4838
        %v5033 = vmul.f32 %v482, %v4839
        %v5034 = vmul.f32 %v483, %v4840
        %v5035 = vmul.f32 %v484, %v4841
        %v5036 = vmul.f32 %v485, %v4842
        %v5037 = vmul.f32 %v486, %v4843
        %v5038 = vmul.f32 %v487, %v4844
        %v5039 = vmul.f32 %v488, %v4845
        %v5040 = vmul.f32 %v489, %v4846
        %v5041 = vmul.f32 %v490, %v4847
        %v5042 = vmul.f32 %v491, %v4848
        %v5043 = vmul.f32 %v492, %v4849
        %v5044 = vmul.f32 %v493, %v4850
        %v5045 = vmul.f32 %v494, %v4851
        %v5046 = vmul.f32 %v495, %v4852
        %v5047 = vmul.f32 %v496, %v4853
        %v5048 = vmul.f32 %v497, %v4854
        %v5049 = vmul.f32 %v498, %v4855
        %v5050 = vmul.f32 %v499, %v4856
        %v5051 = vmul.f32 %v500, %v4857
        %v5052 = vmul.f32 %v501, %v4858
        %v5053 = vmul.f32 %v502, %v4859
        %v5054 = vmul.f32 %v503, %v4860
        %v5055 = vmul.f32 %v504, %v4861
        %v5056 = vmul.f32 %v505, %v4862
        %v5057 = vmul.f32 %v506, %v4863
        %v5058 = vmul.f32 %v507, %v4864
        %v5059 = vmul.f32 %v508, %v4865
        %v5060 = vmul.f32 %v509, %v4866
        %v5061 = vmul.f32 %v510, %v4867
        %v5062 = vmul.f32 %v511, %v4868
        %v5063 = vmul.f32 %v512, %v4869
        %v5064 = vmul.f32 %v513, %v4870
        %v5065 = vmul.f32 %v514, %v4871
        %v5066 = vadd.f32 %v4874, %v4875
        %v5067 = vadd.f32 %v5066, %v4876
        %v5068 = vadd.f32 %v5067, %v4877
        %v5069 = vadd.f32 %v5068, %v4878
        %v5070 = vadd.f32 %v5069, %v4879
        %v5071 = vadd.f32 %v5070, %v4880
        %v5072 = vadd.f32 %v5071, %v4881
        %v5073 = vadd.f32 %v5072, %v4882
        %v5074 = vadd.f32 %v5073, %v4883
        %v5075 = vadd.f32 %v5074, %v4884
        %v5076 = vadd.f32 %v5075, %v4885
        %v5077 = vadd.f32 %v5076, %v4886
        %v5078 = vadd.f32 %v5077, %v4887
        %v5079 = vadd.f32 %v5078, %v4888
        %v5080 = vadd.f32 %v5079, %v4889
        %v5081 = vadd.f32 %v5080, %v4890
        %v5082 = vadd.f32 %v5081, %v4891
        %v5083 = vadd.f32 %v5082, %v4892
        %v5084 = vadd.f32 %v5083, %v4893
        %v5085 = vadd.f32 %v5084, %v4894
        %v5086 = vadd.f32 %v5085, %v4895
        %v5087 = vadd.f32 %v5086, %v4896
        %v5088 = vadd.f32 %v5087, %v4897
        %v5089 = vadd.f32 %v5088, %v4898
        %v5090 = vadd.f32 %v5089, %v4899
        %v5091 = vadd.f32 %v5090, %v4900
        %v5092 = vadd.f32 %v5091, %v4901
        %v5093 = vadd.f32 %v5092, %v4902
        %v5094 = vadd.f32 %v5093, %v4903
        %v5095 = vadd.f32 %v5094, %v4904
        %v5096 = vadd.f32 %v5095, %v4905
        %v5097 = vadd.f32 %v5096, %v4906
        %v5098 = vadd.f32 %v5097, %v4907
        %v5099 = vadd.f32 %v5098, %v4908
        %v5100 = vadd.f32 %v5099, %v4909
        %v5101 = vadd.f32 %v5100, %v4910
        %v5102 = vadd.f32 %v5101, %v4911
        %v5103 = vadd.f32 %v5102, %v4912
        %v5104 = vadd.f32 %v5103, %v4913
        %v5105 = vadd.f32 %v5104, %v4914
        %v5106 = vadd.f32 %v5105, %v4915
        %v5107 = vadd.f32 %v5106, %v4916
        %v5108 = vadd.f32 %v5107, %v4917
        %v5109 = vadd.f32 %v5108, %v4918
        %v5110 = vadd.f32 %v5109, %v4919
        %v5111 = vadd.f32 %v5110, %v4920
        %v5112 = vadd.f32 %v5111, %v4921
        %v5113 = vadd.f32 %v5112, %v4922
        %v5114 = vadd.f32 %v5113, %v4923
        %v5115 = vadd.f32 %v5114, %v4924
        %v5116 = vadd.f32 %v5115, %v4925
        %v5117 = vadd.f32 %v5116, %v4926
        %v5118 = vadd.f32 %v5117, %v4927
        %v5119 = vadd.f32 %v5118, %v4928
        %v5120 = vadd.f32 %v5119, %v4929
        %v5121 = vadd.f32 %v5120, %v4930
        %v5122 = vadd.f32 %v5121, %v4931
        %v5123 = vadd.f32 %v5122, %v4932
        %v5124 = vadd.f32 %v5123, %v4933
        %v5125 = vadd.f32 %v5124, %v4934
        %v5126 = vadd.f32 %v5125, %v4935
        %v5127 = vadd.f32 %v5126, %v4936
        %v5128 = vadd.f32 %v5127, %v4937
        %v5129 = vadd.f32 %v5128, %v4938
        %v5130 = vadd.f32 %v5129, %v4939
        %v5131 = vadd.f32 %v5130, %v4940
        %v5132 = vadd.f32 %v5131, %v4941
        %v5133 = vadd.f32 %v5132, %v4942
        %v5134 = vadd.f32 %v5133, %v4943
        %v5135 = vadd.f32 %v5134, %v4944
        %v5136 = vadd.f32 %v5135, %v4945
        %v5137 = vadd.f32 %v5136, %v4946
        %v5138 = vadd.f32 %v5137, %v4947
        %v5139 = vadd.f32 %v5138, %v4948
        %v5140 = vadd.f32 %v5139, %v4949
        %v5141 = vadd.f32 %v5140, %v4950
        %v5142 = vadd.f32 %v5141, %v4951
        %v5143 = vadd.f32 %v5142, %v4952
        %v5144 = vadd.f32 %v5143, %v4953
        %v5145 = vadd.f32 %v5144, %v4954
        %v5146 = vadd.f32 %v5145, %v4955
        %v5147 = vadd.f32 %v5146, %v4956
        %v5148 = vadd.f32 %v5147, %v4957
        %v5149 = vadd.f32 %v5148, %v4958
        %v5150 = vadd.f32 %v5149, %v4959
        %v5151 = vadd.f32 %v5150, %v4960
        %v5152 = vadd.f32 %v5151, %v4961
        %v5153 = vadd.f32 %v5152, %v4962
        %v5154 = vadd.f32 %v5153, %v4963
        %v5155 = vadd.f32 %v5154, %v4964
        %v5156 = vadd.f32 %v5155, %v4965
        %v5157 = vadd.f32 %v5156, %v4966
        %v5158 = vadd.f32 %v5157, %v4967
        %v5159 = vadd.f32 %v5158, %v4968
        %v5160 = vadd.f32 %v5159, %v4969
        %v5161 = vrot.slane %v5160, 4
        %v5162 = vadd.f32 %v5160, %v5161
        %v5163 = vrot.slane %v5162, 2
        %v5164 = vadd.f32 %v5162, %v5163
        %v5165 = vrot.slane %v5164, 1
        %v5166 = vadd.f32 %v5164, %v5165
        %v5167 = vadd.f32 %v4970, %v4971
        %v5168 = vadd.f32 %v5167, %v4972
        %v5169 = vadd.f32 %v5168, %v4973
        %v5170 = vadd.f32 %v5169, %v4974
        %v5171 = vadd.f32 %v5170, %v4975
        %v5172 = vadd.f32 %v5171, %v4976
        %v5173 = vadd.f32 %v5172, %v4977
        %v5174 = vadd.f32 %v5173, %v4978
        %v5175 = vadd.f32 %v5174, %v4979
        %v5176 = vadd.f32 %v5175, %v4980
        %v5177 = vadd.f32 %v5176, %v4981
        %v5178 = vadd.f32 %v5177, %v4982
        %v5179 = vadd.f32 %v5178, %v4983
        %v5180 = vadd.f32 %v5179, %v4984
        %v5181 = vadd.f32 %v5180, %v4985
        %v5182 = vadd.f32 %v5181, %v4986
        %v5183 = vadd.f32 %v5182, %v4987
        %v5184 = vadd.f32 %v5183, %v4988
        %v5185 = vadd.f32 %v5184, %v4989
        %v5186 = vadd.f32 %v5185, %v4990
        %v5187 = vadd.f32 %v5186, %v4991
        %v5188 = vadd.f32 %v5187, %v4992
        %v5189 = vadd.f32 %v5188, %v4993
        %v5190 = vadd.f32 %v5189, %v4994
        %v5191 = vadd.f32 %v5190, %v4995
        %v5192 = vadd.f32 %v5191, %v4996
        %v5193 = vadd.f32 %v5192, %v4997
        %v5194 = vadd.f32 %v5193, %v4998
        %v5195 = vadd.f32 %v5194, %v4999
        %v5196 = vadd.f32 %v5195, %v5000
        %v5197 = vadd.f32 %v5196, %v5001
        %v5198 = vadd.f32 %v5197, %v5002
        %v5199 = vadd.f32 %v5198, %v5003
        %v5200 = vadd.f32 %v5199, %v5004
        %v5201 = vadd.f32 %v5200, %v5005
        %v5202 = vadd.f32 %v5201, %v5006
        %v5203 = vadd.f32 %v5202, %v5007
        %v5204 = vadd.f32 %v5203, %v5008
        %v5205 = vadd.f32 %v5204, %v5009
        %v5206 = vadd.f32 %v5205, %v5010
        %v5207 = vadd.f32 %v5206, %v5011
        %v5208 = vadd.f32 %v5207, %v5012
        %v5209 = vadd.f32 %v5208, %v5013
        %v5210 = vadd.f32 %v5209, %v5014
        %v5211 = vadd.f32 %v5210, %v5015
        %v5212 = vadd.f32 %v5211, %v5016
        %v5213 = vadd.f32 %v5212, %v5017
        %v5214 = vadd.f32 %v5213, %v5018
        %v5215 = vadd.f32 %v5214, %v5019
        %v5216 = vadd.f32 %v5215, %v5020
        %v5217 = vadd.f32 %v5216, %v5021
        %v5218 = vadd.f32 %v5217, %v5022
        %v5219 = vadd.f32 %v5218, %v5023
        %v5220 = vadd.f32 %v5219, %v5024
        %v5221 = vadd.f32 %v5220, %v5025
        %v5222 = vadd.f32 %v5221, %v5026
        %v5223 = vadd.f32 %v5222, %v5027
        %v5224 = vadd.f32 %v5223, %v5028
        %v5225 = vadd.f32 %v5224, %v5029
        %v5226 = vadd.f32 %v5225, %v5030
        %v5227 = vadd.f32 %v5226, %v5031
        %v5228 = vadd.f32 %v5227, %v5032
        %v5229 = vadd.f32 %v5228, %v5033
        %v5230 = vadd.f32 %v5229, %v5034
        %v5231 = vadd.f32 %v5230, %v5035
        %v5232 = vadd.f32 %v5231, %v5036
        %v5233 = vadd.f32 %v5232, %v5037
        %v5234 = vadd.f32 %v5233, %v5038
        %v5235 = vadd.f32 %v5234, %v5039
        %v5236 = vadd.f32 %v5235, %v5040
        %v5237 = vadd.f32 %v5236, %v5041
        %v5238 = vadd.f32 %v5237, %v5042
        %v5239 = vadd.f32 %v5238, %v5043
        %v5240 = vadd.f32 %v5239, %v5044
        %v5241 = vadd.f32 %v5240, %v5045
        %v5242 = vadd.f32 %v5241, %v5046
        %v5243 = vadd.f32 %v5242, %v5047
        %v5244 = vadd.f32 %v5243, %v5048
        %v5245 = vadd.f32 %v5244, %v5049
        %v5246 = vadd.f32 %v5245, %v5050
        %v5247 = vadd.f32 %v5246, %v5051
        %v5248 = vadd.f32 %v5247, %v5052
        %v5249 = vadd.f32 %v5248, %v5053
        %v5250 = vadd.f32 %v5249, %v5054
        %v5251 = vadd.f32 %v5250, %v5055
        %v5252 = vadd.f32 %v5251, %v5056
        %v5253 = vadd.f32 %v5252, %v5057
        %v5254 = vadd.f32 %v5253, %v5058
        %v5255 = vadd.f32 %v5254, %v5059
        %v5256 = vadd.f32 %v5255, %v5060
        %v5257 = vadd.f32 %v5256, %v5061
        %v5258 = vadd.f32 %v5257, %v5062
        %v5259 = vadd.f32 %v5258, %v5063
        %v5260 = vadd.f32 %v5259, %v5064
        %v5261 = vadd.f32 %v5260, %v5065
        %v5262 = vrot.slane %v5261, 4
        %v5263 = vadd.f32 %v5261, %v5262
        %v5264 = vrot.slane %v5263, 2
        %v5265 = vadd.f32 %v5263, %v5264
        %v5266 = vrot.slane %v5265, 1
        %v5267 = vadd.f32 %v5265, %v5266
        %v5270 = vsel %vm1104, %v5267, %v5166
        %v5272 = vadd.f32 %v4873, %v5270
        %5273 = vst [vmem:[%s4872] sm:$0x3] %v5272
        %s5274 = scalar_lea.vmem %s276, 3072 [#allocation6]
        %v5275 = vld [vmem:[%s5274] sm:$0xf]
        %v5276 = vld [vmem:[%s5274 + $0x4] sm:$0xf]
        %v5277 = vld [vmem:[%s5274 + $0x8] sm:$0xf]
        %v5278 = vld [vmem:[%s5274 + $0xc] sm:$0xf]
        %v5279 = vld [vmem:[%s5274 + $0x10] sm:$0xf]
        %v5280 = vld [vmem:[%s5274 + $0x14] sm:$0xf]
        %v5281 = vld [vmem:[%s5274 + $0x18] sm:$0xf]
        %v5282 = vld [vmem:[%s5274 + $0x1c] sm:$0xf]
        %v5283 = vld [vmem:[%s5274 + $0x20] sm:$0xf]
        %v5284 = vld [vmem:[%s5274 + $0x24] sm:$0xf]
        %v5285 = vld [vmem:[%s5274 + $0x28] sm:$0xf]
        %v5286 = vld [vmem:[%s5274 + $0x2c] sm:$0xf]
        %v5287 = vld [vmem:[%s5274 + $0x30] sm:$0xf]
        %v5288 = vld [vmem:[%s5274 + $0x34] sm:$0xf]
        %v5289 = vld [vmem:[%s5274 + $0x38] sm:$0xf]
        %v5290 = vld [vmem:[%s5274 + $0x3c] sm:$0xf]
        %v5291 = vld [vmem:[%s5274 + $0x40] sm:$0xf]
        %v5292 = vld [vmem:[%s5274 + $0x44] sm:$0xf]
        %v5293 = vld [vmem:[%s5274 + $0x48] sm:$0xf]
        %v5294 = vld [vmem:[%s5274 + $0x4c] sm:$0xf]
        %v5295 = vld [vmem:[%s5274 + $0x50] sm:$0xf]
        %v5296 = vld [vmem:[%s5274 + $0x54] sm:$0xf]
        %v5297 = vld [vmem:[%s5274 + $0x58] sm:$0xf]
        %v5298 = vld [vmem:[%s5274 + $0x5c] sm:$0xf]
        %v5299 = vld [vmem:[%s5274 + $0x60] sm:$0xf]
        %v5300 = vld [vmem:[%s5274 + $0x64] sm:$0xf]
        %v5301 = vld [vmem:[%s5274 + $0x68] sm:$0xf]
        %v5302 = vld [vmem:[%s5274 + $0x6c] sm:$0xf]
        %v5303 = vld [vmem:[%s5274 + $0x70] sm:$0xf]
        %v5304 = vld [vmem:[%s5274 + $0x74] sm:$0xf]
        %v5305 = vld [vmem:[%s5274 + $0x78] sm:$0xf]
        %v5306 = vld [vmem:[%s5274 + $0x7c] sm:$0xf]
        %v5307 = vld [vmem:[%s5274 + $0x80] sm:$0xf]
        %v5308 = vld [vmem:[%s5274 + $0x84] sm:$0xf]
        %v5309 = vld [vmem:[%s5274 + $0x88] sm:$0xf]
        %v5310 = vld [vmem:[%s5274 + $0x8c] sm:$0xf]
        %v5311 = vld [vmem:[%s5274 + $0x90] sm:$0xf]
        %v5312 = vld [vmem:[%s5274 + $0x94] sm:$0xf]
        %v5313 = vld [vmem:[%s5274 + $0x98] sm:$0xf]
        %v5314 = vld [vmem:[%s5274 + $0x9c] sm:$0xf]
        %v5315 = vld [vmem:[%s5274 + $0xa0] sm:$0xf]
        %v5316 = vld [vmem:[%s5274 + $0xa4] sm:$0xf]
        %v5317 = vld [vmem:[%s5274 + $0xa8] sm:$0xf]
        %v5318 = vld [vmem:[%s5274 + $0xac] sm:$0xf]
        %v5319 = vld [vmem:[%s5274 + $0xb0] sm:$0xf]
        %v5320 = vld [vmem:[%s5274 + $0xb4] sm:$0xf]
        %v5321 = vld [vmem:[%s5274 + $0xb8] sm:$0xf]
        %v5322 = vld [vmem:[%s5274 + $0xbc] sm:$0xf]
        %v5323 = vld [vmem:[%s5274 + $0xc0] sm:$0xf]
        %v5324 = vld [vmem:[%s5274 + $0xc4] sm:$0xf]
        %v5325 = vld [vmem:[%s5274 + $0xc8] sm:$0xf]
        %v5326 = vld [vmem:[%s5274 + $0xcc] sm:$0xf]
        %v5327 = vld [vmem:[%s5274 + $0xd0] sm:$0xf]
        %v5328 = vld [vmem:[%s5274 + $0xd4] sm:$0xf]
        %v5329 = vld [vmem:[%s5274 + $0xd8] sm:$0xf]
        %v5330 = vld [vmem:[%s5274 + $0xdc] sm:$0xf]
        %v5331 = vld [vmem:[%s5274 + $0xe0] sm:$0xf]
        %v5332 = vld [vmem:[%s5274 + $0xe4] sm:$0xf]
        %v5333 = vld [vmem:[%s5274 + $0xe8] sm:$0xf]
        %v5334 = vld [vmem:[%s5274 + $0xec] sm:$0xf]
        %v5335 = vld [vmem:[%s5274 + $0xf0] sm:$0xf]
        %v5336 = vld [vmem:[%s5274 + $0xf4] sm:$0xf]
        %v5337 = vld [vmem:[%s5274 + $0xf8] sm:$0xf]
        %v5338 = vld [vmem:[%s5274 + $0xfc] sm:$0xf]
        %v5339 = vld [vmem:[%s5274 + $0x100] sm:$0xf]
        %v5340 = vld [vmem:[%s5274 + $0x104] sm:$0xf]
        %v5341 = vld [vmem:[%s5274 + $0x108] sm:$0xf]
        %v5342 = vld [vmem:[%s5274 + $0x10c] sm:$0xf]
        %v5343 = vld [vmem:[%s5274 + $0x110] sm:$0xf]
        %v5344 = vld [vmem:[%s5274 + $0x114] sm:$0xf]
        %v5345 = vld [vmem:[%s5274 + $0x118] sm:$0xf]
        %v5346 = vld [vmem:[%s5274 + $0x11c] sm:$0xf]
        %v5347 = vld [vmem:[%s5274 + $0x120] sm:$0xf]
        %v5348 = vld [vmem:[%s5274 + $0x124] sm:$0xf]
        %v5349 = vld [vmem:[%s5274 + $0x128] sm:$0xf]
        %v5350 = vld [vmem:[%s5274 + $0x12c] sm:$0xf]
        %v5351 = vld [vmem:[%s5274 + $0x130] sm:$0xf]
        %v5352 = vld [vmem:[%s5274 + $0x134] sm:$0xf]
        %v5353 = vld [vmem:[%s5274 + $0x138] sm:$0xf]
        %v5354 = vld [vmem:[%s5274 + $0x13c] sm:$0xf]
        %v5355 = vld [vmem:[%s5274 + $0x140] sm:$0xf]
        %v5356 = vld [vmem:[%s5274 + $0x144] sm:$0xf]
        %v5357 = vld [vmem:[%s5274 + $0x148] sm:$0xf]
        %v5358 = vld [vmem:[%s5274 + $0x14c] sm:$0xf]
        %v5359 = vld [vmem:[%s5274 + $0x150] sm:$0xf]
        %v5360 = vld [vmem:[%s5274 + $0x154] sm:$0xf]
        %v5361 = vld [vmem:[%s5274 + $0x158] sm:$0xf]
        %v5362 = vld [vmem:[%s5274 + $0x15c] sm:$0xf]
        %v5363 = vld [vmem:[%s5274 + $0x160] sm:$0xf]
        %v5364 = vld [vmem:[%s5274 + $0x164] sm:$0xf]
        %v5365 = vld [vmem:[%s5274 + $0x168] sm:$0xf]
        %v5366 = vld [vmem:[%s5274 + $0x16c] sm:$0xf]
        %v5367 = vld [vmem:[%s5274 + $0x170] sm:$0xf]
        %v5368 = vld [vmem:[%s5274 + $0x174] sm:$0xf]
        %v5369 = vld [vmem:[%s5274 + $0x178] sm:$0xf]
        %v5370 = vld [vmem:[%s5274 + $0x17c] sm:$0xf]
        %v5371 = vunpack.c.l.bf16 %v5275
        %v5372 = vunpack.c.l.bf16 %v5276
        %v5373 = vunpack.c.l.bf16 %v5277
        %v5374 = vunpack.c.l.bf16 %v5278
        %v5375 = vunpack.c.l.bf16 %v5279
        %v5376 = vunpack.c.l.bf16 %v5280
        %v5377 = vunpack.c.l.bf16 %v5281
        %v5378 = vunpack.c.l.bf16 %v5282
        %v5379 = vunpack.c.l.bf16 %v5283
        %v5380 = vunpack.c.l.bf16 %v5284
        %v5381 = vunpack.c.l.bf16 %v5285
        %v5382 = vunpack.c.l.bf16 %v5286
        %v5383 = vunpack.c.l.bf16 %v5287
        %v5384 = vunpack.c.l.bf16 %v5288
        %v5385 = vunpack.c.l.bf16 %v5289
        %v5386 = vunpack.c.l.bf16 %v5290
        %v5387 = vunpack.c.l.bf16 %v5291
        %v5388 = vunpack.c.l.bf16 %v5292
        %v5389 = vunpack.c.l.bf16 %v5293
        %v5390 = vunpack.c.l.bf16 %v5294
        %v5391 = vunpack.c.l.bf16 %v5295
        %v5392 = vunpack.c.l.bf16 %v5296
        %v5393 = vunpack.c.l.bf16 %v5297
        %v5394 = vunpack.c.l.bf16 %v5298
        %v5395 = vunpack.c.l.bf16 %v5299
        %v5396 = vunpack.c.l.bf16 %v5300
        %v5397 = vunpack.c.l.bf16 %v5301
        %v5398 = vunpack.c.l.bf16 %v5302
        %v5399 = vunpack.c.l.bf16 %v5303
        %v5400 = vunpack.c.l.bf16 %v5304
        %v5401 = vunpack.c.l.bf16 %v5305
        %v5402 = vunpack.c.l.bf16 %v5306
        %v5403 = vunpack.c.l.bf16 %v5307
        %v5404 = vunpack.c.l.bf16 %v5308
        %v5405 = vunpack.c.l.bf16 %v5309
        %v5406 = vunpack.c.l.bf16 %v5310
        %v5407 = vunpack.c.l.bf16 %v5311
        %v5408 = vunpack.c.l.bf16 %v5312
        %v5409 = vunpack.c.l.bf16 %v5313
        %v5410 = vunpack.c.l.bf16 %v5314
        %v5411 = vunpack.c.l.bf16 %v5315
        %v5412 = vunpack.c.l.bf16 %v5316
        %v5413 = vunpack.c.l.bf16 %v5317
        %v5414 = vunpack.c.l.bf16 %v5318
        %v5415 = vunpack.c.l.bf16 %v5319
        %v5416 = vunpack.c.l.bf16 %v5320
        %v5417 = vunpack.c.l.bf16 %v5321
        %v5418 = vunpack.c.l.bf16 %v5322
        %v5419 = vunpack.c.l.bf16 %v5323
        %v5420 = vunpack.c.l.bf16 %v5324
        %v5421 = vunpack.c.l.bf16 %v5325
        %v5422 = vunpack.c.l.bf16 %v5326
        %v5423 = vunpack.c.l.bf16 %v5327
        %v5424 = vunpack.c.l.bf16 %v5328
        %v5425 = vunpack.c.l.bf16 %v5329
        %v5426 = vunpack.c.l.bf16 %v5330
        %v5427 = vunpack.c.l.bf16 %v5331
        %v5428 = vunpack.c.l.bf16 %v5332
        %v5429 = vunpack.c.l.bf16 %v5333
        %v5430 = vunpack.c.l.bf16 %v5334
        %v5431 = vunpack.c.l.bf16 %v5335
        %v5432 = vunpack.c.l.bf16 %v5336
        %v5433 = vunpack.c.l.bf16 %v5337
        %v5434 = vunpack.c.l.bf16 %v5338
        %v5435 = vunpack.c.l.bf16 %v5339
        %v5436 = vunpack.c.l.bf16 %v5340
        %v5437 = vunpack.c.l.bf16 %v5341
        %v5438 = vunpack.c.l.bf16 %v5342
        %v5439 = vunpack.c.l.bf16 %v5343
        %v5440 = vunpack.c.l.bf16 %v5344
        %v5441 = vunpack.c.l.bf16 %v5345
        %v5442 = vunpack.c.l.bf16 %v5346
        %v5443 = vunpack.c.l.bf16 %v5347
        %v5444 = vunpack.c.l.bf16 %v5348
        %v5445 = vunpack.c.l.bf16 %v5349
        %v5446 = vunpack.c.l.bf16 %v5350
        %v5447 = vunpack.c.l.bf16 %v5351
        %v5448 = vunpack.c.l.bf16 %v5352
        %v5449 = vunpack.c.l.bf16 %v5353
        %v5450 = vunpack.c.l.bf16 %v5354
        %v5451 = vunpack.c.l.bf16 %v5355
        %v5452 = vunpack.c.l.bf16 %v5356
        %v5453 = vunpack.c.l.bf16 %v5357
        %v5454 = vunpack.c.l.bf16 %v5358
        %v5455 = vunpack.c.l.bf16 %v5359
        %v5456 = vunpack.c.l.bf16 %v5360
        %v5457 = vunpack.c.l.bf16 %v5361
        %v5458 = vunpack.c.l.bf16 %v5362
        %v5459 = vunpack.c.l.bf16 %v5363
        %v5460 = vunpack.c.l.bf16 %v5364
        %v5461 = vunpack.c.l.bf16 %v5365
        %v5462 = vunpack.c.l.bf16 %v5366
        %v5463 = vunpack.c.l.bf16 %v5367
        %v5464 = vunpack.c.l.bf16 %v5368
        %v5465 = vunpack.c.l.bf16 %v5369
        %v5466 = vunpack.c.l.bf16 %v5370
        %s5467 = scalar_lea.vmem [#allocation2], 16
        %v5468 = vld [vmem:[%s5467] sm:$0x3]
        %v5469 = vmul.f32 %v323, %v5371
        %v5470 = vmul.f32 %v324, %v5372
        %v5471 = vmul.f32 %v325, %v5373
        %v5472 = vmul.f32 %v326, %v5374
        %v5473 = vmul.f32 %v327, %v5375
        %v5474 = vmul.f32 %v328, %v5376
        %v5475 = vmul.f32 %v329, %v5377
        %v5476 = vmul.f32 %v330, %v5378
        %v5477 = vmul.f32 %v331, %v5379
        %v5478 = vmul.f32 %v332, %v5380
        %v5479 = vmul.f32 %v333, %v5381
        %v5480 = vmul.f32 %v334, %v5382
        %v5481 = vmul.f32 %v335, %v5383
        %v5482 = vmul.f32 %v336, %v5384
        %v5483 = vmul.f32 %v337, %v5385
        %v5484 = vmul.f32 %v338, %v5386
        %v5485 = vmul.f32 %v339, %v5387
        %v5486 = vmul.f32 %v340, %v5388
        %v5487 = vmul.f32 %v341, %v5389
        %v5488 = vmul.f32 %v342, %v5390
        %v5489 = vmul.f32 %v343, %v5391
        %v5490 = vmul.f32 %v344, %v5392
        %v5491 = vmul.f32 %v345, %v5393
        %v5492 = vmul.f32 %v346, %v5394
        %v5493 = vmul.f32 %v347, %v5395
        %v5494 = vmul.f32 %v348, %v5396
        %v5495 = vmul.f32 %v349, %v5397
        %v5496 = vmul.f32 %v350, %v5398
        %v5497 = vmul.f32 %v351, %v5399
        %v5498 = vmul.f32 %v352, %v5400
        %v5499 = vmul.f32 %v353, %v5401
        %v5500 = vmul.f32 %v354, %v5402
        %v5501 = vmul.f32 %v355, %v5403
        %v5502 = vmul.f32 %v356, %v5404
        %v5503 = vmul.f32 %v357, %v5405
        %v5504 = vmul.f32 %v358, %v5406
        %v5505 = vmul.f32 %v359, %v5407
        %v5506 = vmul.f32 %v360, %v5408
        %v5507 = vmul.f32 %v361, %v5409
        %v5508 = vmul.f32 %v362, %v5410
        %v5509 = vmul.f32 %v363, %v5411
        %v5510 = vmul.f32 %v364, %v5412
        %v5511 = vmul.f32 %v365, %v5413
        %v5512 = vmul.f32 %v366, %v5414
        %v5513 = vmul.f32 %v367, %v5415
        %v5514 = vmul.f32 %v368, %v5416
        %v5515 = vmul.f32 %v369, %v5417
        %v5516 = vmul.f32 %v370, %v5418
        %v5517 = vmul.f32 %v371, %v5419
        %v5518 = vmul.f32 %v372, %v5420
        %v5519 = vmul.f32 %v373, %v5421
        %v5520 = vmul.f32 %v374, %v5422
        %v5521 = vmul.f32 %v375, %v5423
        %v5522 = vmul.f32 %v376, %v5424
        %v5523 = vmul.f32 %v377, %v5425
        %v5524 = vmul.f32 %v378, %v5426
        %v5525 = vmul.f32 %v379, %v5427
        %v5526 = vmul.f32 %v380, %v5428
        %v5527 = vmul.f32 %v381, %v5429
        %v5528 = vmul.f32 %v382, %v5430
        %v5529 = vmul.f32 %v383, %v5431
        %v5530 = vmul.f32 %v384, %v5432
        %v5531 = vmul.f32 %v385, %v5433
        %v5532 = vmul.f32 %v386, %v5434
        %v5533 = vmul.f32 %v387, %v5435
        %v5534 = vmul.f32 %v388, %v5436
        %v5535 = vmul.f32 %v389, %v5437
        %v5536 = vmul.f32 %v390, %v5438
        %v5537 = vmul.f32 %v391, %v5439
        %v5538 = vmul.f32 %v392, %v5440
        %v5539 = vmul.f32 %v393, %v5441
        %v5540 = vmul.f32 %v394, %v5442
        %v5541 = vmul.f32 %v395, %v5443
        %v5542 = vmul.f32 %v396, %v5444
        %v5543 = vmul.f32 %v397, %v5445
        %v5544 = vmul.f32 %v398, %v5446
        %v5545 = vmul.f32 %v399, %v5447
        %v5546 = vmul.f32 %v400, %v5448
        %v5547 = vmul.f32 %v401, %v5449
        %v5548 = vmul.f32 %v402, %v5450
        %v5549 = vmul.f32 %v403, %v5451
        %v5550 = vmul.f32 %v404, %v5452
        %v5551 = vmul.f32 %v405, %v5453
        %v5552 = vmul.f32 %v406, %v5454
        %v5553 = vmul.f32 %v407, %v5455
        %v5554 = vmul.f32 %v408, %v5456
        %v5555 = vmul.f32 %v409, %v5457
        %v5556 = vmul.f32 %v410, %v5458
        %v5557 = vmul.f32 %v411, %v5459
        %v5558 = vmul.f32 %v412, %v5460
        %v5559 = vmul.f32 %v413, %v5461
        %v5560 = vmul.f32 %v414, %v5462
        %v5561 = vmul.f32 %v415, %v5463
        %v5562 = vmul.f32 %v416, %v5464
        %v5563 = vmul.f32 %v417, %v5465
        %v5564 = vmul.f32 %v418, %v5466
        %v5565 = vmul.f32 %v419, %v5371
        %v5566 = vmul.f32 %v420, %v5372
        %v5567 = vmul.f32 %v421, %v5373
        %v5568 = vmul.f32 %v422, %v5374
        %v5569 = vmul.f32 %v423, %v5375
        %v5570 = vmul.f32 %v424, %v5376
        %v5571 = vmul.f32 %v425, %v5377
        %v5572 = vmul.f32 %v426, %v5378
        %v5573 = vmul.f32 %v427, %v5379
        %v5574 = vmul.f32 %v428, %v5380
        %v5575 = vmul.f32 %v429, %v5381
        %v5576 = vmul.f32 %v430, %v5382
        %v5577 = vmul.f32 %v431, %v5383
        %v5578 = vmul.f32 %v432, %v5384
        %v5579 = vmul.f32 %v433, %v5385
        %v5580 = vmul.f32 %v434, %v5386
        %v5581 = vmul.f32 %v435, %v5387
        %v5582 = vmul.f32 %v436, %v5388
        %v5583 = vmul.f32 %v437, %v5389
        %v5584 = vmul.f32 %v438, %v5390
        %v5585 = vmul.f32 %v439, %v5391
        %v5586 = vmul.f32 %v440, %v5392
        %v5587 = vmul.f32 %v441, %v5393
        %v5588 = vmul.f32 %v442, %v5394
        %v5589 = vmul.f32 %v443, %v5395
        %v5590 = vmul.f32 %v444, %v5396
        %v5591 = vmul.f32 %v445, %v5397
        %v5592 = vmul.f32 %v446, %v5398
        %v5593 = vmul.f32 %v447, %v5399
        %v5594 = vmul.f32 %v448, %v5400
        %v5595 = vmul.f32 %v449, %v5401
        %v5596 = vmul.f32 %v450, %v5402
        %v5597 = vmul.f32 %v451, %v5403
        %v5598 = vmul.f32 %v452, %v5404
        %v5599 = vmul.f32 %v453, %v5405
        %v5600 = vmul.f32 %v454, %v5406
        %v5601 = vmul.f32 %v455, %v5407
        %v5602 = vmul.f32 %v456, %v5408
        %v5603 = vmul.f32 %v457, %v5409
        %v5604 = vmul.f32 %v458, %v5410
        %v5605 = vmul.f32 %v459, %v5411
        %v5606 = vmul.f32 %v460, %v5412
        %v5607 = vmul.f32 %v461, %v5413
        %v5608 = vmul.f32 %v462, %v5414
        %v5609 = vmul.f32 %v463, %v5415
        %v5610 = vmul.f32 %v464, %v5416
        %v5611 = vmul.f32 %v465, %v5417
        %v5612 = vmul.f32 %v466, %v5418
        %v5613 = vmul.f32 %v467, %v5419
        %v5614 = vmul.f32 %v468, %v5420
        %v5615 = vmul.f32 %v469, %v5421
        %v5616 = vmul.f32 %v470, %v5422
        %v5617 = vmul.f32 %v471, %v5423
        %v5618 = vmul.f32 %v472, %v5424
        %v5619 = vmul.f32 %v473, %v5425
        %v5620 = vmul.f32 %v474, %v5426
        %v5621 = vmul.f32 %v475, %v5427
        %v5622 = vmul.f32 %v476, %v5428
        %v5623 = vmul.f32 %v477, %v5429
        %v5624 = vmul.f32 %v478, %v5430
        %v5625 = vmul.f32 %v479, %v5431
        %v5626 = vmul.f32 %v480, %v5432
        %v5627 = vmul.f32 %v481, %v5433
        %v5628 = vmul.f32 %v482, %v5434
        %v5629 = vmul.f32 %v483, %v5435
        %v5630 = vmul.f32 %v484, %v5436
        %v5631 = vmul.f32 %v485, %v5437
        %v5632 = vmul.f32 %v486, %v5438
        %v5633 = vmul.f32 %v487, %v5439
        %v5634 = vmul.f32 %v488, %v5440
        %v5635 = vmul.f32 %v489, %v5441
        %v5636 = vmul.f32 %v490, %v5442
        %v5637 = vmul.f32 %v491, %v5443
        %v5638 = vmul.f32 %v492, %v5444
        %v5639 = vmul.f32 %v493, %v5445
        %v5640 = vmul.f32 %v494, %v5446
        %v5641 = vmul.f32 %v495, %v5447
        %v5642 = vmul.f32 %v496, %v5448
        %v5643 = vmul.f32 %v497, %v5449
        %v5644 = vmul.f32 %v498, %v5450
        %v5645 = vmul.f32 %v499, %v5451
        %v5646 = vmul.f32 %v500, %v5452
        %v5647 = vmul.f32 %v501, %v5453
        %v5648 = vmul.f32 %v502, %v5454
        %v5649 = vmul.f32 %v503, %v5455
        %v5650 = vmul.f32 %v504, %v5456
        %v5651 = vmul.f32 %v505, %v5457
        %v5652 = vmul.f32 %v506, %v5458
        %v5653 = vmul.f32 %v507, %v5459
        %v5654 = vmul.f32 %v508, %v5460
        %v5655 = vmul.f32 %v509, %v5461
        %v5656 = vmul.f32 %v510, %v5462
        %v5657 = vmul.f32 %v511, %v5463
        %v5658 = vmul.f32 %v512, %v5464
        %v5659 = vmul.f32 %v513, %v5465
        %v5660 = vmul.f32 %v514, %v5466
        %v5661 = vadd.f32 %v5469, %v5470
        %v5662 = vadd.f32 %v5661, %v5471
        %v5663 = vadd.f32 %v5662, %v5472
        %v5664 = vadd.f32 %v5663, %v5473
        %v5665 = vadd.f32 %v5664, %v5474
        %v5666 = vadd.f32 %v5665, %v5475
        %v5667 = vadd.f32 %v5666, %v5476
        %v5668 = vadd.f32 %v5667, %v5477
        %v5669 = vadd.f32 %v5668, %v5478
        %v5670 = vadd.f32 %v5669, %v5479
        %v5671 = vadd.f32 %v5670, %v5480
        %v5672 = vadd.f32 %v5671, %v5481
        %v5673 = vadd.f32 %v5672, %v5482
        %v5674 = vadd.f32 %v5673, %v5483
        %v5675 = vadd.f32 %v5674, %v5484
        %v5676 = vadd.f32 %v5675, %v5485
        %v5677 = vadd.f32 %v5676, %v5486
        %v5678 = vadd.f32 %v5677, %v5487
        %v5679 = vadd.f32 %v5678, %v5488
        %v5680 = vadd.f32 %v5679, %v5489
        %v5681 = vadd.f32 %v5680, %v5490
        %v5682 = vadd.f32 %v5681, %v5491
        %v5683 = vadd.f32 %v5682, %v5492
        %v5684 = vadd.f32 %v5683, %v5493
        %v5685 = vadd.f32 %v5684, %v5494
        %v5686 = vadd.f32 %v5685, %v5495
        %v5687 = vadd.f32 %v5686, %v5496
        %v5688 = vadd.f32 %v5687, %v5497
        %v5689 = vadd.f32 %v5688, %v5498
        %v5690 = vadd.f32 %v5689, %v5499
        %v5691 = vadd.f32 %v5690, %v5500
        %v5692 = vadd.f32 %v5691, %v5501
        %v5693 = vadd.f32 %v5692, %v5502
        %v5694 = vadd.f32 %v5693, %v5503
        %v5695 = vadd.f32 %v5694, %v5504
        %v5696 = vadd.f32 %v5695, %v5505
        %v5697 = vadd.f32 %v5696, %v5506
        %v5698 = vadd.f32 %v5697, %v5507
        %v5699 = vadd.f32 %v5698, %v5508
        %v5700 = vadd.f32 %v5699, %v5509
        %v5701 = vadd.f32 %v5700, %v5510
        %v5702 = vadd.f32 %v5701, %v5511
        %v5703 = vadd.f32 %v5702, %v5512
        %v5704 = vadd.f32 %v5703, %v5513
        %v5705 = vadd.f32 %v5704, %v5514
        %v5706 = vadd.f32 %v5705, %v5515
        %v5707 = vadd.f32 %v5706, %v5516
        %v5708 = vadd.f32 %v5707, %v5517
        %v5709 = vadd.f32 %v5708, %v5518
        %v5710 = vadd.f32 %v5709, %v5519
        %v5711 = vadd.f32 %v5710, %v5520
        %v5712 = vadd.f32 %v5711, %v5521
        %v5713 = vadd.f32 %v5712, %v5522
        %v5714 = vadd.f32 %v5713, %v5523
        %v5715 = vadd.f32 %v5714, %v5524
        %v5716 = vadd.f32 %v5715, %v5525
        %v5717 = vadd.f32 %v5716, %v5526
        %v5718 = vadd.f32 %v5717, %v5527
        %v5719 = vadd.f32 %v5718, %v5528
        %v5720 = vadd.f32 %v5719, %v5529
        %v5721 = vadd.f32 %v5720, %v5530
        %v5722 = vadd.f32 %v5721, %v5531
        %v5723 = vadd.f32 %v5722, %v5532
        %v5724 = vadd.f32 %v5723, %v5533
        %v5725 = vadd.f32 %v5724, %v5534
        %v5726 = vadd.f32 %v5725, %v5535
        %v5727 = vadd.f32 %v5726, %v5536
        %v5728 = vadd.f32 %v5727, %v5537
        %v5729 = vadd.f32 %v5728, %v5538
        %v5730 = vadd.f32 %v5729, %v5539
        %v5731 = vadd.f32 %v5730, %v5540
        %v5732 = vadd.f32 %v5731, %v5541
        %v5733 = vadd.f32 %v5732, %v5542
        %v5734 = vadd.f32 %v5733, %v5543
        %v5735 = vadd.f32 %v5734, %v5544
        %v5736 = vadd.f32 %v5735, %v5545
        %v5737 = vadd.f32 %v5736, %v5546
        %v5738 = vadd.f32 %v5737, %v5547
        %v5739 = vadd.f32 %v5738, %v5548
        %v5740 = vadd.f32 %v5739, %v5549
        %v5741 = vadd.f32 %v5740, %v5550
        %v5742 = vadd.f32 %v5741, %v5551
        %v5743 = vadd.f32 %v5742, %v5552
        %v5744 = vadd.f32 %v5743, %v5553
        %v5745 = vadd.f32 %v5744, %v5554
        %v5746 = vadd.f32 %v5745, %v5555
        %v5747 = vadd.f32 %v5746, %v5556
        %v5748 = vadd.f32 %v5747, %v5557
        %v5749 = vadd.f32 %v5748, %v5558
        %v5750 = vadd.f32 %v5749, %v5559
        %v5751 = vadd.f32 %v5750, %v5560
        %v5752 = vadd.f32 %v5751, %v5561
        %v5753 = vadd.f32 %v5752, %v5562
        %v5754 = vadd.f32 %v5753, %v5563
        %v5755 = vadd.f32 %v5754, %v5564
        %v5756 = vrot.slane %v5755, 4
        %v5757 = vadd.f32 %v5755, %v5756
        %v5758 = vrot.slane %v5757, 2
        %v5759 = vadd.f32 %v5757, %v5758
        %v5760 = vrot.slane %v5759, 1
        %v5761 = vadd.f32 %v5759, %v5760
        %v5762 = vadd.f32 %v5565, %v5566
        %v5763 = vadd.f32 %v5762, %v5567
        %v5764 = vadd.f32 %v5763, %v5568
        %v5765 = vadd.f32 %v5764, %v5569
        %v5766 = vadd.f32 %v5765, %v5570
        %v5767 = vadd.f32 %v5766, %v5571
        %v5768 = vadd.f32 %v5767, %v5572
        %v5769 = vadd.f32 %v5768, %v5573
        %v5770 = vadd.f32 %v5769, %v5574
        %v5771 = vadd.f32 %v5770, %v5575
        %v5772 = vadd.f32 %v5771, %v5576
        %v5773 = vadd.f32 %v5772, %v5577
        %v5774 = vadd.f32 %v5773, %v5578
        %v5775 = vadd.f32 %v5774, %v5579
        %v5776 = vadd.f32 %v5775, %v5580
        %v5777 = vadd.f32 %v5776, %v5581
        %v5778 = vadd.f32 %v5777, %v5582
        %v5779 = vadd.f32 %v5778, %v5583
        %v5780 = vadd.f32 %v5779, %v5584
        %v5781 = vadd.f32 %v5780, %v5585
        %v5782 = vadd.f32 %v5781, %v5586
        %v5783 = vadd.f32 %v5782, %v5587
        %v5784 = vadd.f32 %v5783, %v5588
        %v5785 = vadd.f32 %v5784, %v5589
        %v5786 = vadd.f32 %v5785, %v5590
        %v5787 = vadd.f32 %v5786, %v5591
        %v5788 = vadd.f32 %v5787, %v5592
        %v5789 = vadd.f32 %v5788, %v5593
        %v5790 = vadd.f32 %v5789, %v5594
        %v5791 = vadd.f32 %v5790, %v5595
        %v5792 = vadd.f32 %v5791, %v5596
        %v5793 = vadd.f32 %v5792, %v5597
        %v5794 = vadd.f32 %v5793, %v5598
        %v5795 = vadd.f32 %v5794, %v5599
        %v5796 = vadd.f32 %v5795, %v5600
        %v5797 = vadd.f32 %v5796, %v5601
        %v5798 = vadd.f32 %v5797, %v5602
        %v5799 = vadd.f32 %v5798, %v5603
        %v5800 = vadd.f32 %v5799, %v5604
        %v5801 = vadd.f32 %v5800, %v5605
        %v5802 = vadd.f32 %v5801, %v5606
        %v5803 = vadd.f32 %v5802, %v5607
        %v5804 = vadd.f32 %v5803, %v5608
        %v5805 = vadd.f32 %v5804, %v5609
        %v5806 = vadd.f32 %v5805, %v5610
        %v5807 = vadd.f32 %v5806, %v5611
        %v5808 = vadd.f32 %v5807, %v5612
        %v5809 = vadd.f32 %v5808, %v5613
        %v5810 = vadd.f32 %v5809, %v5614
        %v5811 = vadd.f32 %v5810, %v5615
        %v5812 = vadd.f32 %v5811, %v5616
        %v5813 = vadd.f32 %v5812, %v5617
        %v5814 = vadd.f32 %v5813, %v5618
        %v5815 = vadd.f32 %v5814, %v5619
        %v5816 = vadd.f32 %v5815, %v5620
        %v5817 = vadd.f32 %v5816, %v5621
        %v5818 = vadd.f32 %v5817, %v5622
        %v5819 = vadd.f32 %v5818, %v5623
        %v5820 = vadd.f32 %v5819, %v5624
        %v5821 = vadd.f32 %v5820, %v5625
        %v5822 = vadd.f32 %v5821, %v5626
        %v5823 = vadd.f32 %v5822, %v5627
        %v5824 = vadd.f32 %v5823, %v5628
        %v5825 = vadd.f32 %v5824, %v5629
        %v5826 = vadd.f32 %v5825, %v5630
        %v5827 = vadd.f32 %v5826, %v5631
        %v5828 = vadd.f32 %v5827, %v5632
        %v5829 = vadd.f32 %v5828, %v5633
        %v5830 = vadd.f32 %v5829, %v5634
        %v5831 = vadd.f32 %v5830, %v5635
        %v5832 = vadd.f32 %v5831, %v5636
        %v5833 = vadd.f32 %v5832, %v5637
        %v5834 = vadd.f32 %v5833, %v5638
        %v5835 = vadd.f32 %v5834, %v5639
        %v5836 = vadd.f32 %v5835, %v5640
        %v5837 = vadd.f32 %v5836, %v5641
        %v5838 = vadd.f32 %v5837, %v5642
        %v5839 = vadd.f32 %v5838, %v5643
        %v5840 = vadd.f32 %v5839, %v5644
        %v5841 = vadd.f32 %v5840, %v5645
        %v5842 = vadd.f32 %v5841, %v5646
        %v5843 = vadd.f32 %v5842, %v5647
        %v5844 = vadd.f32 %v5843, %v5648
        %v5845 = vadd.f32 %v5844, %v5649
        %v5846 = vadd.f32 %v5845, %v5650
        %v5847 = vadd.f32 %v5846, %v5651
        %v5848 = vadd.f32 %v5847, %v5652
        %v5849 = vadd.f32 %v5848, %v5653
        %v5850 = vadd.f32 %v5849, %v5654
        %v5851 = vadd.f32 %v5850, %v5655
        %v5852 = vadd.f32 %v5851, %v5656
        %v5853 = vadd.f32 %v5852, %v5657
        %v5854 = vadd.f32 %v5853, %v5658
        %v5855 = vadd.f32 %v5854, %v5659
        %v5856 = vadd.f32 %v5855, %v5660
        %v5857 = vrot.slane %v5856, 4
        %v5858 = vadd.f32 %v5856, %v5857
        %v5859 = vrot.slane %v5858, 2
        %v5860 = vadd.f32 %v5858, %v5859
        %v5861 = vrot.slane %v5860, 1
        %v5862 = vadd.f32 %v5860, %v5861
        %v5865 = vsel %vm1104, %v5862, %v5761
        %v5867 = vadd.f32 %v5468, %v5865
        %5868 = vst [vmem:[%s5467] sm:$0x3] %v5867
        %s5869 = scalar_lea.vmem %s276, 3456 [#allocation6]
        %v5870 = vld [vmem:[%s5869] sm:$0xf]
        %v5871 = vld [vmem:[%s5869 + $0x4] sm:$0xf]
        %v5872 = vld [vmem:[%s5869 + $0x8] sm:$0xf]
        %v5873 = vld [vmem:[%s5869 + $0xc] sm:$0xf]
        %v5874 = vld [vmem:[%s5869 + $0x10] sm:$0xf]
        %v5875 = vld [vmem:[%s5869 + $0x14] sm:$0xf]
        %v5876 = vld [vmem:[%s5869 + $0x18] sm:$0xf]
        %v5877 = vld [vmem:[%s5869 + $0x1c] sm:$0xf]
        %v5878 = vld [vmem:[%s5869 + $0x20] sm:$0xf]
        %v5879 = vld [vmem:[%s5869 + $0x24] sm:$0xf]
        %v5880 = vld [vmem:[%s5869 + $0x28] sm:$0xf]
        %v5881 = vld [vmem:[%s5869 + $0x2c] sm:$0xf]
        %v5882 = vld [vmem:[%s5869 + $0x30] sm:$0xf]
        %v5883 = vld [vmem:[%s5869 + $0x34] sm:$0xf]
        %v5884 = vld [vmem:[%s5869 + $0x38] sm:$0xf]
        %v5885 = vld [vmem:[%s5869 + $0x3c] sm:$0xf]
        %v5886 = vld [vmem:[%s5869 + $0x40] sm:$0xf]
        %v5887 = vld [vmem:[%s5869 + $0x44] sm:$0xf]
        %v5888 = vld [vmem:[%s5869 + $0x48] sm:$0xf]
        %v5889 = vld [vmem:[%s5869 + $0x4c] sm:$0xf]
        %v5890 = vld [vmem:[%s5869 + $0x50] sm:$0xf]
        %v5891 = vld [vmem:[%s5869 + $0x54] sm:$0xf]
        %v5892 = vld [vmem:[%s5869 + $0x58] sm:$0xf]
        %v5893 = vld [vmem:[%s5869 + $0x5c] sm:$0xf]
        %v5894 = vld [vmem:[%s5869 + $0x60] sm:$0xf]
        %v5895 = vld [vmem:[%s5869 + $0x64] sm:$0xf]
        %v5896 = vld [vmem:[%s5869 + $0x68] sm:$0xf]
        %v5897 = vld [vmem:[%s5869 + $0x6c] sm:$0xf]
        %v5898 = vld [vmem:[%s5869 + $0x70] sm:$0xf]
        %v5899 = vld [vmem:[%s5869 + $0x74] sm:$0xf]
        %v5900 = vld [vmem:[%s5869 + $0x78] sm:$0xf]
        %v5901 = vld [vmem:[%s5869 + $0x7c] sm:$0xf]
        %v5902 = vld [vmem:[%s5869 + $0x80] sm:$0xf]
        %v5903 = vld [vmem:[%s5869 + $0x84] sm:$0xf]
        %v5904 = vld [vmem:[%s5869 + $0x88] sm:$0xf]
        %v5905 = vld [vmem:[%s5869 + $0x8c] sm:$0xf]
        %v5906 = vld [vmem:[%s5869 + $0x90] sm:$0xf]
        %v5907 = vld [vmem:[%s5869 + $0x94] sm:$0xf]
        %v5908 = vld [vmem:[%s5869 + $0x98] sm:$0xf]
        %v5909 = vld [vmem:[%s5869 + $0x9c] sm:$0xf]
        %v5910 = vld [vmem:[%s5869 + $0xa0] sm:$0xf]
        %v5911 = vld [vmem:[%s5869 + $0xa4] sm:$0xf]
        %v5912 = vld [vmem:[%s5869 + $0xa8] sm:$0xf]
        %v5913 = vld [vmem:[%s5869 + $0xac] sm:$0xf]
        %v5914 = vld [vmem:[%s5869 + $0xb0] sm:$0xf]
        %v5915 = vld [vmem:[%s5869 + $0xb4] sm:$0xf]
        %v5916 = vld [vmem:[%s5869 + $0xb8] sm:$0xf]
        %v5917 = vld [vmem:[%s5869 + $0xbc] sm:$0xf]
        %v5918 = vld [vmem:[%s5869 + $0xc0] sm:$0xf]
        %v5919 = vld [vmem:[%s5869 + $0xc4] sm:$0xf]
        %v5920 = vld [vmem:[%s5869 + $0xc8] sm:$0xf]
        %v5921 = vld [vmem:[%s5869 + $0xcc] sm:$0xf]
        %v5922 = vld [vmem:[%s5869 + $0xd0] sm:$0xf]
        %v5923 = vld [vmem:[%s5869 + $0xd4] sm:$0xf]
        %v5924 = vld [vmem:[%s5869 + $0xd8] sm:$0xf]
        %v5925 = vld [vmem:[%s5869 + $0xdc] sm:$0xf]
        %v5926 = vld [vmem:[%s5869 + $0xe0] sm:$0xf]
        %v5927 = vld [vmem:[%s5869 + $0xe4] sm:$0xf]
        %v5928 = vld [vmem:[%s5869 + $0xe8] sm:$0xf]
        %v5929 = vld [vmem:[%s5869 + $0xec] sm:$0xf]
        %v5930 = vld [vmem:[%s5869 + $0xf0] sm:$0xf]
        %v5931 = vld [vmem:[%s5869 + $0xf4] sm:$0xf]
        %v5932 = vld [vmem:[%s5869 + $0xf8] sm:$0xf]
        %v5933 = vld [vmem:[%s5869 + $0xfc] sm:$0xf]
        %v5934 = vld [vmem:[%s5869 + $0x100] sm:$0xf]
        %v5935 = vld [vmem:[%s5869 + $0x104] sm:$0xf]
        %v5936 = vld [vmem:[%s5869 + $0x108] sm:$0xf]
        %v5937 = vld [vmem:[%s5869 + $0x10c] sm:$0xf]
        %v5938 = vld [vmem:[%s5869 + $0x110] sm:$0xf]
        %v5939 = vld [vmem:[%s5869 + $0x114] sm:$0xf]
        %v5940 = vld [vmem:[%s5869 + $0x118] sm:$0xf]
        %v5941 = vld [vmem:[%s5869 + $0x11c] sm:$0xf]
        %v5942 = vld [vmem:[%s5869 + $0x120] sm:$0xf]
        %v5943 = vld [vmem:[%s5869 + $0x124] sm:$0xf]
        %v5944 = vld [vmem:[%s5869 + $0x128] sm:$0xf]
        %v5945 = vld [vmem:[%s5869 + $0x12c] sm:$0xf]
        %v5946 = vld [vmem:[%s5869 + $0x130] sm:$0xf]
        %v5947 = vld [vmem:[%s5869 + $0x134] sm:$0xf]
        %v5948 = vld [vmem:[%s5869 + $0x138] sm:$0xf]
        %v5949 = vld [vmem:[%s5869 + $0x13c] sm:$0xf]
        %v5950 = vld [vmem:[%s5869 + $0x140] sm:$0xf]
        %v5951 = vld [vmem:[%s5869 + $0x144] sm:$0xf]
        %v5952 = vld [vmem:[%s5869 + $0x148] sm:$0xf]
        %v5953 = vld [vmem:[%s5869 + $0x14c] sm:$0xf]
        %v5954 = vld [vmem:[%s5869 + $0x150] sm:$0xf]
        %v5955 = vld [vmem:[%s5869 + $0x154] sm:$0xf]
        %v5956 = vld [vmem:[%s5869 + $0x158] sm:$0xf]
        %v5957 = vld [vmem:[%s5869 + $0x15c] sm:$0xf]
        %v5958 = vld [vmem:[%s5869 + $0x160] sm:$0xf]
        %v5959 = vld [vmem:[%s5869 + $0x164] sm:$0xf]
        %v5960 = vld [vmem:[%s5869 + $0x168] sm:$0xf]
        %v5961 = vld [vmem:[%s5869 + $0x16c] sm:$0xf]
        %v5962 = vld [vmem:[%s5869 + $0x170] sm:$0xf]
        %v5963 = vld [vmem:[%s5869 + $0x174] sm:$0xf]
        %v5964 = vld [vmem:[%s5869 + $0x178] sm:$0xf]
        %v5965 = vld [vmem:[%s5869 + $0x17c] sm:$0xf]
        %v5966 = vunpack.c.l.bf16 %v5870
        %v5967 = vunpack.c.l.bf16 %v5871
        %v5968 = vunpack.c.l.bf16 %v5872
        %v5969 = vunpack.c.l.bf16 %v5873
        %v5970 = vunpack.c.l.bf16 %v5874
        %v5971 = vunpack.c.l.bf16 %v5875
        %v5972 = vunpack.c.l.bf16 %v5876
        %v5973 = vunpack.c.l.bf16 %v5877
        %v5974 = vunpack.c.l.bf16 %v5878
        %v5975 = vunpack.c.l.bf16 %v5879
        %v5976 = vunpack.c.l.bf16 %v5880
        %v5977 = vunpack.c.l.bf16 %v5881
        %v5978 = vunpack.c.l.bf16 %v5882
        %v5979 = vunpack.c.l.bf16 %v5883
        %v5980 = vunpack.c.l.bf16 %v5884
        %v5981 = vunpack.c.l.bf16 %v5885
        %v5982 = vunpack.c.l.bf16 %v5886
        %v5983 = vunpack.c.l.bf16 %v5887
        %v5984 = vunpack.c.l.bf16 %v5888
        %v5985 = vunpack.c.l.bf16 %v5889
        %v5986 = vunpack.c.l.bf16 %v5890
        %v5987 = vunpack.c.l.bf16 %v5891
        %v5988 = vunpack.c.l.bf16 %v5892
        %v5989 = vunpack.c.l.bf16 %v5893
        %v5990 = vunpack.c.l.bf16 %v5894
        %v5991 = vunpack.c.l.bf16 %v5895
        %v5992 = vunpack.c.l.bf16 %v5896
        %v5993 = vunpack.c.l.bf16 %v5897
        %v5994 = vunpack.c.l.bf16 %v5898
        %v5995 = vunpack.c.l.bf16 %v5899
        %v5996 = vunpack.c.l.bf16 %v5900
        %v5997 = vunpack.c.l.bf16 %v5901
        %v5998 = vunpack.c.l.bf16 %v5902
        %v5999 = vunpack.c.l.bf16 %v5903
        %v6000 = vunpack.c.l.bf16 %v5904
        %v6001 = vunpack.c.l.bf16 %v5905
        %v6002 = vunpack.c.l.bf16 %v5906
        %v6003 = vunpack.c.l.bf16 %v5907
        %v6004 = vunpack.c.l.bf16 %v5908
        %v6005 = vunpack.c.l.bf16 %v5909
        %v6006 = vunpack.c.l.bf16 %v5910
        %v6007 = vunpack.c.l.bf16 %v5911
        %v6008 = vunpack.c.l.bf16 %v5912
        %v6009 = vunpack.c.l.bf16 %v5913
        %v6010 = vunpack.c.l.bf16 %v5914
        %v6011 = vunpack.c.l.bf16 %v5915
        %v6012 = vunpack.c.l.bf16 %v5916
        %v6013 = vunpack.c.l.bf16 %v5917
        %v6014 = vunpack.c.l.bf16 %v5918
        %v6015 = vunpack.c.l.bf16 %v5919
        %v6016 = vunpack.c.l.bf16 %v5920
        %v6017 = vunpack.c.l.bf16 %v5921
        %v6018 = vunpack.c.l.bf16 %v5922
        %v6019 = vunpack.c.l.bf16 %v5923
        %v6020 = vunpack.c.l.bf16 %v5924
        %v6021 = vunpack.c.l.bf16 %v5925
        %v6022 = vunpack.c.l.bf16 %v5926
        %v6023 = vunpack.c.l.bf16 %v5927
        %v6024 = vunpack.c.l.bf16 %v5928
        %v6025 = vunpack.c.l.bf16 %v5929
        %v6026 = vunpack.c.l.bf16 %v5930
        %v6027 = vunpack.c.l.bf16 %v5931
        %v6028 = vunpack.c.l.bf16 %v5932
        %v6029 = vunpack.c.l.bf16 %v5933
        %v6030 = vunpack.c.l.bf16 %v5934
        %v6031 = vunpack.c.l.bf16 %v5935
        %v6032 = vunpack.c.l.bf16 %v5936
        %v6033 = vunpack.c.l.bf16 %v5937
        %v6034 = vunpack.c.l.bf16 %v5938
        %v6035 = vunpack.c.l.bf16 %v5939
        %v6036 = vunpack.c.l.bf16 %v5940
        %v6037 = vunpack.c.l.bf16 %v5941
        %v6038 = vunpack.c.l.bf16 %v5942
        %v6039 = vunpack.c.l.bf16 %v5943
        %v6040 = vunpack.c.l.bf16 %v5944
        %v6041 = vunpack.c.l.bf16 %v5945
        %v6042 = vunpack.c.l.bf16 %v5946
        %v6043 = vunpack.c.l.bf16 %v5947
        %v6044 = vunpack.c.l.bf16 %v5948
        %v6045 = vunpack.c.l.bf16 %v5949
        %v6046 = vunpack.c.l.bf16 %v5950
        %v6047 = vunpack.c.l.bf16 %v5951
        %v6048 = vunpack.c.l.bf16 %v5952
        %v6049 = vunpack.c.l.bf16 %v5953
        %v6050 = vunpack.c.l.bf16 %v5954
        %v6051 = vunpack.c.l.bf16 %v5955
        %v6052 = vunpack.c.l.bf16 %v5956
        %v6053 = vunpack.c.l.bf16 %v5957
        %v6054 = vunpack.c.l.bf16 %v5958
        %v6055 = vunpack.c.l.bf16 %v5959
        %v6056 = vunpack.c.l.bf16 %v5960
        %v6057 = vunpack.c.l.bf16 %v5961
        %v6058 = vunpack.c.l.bf16 %v5962
        %v6059 = vunpack.c.l.bf16 %v5963
        %v6060 = vunpack.c.l.bf16 %v5964
        %v6061 = vunpack.c.l.bf16 %v5965
        %s6062 = scalar_lea.vmem [#allocation2], 18
        %v6063 = vld [vmem:[%s6062] sm:$0x3]
        %v6064 = vmul.f32 %v323, %v5966
        %v6065 = vmul.f32 %v324, %v5967
        %v6066 = vmul.f32 %v325, %v5968
        %v6067 = vmul.f32 %v326, %v5969
        %v6068 = vmul.f32 %v327, %v5970
        %v6069 = vmul.f32 %v328, %v5971
        %v6070 = vmul.f32 %v329, %v5972
        %v6071 = vmul.f32 %v330, %v5973
        %v6072 = vmul.f32 %v331, %v5974
        %v6073 = vmul.f32 %v332, %v5975
        %v6074 = vmul.f32 %v333, %v5976
        %v6075 = vmul.f32 %v334, %v5977
        %v6076 = vmul.f32 %v335, %v5978
        %v6077 = vmul.f32 %v336, %v5979
        %v6078 = vmul.f32 %v337, %v5980
        %v6079 = vmul.f32 %v338, %v5981
        %v6080 = vmul.f32 %v339, %v5982
        %v6081 = vmul.f32 %v340, %v5983
        %v6082 = vmul.f32 %v341, %v5984
        %v6083 = vmul.f32 %v342, %v5985
        %v6084 = vmul.f32 %v343, %v5986
        %v6085 = vmul.f32 %v344, %v5987
        %v6086 = vmul.f32 %v345, %v5988
        %v6087 = vmul.f32 %v346, %v5989
        %v6088 = vmul.f32 %v347, %v5990
        %v6089 = vmul.f32 %v348, %v5991
        %v6090 = vmul.f32 %v349, %v5992
        %v6091 = vmul.f32 %v350, %v5993
        %v6092 = vmul.f32 %v351, %v5994
        %v6093 = vmul.f32 %v352, %v5995
        %v6094 = vmul.f32 %v353, %v5996
        %v6095 = vmul.f32 %v354, %v5997
        %v6096 = vmul.f32 %v355, %v5998
        %v6097 = vmul.f32 %v356, %v5999
        %v6098 = vmul.f32 %v357, %v6000
        %v6099 = vmul.f32 %v358, %v6001
        %v6100 = vmul.f32 %v359, %v6002
        %v6101 = vmul.f32 %v360, %v6003
        %v6102 = vmul.f32 %v361, %v6004
        %v6103 = vmul.f32 %v362, %v6005
        %v6104 = vmul.f32 %v363, %v6006
        %v6105 = vmul.f32 %v364, %v6007
        %v6106 = vmul.f32 %v365, %v6008
        %v6107 = vmul.f32 %v366, %v6009
        %v6108 = vmul.f32 %v367, %v6010
        %v6109 = vmul.f32 %v368, %v6011
        %v6110 = vmul.f32 %v369, %v6012
        %v6111 = vmul.f32 %v370, %v6013
        %v6112 = vmul.f32 %v371, %v6014
        %v6113 = vmul.f32 %v372, %v6015
        %v6114 = vmul.f32 %v373, %v6016
        %v6115 = vmul.f32 %v374, %v6017
        %v6116 = vmul.f32 %v375, %v6018
        %v6117 = vmul.f32 %v376, %v6019
        %v6118 = vmul.f32 %v377, %v6020
        %v6119 = vmul.f32 %v378, %v6021
        %v6120 = vmul.f32 %v379, %v6022
        %v6121 = vmul.f32 %v380, %v6023
        %v6122 = vmul.f32 %v381, %v6024
        %v6123 = vmul.f32 %v382, %v6025
        %v6124 = vmul.f32 %v383, %v6026
        %v6125 = vmul.f32 %v384, %v6027
        %v6126 = vmul.f32 %v385, %v6028
        %v6127 = vmul.f32 %v386, %v6029
        %v6128 = vmul.f32 %v387, %v6030
        %v6129 = vmul.f32 %v388, %v6031
        %v6130 = vmul.f32 %v389, %v6032
        %v6131 = vmul.f32 %v390, %v6033
        %v6132 = vmul.f32 %v391, %v6034
        %v6133 = vmul.f32 %v392, %v6035
        %v6134 = vmul.f32 %v393, %v6036
        %v6135 = vmul.f32 %v394, %v6037
        %v6136 = vmul.f32 %v395, %v6038
        %v6137 = vmul.f32 %v396, %v6039
        %v6138 = vmul.f32 %v397, %v6040
        %v6139 = vmul.f32 %v398, %v6041
        %v6140 = vmul.f32 %v399, %v6042
        %v6141 = vmul.f32 %v400, %v6043
        %v6142 = vmul.f32 %v401, %v6044
        %v6143 = vmul.f32 %v402, %v6045
        %v6144 = vmul.f32 %v403, %v6046
        %v6145 = vmul.f32 %v404, %v6047
        %v6146 = vmul.f32 %v405, %v6048
        %v6147 = vmul.f32 %v406, %v6049
        %v6148 = vmul.f32 %v407, %v6050
        %v6149 = vmul.f32 %v408, %v6051
        %v6150 = vmul.f32 %v409, %v6052
        %v6151 = vmul.f32 %v410, %v6053
        %v6152 = vmul.f32 %v411, %v6054
        %v6153 = vmul.f32 %v412, %v6055
        %v6154 = vmul.f32 %v413, %v6056
        %v6155 = vmul.f32 %v414, %v6057
        %v6156 = vmul.f32 %v415, %v6058
        %v6157 = vmul.f32 %v416, %v6059
        %v6158 = vmul.f32 %v417, %v6060
        %v6159 = vmul.f32 %v418, %v6061
        %v6160 = vmul.f32 %v419, %v5966
        %v6161 = vmul.f32 %v420, %v5967
        %v6162 = vmul.f32 %v421, %v5968
        %v6163 = vmul.f32 %v422, %v5969
        %v6164 = vmul.f32 %v423, %v5970
        %v6165 = vmul.f32 %v424, %v5971
        %v6166 = vmul.f32 %v425, %v5972
        %v6167 = vmul.f32 %v426, %v5973
        %v6168 = vmul.f32 %v427, %v5974
        %v6169 = vmul.f32 %v428, %v5975
        %v6170 = vmul.f32 %v429, %v5976
        %v6171 = vmul.f32 %v430, %v5977
        %v6172 = vmul.f32 %v431, %v5978
        %v6173 = vmul.f32 %v432, %v5979
        %v6174 = vmul.f32 %v433, %v5980
        %v6175 = vmul.f32 %v434, %v5981
        %v6176 = vmul.f32 %v435, %v5982
        %v6177 = vmul.f32 %v436, %v5983
        %v6178 = vmul.f32 %v437, %v5984
        %v6179 = vmul.f32 %v438, %v5985
        %v6180 = vmul.f32 %v439, %v5986
        %v6181 = vmul.f32 %v440, %v5987
        %v6182 = vmul.f32 %v441, %v5988
        %v6183 = vmul.f32 %v442, %v5989
        %v6184 = vmul.f32 %v443, %v5990
        %v6185 = vmul.f32 %v444, %v5991
        %v6186 = vmul.f32 %v445, %v5992
        %v6187 = vmul.f32 %v446, %v5993
        %v6188 = vmul.f32 %v447, %v5994
        %v6189 = vmul.f32 %v448, %v5995
        %v6190 = vmul.f32 %v449, %v5996
        %v6191 = vmul.f32 %v450, %v5997
        %v6192 = vmul.f32 %v451, %v5998
        %v6193 = vmul.f32 %v452, %v5999
        %v6194 = vmul.f32 %v453, %v6000
        %v6195 = vmul.f32 %v454, %v6001
        %v6196 = vmul.f32 %v455, %v6002
        %v6197 = vmul.f32 %v456, %v6003
        %v6198 = vmul.f32 %v457, %v6004
        %v6199 = vmul.f32 %v458, %v6005
        %v6200 = vmul.f32 %v459, %v6006
        %v6201 = vmul.f32 %v460, %v6007
        %v6202 = vmul.f32 %v461, %v6008
        %v6203 = vmul.f32 %v462, %v6009
        %v6204 = vmul.f32 %v463, %v6010
        %v6205 = vmul.f32 %v464, %v6011
        %v6206 = vmul.f32 %v465, %v6012
        %v6207 = vmul.f32 %v466, %v6013
        %v6208 = vmul.f32 %v467, %v6014
        %v6209 = vmul.f32 %v468, %v6015
        %v6210 = vmul.f32 %v469, %v6016
        %v6211 = vmul.f32 %v470, %v6017
        %v6212 = vmul.f32 %v471, %v6018
        %v6213 = vmul.f32 %v472, %v6019
        %v6214 = vmul.f32 %v473, %v6020
        %v6215 = vmul.f32 %v474, %v6021
        %v6216 = vmul.f32 %v475, %v6022
        %v6217 = vmul.f32 %v476, %v6023
        %v6218 = vmul.f32 %v477, %v6024
        %v6219 = vmul.f32 %v478, %v6025
        %v6220 = vmul.f32 %v479, %v6026
        %v6221 = vmul.f32 %v480, %v6027
        %v6222 = vmul.f32 %v481, %v6028
        %v6223 = vmul.f32 %v482, %v6029
        %v6224 = vmul.f32 %v483, %v6030
        %v6225 = vmul.f32 %v484, %v6031
        %v6226 = vmul.f32 %v485, %v6032
        %v6227 = vmul.f32 %v486, %v6033
        %v6228 = vmul.f32 %v487, %v6034
        %v6229 = vmul.f32 %v488, %v6035
        %v6230 = vmul.f32 %v489, %v6036
        %v6231 = vmul.f32 %v490, %v6037
        %v6232 = vmul.f32 %v491, %v6038
        %v6233 = vmul.f32 %v492, %v6039
        %v6234 = vmul.f32 %v493, %v6040
        %v6235 = vmul.f32 %v494, %v6041
        %v6236 = vmul.f32 %v495, %v6042
        %v6237 = vmul.f32 %v496, %v6043
        %v6238 = vmul.f32 %v497, %v6044
        %v6239 = vmul.f32 %v498, %v6045
        %v6240 = vmul.f32 %v499, %v6046
        %v6241 = vmul.f32 %v500, %v6047
        %v6242 = vmul.f32 %v501, %v6048
        %v6243 = vmul.f32 %v502, %v6049
        %v6244 = vmul.f32 %v503, %v6050
        %v6245 = vmul.f32 %v504, %v6051
        %v6246 = vmul.f32 %v505, %v6052
        %v6247 = vmul.f32 %v506, %v6053
        %v6248 = vmul.f32 %v507, %v6054
        %v6249 = vmul.f32 %v508, %v6055
        %v6250 = vmul.f32 %v509, %v6056
        %v6251 = vmul.f32 %v510, %v6057
        %v6252 = vmul.f32 %v511, %v6058
        %v6253 = vmul.f32 %v512, %v6059
        %v6254 = vmul.f32 %v513, %v6060
        %v6255 = vmul.f32 %v514, %v6061
        %v6256 = vadd.f32 %v6064, %v6065
        %v6257 = vadd.f32 %v6256, %v6066
        %v6258 = vadd.f32 %v6257, %v6067
        %v6259 = vadd.f32 %v6258, %v6068
        %v6260 = vadd.f32 %v6259, %v6069
        %v6261 = vadd.f32 %v6260, %v6070
        %v6262 = vadd.f32 %v6261, %v6071
        %v6263 = vadd.f32 %v6262, %v6072
        %v6264 = vadd.f32 %v6263, %v6073
        %v6265 = vadd.f32 %v6264, %v6074
        %v6266 = vadd.f32 %v6265, %v6075
        %v6267 = vadd.f32 %v6266, %v6076
        %v6268 = vadd.f32 %v6267, %v6077
        %v6269 = vadd.f32 %v6268, %v6078
        %v6270 = vadd.f32 %v6269, %v6079
        %v6271 = vadd.f32 %v6270, %v6080
        %v6272 = vadd.f32 %v6271, %v6081
        %v6273 = vadd.f32 %v6272, %v6082
        %v6274 = vadd.f32 %v6273, %v6083
        %v6275 = vadd.f32 %v6274, %v6084
        %v6276 = vadd.f32 %v6275, %v6085
        %v6277 = vadd.f32 %v6276, %v6086
        %v6278 = vadd.f32 %v6277, %v6087
        %v6279 = vadd.f32 %v6278, %v6088
        %v6280 = vadd.f32 %v6279, %v6089
        %v6281 = vadd.f32 %v6280, %v6090
        %v6282 = vadd.f32 %v6281, %v6091
        %v6283 = vadd.f32 %v6282, %v6092
        %v6284 = vadd.f32 %v6283, %v6093
        %v6285 = vadd.f32 %v6284, %v6094
        %v6286 = vadd.f32 %v6285, %v6095
        %v6287 = vadd.f32 %v6286, %v6096
        %v6288 = vadd.f32 %v6287, %v6097
        %v6289 = vadd.f32 %v6288, %v6098
        %v6290 = vadd.f32 %v6289, %v6099
        %v6291 = vadd.f32 %v6290, %v6100
        %v6292 = vadd.f32 %v6291, %v6101
        %v6293 = vadd.f32 %v6292, %v6102
        %v6294 = vadd.f32 %v6293, %v6103
        %v6295 = vadd.f32 %v6294, %v6104
        %v6296 = vadd.f32 %v6295, %v6105
        %v6297 = vadd.f32 %v6296, %v6106
        %v6298 = vadd.f32 %v6297, %v6107
        %v6299 = vadd.f32 %v6298, %v6108
        %v6300 = vadd.f32 %v6299, %v6109
        %v6301 = vadd.f32 %v6300, %v6110
        %v6302 = vadd.f32 %v6301, %v6111
        %v6303 = vadd.f32 %v6302, %v6112
        %v6304 = vadd.f32 %v6303, %v6113
        %v6305 = vadd.f32 %v6304, %v6114
        %v6306 = vadd.f32 %v6305, %v6115
        %v6307 = vadd.f32 %v6306, %v6116
        %v6308 = vadd.f32 %v6307, %v6117
        %v6309 = vadd.f32 %v6308, %v6118
        %v6310 = vadd.f32 %v6309, %v6119
        %v6311 = vadd.f32 %v6310, %v6120
        %v6312 = vadd.f32 %v6311, %v6121
        %v6313 = vadd.f32 %v6312, %v6122
        %v6314 = vadd.f32 %v6313, %v6123
        %v6315 = vadd.f32 %v6314, %v6124
        %v6316 = vadd.f32 %v6315, %v6125
        %v6317 = vadd.f32 %v6316, %v6126
        %v6318 = vadd.f32 %v6317, %v6127
        %v6319 = vadd.f32 %v6318, %v6128
        %v6320 = vadd.f32 %v6319, %v6129
        %v6321 = vadd.f32 %v6320, %v6130
        %v6322 = vadd.f32 %v6321, %v6131
        %v6323 = vadd.f32 %v6322, %v6132
        %v6324 = vadd.f32 %v6323, %v6133
        %v6325 = vadd.f32 %v6324, %v6134
        %v6326 = vadd.f32 %v6325, %v6135
        %v6327 = vadd.f32 %v6326, %v6136
        %v6328 = vadd.f32 %v6327, %v6137
        %v6329 = vadd.f32 %v6328, %v6138
        %v6330 = vadd.f32 %v6329, %v6139
        %v6331 = vadd.f32 %v6330, %v6140
        %v6332 = vadd.f32 %v6331, %v6141
        %v6333 = vadd.f32 %v6332, %v6142
        %v6334 = vadd.f32 %v6333, %v6143
        %v6335 = vadd.f32 %v6334, %v6144
        %v6336 = vadd.f32 %v6335, %v6145
        %v6337 = vadd.f32 %v6336, %v6146
        %v6338 = vadd.f32 %v6337, %v6147
        %v6339 = vadd.f32 %v6338, %v6148
        %v6340 = vadd.f32 %v6339, %v6149
        %v6341 = vadd.f32 %v6340, %v6150
        %v6342 = vadd.f32 %v6341, %v6151
        %v6343 = vadd.f32 %v6342, %v6152
        %v6344 = vadd.f32 %v6343, %v6153
        %v6345 = vadd.f32 %v6344, %v6154
        %v6346 = vadd.f32 %v6345, %v6155
        %v6347 = vadd.f32 %v6346, %v6156
        %v6348 = vadd.f32 %v6347, %v6157
        %v6349 = vadd.f32 %v6348, %v6158
        %v6350 = vadd.f32 %v6349, %v6159
        %v6351 = vrot.slane %v6350, 4
        %v6352 = vadd.f32 %v6350, %v6351
        %v6353 = vrot.slane %v6352, 2
        %v6354 = vadd.f32 %v6352, %v6353
        %v6355 = vrot.slane %v6354, 1
        %v6356 = vadd.f32 %v6354, %v6355
        %v6357 = vadd.f32 %v6160, %v6161
        %v6358 = vadd.f32 %v6357, %v6162
        %v6359 = vadd.f32 %v6358, %v6163
        %v6360 = vadd.f32 %v6359, %v6164
        %v6361 = vadd.f32 %v6360, %v6165
        %v6362 = vadd.f32 %v6361, %v6166
        %v6363 = vadd.f32 %v6362, %v6167
        %v6364 = vadd.f32 %v6363, %v6168
        %v6365 = vadd.f32 %v6364, %v6169
        %v6366 = vadd.f32 %v6365, %v6170
        %v6367 = vadd.f32 %v6366, %v6171
        %v6368 = vadd.f32 %v6367, %v6172
        %v6369 = vadd.f32 %v6368, %v6173
        %v6370 = vadd.f32 %v6369, %v6174
        %v6371 = vadd.f32 %v6370, %v6175
        %v6372 = vadd.f32 %v6371, %v6176
        %v6373 = vadd.f32 %v6372, %v6177
        %v6374 = vadd.f32 %v6373, %v6178
        %v6375 = vadd.f32 %v6374, %v6179
        %v6376 = vadd.f32 %v6375, %v6180
        %v6377 = vadd.f32 %v6376, %v6181
        %v6378 = vadd.f32 %v6377, %v6182
        %v6379 = vadd.f32 %v6378, %v6183
        %v6380 = vadd.f32 %v6379, %v6184
        %v6381 = vadd.f32 %v6380, %v6185
        %v6382 = vadd.f32 %v6381, %v6186
        %v6383 = vadd.f32 %v6382, %v6187
        %v6384 = vadd.f32 %v6383, %v6188
        %v6385 = vadd.f32 %v6384, %v6189
        %v6386 = vadd.f32 %v6385, %v6190
        %v6387 = vadd.f32 %v6386, %v6191
        %v6388 = vadd.f32 %v6387, %v6192
        %v6389 = vadd.f32 %v6388, %v6193
        %v6390 = vadd.f32 %v6389, %v6194
        %v6391 = vadd.f32 %v6390, %v6195
        %v6392 = vadd.f32 %v6391, %v6196
        %v6393 = vadd.f32 %v6392, %v6197
        %v6394 = vadd.f32 %v6393, %v6198
        %v6395 = vadd.f32 %v6394, %v6199
        %v6396 = vadd.f32 %v6395, %v6200
        %v6397 = vadd.f32 %v6396, %v6201
        %v6398 = vadd.f32 %v6397, %v6202
        %v6399 = vadd.f32 %v6398, %v6203
        %v6400 = vadd.f32 %v6399, %v6204
        %v6401 = vadd.f32 %v6400, %v6205
        %v6402 = vadd.f32 %v6401, %v6206
        %v6403 = vadd.f32 %v6402, %v6207
        %v6404 = vadd.f32 %v6403, %v6208
        %v6405 = vadd.f32 %v6404, %v6209
        %v6406 = vadd.f32 %v6405, %v6210
        %v6407 = vadd.f32 %v6406, %v6211
        %v6408 = vadd.f32 %v6407, %v6212
        %v6409 = vadd.f32 %v6408, %v6213
        %v6410 = vadd.f32 %v6409, %v6214
        %v6411 = vadd.f32 %v6410, %v6215
        %v6412 = vadd.f32 %v6411, %v6216
        %v6413 = vadd.f32 %v6412, %v6217
        %v6414 = vadd.f32 %v6413, %v6218
        %v6415 = vadd.f32 %v6414, %v6219
        %v6416 = vadd.f32 %v6415, %v6220
        %v6417 = vadd.f32 %v6416, %v6221
        %v6418 = vadd.f32 %v6417, %v6222
        %v6419 = vadd.f32 %v6418, %v6223
        %v6420 = vadd.f32 %v6419, %v6224
        %v6421 = vadd.f32 %v6420, %v6225
        %v6422 = vadd.f32 %v6421, %v6226
        %v6423 = vadd.f32 %v6422, %v6227
        %v6424 = vadd.f32 %v6423, %v6228
        %v6425 = vadd.f32 %v6424, %v6229
        %v6426 = vadd.f32 %v6425, %v6230
        %v6427 = vadd.f32 %v6426, %v6231
        %v6428 = vadd.f32 %v6427, %v6232
        %v6429 = vadd.f32 %v6428, %v6233
        %v6430 = vadd.f32 %v6429, %v6234
        %v6431 = vadd.f32 %v6430, %v6235
        %v6432 = vadd.f32 %v6431, %v6236
        %v6433 = vadd.f32 %v6432, %v6237
        %v6434 = vadd.f32 %v6433, %v6238
        %v6435 = vadd.f32 %v6434, %v6239
        %v6436 = vadd.f32 %v6435, %v6240
        %v6437 = vadd.f32 %v6436, %v6241
        %v6438 = vadd.f32 %v6437, %v6242
        %v6439 = vadd.f32 %v6438, %v6243
        %v6440 = vadd.f32 %v6439, %v6244
        %v6441 = vadd.f32 %v6440, %v6245
        %v6442 = vadd.f32 %v6441, %v6246
        %v6443 = vadd.f32 %v6442, %v6247
        %v6444 = vadd.f32 %v6443, %v6248
        %v6445 = vadd.f32 %v6444, %v6249
        %v6446 = vadd.f32 %v6445, %v6250
        %v6447 = vadd.f32 %v6446, %v6251
        %v6448 = vadd.f32 %v6447, %v6252
        %v6449 = vadd.f32 %v6448, %v6253
        %v6450 = vadd.f32 %v6449, %v6254
        %v6451 = vadd.f32 %v6450, %v6255
        %v6452 = vrot.slane %v6451, 4
        %v6453 = vadd.f32 %v6451, %v6452
        %v6454 = vrot.slane %v6453, 2
        %v6455 = vadd.f32 %v6453, %v6454
        %v6456 = vrot.slane %v6455, 1
        %v6457 = vadd.f32 %v6455, %v6456
        %v6460 = vsel %vm1104, %v6457, %v6356
        %v6462 = vadd.f32 %v6063, %v6460
        %6463 = vst [vmem:[%s6062] sm:$0x3] %v6462
        %p6464 = scmp.eq.s32.totalorder %s26, 1
        // Predicated region
        $region49: #{tpu_custom_call.1} parent=31 // pred_check
          %p6465 = pneg %p6464
        $region50: #{tpu_custom_call.1} parent=31 // pred_check_branch
          %6467 = sbr.rel (%p6465) target = $region52
        $region51: #{tpu_custom_call.1} parent=31 // pred_region
          %v6468 = vld [vmem:[#allocation2] sm:$0x3]
          %v6469 = vld [vmem:[#allocation2 + $0x2] sm:$0x3]
          %v6470 = vld [vmem:[#allocation2 + $0x4] sm:$0x3]
          %v6471 = vld [vmem:[#allocation2 + $0x6] sm:$0x3]
          %v6472 = vld [vmem:[#allocation2 + $0x8] sm:$0x3]
          %v6473 = vld [vmem:[#allocation2 + $0xa] sm:$0x3]
          %v6474 = vld [vmem:[#allocation2 + $0xc] sm:$0x3]
          %v6475 = vld [vmem:[#allocation2 + $0xe] sm:$0x3]
          %v6476 = vld [vmem:[#allocation2 + $0x10] sm:$0x3]
          %v6477 = vld [vmem:[#allocation2 + $0x12] sm:$0x3]
          %vm6478 = vcmask 1041408
          %v6479 = vsel %vm6478, %v6468, 0.0
          %6480 = vadd.xlane.f32.xlu0 %v6479
          %v6481 = vpop.xlane.xlu0 %6480
          %v6482 = vsel %vm6478, %v6469, 0.0
          %6483 = vadd.xlane.f32.xlu0 %v6482
          %v6484 = vpop.xlane.xlu0 %6483
          %v6485 = vsel %vm6478, %v6470, 0.0
          %6486 = vadd.xlane.f32.xlu0 %v6485
          %v6487 = vpop.xlane.xlu0 %6486
          %v6488 = vsel %vm6478, %v6471, 0.0
          %6489 = vadd.xlane.f32.xlu0 %v6488
          %v6490 = vpop.xlane.xlu0 %6489
          %v6491 = vsel %vm6478, %v6472, 0.0
          %6492 = vadd.xlane.f32.xlu0 %v6491
          %v6493 = vpop.xlane.xlu0 %6492
          %v6494 = vsel %vm6478, %v6473, 0.0
          %6495 = vadd.xlane.f32.xlu0 %v6494
          %v6496 = vpop.xlane.xlu0 %6495
          %v6497 = vsel %vm6478, %v6474, 0.0
          %6498 = vadd.xlane.f32.xlu0 %v6497
          %v6499 = vpop.xlane.xlu0 %6498
          %v6500 = vsel %vm6478, %v6475, 0.0
          %6501 = vadd.xlane.f32.xlu0 %v6500
          %v6502 = vpop.xlane.xlu0 %6501
          %v6503 = vsel %vm6478, %v6476, 0.0
          %6504 = vadd.xlane.f32.xlu0 %v6503
          %v6505 = vpop.xlane.xlu0 %6504
          %v6506 = vsel %vm6478, %v6477, 0.0
          %6507 = vadd.xlane.f32.xlu0 %v6506
          %v6508 = vpop.xlane.xlu0 %6507
          %v6519 = vlaneseq
          %v6520 = vand.u32 %v6519, 127
          %v6521 = vlaneseq
          %v6522 = vshrl.u32 %v6521, 7
          %v6523 = vsub.s32 %v6520, %v6522
          %v6524 = vrot.slane %v6481, %v6523
          %v6525 = vlaneseq
          %v6526 = vshrl.u32 %v6525, 7
          %v6527 = vsub.s32 %v6520, %v6526
          %v6528 = vrot.slane %v6484, %v6527
          %v6529 = vlaneseq
          %v6530 = vshrl.u32 %v6529, 7
          %v6531 = vsub.s32 %v6520, %v6530
          %v6532 = vrot.slane %v6487, %v6531
          %v6533 = vlaneseq
          %v6534 = vshrl.u32 %v6533, 7
          %v6535 = vsub.s32 %v6520, %v6534
          %v6536 = vrot.slane %v6490, %v6535
          %v6537 = vlaneseq
          %v6538 = vshrl.u32 %v6537, 7
          %v6539 = vsub.s32 %v6520, %v6538
          %v6540 = vrot.slane %v6493, %v6539
          %v6541 = vlaneseq
          %v6542 = vshrl.u32 %v6541, 7
          %v6543 = vsub.s32 %v6520, %v6542
          %v6544 = vrot.slane %v6496, %v6543
          %v6545 = vlaneseq
          %v6546 = vshrl.u32 %v6545, 7
          %v6547 = vsub.s32 %v6520, %v6546
          %v6548 = vrot.slane %v6499, %v6547
          %v6549 = vlaneseq
          %v6550 = vshrl.u32 %v6549, 7
          %v6551 = vsub.s32 %v6520, %v6550
          %v6552 = vrot.slane %v6502, %v6551
          %v6553 = vlaneseq
          %v6554 = vshrl.u32 %v6553, 7
          %v6555 = vsub.s32 %v6520, %v6554
          %v6556 = vrot.slane %v6505, %v6555
          %v6557 = vlaneseq
          %v6558 = vshrl.u32 %v6557, 7
          %v6559 = vsub.s32 %v6520, %v6558
          %v6560 = vrot.slane %v6508, %v6559
          %v6561 = vsel %vm1104, %v6528, %v6524
          %vm6562 = vcmask 1042434
          %v6563 = vsel %vm6562, %v6532, %v6561
          %vm6564 = vcmask 1043459
          %v6565 = vsel %vm6564, %v6536, %v6563
          %vm6566 = vcmask 1044484
          %v6567 = vsel %vm6566, %v6540, %v6565
          %vm6568 = vcmask 1045509
          %v6569 = vsel %vm6568, %v6544, %v6567
          %vm6570 = vcmask 1046534
          %v6571 = vsel %vm6570, %v6548, %v6569
          %vm6572 = vcmask 1047559
          %v6573 = vsel %vm6572, %v6552, %v6571
          %v6574 = vsel %vm1104, %v6560, %v6556
          %6577 = vxpose.xlu0.b32.start [1/16] %v6573, 128
          %6578 = vxpose.xlu0.b32.cont [2/16] %v6574, 128
          %6579 = vxpose.xlu0.b32.cont [3/16] 0.0, 128
          %6580 = vxpose.xlu0.b32.cont [4/16] 0.0, 128
          %6581 = vxpose.xlu0.b32.cont [5/16] 0.0, 128
          %6582 = vxpose.xlu0.b32.cont [6/16] 0.0, 128
          %6583 = vxpose.xlu0.b32.cont [7/16] 0.0, 128
          %6584 = vxpose.xlu0.b32.cont [8/16] 0.0, 128
          %6585 = vxpose.xlu0.b32.cont [9/16] 0.0, 128
          %6586 = vxpose.xlu0.b32.cont [10/16] 0.0, 128
          %6587 = vxpose.xlu0.b32.cont [11/16] 0.0, 128
          %6588 = vxpose.xlu0.b32.cont [12/16] 0.0, 128
          %6589 = vxpose.xlu0.b32.cont [13/16] 0.0, 128
          %6590 = vxpose.xlu0.b32.cont [14/16] 0.0, 128
          %6591 = vxpose.xlu0.b32.cont [15/16] 0.0, 128
          %6592 = vxpose.xlu0.b32.end [16/16] 0.0, 128
          %v6593 = vpop.trf.xlu0
          %v6594 = vpop.trf.xlu0
          %v6595 = vpop.trf.xlu0
          %v6596 = vpop.trf.xlu0
          %v6597 = vpop.trf.xlu0
          %v6598 = vpop.trf.xlu0
          %v6599 = vpop.trf.xlu0
          %v6600 = vpop.trf.xlu0
          %v6601 = vpop.trf.xlu0
          %v6602 = vpop.trf.xlu0
          %v6603 = vpop.trf.xlu0
          %v6604 = vpop.trf.xlu0
          %v6605 = vpop.trf.xlu0
          %v6606 = vpop.trf.xlu0
          %v6607 = vpop.trf.xlu0
          %v6608 = vpop.trf.xlu0
          %v6609 = vld [vmem:[#allocation8] sm:$0x1]
          %p6610 = scmp.eq.s32.totalorder %s25, 0
          %s6611 = scalar_select %p6610, 1, 0
          %s6612 = scvt.s32.f32 %s6611
          %v6613 = vstv %s6612
          %v6614 = vmul.f32 %v6609, %v6613
          %v6616 = vlaneseq
          %v6617 = vshrl.u32 %v6616, 7
          %v6618 = vsub.s32 0, %v6617
          %v6619 = vrot.slane %v6614, %v6618
          %v6621 = vadd.f32 %v6593, %v6619
          %vm6622 = vcmask 74752
          %6623 = vst.msk [vmem:[#allocation9] sm:$0x3] %vm6622, %v6621
        $region52: #{tpu_custom_call.1} parent=31 // pred_fallthru
          _
        // Predicated region
        $region53: #{tpu_custom_call.1} parent=31 // pred_check
          %p6624 = pneg %p127
        $region54: #{tpu_custom_call.1} parent=31 // pred_check_branch
          %6626 = sbr.rel (%p6624) target = $region56
        $region55: #{tpu_custom_call.1} parent=31 // pred_region
          %s6628 = ssub.s32 32, 32
          %6629 = vsyncadd [#allocation5], %s6628
          %s6631 = sshll.u32 [#allocation9], 4
          %s6632 = int_to_ptr.vmem [resolvable:$true] %s6631
          %6634 = dma.vmem_to_hbm [thread:$0]  %s6632, 32, %s3, [#allocation5]
        $region56: #{tpu_custom_call.1} parent=31 // pred_fallthru
          _
        // Predicated region
        $region57: #{tpu_custom_call.1} parent=31 // pred_check
          %p6635 = pneg %p127
        $region58: #{tpu_custom_call.1} parent=31 // pred_check_branch
          %6637 = sbr.rel (%p6635) target = $region60
        $region59: #{tpu_custom_call.1} parent=31 // pred_region
          %6638 = dma.done [#allocation5], 32
        $region60: #{tpu_custom_call.1} parent=31 // pred_fallthru
          _
      $region32: #{tpu_custom_call.1} parent=5 // pred_fallthru
        _
      %p6639 = scmp.le.s32.totalorder 2, %s16
      // Predicated region
      $region61: #{tpu_custom_call.1} parent=5 // pred_check
        %p6640 = pneg %p6639
      $region62: #{tpu_custom_call.1} parent=5 // pred_check_branch
        %6642 = sbr.rel (%p6640) target = $region64
      $region63: #{tpu_custom_call.1} parent=5 // pred_region
        %s6643 = ssub.s32 %s16, 2
      $region64: #{tpu_custom_call.1} parent=5 // pred_fallthru
        _
    $region6: #{tpu_custom_call.1} parent=1 // loop_footer
      %s20 = sadd.s32 1, %s16
    $region7: #{tpu_custom_call.1} parent=1 // loop_footer_branch
      %15 = sbr.rel target = $region3
    $region8: #{tpu_custom_call.1} parent=1 // loop_exit
      _
    %6644 = vsyncpa [#allocation4], 1
    %s6645 = scalar_lea.sflag [#allocation4], 1
    %6646 = vsyncpa %s6645, 1
    %6647 = vsyncpa [#allocation7], 1
    %s6648 = scalar_lea.sflag [#allocation7], 1
    %6649 = vsyncpa %s6648, 1
    %6650 = vsyncpa [#allocation5], 1
    %s6651 = scalar_lea.sflag [#allocation5], 1
    %6652 = vsyncpa %s6651, 1

</llo_original>
